<compile_context>
chip_gen: v5e
topology: v5e:2x2
jax: 0.10.0
libtpu: 0.0.40
codegen_flags: <defaults>
</compile_context>

<pallas_src>
import functools

import jax
import jax.numpy as jnp
from jax.experimental import pallas as pl
from jax.experimental.pallas import tpu as pltpu

LANE = 128
NEG_INF = -1e30


def _round_up(x, m):
    return ((x + m - 1) // m) * m


# Explicit scoped-VMEM limit (review item for v5e / v7x); keep headroom below
# the physical capacity of whatever chip we are on.
try:
    _VMEM_LIMIT = int(min(3 * pltpu.get_tpu_info().vmem_capacity_bytes // 4,
                          96 * 1024 * 1024))
except Exception:  # pragma: no cover - fall back to compiler default
    _VMEM_LIMIT = None


def _compiler_params(sem):
    return pltpu.CompilerParams(dimension_semantics=sem,
                                vmem_limit_bytes=_VMEM_LIMIT)


# --------------------------------------------------------------------------
# In-kernel helpers (pure jnp on VMEM-resident values)
# --------------------------------------------------------------------------
def _ln_masked(x, g, b, d_real):
    # Padded feature columns of x are exactly zero, so full-width sums equal
    # the real-column sums; normalize with the real feature count.  gamma/beta
    # are zero in the padded columns, so padded outputs stay exactly zero.
    inv_d = 1.0 / float(d_real)
    mean = jnp.sum(x, axis=-1, keepdims=True) * inv_d
    var = jnp.sum(x * x, axis=-1, keepdims=True) * inv_d - mean * mean
    return (x - mean) * jax.lax.rsqrt(var + 1e-5) * g + b


def _rope(x, cos, sin, half):
    # x: (H, T, hd) in split-half layout (weight columns were pre-permuted
    # from the torchtune interleaved convention), cos/sin: (T, half).
    x1 = x[..., :half]
    x2 = x[..., half:]
    return jnp.concatenate([x1 * cos - x2 * sin, x2 * cos + x1 * sin], axis=-1)


def _mha(q2, k2, v2, mask_ref, cos_q, sin_q, cos_k, sin_k,
         *, n_heads, bb, tq, tk):
    # q2: (bb*tq, d) f32, k2/v2: (bb*tk, d) f32; mask_ref block: (bb, 1, tk).
    # Heads are processed with ONE batched dot_general per matmul; bf16 casts,
    # RoPE and the mask broadcast happen once (not per head).
    d = q2.shape[-1]
    hd = d // n_heads
    half = hd // 2
    scale = 1.0 / float(hd) ** 0.5
    bf = jnp.bfloat16
    outs = []
    for bi in range(bb):  # static loop over batch rows in this block
        q = q2[bi * tq:(bi + 1) * tq]
        k = k2[bi * tk:(bi + 1) * tk]
        v = v2[bi * tk:(bi + 1) * tk]
        qs = jnp.stack([q[:, h * hd:(h + 1) * hd] for h in range(n_heads)], 0)
        ks = jnp.stack([k[:, h * hd:(h + 1) * hd] for h in range(n_heads)], 0)
        vs = jnp.stack([v[:, h * hd:(h + 1) * hd] for h in range(n_heads)], 0)
        qs = _rope(qs, cos_q, sin_q, half) * scale        # fold softmax scale
        ks = _rope(ks, cos_k, sin_k, half)
        qb = qs.astype(bf)
        kb = ks.astype(bf)
        vb = vs.astype(bf)
        # (H, tq, tk): one batched MXU push over all heads.
        s = jax.lax.dot_general(qb, kb, (((2,), (2,)), ((0,), (0,))),
                                preferred_element_type=jnp.float32)
        s = s + mask_ref[bi]                              # (1, tk) broadcast
        s = s - jnp.max(s, axis=-1, keepdims=True)
        p = jnp.exp(s)
        p = p * pl.reciprocal(jnp.sum(p, axis=-1, keepdims=True), approx=True)
        # (H, tq, hd): one batched MXU push over all heads.
        o = jax.lax.dot_general(p.astype(bf), vb,
                                (((2,), (1,)), ((0,), (0,))),
                                preferred_element_type=jnp.float32)
        outs.append(jnp.concatenate([o[h] for h in range(n_heads)], axis=-1))
    # TODO(synk): for long sequences replace the materialized (H,T,S) scores
    #             with a KV-tiled online-softmax loop (v7x 64 MiB VMEM).
    return outs[0] if bb == 1 else jnp.concatenate(outs, axis=0)


# --------------------------------------------------------------------------
# Fused whole-stack kernels (one pallas_call per encoder / decoder stack)
# --------------------------------------------------------------------------
def _encoder_stack_kernel(x_ref, mask_ref, cos_ref, sin_ref,
                          ln1g, ln1b, wqkv, bqkv, wo, bo,
                          ln2g, ln2b, w1, b1, w2, b2,
                          o_ref, acc_ref, *, n_heads, d_real, dp, bb):
    l = pl.program_id(1)
    T = x_ref.shape[1]
    bf = jnp.bfloat16

    @pl.when(l == 0)
    def _():
        acc_ref[...] = x_ref[...]          # load residual stream once per b

    x = acc_ref[...].reshape(bb * T, dp)   # fold batch block into matmul M
    cos = cos_ref[...]
    sin = sin_ref[...]

    # --- self-attention sub-block ---
    h = _ln_masked(x, ln1g[0], ln1b[0], d_real)
    qkv = jnp.dot(h.astype(bf), wqkv[0],
                  preferred_element_type=jnp.float32) + bqkv[0]
    attn = _mha(qkv[:, 0:d_real], qkv[:, dp:dp + d_real],
                qkv[:, 2 * dp:2 * dp + d_real],
                mask_ref, cos, sin, cos, sin,
                n_heads=n_heads, bb=bb, tq=T, tk=T)
    x = x + jnp.dot(attn.astype(bf), wo[0],
                    preferred_element_type=jnp.float32) + bo[0]

    # --- feed-forward sub-block ---
    h = _ln_masked(x, ln2g[0], ln2b[0], d_real)
    h1 = jnp.maximum(jnp.dot(h.astype(bf), w1[0],
                             preferred_element_type=jnp.float32) + b1[0], 0.0)
    x = x + jnp.dot(h1.astype(bf), w2[0],
                    preferred_element_type=jnp.float32) + b2[0]

    acc_ref[...] = x.reshape(bb, T, dp)

    @pl.when(l == pl.num_programs(1) - 1)
    def _():
        o_ref[...] = acc_ref[...].astype(o_ref.dtype)


def _decoder_stack_kernel(y_ref, ctx_ref, dmask_ref, emask_ref,
                          cosd_ref, sind_ref, cose_ref, sine_ref,
                          ln1g, ln1b, wqkv, bqkv, wos, bos,
                          ln2g, ln2b, wq, bq, wkv, bkv, woc, boc,
                          ln3g, ln3b, w1, b1, w2, b2,
                          o_ref, acc_ref, *, n_heads, d_real, dp, bb):
    l = pl.program_id(1)
    Td = y_ref.shape[1]
    Ts = ctx_ref.shape[1]
    bf = jnp.bfloat16

    @pl.when(l == 0)
    def _():
        acc_ref[...] = y_ref[...]

    x = acc_ref[...].reshape(bb * Td, dp)
    cos_d = cosd_ref[...]
    sin_d = sind_ref[...]
    cos_e = cose_ref[...]
    sin_e = sine_ref[...]

    # --- masked self-attention (key-padding mask only, as in the reference) ---
    h = _ln_masked(x, ln1g[0], ln1b[0], d_real)
    qkv = jnp.dot(h.astype(bf), wqkv[0],
                  preferred_element_type=jnp.float32) + bqkv[0]
    attn = _mha(qkv[:, 0:d_real], qkv[:, dp:dp + d_real],
                qkv[:, 2 * dp:2 * dp + d_real],
                dmask_ref, cos_d, sin_d, cos_d, sin_d,
                n_heads=n_heads, bb=bb, tq=Td, tk=Td)
    x = x + jnp.dot(attn.astype(bf), wos[0],
                    preferred_element_type=jnp.float32) + bos[0]

    # --- cross-attention (q from decoder, k/v from encoder context) ---
    h = _ln_masked(x, ln2g[0], ln2b[0], d_real)
    qc = jnp.dot(h.astype(bf), wq[0],
                 preferred_element_type=jnp.float32) + bq[0]
    ctx = ctx_ref[...].reshape(bb * Ts, dp)               # already bf16
    kv = jnp.dot(ctx, wkv[0], preferred_element_type=jnp.float32) + bkv[0]
    attn = _mha(qc[:, 0:d_real], kv[:, 0:d_real], kv[:, dp:dp + d_real],
                emask_ref, cos_d, sin_d, cos_e, sin_e,
                n_heads=n_heads, bb=bb, tq=Td, tk=Ts)
    x = x + jnp.dot(attn.astype(bf), woc[0],
                    preferred_element_type=jnp.float32) + boc[0]

    # --- feed-forward ---
    h = _ln_masked(x, ln3g[0], ln3b[0], d_real)
    h1 = jnp.maximum(jnp.dot(h.astype(bf), w1[0],
                             preferred_element_type=jnp.float32) + b1[0], 0.0)
    x = x + jnp.dot(h1.astype(bf), w2[0],
                    preferred_element_type=jnp.float32) + b2[0]

    acc_ref[...] = x.reshape(bb, Td, dp)

    @pl.when(l == pl.num_programs(1) - 1)
    def _():
        o_ref[...] = acc_ref[...]


def _linear_kernel(x_ref, w_ref, b_ref, o_ref):
    o_ref[...] = (jnp.dot(x_ref[...].astype(jnp.bfloat16), w_ref[...],
                          preferred_element_type=jnp.float32) + b_ref[...])


def _head_loss_kernel(y_ref, tgt_ref, g_ref, b_ref, wh_ref, bh_ref,
                      mel_ref, loss_ref, *, d_real):
    h = _ln_masked(y_ref[...], g_ref[...], b_ref[...], d_real)
    mel = (jnp.dot(h.astype(jnp.bfloat16), wh_ref[...],
                   preferred_element_type=jnp.float32) + bh_ref[...])
    tgt = tgt_ref[...]
    valid = tgt != -100.0          # padded mel columns carry -100 -> excluded
    mel_m = jnp.where(valid, mel, 0.0)
    tv = jnp.where(valid, tgt, 0.0)
    total = jnp.sum(jnp.abs(mel_m - tv), axis=(0, 1), keepdims=True)
    count = jnp.sum(valid.astype(jnp.float32), axis=(0, 1), keepdims=True)
    mel_ref[...] = mel_m
    loss_ref[...] = total / count


# --------------------------------------------------------------------------
# pallas_call wrappers
# --------------------------------------------------------------------------
ENC_KEYS = ("ln1g", "ln1b", "wqkv", "bqkv", "wo", "bo",
            "ln2g", "ln2b", "w1", "b1", "w2", "b2")
DEC_KEYS = ("ln1g", "ln1b", "wqkv", "bqkv", "wos", "bos",
            "ln2g", "ln2b", "wq", "bq", "wkv", "bkv", "woc", "boc",
            "ln3g", "ln3b", "w1", "b1", "w2", "b2")


def _stacked_spec(a):
    # Per-layer block of a layer-stacked weight: prefetched/pipelined over l.
    nd = a.ndim
    return pl.BlockSpec((1,) + a.shape[1:],
                        lambda b, l, _n=nd: (l,) + (0,) * (_n - 1))


def _const_spec(a):
    nd = a.ndim
    return pl.BlockSpec(a.shape, lambda b, l, _n=nd: (0,) * _n)


def _pick_batch_block(B, T, target_rows=256):
    # Fold several batch elements into matmul M, but keep >=2 parallel grid
    # steps when possible (v7x has 2 TensorCores).
    best = 1
    for cand in range(1, B + 1):
        if B % cand == 0 and cand * T <= target_rows and B // cand >= 2:
            best = cand
    return best


def encoder_stack(p, x, mask_add, cos, sin, *, n_heads, d_real, dp):
    B, T, _ = x.shape
    L = p["wqkv"].shape[0]
    bb = _pick_batch_block(B, T)
    ws = [p[k] for k in ENC_KEYS]
    in_specs = ([pl.BlockSpec((bb, T, dp), lambda b, l: (b, 0, 0)),
                 pl.BlockSpec((bb, 1, T), lambda b, l: (b, 0, 0)),
                 _const_spec(cos), _const_spec(sin)]
                + [_stacked_spec(w) for w in ws])
    return pl.pallas_call(
        functools.partial(_encoder_stack_kernel, n_heads=n_heads,
                          d_real=d_real, dp=dp, bb=bb),
        out_shape=jax.ShapeDtypeStruct((B, T, dp), jnp.bfloat16),
        grid=(B // bb, L),
        in_specs=in_specs,
        out_specs=pl.BlockSpec((bb, T, dp), lambda b, l: (b, 0, 0)),
        scratch_shapes=[pltpu.VMEM((bb, T, dp), jnp.float32)],
        compiler_params=_compiler_params(("parallel", "arbitrary")),
    )(x, mask_add, cos, sin, *ws)


def decoder_stack(p, y, ctx_bf16, dmask_add, emask_add,
                  cos_d, sin_d, cos_e, sin_e, *, n_heads, d_real, dp):
    B, Td, _ = y.shape
    Ts = ctx_bf16.shape[1]
    L = p["wqkv"].shape[0]
    bb = _pick_batch_block(B, Td)
    ws = [p[k] for k in DEC_KEYS]
    in_specs = ([pl.BlockSpec((bb, Td, dp), lambda b, l: (b, 0, 0)),
                 pl.BlockSpec((bb, Ts, dp), lambda b, l: (b, 0, 0)),
                 pl.BlockSpec((bb, 1, Td), lambda b, l: (b, 0, 0)),
                 pl.BlockSpec((bb, 1, Ts), lambda b, l: (b, 0, 0)),
                 _const_spec(cos_d), _const_spec(sin_d),
                 _const_spec(cos_e), _const_spec(sin_e)]
                + [_stacked_spec(w) for w in ws])
    return pl.pallas_call(
        functools.partial(_decoder_stack_kernel, n_heads=n_heads,
                          d_real=d_real, dp=dp, bb=bb),
        out_shape=jax.ShapeDtypeStruct((B, Td, dp), jnp.float32),
        grid=(B // bb, L),
        in_specs=in_specs,
        out_specs=pl.BlockSpec((bb, Td, dp), lambda b, l: (b, 0, 0)),
        scratch_shapes=[pltpu.VMEM((bb, Td, dp), jnp.float32)],
        compiler_params=_compiler_params(("parallel", "arbitrary")),
    )(y, ctx_bf16, dmask_add, emask_add, cos_d, sin_d, cos_e, sin_e, *ws)


def linear(x2d, w, b_row, block_rows=512):
    M, K = x2d.shape
    N = w.shape[1]
    mb = block_rows if (M > block_rows and M % block_rows == 0) else M
    return pl.pallas_call(
        _linear_kernel,
        out_shape=jax.ShapeDtypeStruct((M, N), jnp.float32),
        grid=(M // mb,),
        in_specs=[pl.BlockSpec((mb, K), lambda i: (i, 0)),
                  pl.BlockSpec((K, N), lambda i: (0, 0)),
                  pl.BlockSpec((1, N), lambda i: (0, 0))],
        out_specs=pl.BlockSpec((mb, N), lambda i: (i, 0)),
        compiler_params=_compiler_params(("parallel",)),
    )(x2d, w, b_row)


def head_loss(y2d, tgt2d, ln_f, ln_head, *, d_real):
    R, dpad = y2d.shape
    Mp = tgt2d.shape[1]
    g, b = ln_f
    wh, bh = ln_head
    mel, loss = pl.pallas_call(
        functools.partial(_head_loss_kernel, d_real=d_real),
        out_shape=(jax.ShapeDtypeStruct((R, Mp), jnp.float32),
                   jax.ShapeDtypeStruct((1, 1), jnp.float32)),
        grid=(1,),
        in_specs=[pl.BlockSpec((R, dpad), lambda i: (0, 0)),
                  pl.BlockSpec((R, Mp), lambda i: (0, 0)),
                  pl.BlockSpec((1, dpad), lambda i: (0, 0)),
                  pl.BlockSpec((1, dpad), lambda i: (0, 0)),
                  pl.BlockSpec((dpad, Mp), lambda i: (0, 0)),
                  pl.BlockSpec((1, Mp), lambda i: (0, 0))],
        out_specs=(pl.BlockSpec((R, Mp), lambda i: (0, 0)),
                   pl.BlockSpec((1, 1), lambda i: (0, 0))),
        compiler_params=_compiler_params(("arbitrary",)),
    )(y2d, tgt2d, g, b, wh, bh)
    return mel, loss[0, 0]


# --------------------------------------------------------------------------
# JAX glue: embedding lookup, masks, RoPE tables, forward pass
# --------------------------------------------------------------------------
def rope_tables(T, hd, base=10000.0):
    inv = 1.0 / (base ** (jnp.arange(0, hd, 2, dtype=jnp.float32) / hd))
    ang = jnp.arange(T, dtype=jnp.float32)[:, None] * inv[None, :]
    return jnp.cos(ang), jnp.sin(ang)                     # (T, hd // 2)


def transformer_forward(params, src_idx, encoder_mask, decoder_input,
                        decoder_mask, batch_targets,
                        *, n_heads, d_model, n_mels):
    dp = _round_up(d_model, LANE)
    mp = _round_up(n_mels, LANE)
    hd = d_model // n_heads
    B, T_src = src_idx.shape
    _, T_dec, _ = decoder_input.shape

    # TODO(synk): token/positional embedding gather kept in XLA glue (tiny);
    #             could become a scalar-prefetch Pallas gather at scale.
    x = params["tok_emb"][src_idx] + params["pos_emb"][:T_src][None, :, :]
    x = x.astype(jnp.float32)

    # True = attend (PyTorch SDPA boolean attn_mask convention) -> additive.
    enc_mask_add = jnp.where(encoder_mask, 0.0, NEG_INF).astype(jnp.float32)[:, None, :]
    dec_mask_add = jnp.where(decoder_mask, 0.0, NEG_INF).astype(jnp.float32)[:, None, :]

    cos_e, sin_e = rope_tables(T_src, hd)
    cos_d, sin_d = rope_tables(T_dec, hd)

    enc_out = encoder_stack(params["enc"], x, enc_mask_add, cos_e, sin_e,
                            n_heads=n_heads, d_real=d_model, dp=dp)

    dec_in = jnp.pad(decoder_input, ((0, 0), (0, 0), (0, mp - n_mels)))
    y0 = linear(dec_in.reshape(B * T_dec, mp),
                params["trg_proj"][0], params["trg_proj"][1]
                ).reshape(B, T_dec, dp)

    dec_out = decoder_stack(params["dec"], y0, enc_out,
                            dec_mask_add, enc_mask_add,
                            cos_d, sin_d, cos_e, sin_e,
                            n_heads=n_heads, d_real=d_model, dp=dp)

    tgt = jnp.pad(batch_targets, ((0, 0), (0, 0), (0, mp - n_mels)),
                  constant_values=-100.0)
    mel_p, loss = head_loss(dec_out.reshape(B * T_dec, dp),
                            tgt.reshape(B * T_dec, mp),
                            params["ln_f"], params["ln_head"], d_real=d_model)
    mel = mel_p[:, :n_mels].reshape(B, T_dec, n_mels)
    return mel, loss


# --------------------------------------------------------------------------
# Parameter init (PyTorch-like) + one-time prep (pad / fuse / permute / bf16)
# --------------------------------------------------------------------------
def init_linear(key, din, dout):
    k1, k2 = jax.random.split(key)
    bound = 1.0 / (din ** 0.5)
    w = jax.random.uniform(k1, (din, dout), jnp.float32, -bound, bound)
    b = jax.random.uniform(k2, (dout,), jnp.float32, -bound, bound)
    return (w, b)


def init_ln(d):
    return (jnp.ones((d,), jnp.float32), jnp.zeros((d,), jnp.float32))


def init_mha(key, d):
    ks = jax.random.split(key, 4)
    return {"q": init_linear(ks[0], d, d), "k": init_linear(ks[1], d, d),
            "v": init_linear(ks[2], d, d), "o": init_linear(ks[3], d, d)}


def init_ffn(key, d):
    k1, k2 = jax.random.split(key)
    return {"w1": init_linear(k1, d, 4 * d), "w2": init_linear(k2, 4 * d, d)}


def init_params(key, block_size, char_size, d_model, n_layers, n_mels):
    keys = jax.random.split(key, 6 + 2 * n_layers)
    params = {
        "tok_emb": jax.random.normal(keys[0], (char_size, d_model), jnp.float32),
        "pos_emb": jax.random.normal(keys[1], (block_size, d_model), jnp.float32),
        "trg_proj": init_linear(keys[2], n_mels, d_model),
        "ln_f": init_ln(d_model),
        "ln_head": init_linear(keys[3], d_model, n_mels),
        "encoder": [],
        "decoder": [],
    }
    for i in range(n_layers):
        ks = jax.random.split(keys[4 + i], 2)
        params["encoder"].append({
            "attn": init_mha(ks[0], d_model),
            "ffwd": init_ffn(ks[1], d_model),
            "ln1": init_ln(d_model), "ln2": init_ln(d_model),
        })
    for i in range(n_layers):
        ks = jax.random.split(keys[4 + n_layers + i], 3)
        params["decoder"].append({
            "self_attn": init_mha(ks[0], d_model),
            "cross_attn": init_mha(ks[1], d_model),
            "ffwd": init_ffn(ks[2], d_model),
            "ln1": init_ln(d_model), "ln2": init_ln(d_model),
            "ln3": init_ln(d_model),
        })
    return params


def _rope_perm(d, n_heads):
    # interleaved pairs (2i, 2i+1) -> split halves (i, half+i) per head.
    hd = d // n_heads
    perm_head = jnp.concatenate([jnp.arange(0, hd, 2), jnp.arange(1, hd, 2)])
    perm = (jnp.arange(n_heads)[:, None] * hd + perm_head[None, :]).reshape(-1)
    return perm.astype(jnp.int32)


def prepare_params(raw, n_heads):
    d = raw["tok_emb"].shape[1]
    n_mels = raw["trg_proj"][0].shape[0]
    dp = _round_up(d, LANE)
    fp = _round_up(4 * d, LANE)
    mp = _round_up(n_mels, LANE)
    perm = _rope_perm(d, n_heads)
    bf = jnp.bfloat16

    def pad_mat(w, rows, cols):
        return jnp.pad(w, ((0, rows - w.shape[0]), (0, cols - w.shape[1])))

    def pad_vec(v, n):
        return jnp.pad(v, (0, n - v.shape[0])).reshape(1, n).astype(jnp.float32)

    def prep_ln(ln):
        g, b = ln
        return pad_vec(g, dp), pad_vec(b, dp)

    def prep_qkv(a):
        wq, bq = a["q"]; wk, bk = a["k"]; wv, bv = a["v"]
        w = jnp.zeros((dp, 3 * dp), jnp.float32)
        w = w.at[:d, 0:d].set(wq[:, perm])
        w = w.at[:d, dp:dp + d].set(wk[:, perm])
        w = w.at[:d, 2 * dp:2 * dp + d].set(wv)
        b = jnp.zeros((3 * dp,), jnp.float32)
        b = b.at[0:d].set(bq[perm])
        b = b.at[dp:dp + d].set(bk[perm])
        b = b.at[2 * dp:2 * dp + d].set(bv)
        return w.astype(bf), b.reshape(1, -1)

    def prep_kv(a):
        wk, bk = a["k"]; wv, bv = a["v"]
        w = jnp.zeros((dp, 2 * dp), jnp.float32)
        w = w.at[:d, 0:d].set(wk[:, perm])
        w = w.at[:d, dp:dp + d].set(wv)
        b = jnp.zeros((2 * dp,), jnp.float32)
        b = b.at[0:d].set(bk[perm])
        b = b.at[dp:dp + d].set(bv)
        return w.astype(bf), b.reshape(1, -1)

    def prep_q(a):
        wq, bq = a["q"]
        return pad_mat(wq[:, perm], dp, dp).astype(bf), pad_vec(bq[perm], dp)

    def prep_o(a):
        wo, bo = a["o"]
        return pad_mat(wo, d, dp).astype(bf), pad_vec(bo, dp)

    def prep_ffn(f):
        w1, b1 = f["w1"]; w2, b2 = f["w2"]
        return (pad_mat(w1, dp, fp).astype(bf), pad_vec(b1, fp),
                pad_mat(w2, fp, dp).astype(bf), pad_vec(b2, dp))

    enc = {k: [] for k in ENC_KEYS}
    for lp in raw["encoder"]:
        g1, b1_ = prep_ln(lp["ln1"])
        g2, b2_ = prep_ln(lp["ln2"])
        wqkv, bqkv = prep_qkv(lp["attn"])
        wo, bo = prep_o(lp["attn"])
        fw1, fb1, fw2, fb2 = prep_ffn(lp["ffwd"])
        vals = dict(ln1g=g1, ln1b=b1_, wqkv=wqkv, bqkv=bqkv, wo=wo, bo=bo,
                    ln2g=g2, ln2b=b2_, w1=fw1, b1=fb1, w2=fw2, b2=fb2)
        for k in ENC_KEYS:
            enc[k].append(vals[k])
    enc = {k: jnp.stack(v, axis=0) for k, v in enc.items()}

    dec = {k: [] for k in DEC_KEYS}
    for lp in raw["decoder"]:
        g1, b1_ = prep_ln(lp["ln1"])
        g2, b2_ = prep_ln(lp["ln2"])
        g3, b3_ = prep_ln(lp["ln3"])
        wqkv, bqkv = prep_qkv(lp["self_attn"])
        wos, bos = prep_o(lp["self_attn"])
        wq, bq = prep_q(lp["cross_attn"])
        wkv, bkv = prep_kv(lp["cross_attn"])
        woc, boc = prep_o(lp["cross_attn"])
        fw1, fb1, fw2, fb2 = prep_ffn(lp["ffwd"])
        vals = dict(ln1g=g1, ln1b=b1_, wqkv=wqkv, bqkv=bqkv, wos=wos, bos=bos,
                    ln2g=g2, ln2b=b2_, wq=wq, bq=bq, wkv=wkv, bkv=bkv,
                    woc=woc, boc=boc, ln3g=g3, ln3b=b3_,
                    w1=fw1, b1=fb1, w2=fw2, b2=fb2)
        for k in DEC_KEYS:
            dec[k].append(vals[k])
    dec = {k: jnp.stack(v, axis=0) for k, v in dec.items()}

    return {
        "tok_emb": pad_mat(raw["tok_emb"], raw["tok_emb"].shape[0], dp),
        "pos_emb": pad_mat(raw["pos_emb"], raw["pos_emb"].shape[0], dp),
        "trg_proj": (pad_mat(raw["trg_proj"][0], mp, dp).astype(bf),
                     pad_vec(raw["trg_proj"][1], dp)),
        "ln_f": prep_ln(raw["ln_f"]),
        "ln_head": (pad_mat(raw["ln_head"][0], dp, mp).astype(bf),
                    pad_vec(raw["ln_head"][1], mp)),
        "enc": enc,
        "dec": dec,
    }


# --------------------------------------------------------------------------
if __name__ == "__main__":
    block_size, char_size = 64, 40
    d_model, n_heads, n_layers, n_mels = 32, 4, 2, 16
    B, T_src, T_dec = 2, 8, 8

    key = jax.random.PRNGKey(0)
    kp, k1, k2, k3 = jax.random.split(key, 4)
    raw_params = init_params(kp, block_size, char_size, d_model, n_layers, n_mels)
    params = prepare_params(raw_params, n_heads)

    src_idx = jax.random.randint(k1, (B, T_src), 0, char_size)
    enc_lens = jnp.array([8, 6])
    dec_lens = jnp.array([8, 5])
    encoder_mask = jnp.arange(T_src)[None, :] < enc_lens[:, None]   # (B, T_src)
    decoder_mask = jnp.arange(T_dec)[None, :] < dec_lens[:, None]   # (B, T_dec)

    decoder_input = jax.random.normal(k2, (B, T_dec, n_mels), jnp.float32)
    batch_targets = jax.random.normal(k3, (B, T_dec, n_mels), jnp.float32)
    pad = ~(jnp.arange(T_dec)[None, :, None] < dec_lens[:, None, None])
    batch_targets = jnp.where(pad, -100.0, batch_targets)

    fwd = jax.jit(functools.partial(transformer_forward, n_heads=n_heads,
                                    d_model=d_model, n_mels=n_mels))
    mel_output, loss = fwd(params, src_idx, encoder_mask, decoder_input,
                           decoder_mask, batch_targets)
    jax.block_until_ready((mel_output, loss))
    assert mel_output.shape == (B, T_dec, n_mels)
    assert bool(jnp.isfinite(loss))
    print("KERNEL_OK")
</pallas_src>

<mosaic_0001>
module attributes {stable_mosaic.version = 11 : i64} {
  func.func @_encoder_stack_kernel(%arg0: i32, %arg1: i32, %arg2: memref<1x8x128xf32, #tpu.memory_space<vmem>>, %arg3: memref<1x1x8xf32, #tpu.memory_space<vmem>>, %arg4: memref<8x4xf32, #tpu.memory_space<vmem>>, %arg5: memref<8x4xf32, #tpu.memory_space<vmem>>, %arg6: memref<1x1x128xf32, #tpu.memory_space<vmem>>, %arg7: memref<1x1x128xf32, #tpu.memory_space<vmem>>, %arg8: memref<1x128x384xbf16, #tpu.memory_space<vmem>>, %arg9: memref<1x1x384xf32, #tpu.memory_space<vmem>>, %arg10: memref<1x32x128xbf16, #tpu.memory_space<vmem>>, %arg11: memref<1x1x128xf32, #tpu.memory_space<vmem>>, %arg12: memref<1x1x128xf32, #tpu.memory_space<vmem>>, %arg13: memref<1x1x128xf32, #tpu.memory_space<vmem>>, %arg14: memref<1x128x128xbf16, #tpu.memory_space<vmem>>, %arg15: memref<1x1x128xf32, #tpu.memory_space<vmem>>, %arg16: memref<1x128x128xbf16, #tpu.memory_space<vmem>>, %arg17: memref<1x1x128xf32, #tpu.memory_space<vmem>>, %arg18: memref<1x8x128xbf16, #tpu.memory_space<vmem>>, %arg19: memref<1x8x128xf32, #tpu.memory_space<vmem>>) attributes {dimension_semantics = [#tpu.dimension_semantics<parallel>, #tpu.dimension_semantics<arbitrary>], iteration_bounds = array<i64: 2, 2>, scalar_prefetch = 0 : i64, scratch_operands = 1 : i64, tpu.core_type = #tpu.core_type<tc>, window_params = [{transform_indices = @transform_0, window_bounds = array<i64: 1, 8, 128>}, {transform_indices = @transform_1, window_bounds = array<i64: 1, 1, 8>}, {pipeline_mode = #tpu.pipeline_mode<synchronous>, transform_indices = @transform_2, window_bounds = array<i64: 8, 4>}, {pipeline_mode = #tpu.pipeline_mode<synchronous>, transform_indices = @transform_3, window_bounds = array<i64: 8, 4>}, {transform_indices = @transform_4, window_bounds = array<i64: 1, 1, 128>}, {transform_indices = @transform_5, window_bounds = array<i64: 1, 1, 128>}, {transform_indices = @transform_6, window_bounds = array<i64: 1, 128, 384>}, {transform_indices = @transform_7, window_bounds = array<i64: 1, 1, 384>}, {transform_indices = @transform_8, window_bounds = array<i64: 1, 32, 128>}, {transform_indices = @transform_9, window_bounds = array<i64: 1, 1, 128>}, {transform_indices = @transform_10, window_bounds = array<i64: 1, 1, 128>}, {transform_indices = @transform_11, window_bounds = array<i64: 1, 1, 128>}, {transform_indices = @transform_12, window_bounds = array<i64: 1, 128, 128>}, {transform_indices = @transform_13, window_bounds = array<i64: 1, 1, 128>}, {transform_indices = @transform_14, window_bounds = array<i64: 1, 128, 128>}, {transform_indices = @transform_15, window_bounds = array<i64: 1, 1, 128>}, {transform_indices = @transform_16, window_bounds = array<i64: 1, 8, 128>}]} {
    %c0_i32 = arith.constant 0 : i32
    %0 = arith.cmpi eq, %arg1, %c0_i32 : i32
    %1 = arith.extui %0 : i1 to i32
    %c0_i32_0 = arith.constant 0 : i32
    %2 = arith.cmpi ne, %1, %c0_i32_0 : i32
    scf.if %2 {
      %c0_69 = arith.constant 0 : index
      %c0_70 = arith.constant 0 : index
      %c0_71 = arith.constant 0 : index
      %196 = vector.load %arg2[%c0_69, %c0_70, %c0_71] : memref<1x8x128xf32, #tpu.memory_space<vmem>>, vector<1x8x128xf32>
      %c0_72 = arith.constant 0 : index
      %c0_73 = arith.constant 0 : index
      %c0_74 = arith.constant 0 : index
      %197 = vector.load %arg19[%c0_72, %c0_73, %c0_74] : memref<1x8x128xf32, #tpu.memory_space<vmem>>, vector<1x8x128xf32>
      tpu.vector_store %arg19[%c0_72, %c0_73, %c0_74], %196 {strides = array<i32>} : memref<1x8x128xf32, #tpu.memory_space<vmem>>, vector<1x8x128xf32>,
    } else {
    }
    %c0 = arith.constant 0 : index
    %c0_1 = arith.constant 0 : index
    %c0_2 = arith.constant 0 : index
    %3 = vector.load %arg19[%c0, %c0_1, %c0_2] : memref<1x8x128xf32, #tpu.memory_space<vmem>>, vector<1x8x128xf32>
    %4 = vector.shape_cast %3 : vector<1x8x128xf32> to vector<8x128xf32>
    %c0_3 = arith.constant 0 : index
    %c0_4 = arith.constant 0 : index
    %5 = vector.load %arg4[%c0_3, %c0_4] : memref<8x4xf32, #tpu.memory_space<vmem>>, vector<8x4xf32>
    %c0_5 = arith.constant 0 : index
    %c0_6 = arith.constant 0 : index
    %6 = vector.load %arg5[%c0_5, %c0_6] : memref<8x4xf32, #tpu.memory_space<vmem>>, vector<8x4xf32>
    %c0_7 = arith.constant 0 : index
    %c0_8 = arith.constant 0 : index
    %c0_9 = arith.constant 0 : index
    %7 = vector.load %arg6[%c0_7, %c0_8, %c0_9] : memref<1x1x128xf32, #tpu.memory_space<vmem>>, vector<1x1x128xf32>
    %8 = vector.shape_cast %7 : vector<1x1x128xf32> to vector<1x128xf32>
    %c0_10 = arith.constant 0 : index
    %c0_11 = arith.constant 0 : index
    %c0_12 = arith.constant 0 : index
    %9 = vector.load %arg7[%c0_10, %c0_11, %c0_12] : memref<1x1x128xf32, #tpu.memory_space<vmem>>, vector<1x1x128xf32>
    %10 = vector.shape_cast %9 : vector<1x1x128xf32> to vector<1x128xf32>
    %cst = arith.constant dense<0.000000e+00> : vector<8xf32>
    %11 = vector.multi_reduction <add>, %4, %cst [1] : vector<8x128xf32> to vector<8xf32>
    %12 = vector.shape_cast %11 : vector<8xf32> to vector<8x1xf32>
    %cst_13 = arith.constant 3.125000e-02 : f32
    %13 = vector.broadcast %cst_13 : f32 to vector<8x1xf32>
    %14 = arith.mulf %12, %13 : vector<8x1xf32>
    %15 = arith.mulf %4, %4 : vector<8x128xf32>
    %cst_14 = arith.constant dense<0.000000e+00> : vector<8xf32>
    %16 = vector.multi_reduction <add>, %15, %cst_14 [1] : vector<8x128xf32> to vector<8xf32>
    %17 = vector.shape_cast %16 : vector<8xf32> to vector<8x1xf32>
    %cst_15 = arith.constant 3.125000e-02 : f32
    %18 = vector.broadcast %cst_15 : f32 to vector<8x1xf32>
    %19 = arith.mulf %17, %18 : vector<8x1xf32>
    %20 = arith.mulf %14, %14 : vector<8x1xf32>
    %21 = arith.subf %19, %20 : vector<8x1xf32>
    %22 = vector.broadcast %14 : vector<8x1xf32> to vector<8x128xf32>
    %23 = arith.subf %4, %22 : vector<8x128xf32>
    %cst_16 = arith.constant 9.99999974E-6 : f32
    %24 = vector.broadcast %cst_16 : f32 to vector<8x1xf32>
    %25 = arith.addf %21, %24 : vector<8x1xf32>
    %26 = math.rsqrt %25 : vector<8x1xf32>
    %27 = vector.broadcast %26 : vector<8x1xf32> to vector<8x128xf32>
    %28 = arith.mulf %23, %27 : vector<8x128xf32>
    %29 = vector.broadcast %8 : vector<1x128xf32> to vector<8x128xf32>
    %30 = arith.mulf %28, %29 : vector<8x128xf32>
    %31 = vector.broadcast %10 : vector<1x128xf32> to vector<8x128xf32>
    %32 = arith.addf %30, %31 : vector<8x128xf32>
    %33 = arith.truncf %32 : vector<8x128xf32> to vector<8x128xbf16>
    %c0_17 = arith.constant 0 : index
    %c0_18 = arith.constant 0 : index
    %c0_19 = arith.constant 0 : index
    %34 = vector.load %arg8[%c0_17, %c0_18, %c0_19] : memref<1x128x384xbf16, #tpu.memory_space<vmem>>, vector<1x128x384xbf16>
    %35 = vector.shape_cast %34 : vector<1x128x384xbf16> to vector<128x384xbf16>
    %cst_20 = arith.constant dense<0.000000e+00> : vector<8x384xf32>
    %36 = tpu.matmul %33, %35, %cst_20 {dimension_numbers = #tpu.dot_dimension_numbers<[1], [0], [0], [1], [0, 0, 1, 1], [], []>} : vector<8x128xbf16>, vector<128x384xbf16>, vector<8x384xf32> -> vector<8x384xf32>
    %c0_21 = arith.constant 0 : index
    %c0_22 = arith.constant 0 : index
    %c0_23 = arith.constant 0 : index
    %37 = vector.load %arg9[%c0_21, %c0_22, %c0_23] : memref<1x1x384xf32, #tpu.memory_space<vmem>>, vector<1x1x384xf32>
    %38 = vector.shape_cast %37 : vector<1x1x384xf32> to vector<1x384xf32>
    %39 = vector.broadcast %38 : vector<1x384xf32> to vector<8x384xf32>
    %40 = arith.addf %36, %39 : vector<8x384xf32>
    %41 = vector.extract_strided_slice %40 {offsets = [0, 0], sizes = [8, 32], strides = [1, 1]} : vector<8x384xf32> to vector<8x32xf32>
    %42 = vector.extract_strided_slice %40 {offsets = [0, 128], sizes = [8, 32], strides = [1, 1]} : vector<8x384xf32> to vector<8x32xf32>
    %43 = vector.extract_strided_slice %40 {offsets = [0, 256], sizes = [8, 32], strides = [1, 1]} : vector<8x384xf32> to vector<8x32xf32>
    %44 = vector.extract_strided_slice %41 {offsets = [0, 0], sizes = [8, 8], strides = [1, 1]} : vector<8x32xf32> to vector<8x8xf32>
    %45 = vector.extract_strided_slice %41 {offsets = [0, 8], sizes = [8, 8], strides = [1, 1]} : vector<8x32xf32> to vector<8x8xf32>
    %46 = vector.extract_strided_slice %41 {offsets = [0, 16], sizes = [8, 8], strides = [1, 1]} : vector<8x32xf32> to vector<8x8xf32>
    %47 = vector.extract_strided_slice %41 {offsets = [0, 24], sizes = [8, 8], strides = [1, 1]} : vector<8x32xf32> to vector<8x8xf32>
    %48 = vector.shape_cast %44 : vector<8x8xf32> to vector<1x8x8xf32>
    %49 = vector.shape_cast %45 : vector<8x8xf32> to vector<1x8x8xf32>
    %50 = vector.shape_cast %46 : vector<8x8xf32> to vector<1x8x8xf32>
    %51 = vector.shape_cast %47 : vector<8x8xf32> to vector<1x8x8xf32>
    %52 = tpu.concatenate %48, %49, %50, %51 in 0 : vector<1x8x8xf32>, vector<1x8x8xf32>, vector<1x8x8xf32>, vector<1x8x8xf32> -> vector<4x8x8xf32>
    %53 = vector.extract_strided_slice %42 {offsets = [0, 0], sizes = [8, 8], strides = [1, 1]} : vector<8x32xf32> to vector<8x8xf32>
    %54 = vector.extract_strided_slice %42 {offsets = [0, 8], sizes = [8, 8], strides = [1, 1]} : vector<8x32xf32> to vector<8x8xf32>
    %55 = vector.extract_strided_slice %42 {offsets = [0, 16], sizes = [8, 8], strides = [1, 1]} : vector<8x32xf32> to vector<8x8xf32>
    %56 = vector.extract_strided_slice %42 {offsets = [0, 24], sizes = [8, 8], strides = [1, 1]} : vector<8x32xf32> to vector<8x8xf32>
    %57 = vector.shape_cast %53 : vector<8x8xf32> to vector<1x8x8xf32>
    %58 = vector.shape_cast %54 : vector<8x8xf32> to vector<1x8x8xf32>
    %59 = vector.shape_cast %55 : vector<8x8xf32> to vector<1x8x8xf32>
    %60 = vector.shape_cast %56 : vector<8x8xf32> to vector<1x8x8xf32>
    %61 = tpu.concatenate %57, %58, %59, %60 in 0 : vector<1x8x8xf32>, vector<1x8x8xf32>, vector<1x8x8xf32>, vector<1x8x8xf32> -> vector<4x8x8xf32>
    %62 = vector.extract_strided_slice %43 {offsets = [0, 0], sizes = [8, 8], strides = [1, 1]} : vector<8x32xf32> to vector<8x8xf32>
    %63 = vector.extract_strided_slice %43 {offsets = [0, 8], sizes = [8, 8], strides = [1, 1]} : vector<8x32xf32> to vector<8x8xf32>
    %64 = vector.extract_strided_slice %43 {offsets = [0, 16], sizes = [8, 8], strides = [1, 1]} : vector<8x32xf32> to vector<8x8xf32>
    %65 = vector.extract_strided_slice %43 {offsets = [0, 24], sizes = [8, 8], strides = [1, 1]} : vector<8x32xf32> to vector<8x8xf32>
    %66 = vector.shape_cast %62 : vector<8x8xf32> to vector<1x8x8xf32>
    %67 = vector.shape_cast %63 : vector<8x8xf32> to vector<1x8x8xf32>
    %68 = vector.shape_cast %64 : vector<8x8xf32> to vector<1x8x8xf32>
    %69 = vector.shape_cast %65 : vector<8x8xf32> to vector<1x8x8xf32>
    %70 = tpu.concatenate %66, %67, %68, %69 in 0 : vector<1x8x8xf32>, vector<1x8x8xf32>, vector<1x8x8xf32>, vector<1x8x8xf32> -> vector<4x8x8xf32>
    %71 = vector.extract_strided_slice %52 {offsets = [0, 0, 0], sizes = [4, 8, 4], strides = [1, 1, 1]} : vector<4x8x8xf32> to vector<4x8x4xf32>
    %72 = vector.extract_strided_slice %52 {offsets = [0, 0, 4], sizes = [4, 8, 4], strides = [1, 1, 1]} : vector<4x8x8xf32> to vector<4x8x4xf32>
    %73 = vector.shape_cast %5 : vector<8x4xf32> to vector<1x8x4xf32>
    %74 = vector.broadcast %73 : vector<1x8x4xf32> to vector<4x8x4xf32>
    %75 = arith.mulf %71, %74 : vector<4x8x4xf32>
    %76 = vector.shape_cast %6 : vector<8x4xf32> to vector<1x8x4xf32>
    %77 = vector.broadcast %76 : vector<1x8x4xf32> to vector<4x8x4xf32>
    %78 = arith.mulf %72, %77 : vector<4x8x4xf32>
    %79 = arith.subf %75, %78 : vector<4x8x4xf32>
    %80 = vector.shape_cast %5 : vector<8x4xf32> to vector<1x8x4xf32>
    %81 = vector.broadcast %80 : vector<1x8x4xf32> to vector<4x8x4xf32>
    %82 = arith.mulf %72, %81 : vector<4x8x4xf32>
    %83 = vector.shape_cast %6 : vector<8x4xf32> to vector<1x8x4xf32>
    %84 = vector.broadcast %83 : vector<1x8x4xf32> to vector<4x8x4xf32>
    %85 = arith.mulf %71, %84 : vector<4x8x4xf32>
    %86 = arith.addf %82, %85 : vector<4x8x4xf32>
    %87 = tpu.concatenate %79, %86 in 2 : vector<4x8x4xf32>, vector<4x8x4xf32> -> vector<4x8x8xf32>
    %cst_24 = arith.constant 0.353553385 : f32
    %88 = vector.broadcast %cst_24 : f32 to vector<4x8x8xf32>
    %89 = arith.mulf %87, %88 : vector<4x8x8xf32>
    %90 = vector.extract_strided_slice %61 {offsets = [0, 0, 0], sizes = [4, 8, 4], strides = [1, 1, 1]} : vector<4x8x8xf32> to vector<4x8x4xf32>
    %91 = vector.extract_strided_slice %61 {offsets = [0, 0, 4], sizes = [4, 8, 4], strides = [1, 1, 1]} : vector<4x8x8xf32> to vector<4x8x4xf32>
    %92 = vector.shape_cast %5 : vector<8x4xf32> to vector<1x8x4xf32>
    %93 = vector.broadcast %92 : vector<1x8x4xf32> to vector<4x8x4xf32>
    %94 = arith.mulf %90, %93 : vector<4x8x4xf32>
    %95 = vector.shape_cast %6 : vector<8x4xf32> to vector<1x8x4xf32>
    %96 = vector.broadcast %95 : vector<1x8x4xf32> to vector<4x8x4xf32>
    %97 = arith.mulf %91, %96 : vector<4x8x4xf32>
    %98 = arith.subf %94, %97 : vector<4x8x4xf32>
    %99 = vector.shape_cast %5 : vector<8x4xf32> to vector<1x8x4xf32>
    %100 = vector.broadcast %99 : vector<1x8x4xf32> to vector<4x8x4xf32>
    %101 = arith.mulf %91, %100 : vector<4x8x4xf32>
    %102 = vector.shape_cast %6 : vector<8x4xf32> to vector<1x8x4xf32>
    %103 = vector.broadcast %102 : vector<1x8x4xf32> to vector<4x8x4xf32>
    %104 = arith.mulf %90, %103 : vector<4x8x4xf32>
    %105 = arith.addf %101, %104 : vector<4x8x4xf32>
    %106 = tpu.concatenate %98, %105 in 2 : vector<4x8x4xf32>, vector<4x8x4xf32> -> vector<4x8x8xf32>
    %107 = arith.truncf %89 : vector<4x8x8xf32> to vector<4x8x8xbf16>
    %108 = arith.truncf %106 : vector<4x8x8xf32> to vector<4x8x8xbf16>
    %109 = arith.truncf %70 : vector<4x8x8xf32> to vector<4x8x8xbf16>
    %cst_25 = arith.constant dense<0.000000e+00> : vector<4x8x8xf32>
    %110 = tpu.matmul %107, %108, %cst_25 {dimension_numbers = #tpu.dot_dimension_numbers<[2], [2], [1], [1], [0, 0, 0, 1, 1, 1], [0], [0]>} : vector<4x8x8xbf16>, vector<4x8x8xbf16>, vector<4x8x8xf32> -> vector<4x8x8xf32>
    %c0_26 = arith.constant 0 : index
    %c0_27 = arith.constant 0 : index
    %c0_28 = arith.constant 0 : index
    %111 = vector.load %arg3[%c0_26, %c0_27, %c0_28] : memref<1x1x8xf32, #tpu.memory_space<vmem>>, vector<1x1x8xf32>
    %112 = vector.shape_cast %111 : vector<1x1x8xf32> to vector<1x8xf32>
    %113 = vector.shape_cast %112 : vector<1x8xf32> to vector<1x1x8xf32>
    %114 = vector.broadcast %113 : vector<1x1x8xf32> to vector<4x8x8xf32>
    %115 = arith.addf %110, %114 : vector<4x8x8xf32>
    %cst_29 = arith.constant dense<0xFF800000> : vector<4x8xf32>
    %116 = vector.multi_reduction <maximumf>, %115, %cst_29 [2] : vector<4x8x8xf32> to vector<4x8xf32>
    %117 = vector.shape_cast %116 : vector<4x8xf32> to vector<4x8x1xf32>
    %118 = vector.broadcast %117 : vector<4x8x1xf32> to vector<4x8x8xf32>
    %119 = arith.subf %115, %118 : vector<4x8x8xf32>
    %120 = math.exp %119 : vector<4x8x8xf32>
    %cst_30 = arith.constant dense<0.000000e+00> : vector<4x8xf32>
    %121 = vector.multi_reduction <add>, %120, %cst_30 [2] : vector<4x8x8xf32> to vector<4x8xf32>
    %122 = vector.shape_cast %121 : vector<4x8xf32> to vector<4x8x1xf32>
    %123 = tpu.reciprocal %122 {approx = true} : vector<4x8x1xf32> -> vector<4x8x1xf32>
    %124 = vector.broadcast %123 : vector<4x8x1xf32> to vector<4x8x8xf32>
    %125 = arith.mulf %120, %124 : vector<4x8x8xf32>
    %126 = arith.truncf %125 : vector<4x8x8xf32> to vector<4x8x8xbf16>
    %cst_31 = arith.constant dense<0.000000e+00> : vector<4x8x8xf32>
    %127 = tpu.matmul %126, %109, %cst_31 {dimension_numbers = #tpu.dot_dimension_numbers<[2], [1], [1], [2], [0, 0, 0, 1, 1, 2], [0], [0]>} : vector<4x8x8xbf16>, vector<4x8x8xbf16>, vector<4x8x8xf32> -> vector<4x8x8xf32>
    %128 = vector.extract_strided_slice %127 {offsets = [0, 0, 0], sizes = [1, 8, 8], strides = [1, 1, 1]} : vector<4x8x8xf32> to vector<1x8x8xf32>
    %129 = vector.shape_cast %128 : vector<1x8x8xf32> to vector<8x8xf32>
    %130 = vector.extract_strided_slice %127 {offsets = [1, 0, 0], sizes = [1, 8, 8], strides = [1, 1, 1]} : vector<4x8x8xf32> to vector<1x8x8xf32>
    %131 = vector.shape_cast %130 : vector<1x8x8xf32> to vector<8x8xf32>
    %132 = vector.extract_strided_slice %127 {offsets = [2, 0, 0], sizes = [1, 8, 8], strides = [1, 1, 1]} : vector<4x8x8xf32> to vector<1x8x8xf32>
    %133 = vector.shape_cast %132 : vector<1x8x8xf32> to vector<8x8xf32>
    %134 = vector.extract_strided_slice %127 {offsets = [3, 0, 0], sizes = [1, 8, 8], strides = [1, 1, 1]} : vector<4x8x8xf32> to vector<1x8x8xf32>
    %135 = vector.shape_cast %134 : vector<1x8x8xf32> to vector<8x8xf32>
    %136 = tpu.concatenate %129, %131, %133, %135 in 1 : vector<8x8xf32>, vector<8x8xf32>, vector<8x8xf32>, vector<8x8xf32> -> vector<8x32xf32>
    %137 = arith.truncf %136 : vector<8x32xf32> to vector<8x32xbf16>
    %c0_32 = arith.constant 0 : index
    %c0_33 = arith.constant 0 : index
    %c0_34 = arith.constant 0 : index
    %138 = vector.load %arg10[%c0_32, %c0_33, %c0_34] : memref<1x32x128xbf16, #tpu.memory_space<vmem>>, vector<1x32x128xbf16>
    %139 = vector.shape_cast %138 : vector<1x32x128xbf16> to vector<32x128xbf16>
    %cst_35 = arith.constant dense<0.000000e+00> : vector<8x128xf32>
    %140 = tpu.matmul %137, %139, %cst_35 {dimension_numbers = #tpu.dot_dimension_numbers<[1], [0], [0], [1], [0, 0, 1, 1], [], []>} : vector<8x32xbf16>, vector<32x128xbf16>, vector<8x128xf32> -> vector<8x128xf32>
    %141 = arith.addf %4, %140 : vector<8x128xf32>
    %c0_36 = arith.constant 0 : index
    %c0_37 = arith.constant 0 : index
    %c0_38 = arith.constant 0 : index
    %142 = vector.load %arg11[%c0_36, %c0_37, %c0_38] : memref<1x1x128xf32, #tpu.memory_space<vmem>>, vector<1x1x128xf32>
    %143 = vector.shape_cast %142 : vector<1x1x128xf32> to vector<1x128xf32>
    %144 = vector.broadcast %143 : vector<1x128xf32> to vector<8x128xf32>
    %145 = arith.addf %141, %144 : vector<8x128xf32>
    %c0_39 = arith.constant 0 : index
    %c0_40 = arith.constant 0 : index
    %c0_41 = arith.constant 0 : index
    %146 = vector.load %arg12[%c0_39, %c0_40, %c0_41] : memref<1x1x128xf32, #tpu.memory_space<vmem>>, vector<1x1x128xf32>
    %147 = vector.shape_cast %146 : vector<1x1x128xf32> to vector<1x128xf32>
    %c0_42 = arith.constant 0 : index
    %c0_43 = arith.constant 0 : index
    %c0_44 = arith.constant 0 : index
    %148 = vector.load %arg13[%c0_42, %c0_43, %c0_44] : memref<1x1x128xf32, #tpu.memory_space<vmem>>, vector<1x1x128xf32>
    %149 = vector.shape_cast %148 : vector<1x1x128xf32> to vector<1x128xf32>
    %cst_45 = arith.constant dense<0.000000e+00> : vector<8xf32>
    %150 = vector.multi_reduction <add>, %145, %cst_45 [1] : vector<8x128xf32> to vector<8xf32>
    %151 = vector.shape_cast %150 : vector<8xf32> to vector<8x1xf32>
    %cst_46 = arith.constant 3.125000e-02 : f32
    %152 = vector.broadcast %cst_46 : f32 to vector<8x1xf32>
    %153 = arith.mulf %151, %152 : vector<8x1xf32>
    %154 = arith.mulf %145, %145 : vector<8x128xf32>
    %cst_47 = arith.constant dense<0.000000e+00> : vector<8xf32>
    %155 = vector.multi_reduction <add>, %154, %cst_47 [1] : vector<8x128xf32> to vector<8xf32>
    %156 = vector.shape_cast %155 : vector<8xf32> to vector<8x1xf32>
    %cst_48 = arith.constant 3.125000e-02 : f32
    %157 = vector.broadcast %cst_48 : f32 to vector<8x1xf32>
    %158 = arith.mulf %156, %157 : vector<8x1xf32>
    %159 = arith.mulf %153, %153 : vector<8x1xf32>
    %160 = arith.subf %158, %159 : vector<8x1xf32>
    %161 = vector.broadcast %153 : vector<8x1xf32> to vector<8x128xf32>
    %162 = arith.subf %145, %161 : vector<8x128xf32>
    %cst_49 = arith.constant 9.99999974E-6 : f32
    %163 = vector.broadcast %cst_49 : f32 to vector<8x1xf32>
    %164 = arith.addf %160, %163 : vector<8x1xf32>
    %165 = math.rsqrt %164 : vector<8x1xf32>
    %166 = vector.broadcast %165 : vector<8x1xf32> to vector<8x128xf32>
    %167 = arith.mulf %162, %166 : vector<8x128xf32>
    %168 = vector.broadcast %147 : vector<1x128xf32> to vector<8x128xf32>
    %169 = arith.mulf %167, %168 : vector<8x128xf32>
    %170 = vector.broadcast %149 : vector<1x128xf32> to vector<8x128xf32>
    %171 = arith.addf %169, %170 : vector<8x128xf32>
    %172 = arith.truncf %171 : vector<8x128xf32> to vector<8x128xbf16>
    %c0_50 = arith.constant 0 : index
    %c0_51 = arith.constant 0 : index
    %c0_52 = arith.constant 0 : index
    %173 = vector.load %arg14[%c0_50, %c0_51, %c0_52] : memref<1x128x128xbf16, #tpu.memory_space<vmem>>, vector<1x128x128xbf16>
    %174 = vector.shape_cast %173 : vector<1x128x128xbf16> to vector<128x128xbf16>
    %cst_53 = arith.constant dense<0.000000e+00> : vector<8x128xf32>
    %175 = tpu.matmul %172, %174, %cst_53 {dimension_numbers = #tpu.dot_dimension_numbers<[1], [0], [0], [1], [0, 0, 1, 1], [], []>} : vector<8x128xbf16>, vector<128x128xbf16>, vector<8x128xf32> -> vector<8x128xf32>
    %c0_54 = arith.constant 0 : index
    %c0_55 = arith.constant 0 : index
    %c0_56 = arith.constant 0 : index
    %176 = vector.load %arg15[%c0_54, %c0_55, %c0_56] : memref<1x1x128xf32, #tpu.memory_space<vmem>>, vector<1x1x128xf32>
    %177 = vector.shape_cast %176 : vector<1x1x128xf32> to vector<1x128xf32>
    %178 = vector.broadcast %177 : vector<1x128xf32> to vector<8x128xf32>
    %179 = arith.addf %175, %178 : vector<8x128xf32>
    %cst_57 = arith.constant 0.000000e+00 : f32
    %180 = vector.broadcast %cst_57 : f32 to vector<8x128xf32>
    %181 = arith.maximumf %179, %180 : vector<8x128xf32>
    %182 = arith.truncf %181 : vector<8x128xf32> to vector<8x128xbf16>
    %c0_58 = arith.constant 0 : index
    %c0_59 = arith.constant 0 : index
    %c0_60 = arith.constant 0 : index
    %183 = vector.load %arg16[%c0_58, %c0_59, %c0_60] : memref<1x128x128xbf16, #tpu.memory_space<vmem>>, vector<1x128x128xbf16>
    %184 = vector.shape_cast %183 : vector<1x128x128xbf16> to vector<128x128xbf16>
    %cst_61 = arith.constant dense<0.000000e+00> : vector<8x128xf32>
    %185 = tpu.matmul %182, %184, %cst_61 {dimension_numbers = #tpu.dot_dimension_numbers<[1], [0], [0], [1], [0, 0, 1, 1], [], []>} : vector<8x128xbf16>, vector<128x128xbf16>, vector<8x128xf32> -> vector<8x128xf32>
    %186 = arith.addf %145, %185 : vector<8x128xf32>
    %c0_62 = arith.constant 0 : index
    %c0_63 = arith.constant 0 : index
    %c0_64 = arith.constant 0 : index
    %187 = vector.load %arg17[%c0_62, %c0_63, %c0_64] : memref<1x1x128xf32, #tpu.memory_space<vmem>>, vector<1x1x128xf32>
    %188 = vector.shape_cast %187 : vector<1x1x128xf32> to vector<1x128xf32>
    %189 = vector.broadcast %188 : vector<1x128xf32> to vector<8x128xf32>
    %190 = arith.addf %186, %189 : vector<8x128xf32>
    %191 = vector.shape_cast %190 : vector<8x128xf32> to vector<1x8x128xf32>
    %c0_65 = arith.constant 0 : index
    %c0_66 = arith.constant 0 : index
    %c0_67 = arith.constant 0 : index
    %192 = vector.load %arg19[%c0_65, %c0_66, %c0_67] : memref<1x8x128xf32, #tpu.memory_space<vmem>>, vector<1x8x128xf32>
    tpu.vector_store %arg19[%c0_65, %c0_66, %c0_67], %191 {strides = array<i32>} : memref<1x8x128xf32, #tpu.memory_space<vmem>>, vector<1x8x128xf32>,
    %c1_i32 = arith.constant 1 : i32
    %193 = arith.cmpi eq, %arg1, %c1_i32 : i32
    %194 = arith.extui %193 : i1 to i32
    %c0_i32_68 = arith.constant 0 : i32
    %195 = arith.cmpi ne, %194, %c0_i32_68 : i32
    scf.if %195 {
      %c0_69 = arith.constant 0 : index
      %c0_70 = arith.constant 0 : index
      %c0_71 = arith.constant 0 : index
      %196 = vector.load %arg19[%c0_69, %c0_70, %c0_71] : memref<1x8x128xf32, #tpu.memory_space<vmem>>, vector<1x8x128xf32>
      %197 = arith.truncf %196 : vector<1x8x128xf32> to vector<1x8x128xbf16>
      %c0_72 = arith.constant 0 : index
      %c0_73 = arith.constant 0 : index
      %c0_74 = arith.constant 0 : index
      %198 = vector.load %arg18[%c0_72, %c0_73, %c0_74] : memref<1x8x128xbf16, #tpu.memory_space<vmem>>, vector<1x8x128xbf16>
      tpu.vector_store %arg18[%c0_72, %c0_73, %c0_74], %197 {strides = array<i32>} : memref<1x8x128xbf16, #tpu.memory_space<vmem>>, vector<1x8x128xbf16>,
    } else {
    }
    return
  }
  func.func @transform_0(%arg0: i32, %arg1: i32) -> (i32, i32, i32) {
    %c0_i32 = arith.constant 0 : i32
    %c0_i32_0 = arith.constant 0 : i32
    %c0_i32_1 = arith.constant 0 : i32
    return %arg0, %c0_i32, %c0_i32_0 : i32, i32, i32
  }
  func.func @transform_1(%arg0: i32, %arg1: i32) -> (i32, i32, i32) {
    %c0_i32 = arith.constant 0 : i32
    %c0_i32_0 = arith.constant 0 : i32
    %c0_i32_1 = arith.constant 0 : i32
    return %arg0, %c0_i32, %c0_i32_0 : i32, i32, i32
  }
  func.func @transform_2(%arg0: i32, %arg1: i32) -> (i32, i32) {
    %c0_i32 = arith.constant 0 : i32
    %c0_i32_0 = arith.constant 0 : i32
    %c0_i32_1 = arith.constant 0 : i32
    return %c0_i32, %c0_i32_0 : i32, i32
  }
  func.func @transform_3(%arg0: i32, %arg1: i32) -> (i32, i32) {
    %c0_i32 = arith.constant 0 : i32
    %c0_i32_0 = arith.constant 0 : i32
    %c0_i32_1 = arith.constant 0 : i32
    return %c0_i32, %c0_i32_0 : i32, i32
  }
  func.func @transform_4(%arg0: i32, %arg1: i32) -> (i32, i32, i32) {
    %c0_i32 = arith.constant 0 : i32
    %c0_i32_0 = arith.constant 0 : i32
    %c0_i32_1 = arith.constant 0 : i32
    return %arg1, %c0_i32, %c0_i32_0 : i32, i32, i32
  }
  func.func @transform_5(%arg0: i32, %arg1: i32) -> (i32, i32, i32) {
    %c0_i32 = arith.constant 0 : i32
    %c0_i32_0 = arith.constant 0 : i32
    %c0_i32_1 = arith.constant 0 : i32
    return %arg1, %c0_i32, %c0_i32_0 : i32, i32, i32
  }
  func.func @transform_6(%arg0: i32, %arg1: i32) -> (i32, i32, i32) {
    %c0_i32 = arith.constant 0 : i32
    %c0_i32_0 = arith.constant 0 : i32
    %c0_i32_1 = arith.constant 0 : i32
    return %arg1, %c0_i32, %c0_i32_0 : i32, i32, i32
  }
  func.func @transform_7(%arg0: i32, %arg1: i32) -> (i32, i32, i32) {
    %c0_i32 = arith.constant 0 : i32
    %c0_i32_0 = arith.constant 0 : i32
    %c0_i32_1 = arith.constant 0 : i32
    return %arg1, %c0_i32, %c0_i32_0 : i32, i32, i32
  }
  func.func @transform_8(%arg0: i32, %arg1: i32) -> (i32, i32, i32) {
    %c0_i32 = arith.constant 0 : i32
    %c0_i32_0 = arith.constant 0 : i32
    %c0_i32_1 = arith.constant 0 : i32
    return %arg1, %c0_i32, %c0_i32_0 : i32, i32, i32
  }
  func.func @transform_9(%arg0: i32, %arg1: i32) -> (i32, i32, i32) {
    %c0_i32 = arith.constant 0 : i32
    %c0_i32_0 = arith.constant 0 : i32
    %c0_i32_1 = arith.constant 0 : i32
    return %arg1, %c0_i32, %c0_i32_0 : i32, i32, i32
  }
  func.func @transform_10(%arg0: i32, %arg1: i32) -> (i32, i32, i32) {
    %c0_i32 = arith.constant 0 : i32
    %c0_i32_0 = arith.constant 0 : i32
    %c0_i32_1 = arith.constant 0 : i32
    return %arg1, %c0_i32, %c0_i32_0 : i32, i32, i32
  }
  func.func @transform_11(%arg0: i32, %arg1: i32) -> (i32, i32, i32) {
    %c0_i32 = arith.constant 0 : i32
    %c0_i32_0 = arith.constant 0 : i32
    %c0_i32_1 = arith.constant 0 : i32
    return %arg1, %c0_i32, %c0_i32_0 : i32, i32, i32
  }
  func.func @transform_12(%arg0: i32, %arg1: i32) -> (i32, i32, i32) {
    %c0_i32 = arith.constant 0 : i32
    %c0_i32_0 = arith.constant 0 : i32
    %c0_i32_1 = arith.constant 0 : i32
    return %arg1, %c0_i32, %c0_i32_0 : i32, i32, i32
  }
  func.func @transform_13(%arg0: i32, %arg1: i32) -> (i32, i32, i32) {
    %c0_i32 = arith.constant 0 : i32
    %c0_i32_0 = arith.constant 0 : i32
    %c0_i32_1 = arith.constant 0 : i32
    return %arg1, %c0_i32, %c0_i32_0 : i32, i32, i32
  }
  func.func @transform_14(%arg0: i32, %arg1: i32) -> (i32, i32, i32) {
    %c0_i32 = arith.constant 0 : i32
    %c0_i32_0 = arith.constant 0 : i32
    %c0_i32_1 = arith.constant 0 : i32
    return %arg1, %c0_i32, %c0_i32_0 : i32, i32, i32
  }
  func.func @transform_15(%arg0: i32, %arg1: i32) -> (i32, i32, i32) {
    %c0_i32 = arith.constant 0 : i32
    %c0_i32_0 = arith.constant 0 : i32
    %c0_i32_1 = arith.constant 0 : i32
    return %arg1, %c0_i32, %c0_i32_0 : i32, i32, i32
  }
  func.func @transform_16(%arg0: i32, %arg1: i32) -> (i32, i32, i32) {
    %c0_i32 = arith.constant 0 : i32
    %c0_i32_0 = arith.constant 0 : i32
    %c0_i32_1 = arith.constant 0 : i32
    return %arg0, %c0_i32, %c0_i32_0 : i32, i32, i32
  }
}

module attributes {stable_mosaic.version = 11 : i64} {
  func.func @_linear_kernel(%arg0: i32, %arg1: memref<16x128xf32, #tpu.memory_space<vmem>>, %arg2: memref<128x128xbf16, #tpu.memory_space<vmem>>, %arg3: memref<1x128xf32, #tpu.memory_space<vmem>>, %arg4: memref<16x128xf32, #tpu.memory_space<vmem>>) attributes {dimension_semantics = [#tpu.dimension_semantics<parallel>], iteration_bounds = array<i64: 1>, scalar_prefetch = 0 : i64, scratch_operands = 0 : i64, tpu.core_type = #tpu.core_type<tc>, window_params = [{transform_indices = @transform_0, window_bounds = array<i64: 16, 128>}, {pipeline_mode = #tpu.pipeline_mode<synchronous>, transform_indices = @transform_1, window_bounds = array<i64: 128, 128>}, {pipeline_mode = #tpu.pipeline_mode<synchronous>, transform_indices = @transform_2, window_bounds = array<i64: 1, 128>}, {transform_indices = @transform_3, window_bounds = array<i64: 16, 128>}]} {
    %c0 = arith.constant 0 : index
    %c0_0 = arith.constant 0 : index
    %0 = vector.load %arg1[%c0, %c0_0] : memref<16x128xf32, #tpu.memory_space<vmem>>, vector<16x128xf32>
    %1 = arith.truncf %0 : vector<16x128xf32> to vector<16x128xbf16>
    %c0_1 = arith.constant 0 : index
    %c0_2 = arith.constant 0 : index
    %2 = vector.load %arg2[%c0_1, %c0_2] : memref<128x128xbf16, #tpu.memory_space<vmem>>, vector<128x128xbf16>
    %cst = arith.constant dense<0.000000e+00> : vector<16x128xf32>
    %3 = tpu.matmul %1, %2, %cst {dimension_numbers = #tpu.dot_dimension_numbers<[1], [0], [0], [1], [0, 0, 1, 1], [], []>} : vector<16x128xbf16>, vector<128x128xbf16>, vector<16x128xf32> -> vector<16x128xf32>
    %c0_3 = arith.constant 0 : index
    %c0_4 = arith.constant 0 : index
    %4 = vector.load %arg3[%c0_3, %c0_4] : memref<1x128xf32, #tpu.memory_space<vmem>>, vector<1x128xf32>
    %5 = vector.broadcast %4 : vector<1x128xf32> to vector<16x128xf32>
    %6 = arith.addf %3, %5 : vector<16x128xf32>
    %c0_5 = arith.constant 0 : index
    %c0_6 = arith.constant 0 : index
    %7 = vector.load %arg4[%c0_5, %c0_6] : memref<16x128xf32, #tpu.memory_space<vmem>>, vector<16x128xf32>
    tpu.vector_store %arg4[%c0_5, %c0_6], %6 {strides = array<i32>} : memref<16x128xf32, #tpu.memory_space<vmem>>, vector<16x128xf32>,
    return
  }
  func.func @transform_0(%arg0: i32) -> (i32, i32) {
    %c0_i32 = arith.constant 0 : i32
    %c0_i32_0 = arith.constant 0 : i32
    return %arg0, %c0_i32 : i32, i32
  }
  func.func @transform_1(%arg0: i32) -> (i32, i32) {
    %c0_i32 = arith.constant 0 : i32
    %c0_i32_0 = arith.constant 0 : i32
    %c0_i32_1 = arith.constant 0 : i32
    return %c0_i32, %c0_i32_0 : i32, i32
  }
  func.func @transform_2(%arg0: i32) -> (i32, i32) {
    %c0_i32 = arith.constant 0 : i32
    %c0_i32_0 = arith.constant 0 : i32
    %c0_i32_1 = arith.constant 0 : i32
    return %c0_i32, %c0_i32_0 : i32, i32
  }
  func.func @transform_3(%arg0: i32) -> (i32, i32) {
    %c0_i32 = arith.constant 0 : i32
    %c0_i32_0 = arith.constant 0 : i32
    return %arg0, %c0_i32 : i32, i32
  }
}

module attributes {stable_mosaic.version = 11 : i64} {
  func.func @_head_loss_kernel(%arg0: i32, %arg1: memref<16x128xf32, #tpu.memory_space<vmem>>, %arg2: memref<16x128xf32, #tpu.memory_space<vmem>>, %arg3: memref<1x128xf32, #tpu.memory_space<vmem>>, %arg4: memref<1x128xf32, #tpu.memory_space<vmem>>, %arg5: memref<128x128xbf16, #tpu.memory_space<vmem>>, %arg6: memref<1x128xf32, #tpu.memory_space<vmem>>, %arg7: memref<16x128xf32, #tpu.memory_space<vmem>>, %arg8: memref<1x1xf32, #tpu.memory_space<vmem>>) attributes {dimension_semantics = [#tpu.dimension_semantics<arbitrary>], iteration_bounds = array<i64: 1>, scalar_prefetch = 0 : i64, scratch_operands = 0 : i64, tpu.core_type = #tpu.core_type<tc>, window_params = [{pipeline_mode = #tpu.pipeline_mode<synchronous>, transform_indices = @transform_0, window_bounds = array<i64: 16, 128>}, {pipeline_mode = #tpu.pipeline_mode<synchronous>, transform_indices = @transform_1, window_bounds = array<i64: 16, 128>}, {pipeline_mode = #tpu.pipeline_mode<synchronous>, transform_indices = @transform_2, window_bounds = array<i64: 1, 128>}, {pipeline_mode = #tpu.pipeline_mode<synchronous>, transform_indices = @transform_3, window_bounds = array<i64: 1, 128>}, {pipeline_mode = #tpu.pipeline_mode<synchronous>, transform_indices = @transform_4, window_bounds = array<i64: 128, 128>}, {pipeline_mode = #tpu.pipeline_mode<synchronous>, transform_indices = @transform_5, window_bounds = array<i64: 1, 128>}, {pipeline_mode = #tpu.pipeline_mode<synchronous>, transform_indices = @transform_6, window_bounds = array<i64: 16, 128>}, {pipeline_mode = #tpu.pipeline_mode<synchronous>, transform_indices = @transform_7, window_bounds = array<i64: 1, 1>}]} {
    %c0 = arith.constant 0 : index
    %c0_0 = arith.constant 0 : index
    %0 = vector.load %arg1[%c0, %c0_0] : memref<16x128xf32, #tpu.memory_space<vmem>>, vector<16x128xf32>
    %c0_1 = arith.constant 0 : index
    %c0_2 = arith.constant 0 : index
    %1 = vector.load %arg3[%c0_1, %c0_2] : memref<1x128xf32, #tpu.memory_space<vmem>>, vector<1x128xf32>
    %c0_3 = arith.constant 0 : index
    %c0_4 = arith.constant 0 : index
    %2 = vector.load %arg4[%c0_3, %c0_4] : memref<1x128xf32, #tpu.memory_space<vmem>>, vector<1x128xf32>
    %cst = arith.constant dense<0.000000e+00> : vector<16xf32>
    %3 = vector.multi_reduction <add>, %0, %cst [1] : vector<16x128xf32> to vector<16xf32>
    %4 = vector.shape_cast %3 : vector<16xf32> to vector<16x1xf32>
    %cst_5 = arith.constant 3.125000e-02 : f32
    %5 = vector.broadcast %cst_5 : f32 to vector<16x1xf32>
    %6 = arith.mulf %4, %5 : vector<16x1xf32>
    %7 = arith.mulf %0, %0 : vector<16x128xf32>
    %cst_6 = arith.constant dense<0.000000e+00> : vector<16xf32>
    %8 = vector.multi_reduction <add>, %7, %cst_6 [1] : vector<16x128xf32> to vector<16xf32>
    %9 = vector.shape_cast %8 : vector<16xf32> to vector<16x1xf32>
    %cst_7 = arith.constant 3.125000e-02 : f32
    %10 = vector.broadcast %cst_7 : f32 to vector<16x1xf32>
    %11 = arith.mulf %9, %10 : vector<16x1xf32>
    %12 = arith.mulf %6, %6 : vector<16x1xf32>
    %13 = arith.subf %11, %12 : vector<16x1xf32>
    %14 = vector.broadcast %6 : vector<16x1xf32> to vector<16x128xf32>
    %15 = arith.subf %0, %14 : vector<16x128xf32>
    %cst_8 = arith.constant 9.99999974E-6 : f32
    %16 = vector.broadcast %cst_8 : f32 to vector<16x1xf32>
    %17 = arith.addf %13, %16 : vector<16x1xf32>
    %18 = math.rsqrt %17 : vector<16x1xf32>
    %19 = vector.broadcast %18 : vector<16x1xf32> to vector<16x128xf32>
    %20 = arith.mulf %15, %19 : vector<16x128xf32>
    %21 = vector.broadcast %1 : vector<1x128xf32> to vector<16x128xf32>
    %22 = arith.mulf %20, %21 : vector<16x128xf32>
    %23 = vector.broadcast %2 : vector<1x128xf32> to vector<16x128xf32>
    %24 = arith.addf %22, %23 : vector<16x128xf32>
    %25 = arith.truncf %24 : vector<16x128xf32> to vector<16x128xbf16>
    %c0_9 = arith.constant 0 : index
    %c0_10 = arith.constant 0 : index
    %26 = vector.load %arg5[%c0_9, %c0_10] : memref<128x128xbf16, #tpu.memory_space<vmem>>, vector<128x128xbf16>
    %cst_11 = arith.constant dense<0.000000e+00> : vector<16x128xf32>
    %27 = tpu.matmul %25, %26, %cst_11 {dimension_numbers = #tpu.dot_dimension_numbers<[1], [0], [0], [1], [0, 0, 1, 1], [], []>} : vector<16x128xbf16>, vector<128x128xbf16>, vector<16x128xf32> -> vector<16x128xf32>
    %c0_12 = arith.constant 0 : index
    %c0_13 = arith.constant 0 : index
    %28 = vector.load %arg6[%c0_12, %c0_13] : memref<1x128xf32, #tpu.memory_space<vmem>>, vector<1x128xf32>
    %29 = vector.broadcast %28 : vector<1x128xf32> to vector<16x128xf32>
    %30 = arith.addf %27, %29 : vector<16x128xf32>
    %c0_14 = arith.constant 0 : index
    %c0_15 = arith.constant 0 : index
    %31 = vector.load %arg2[%c0_14, %c0_15] : memref<16x128xf32, #tpu.memory_space<vmem>>, vector<16x128xf32>
    %cst_16 = arith.constant -1.000000e+02 : f32
    %32 = vector.broadcast %cst_16 : f32 to vector<16x128xf32>
    %33 = arith.cmpf one, %31, %32 : vector<16x128xf32>
    %cst_17 = arith.constant 0.000000e+00 : f32
    %34 = vector.broadcast %cst_17 : f32 to vector<16x128xf32>
    %35 = arith.select %33, %30, %34 : vector<16x128xi1>, vector<16x128xf32>
    %cst_18 = arith.constant 0.000000e+00 : f32
    %36 = vector.broadcast %cst_18 : f32 to vector<16x128xf32>
    %37 = arith.select %33, %31, %36 : vector<16x128xi1>, vector<16x128xf32>
    %38 = arith.subf %35, %37 : vector<16x128xf32>
    %39 = math.absf %38 : vector<16x128xf32>
    %40 = vector.shape_cast %39 : vector<16x128xf32> to vector<1x16x128xf32>
    %cst_19 = arith.constant dense<0.000000e+00> : vector<1xf32>
    %41 = vector.multi_reduction <add>, %40, %cst_19 [1, 2] : vector<1x16x128xf32> to vector<1xf32>
    %42 = vector.shape_cast %41 : vector<1xf32> to vector<1x1x1xf32>
    %43 = vector.extract %42[0, 0, 0] : f32 from vector<1x1x1xf32>
    %44 = vector.broadcast %43 : f32 to vector<1x1xf32>
    %45 = arith.extui %33 : vector<16x128xi1> to vector<16x128xi32>
    %46 = arith.sitofp %45 : vector<16x128xi32> to vector<16x128xf32>
    %47 = vector.shape_cast %46 : vector<16x128xf32> to vector<1x16x128xf32>
    %cst_20 = arith.constant dense<0.000000e+00> : vector<1xf32>
    %48 = vector.multi_reduction <add>, %47, %cst_20 [1, 2] : vector<1x16x128xf32> to vector<1xf32>
    %49 = vector.shape_cast %48 : vector<1xf32> to vector<1x1x1xf32>
    %50 = vector.extract %49[0, 0, 0] : f32 from vector<1x1x1xf32>
    %51 = vector.broadcast %50 : f32 to vector<1x1xf32>
    %c0_21 = arith.constant 0 : index
    %c0_22 = arith.constant 0 : index
    %52 = vector.load %arg7[%c0_21, %c0_22] : memref<16x128xf32, #tpu.memory_space<vmem>>, vector<16x128xf32>
    tpu.vector_store %arg7[%c0_21, %c0_22], %35 {strides = array<i32>} : memref<16x128xf32, #tpu.memory_space<vmem>>, vector<16x128xf32>,
    %53 = arith.divf %44, %51 : vector<1x1xf32>
    %c0_23 = arith.constant 0 : index
    %c0_24 = arith.constant 0 : index
    %54 = vector.load %arg8[%c0_23, %c0_24] : memref<1x1xf32, #tpu.memory_space<vmem>>, vector<1x1xf32>
    tpu.vector_store %arg8[%c0_23, %c0_24], %53 {strides = array<i32>} : memref<1x1xf32, #tpu.memory_space<vmem>>, vector<1x1xf32>,
    return
  }
  func.func @transform_0(%arg0: i32) -> (i32, i32) {
    %c0_i32 = arith.constant 0 : i32
    %c0_i32_0 = arith.constant 0 : i32
    %c0_i32_1 = arith.constant 0 : i32
    return %c0_i32, %c0_i32_0 : i32, i32
  }
  func.func @transform_1(%arg0: i32) -> (i32, i32) {
    %c0_i32 = arith.constant 0 : i32
    %c0_i32_0 = arith.constant 0 : i32
    %c0_i32_1 = arith.constant 0 : i32
    return %c0_i32, %c0_i32_0 : i32, i32
  }
  func.func @transform_2(%arg0: i32) -> (i32, i32) {
    %c0_i32 = arith.constant 0 : i32
    %c0_i32_0 = arith.constant 0 : i32
    %c0_i32_1 = arith.constant 0 : i32
    return %c0_i32, %c0_i32_0 : i32, i32
  }
  func.func @transform_3(%arg0: i32) -> (i32, i32) {
    %c0_i32 = arith.constant 0 : i32
    %c0_i32_0 = arith.constant 0 : i32
    %c0_i32_1 = arith.constant 0 : i32
    return %c0_i32, %c0_i32_0 : i32, i32
  }
  func.func @transform_4(%arg0: i32) -> (i32, i32) {
    %c0_i32 = arith.constant 0 : i32
    %c0_i32_0 = arith.constant 0 : i32
    %c0_i32_1 = arith.constant 0 : i32
    return %c0_i32, %c0_i32_0 : i32, i32
  }
  func.func @transform_5(%arg0: i32) -> (i32, i32) {
    %c0_i32 = arith.constant 0 : i32
    %c0_i32_0 = arith.constant 0 : i32
    %c0_i32_1 = arith.constant 0 : i32
    return %c0_i32, %c0_i32_0 : i32, i32
  }
  func.func @transform_6(%arg0: i32) -> (i32, i32) {
    %c0_i32 = arith.constant 0 : i32
    %c0_i32_0 = arith.constant 0 : i32
    %c0_i32_1 = arith.constant 0 : i32
    return %c0_i32, %c0_i32_0 : i32, i32
  }
  func.func @transform_7(%arg0: i32) -> (i32, i32) {
    %c0_i32 = arith.constant 0 : i32
    %c0_i32_0 = arith.constant 0 : i32
    %c0_i32_1 = arith.constant 0 : i32
    return %c0_i32, %c0_i32_0 : i32, i32
  }
}

module attributes {stable_mosaic.version = 11 : i64} {
  func.func @_decoder_stack_kernel(%arg0: i32, %arg1: i32, %arg2: memref<1x8x128xf32, #tpu.memory_space<vmem>>, %arg3: memref<1x8x128xbf16, #tpu.memory_space<vmem>>, %arg4: memref<1x1x8xf32, #tpu.memory_space<vmem>>, %arg5: memref<1x1x8xf32, #tpu.memory_space<vmem>>, %arg6: memref<8x4xf32, #tpu.memory_space<vmem>>, %arg7: memref<8x4xf32, #tpu.memory_space<vmem>>, %arg8: memref<8x4xf32, #tpu.memory_space<vmem>>, %arg9: memref<8x4xf32, #tpu.memory_space<vmem>>, %arg10: memref<1x1x128xf32, #tpu.memory_space<vmem>>, %arg11: memref<1x1x128xf32, #tpu.memory_space<vmem>>, %arg12: memref<1x128x384xbf16, #tpu.memory_space<vmem>>, %arg13: memref<1x1x384xf32, #tpu.memory_space<vmem>>, %arg14: memref<1x32x128xbf16, #tpu.memory_space<vmem>>, %arg15: memref<1x1x128xf32, #tpu.memory_space<vmem>>, %arg16: memref<1x1x128xf32, #tpu.memory_space<vmem>>, %arg17: memref<1x1x128xf32, #tpu.memory_space<vmem>>, %arg18: memref<1x128x128xbf16, #tpu.memory_space<vmem>>, %arg19: memref<1x1x128xf32, #tpu.memory_space<vmem>>, %arg20: memref<1x128x256xbf16, #tpu.memory_space<vmem>>, %arg21: memref<1x1x256xf32, #tpu.memory_space<vmem>>, %arg22: memref<1x32x128xbf16, #tpu.memory_space<vmem>>, %arg23: memref<1x1x128xf32, #tpu.memory_space<vmem>>, %arg24: memref<1x1x128xf32, #tpu.memory_space<vmem>>, %arg25: memref<1x1x128xf32, #tpu.memory_space<vmem>>, %arg26: memref<1x128x128xbf16, #tpu.memory_space<vmem>>, %arg27: memref<1x1x128xf32, #tpu.memory_space<vmem>>, %arg28: memref<1x128x128xbf16, #tpu.memory_space<vmem>>, %arg29: memref<1x1x128xf32, #tpu.memory_space<vmem>>, %arg30: memref<1x8x128xf32, #tpu.memory_space<vmem>>, %arg31: memref<1x8x128xf32, #tpu.memory_space<vmem>>) attributes {dimension_semantics = [#tpu.dimension_semantics<parallel>, #tpu.dimension_semantics<arbitrary>], iteration_bounds = array<i64: 2, 2>, scalar_prefetch = 0 : i64, scratch_operands = 1 : i64, tpu.core_type = #tpu.core_type<tc>, window_params = [{transform_indices = @transform_0, window_bounds = array<i64: 1, 8, 128>}, {transform_indices = @transform_1, window_bounds = array<i64: 1, 8, 128>}, {transform_indices = @transform_2, window_bounds = array<i64: 1, 1, 8>}, {transform_indices = @transform_3, window_bounds = array<i64: 1, 1, 8>}, {pipeline_mode = #tpu.pipeline_mode<synchronous>, transform_indices = @transform_4, window_bounds = array<i64: 8, 4>}, {pipeline_mode = #tpu.pipeline_mode<synchronous>, transform_indices = @transform_5, window_bounds = array<i64: 8, 4>}, {pipeline_mode = #tpu.pipeline_mode<synchronous>, transform_indices = @transform_6, window_bounds = array<i64: 8, 4>}, {pipeline_mode = #tpu.pipeline_mode<synchronous>, transform_indices = @transform_7, window_bounds = array<i64: 8, 4>}, {transform_indices = @transform_8, window_bounds = array<i64: 1, 1, 128>}, {transform_indices = @transform_9, window_bounds = array<i64: 1, 1, 128>}, {transform_indices = @transform_10, window_bounds = array<i64: 1, 128, 384>}, {transform_indices = @transform_11, window_bounds = array<i64: 1, 1, 384>}, {transform_indices = @transform_12, window_bounds = array<i64: 1, 32, 128>}, {transform_indices = @transform_13, window_bounds = array<i64: 1, 1, 128>}, {transform_indices = @transform_14, window_bounds = array<i64: 1, 1, 128>}, {transform_indices = @transform_15, window_bounds = array<i64: 1, 1, 128>}, {transform_indices = @transform_16, window_bounds = array<i64: 1, 128, 128>}, {transform_indices = @transform_17, window_bounds = array<i64: 1, 1, 128>}, {transform_indices = @transform_18, window_bounds = array<i64: 1, 128, 256>}, {transform_indices = @transform_19, window_bounds = array<i64: 1, 1, 256>}, {transform_indices = @transform_20, window_bounds = array<i64: 1, 32, 128>}, {transform_indices = @transform_21, window_bounds = array<i64: 1, 1, 128>}, {transform_indices = @transform_22, window_bounds = array<i64: 1, 1, 128>}, {transform_indices = @transform_23, window_bounds = array<i64: 1, 1, 128>}, {transform_indices = @transform_24, window_bounds = array<i64: 1, 128, 128>}, {transform_indices = @transform_25, window_bounds = array<i64: 1, 1, 128>}, {transform_indices = @transform_26, window_bounds = array<i64: 1, 128, 128>}, {transform_indices = @transform_27, window_bounds = array<i64: 1, 1, 128>}, {transform_indices = @transform_28, window_bounds = array<i64: 1, 8, 128>}]} {
    %c0_i32 = arith.constant 0 : i32
    %0 = arith.cmpi eq, %arg1, %c0_i32 : i32
    %1 = arith.extui %0 : i1 to i32
    %c0_i32_0 = arith.constant 0 : i32
    %2 = arith.cmpi ne, %1, %c0_i32_0 : i32
    scf.if %2 {
      %c0_116 = arith.constant 0 : index
      %c0_117 = arith.constant 0 : index
      %c0_118 = arith.constant 0 : index
      %346 = vector.load %arg2[%c0_116, %c0_117, %c0_118] : memref<1x8x128xf32, #tpu.memory_space<vmem>>, vector<1x8x128xf32>
      %c0_119 = arith.constant 0 : index
      %c0_120 = arith.constant 0 : index
      %c0_121 = arith.constant 0 : index
      %347 = vector.load %arg31[%c0_119, %c0_120, %c0_121] : memref<1x8x128xf32, #tpu.memory_space<vmem>>, vector<1x8x128xf32>
      tpu.vector_store %arg31[%c0_119, %c0_120, %c0_121], %346 {strides = array<i32>} : memref<1x8x128xf32, #tpu.memory_space<vmem>>, vector<1x8x128xf32>,
    } else {
    }
    %c0 = arith.constant 0 : index
    %c0_1 = arith.constant 0 : index
    %c0_2 = arith.constant 0 : index
    %3 = vector.load %arg31[%c0, %c0_1, %c0_2] : memref<1x8x128xf32, #tpu.memory_space<vmem>>, vector<1x8x128xf32>
    %4 = vector.shape_cast %3 : vector<1x8x128xf32> to vector<8x128xf32>
    %c0_3 = arith.constant 0 : index
    %c0_4 = arith.constant 0 : index
    %5 = vector.load %arg6[%c0_3, %c0_4] : memref<8x4xf32, #tpu.memory_space<vmem>>, vector<8x4xf32>
    %c0_5 = arith.constant 0 : index
    %c0_6 = arith.constant 0 : index
    %6 = vector.load %arg7[%c0_5, %c0_6] : memref<8x4xf32, #tpu.memory_space<vmem>>, vector<8x4xf32>
    %c0_7 = arith.constant 0 : index
    %c0_8 = arith.constant 0 : index
    %7 = vector.load %arg8[%c0_7, %c0_8] : memref<8x4xf32, #tpu.memory_space<vmem>>, vector<8x4xf32>
    %c0_9 = arith.constant 0 : index
    %c0_10 = arith.constant 0 : index
    %8 = vector.load %arg9[%c0_9, %c0_10] : memref<8x4xf32, #tpu.memory_space<vmem>>, vector<8x4xf32>
    %c0_11 = arith.constant 0 : index
    %c0_12 = arith.constant 0 : index
    %c0_13 = arith.constant 0 : index
    %9 = vector.load %arg10[%c0_11, %c0_12, %c0_13] : memref<1x1x128xf32, #tpu.memory_space<vmem>>, vector<1x1x128xf32>
    %10 = vector.shape_cast %9 : vector<1x1x128xf32> to vector<1x128xf32>
    %c0_14 = arith.constant 0 : index
    %c0_15 = arith.constant 0 : index
    %c0_16 = arith.constant 0 : index
    %11 = vector.load %arg11[%c0_14, %c0_15, %c0_16] : memref<1x1x128xf32, #tpu.memory_space<vmem>>, vector<1x1x128xf32>
    %12 = vector.shape_cast %11 : vector<1x1x128xf32> to vector<1x128xf32>
    %cst = arith.constant dense<0.000000e+00> : vector<8xf32>
    %13 = vector.multi_reduction <add>, %4, %cst [1] : vector<8x128xf32> to vector<8xf32>
    %14 = vector.shape_cast %13 : vector<8xf32> to vector<8x1xf32>
    %cst_17 = arith.constant 3.125000e-02 : f32
    %15 = vector.broadcast %cst_17 : f32 to vector<8x1xf32>
    %16 = arith.mulf %14, %15 : vector<8x1xf32>
    %17 = arith.mulf %4, %4 : vector<8x128xf32>
    %cst_18 = arith.constant dense<0.000000e+00> : vector<8xf32>
    %18 = vector.multi_reduction <add>, %17, %cst_18 [1] : vector<8x128xf32> to vector<8xf32>
    %19 = vector.shape_cast %18 : vector<8xf32> to vector<8x1xf32>
    %cst_19 = arith.constant 3.125000e-02 : f32
    %20 = vector.broadcast %cst_19 : f32 to vector<8x1xf32>
    %21 = arith.mulf %19, %20 : vector<8x1xf32>
    %22 = arith.mulf %16, %16 : vector<8x1xf32>
    %23 = arith.subf %21, %22 : vector<8x1xf32>
    %24 = vector.broadcast %16 : vector<8x1xf32> to vector<8x128xf32>
    %25 = arith.subf %4, %24 : vector<8x128xf32>
    %cst_20 = arith.constant 9.99999974E-6 : f32
    %26 = vector.broadcast %cst_20 : f32 to vector<8x1xf32>
    %27 = arith.addf %23, %26 : vector<8x1xf32>
    %28 = math.rsqrt %27 : vector<8x1xf32>
    %29 = vector.broadcast %28 : vector<8x1xf32> to vector<8x128xf32>
    %30 = arith.mulf %25, %29 : vector<8x128xf32>
    %31 = vector.broadcast %10 : vector<1x128xf32> to vector<8x128xf32>
    %32 = arith.mulf %30, %31 : vector<8x128xf32>
    %33 = vector.broadcast %12 : vector<1x128xf32> to vector<8x128xf32>
    %34 = arith.addf %32, %33 : vector<8x128xf32>
    %35 = arith.truncf %34 : vector<8x128xf32> to vector<8x128xbf16>
    %c0_21 = arith.constant 0 : index
    %c0_22 = arith.constant 0 : index
    %c0_23 = arith.constant 0 : index
    %36 = vector.load %arg12[%c0_21, %c0_22, %c0_23] : memref<1x128x384xbf16, #tpu.memory_space<vmem>>, vector<1x128x384xbf16>
    %37 = vector.shape_cast %36 : vector<1x128x384xbf16> to vector<128x384xbf16>
    %cst_24 = arith.constant dense<0.000000e+00> : vector<8x384xf32>
    %38 = tpu.matmul %35, %37, %cst_24 {dimension_numbers = #tpu.dot_dimension_numbers<[1], [0], [0], [1], [0, 0, 1, 1], [], []>} : vector<8x128xbf16>, vector<128x384xbf16>, vector<8x384xf32> -> vector<8x384xf32>
    %c0_25 = arith.constant 0 : index
    %c0_26 = arith.constant 0 : index
    %c0_27 = arith.constant 0 : index
    %39 = vector.load %arg13[%c0_25, %c0_26, %c0_27] : memref<1x1x384xf32, #tpu.memory_space<vmem>>, vector<1x1x384xf32>
    %40 = vector.shape_cast %39 : vector<1x1x384xf32> to vector<1x384xf32>
    %41 = vector.broadcast %40 : vector<1x384xf32> to vector<8x384xf32>
    %42 = arith.addf %38, %41 : vector<8x384xf32>
    %43 = vector.extract_strided_slice %42 {offsets = [0, 0], sizes = [8, 32], strides = [1, 1]} : vector<8x384xf32> to vector<8x32xf32>
    %44 = vector.extract_strided_slice %42 {offsets = [0, 128], sizes = [8, 32], strides = [1, 1]} : vector<8x384xf32> to vector<8x32xf32>
    %45 = vector.extract_strided_slice %42 {offsets = [0, 256], sizes = [8, 32], strides = [1, 1]} : vector<8x384xf32> to vector<8x32xf32>
    %46 = vector.extract_strided_slice %43 {offsets = [0, 0], sizes = [8, 8], strides = [1, 1]} : vector<8x32xf32> to vector<8x8xf32>
    %47 = vector.extract_strided_slice %43 {offsets = [0, 8], sizes = [8, 8], strides = [1, 1]} : vector<8x32xf32> to vector<8x8xf32>
    %48 = vector.extract_strided_slice %43 {offsets = [0, 16], sizes = [8, 8], strides = [1, 1]} : vector<8x32xf32> to vector<8x8xf32>
    %49 = vector.extract_strided_slice %43 {offsets = [0, 24], sizes = [8, 8], strides = [1, 1]} : vector<8x32xf32> to vector<8x8xf32>
    %50 = vector.shape_cast %46 : vector<8x8xf32> to vector<1x8x8xf32>
    %51 = vector.shape_cast %47 : vector<8x8xf32> to vector<1x8x8xf32>
    %52 = vector.shape_cast %48 : vector<8x8xf32> to vector<1x8x8xf32>
    %53 = vector.shape_cast %49 : vector<8x8xf32> to vector<1x8x8xf32>
    %54 = tpu.concatenate %50, %51, %52, %53 in 0 : vector<1x8x8xf32>, vector<1x8x8xf32>, vector<1x8x8xf32>, vector<1x8x8xf32> -> vector<4x8x8xf32>
    %55 = vector.extract_strided_slice %44 {offsets = [0, 0], sizes = [8, 8], strides = [1, 1]} : vector<8x32xf32> to vector<8x8xf32>
    %56 = vector.extract_strided_slice %44 {offsets = [0, 8], sizes = [8, 8], strides = [1, 1]} : vector<8x32xf32> to vector<8x8xf32>
    %57 = vector.extract_strided_slice %44 {offsets = [0, 16], sizes = [8, 8], strides = [1, 1]} : vector<8x32xf32> to vector<8x8xf32>
    %58 = vector.extract_strided_slice %44 {offsets = [0, 24], sizes = [8, 8], strides = [1, 1]} : vector<8x32xf32> to vector<8x8xf32>
    %59 = vector.shape_cast %55 : vector<8x8xf32> to vector<1x8x8xf32>
    %60 = vector.shape_cast %56 : vector<8x8xf32> to vector<1x8x8xf32>
    %61 = vector.shape_cast %57 : vector<8x8xf32> to vector<1x8x8xf32>
    %62 = vector.shape_cast %58 : vector<8x8xf32> to vector<1x8x8xf32>
    %63 = tpu.concatenate %59, %60, %61, %62 in 0 : vector<1x8x8xf32>, vector<1x8x8xf32>, vector<1x8x8xf32>, vector<1x8x8xf32> -> vector<4x8x8xf32>
    %64 = vector.extract_strided_slice %45 {offsets = [0, 0], sizes = [8, 8], strides = [1, 1]} : vector<8x32xf32> to vector<8x8xf32>
    %65 = vector.extract_strided_slice %45 {offsets = [0, 8], sizes = [8, 8], strides = [1, 1]} : vector<8x32xf32> to vector<8x8xf32>
    %66 = vector.extract_strided_slice %45 {offsets = [0, 16], sizes = [8, 8], strides = [1, 1]} : vector<8x32xf32> to vector<8x8xf32>
    %67 = vector.extract_strided_slice %45 {offsets = [0, 24], sizes = [8, 8], strides = [1, 1]} : vector<8x32xf32> to vector<8x8xf32>
    %68 = vector.shape_cast %64 : vector<8x8xf32> to vector<1x8x8xf32>
    %69 = vector.shape_cast %65 : vector<8x8xf32> to vector<1x8x8xf32>
    %70 = vector.shape_cast %66 : vector<8x8xf32> to vector<1x8x8xf32>
    %71 = vector.shape_cast %67 : vector<8x8xf32> to vector<1x8x8xf32>
    %72 = tpu.concatenate %68, %69, %70, %71 in 0 : vector<1x8x8xf32>, vector<1x8x8xf32>, vector<1x8x8xf32>, vector<1x8x8xf32> -> vector<4x8x8xf32>
    %73 = vector.extract_strided_slice %54 {offsets = [0, 0, 0], sizes = [4, 8, 4], strides = [1, 1, 1]} : vector<4x8x8xf32> to vector<4x8x4xf32>
    %74 = vector.extract_strided_slice %54 {offsets = [0, 0, 4], sizes = [4, 8, 4], strides = [1, 1, 1]} : vector<4x8x8xf32> to vector<4x8x4xf32>
    %75 = vector.shape_cast %5 : vector<8x4xf32> to vector<1x8x4xf32>
    %76 = vector.broadcast %75 : vector<1x8x4xf32> to vector<4x8x4xf32>
    %77 = arith.mulf %73, %76 : vector<4x8x4xf32>
    %78 = vector.shape_cast %6 : vector<8x4xf32> to vector<1x8x4xf32>
    %79 = vector.broadcast %78 : vector<1x8x4xf32> to vector<4x8x4xf32>
    %80 = arith.mulf %74, %79 : vector<4x8x4xf32>
    %81 = arith.subf %77, %80 : vector<4x8x4xf32>
    %82 = vector.shape_cast %5 : vector<8x4xf32> to vector<1x8x4xf32>
    %83 = vector.broadcast %82 : vector<1x8x4xf32> to vector<4x8x4xf32>
    %84 = arith.mulf %74, %83 : vector<4x8x4xf32>
    %85 = vector.shape_cast %6 : vector<8x4xf32> to vector<1x8x4xf32>
    %86 = vector.broadcast %85 : vector<1x8x4xf32> to vector<4x8x4xf32>
    %87 = arith.mulf %73, %86 : vector<4x8x4xf32>
    %88 = arith.addf %84, %87 : vector<4x8x4xf32>
    %89 = tpu.concatenate %81, %88 in 2 : vector<4x8x4xf32>, vector<4x8x4xf32> -> vector<4x8x8xf32>
    %cst_28 = arith.constant 0.353553385 : f32
    %90 = vector.broadcast %cst_28 : f32 to vector<4x8x8xf32>
    %91 = arith.mulf %89, %90 : vector<4x8x8xf32>
    %92 = vector.extract_strided_slice %63 {offsets = [0, 0, 0], sizes = [4, 8, 4], strides = [1, 1, 1]} : vector<4x8x8xf32> to vector<4x8x4xf32>
    %93 = vector.extract_strided_slice %63 {offsets = [0, 0, 4], sizes = [4, 8, 4], strides = [1, 1, 1]} : vector<4x8x8xf32> to vector<4x8x4xf32>
    %94 = vector.shape_cast %5 : vector<8x4xf32> to vector<1x8x4xf32>
    %95 = vector.broadcast %94 : vector<1x8x4xf32> to vector<4x8x4xf32>
    %96 = arith.mulf %92, %95 : vector<4x8x4xf32>
    %97 = vector.shape_cast %6 : vector<8x4xf32> to vector<1x8x4xf32>
    %98 = vector.broadcast %97 : vector<1x8x4xf32> to vector<4x8x4xf32>
    %99 = arith.mulf %93, %98 : vector<4x8x4xf32>
    %100 = arith.subf %96, %99 : vector<4x8x4xf32>
    %101 = vector.shape_cast %5 : vector<8x4xf32> to vector<1x8x4xf32>
    %102 = vector.broadcast %101 : vector<1x8x4xf32> to vector<4x8x4xf32>
    %103 = arith.mulf %93, %102 : vector<4x8x4xf32>
    %104 = vector.shape_cast %6 : vector<8x4xf32> to vector<1x8x4xf32>
    %105 = vector.broadcast %104 : vector<1x8x4xf32> to vector<4x8x4xf32>
    %106 = arith.mulf %92, %105 : vector<4x8x4xf32>
    %107 = arith.addf %103, %106 : vector<4x8x4xf32>
    %108 = tpu.concatenate %100, %107 in 2 : vector<4x8x4xf32>, vector<4x8x4xf32> -> vector<4x8x8xf32>
    %109 = arith.truncf %91 : vector<4x8x8xf32> to vector<4x8x8xbf16>
    %110 = arith.truncf %108 : vector<4x8x8xf32> to vector<4x8x8xbf16>
    %111 = arith.truncf %72 : vector<4x8x8xf32> to vector<4x8x8xbf16>
    %cst_29 = arith.constant dense<0.000000e+00> : vector<4x8x8xf32>
    %112 = tpu.matmul %109, %110, %cst_29 {dimension_numbers = #tpu.dot_dimension_numbers<[2], [2], [1], [1], [0, 0, 0, 1, 1, 1], [0], [0]>} : vector<4x8x8xbf16>, vector<4x8x8xbf16>, vector<4x8x8xf32> -> vector<4x8x8xf32>
    %c0_30 = arith.constant 0 : index
    %c0_31 = arith.constant 0 : index
    %c0_32 = arith.constant 0 : index
    %113 = vector.load %arg4[%c0_30, %c0_31, %c0_32] : memref<1x1x8xf32, #tpu.memory_space<vmem>>, vector<1x1x8xf32>
    %114 = vector.shape_cast %113 : vector<1x1x8xf32> to vector<1x8xf32>
    %115 = vector.shape_cast %114 : vector<1x8xf32> to vector<1x1x8xf32>
    %116 = vector.broadcast %115 : vector<1x1x8xf32> to vector<4x8x8xf32>
    %117 = arith.addf %112, %116 : vector<4x8x8xf32>
    %cst_33 = arith.constant dense<0xFF800000> : vector<4x8xf32>
    %118 = vector.multi_reduction <maximumf>, %117, %cst_33 [2] : vector<4x8x8xf32> to vector<4x8xf32>
    %119 = vector.shape_cast %118 : vector<4x8xf32> to vector<4x8x1xf32>
    %120 = vector.broadcast %119 : vector<4x8x1xf32> to vector<4x8x8xf32>
    %121 = arith.subf %117, %120 : vector<4x8x8xf32>
    %122 = math.exp %121 : vector<4x8x8xf32>
    %cst_34 = arith.constant dense<0.000000e+00> : vector<4x8xf32>
    %123 = vector.multi_reduction <add>, %122, %cst_34 [2] : vector<4x8x8xf32> to vector<4x8xf32>
    %124 = vector.shape_cast %123 : vector<4x8xf32> to vector<4x8x1xf32>
    %125 = tpu.reciprocal %124 {approx = true} : vector<4x8x1xf32> -> vector<4x8x1xf32>
    %126 = vector.broadcast %125 : vector<4x8x1xf32> to vector<4x8x8xf32>
    %127 = arith.mulf %122, %126 : vector<4x8x8xf32>
    %128 = arith.truncf %127 : vector<4x8x8xf32> to vector<4x8x8xbf16>
    %cst_35 = arith.constant dense<0.000000e+00> : vector<4x8x8xf32>
    %129 = tpu.matmul %128, %111, %cst_35 {dimension_numbers = #tpu.dot_dimension_numbers<[2], [1], [1], [2], [0, 0, 0, 1, 1, 2], [0], [0]>} : vector<4x8x8xbf16>, vector<4x8x8xbf16>, vector<4x8x8xf32> -> vector<4x8x8xf32>
    %130 = vector.extract_strided_slice %129 {offsets = [0, 0, 0], sizes = [1, 8, 8], strides = [1, 1, 1]} : vector<4x8x8xf32> to vector<1x8x8xf32>
    %131 = vector.shape_cast %130 : vector<1x8x8xf32> to vector<8x8xf32>
    %132 = vector.extract_strided_slice %129 {offsets = [1, 0, 0], sizes = [1, 8, 8], strides = [1, 1, 1]} : vector<4x8x8xf32> to vector<1x8x8xf32>
    %133 = vector.shape_cast %132 : vector<1x8x8xf32> to vector<8x8xf32>
    %134 = vector.extract_strided_slice %129 {offsets = [2, 0, 0], sizes = [1, 8, 8], strides = [1, 1, 1]} : vector<4x8x8xf32> to vector<1x8x8xf32>
    %135 = vector.shape_cast %134 : vector<1x8x8xf32> to vector<8x8xf32>
    %136 = vector.extract_strided_slice %129 {offsets = [3, 0, 0], sizes = [1, 8, 8], strides = [1, 1, 1]} : vector<4x8x8xf32> to vector<1x8x8xf32>
    %137 = vector.shape_cast %136 : vector<1x8x8xf32> to vector<8x8xf32>
    %138 = tpu.concatenate %131, %133, %135, %137 in 1 : vector<8x8xf32>, vector<8x8xf32>, vector<8x8xf32>, vector<8x8xf32> -> vector<8x32xf32>
    %139 = arith.truncf %138 : vector<8x32xf32> to vector<8x32xbf16>
    %c0_36 = arith.constant 0 : index
    %c0_37 = arith.constant 0 : index
    %c0_38 = arith.constant 0 : index
    %140 = vector.load %arg14[%c0_36, %c0_37, %c0_38] : memref<1x32x128xbf16, #tpu.memory_space<vmem>>, vector<1x32x128xbf16>
    %141 = vector.shape_cast %140 : vector<1x32x128xbf16> to vector<32x128xbf16>
    %cst_39 = arith.constant dense<0.000000e+00> : vector<8x128xf32>
    %142 = tpu.matmul %139, %141, %cst_39 {dimension_numbers = #tpu.dot_dimension_numbers<[1], [0], [0], [1], [0, 0, 1, 1], [], []>} : vector<8x32xbf16>, vector<32x128xbf16>, vector<8x128xf32> -> vector<8x128xf32>
    %143 = arith.addf %4, %142 : vector<8x128xf32>
    %c0_40 = arith.constant 0 : index
    %c0_41 = arith.constant 0 : index
    %c0_42 = arith.constant 0 : index
    %144 = vector.load %arg15[%c0_40, %c0_41, %c0_42] : memref<1x1x128xf32, #tpu.memory_space<vmem>>, vector<1x1x128xf32>
    %145 = vector.shape_cast %144 : vector<1x1x128xf32> to vector<1x128xf32>
    %146 = vector.broadcast %145 : vector<1x128xf32> to vector<8x128xf32>
    %147 = arith.addf %143, %146 : vector<8x128xf32>
    %c0_43 = arith.constant 0 : index
    %c0_44 = arith.constant 0 : index
    %c0_45 = arith.constant 0 : index
    %148 = vector.load %arg16[%c0_43, %c0_44, %c0_45] : memref<1x1x128xf32, #tpu.memory_space<vmem>>, vector<1x1x128xf32>
    %149 = vector.shape_cast %148 : vector<1x1x128xf32> to vector<1x128xf32>
    %c0_46 = arith.constant 0 : index
    %c0_47 = arith.constant 0 : index
    %c0_48 = arith.constant 0 : index
    %150 = vector.load %arg17[%c0_46, %c0_47, %c0_48] : memref<1x1x128xf32, #tpu.memory_space<vmem>>, vector<1x1x128xf32>
    %151 = vector.shape_cast %150 : vector<1x1x128xf32> to vector<1x128xf32>
    %cst_49 = arith.constant dense<0.000000e+00> : vector<8xf32>
    %152 = vector.multi_reduction <add>, %147, %cst_49 [1] : vector<8x128xf32> to vector<8xf32>
    %153 = vector.shape_cast %152 : vector<8xf32> to vector<8x1xf32>
    %cst_50 = arith.constant 3.125000e-02 : f32
    %154 = vector.broadcast %cst_50 : f32 to vector<8x1xf32>
    %155 = arith.mulf %153, %154 : vector<8x1xf32>
    %156 = arith.mulf %147, %147 : vector<8x128xf32>
    %cst_51 = arith.constant dense<0.000000e+00> : vector<8xf32>
    %157 = vector.multi_reduction <add>, %156, %cst_51 [1] : vector<8x128xf32> to vector<8xf32>
    %158 = vector.shape_cast %157 : vector<8xf32> to vector<8x1xf32>
    %cst_52 = arith.constant 3.125000e-02 : f32
    %159 = vector.broadcast %cst_52 : f32 to vector<8x1xf32>
    %160 = arith.mulf %158, %159 : vector<8x1xf32>
    %161 = arith.mulf %155, %155 : vector<8x1xf32>
    %162 = arith.subf %160, %161 : vector<8x1xf32>
    %163 = vector.broadcast %155 : vector<8x1xf32> to vector<8x128xf32>
    %164 = arith.subf %147, %163 : vector<8x128xf32>
    %cst_53 = arith.constant 9.99999974E-6 : f32
    %165 = vector.broadcast %cst_53 : f32 to vector<8x1xf32>
    %166 = arith.addf %162, %165 : vector<8x1xf32>
    %167 = math.rsqrt %166 : vector<8x1xf32>
    %168 = vector.broadcast %167 : vector<8x1xf32> to vector<8x128xf32>
    %169 = arith.mulf %164, %168 : vector<8x128xf32>
    %170 = vector.broadcast %149 : vector<1x128xf32> to vector<8x128xf32>
    %171 = arith.mulf %169, %170 : vector<8x128xf32>
    %172 = vector.broadcast %151 : vector<1x128xf32> to vector<8x128xf32>
    %173 = arith.addf %171, %172 : vector<8x128xf32>
    %174 = arith.truncf %173 : vector<8x128xf32> to vector<8x128xbf16>
    %c0_54 = arith.constant 0 : index
    %c0_55 = arith.constant 0 : index
    %c0_56 = arith.constant 0 : index
    %175 = vector.load %arg18[%c0_54, %c0_55, %c0_56] : memref<1x128x128xbf16, #tpu.memory_space<vmem>>, vector<1x128x128xbf16>
    %176 = vector.shape_cast %175 : vector<1x128x128xbf16> to vector<128x128xbf16>
    %cst_57 = arith.constant dense<0.000000e+00> : vector<8x128xf32>
    %177 = tpu.matmul %174, %176, %cst_57 {dimension_numbers = #tpu.dot_dimension_numbers<[1], [0], [0], [1], [0, 0, 1, 1], [], []>} : vector<8x128xbf16>, vector<128x128xbf16>, vector<8x128xf32> -> vector<8x128xf32>
    %c0_58 = arith.constant 0 : index
    %c0_59 = arith.constant 0 : index
    %c0_60 = arith.constant 0 : index
    %178 = vector.load %arg19[%c0_58, %c0_59, %c0_60] : memref<1x1x128xf32, #tpu.memory_space<vmem>>, vector<1x1x128xf32>
    %179 = vector.shape_cast %178 : vector<1x1x128xf32> to vector<1x128xf32>
    %180 = vector.broadcast %179 : vector<1x128xf32> to vector<8x128xf32>
    %181 = arith.addf %177, %180 : vector<8x128xf32>
    %c0_61 = arith.constant 0 : index
    %c0_62 = arith.constant 0 : index
    %c0_63 = arith.constant 0 : index
    %182 = vector.load %arg3[%c0_61, %c0_62, %c0_63] : memref<1x8x128xbf16, #tpu.memory_space<vmem>>, vector<1x8x128xbf16>
    %183 = vector.shape_cast %182 : vector<1x8x128xbf16> to vector<8x128xbf16>
    %c0_64 = arith.constant 0 : index
    %c0_65 = arith.constant 0 : index
    %c0_66 = arith.constant 0 : index
    %184 = vector.load %arg20[%c0_64, %c0_65, %c0_66] : memref<1x128x256xbf16, #tpu.memory_space<vmem>>, vector<1x128x256xbf16>
    %185 = vector.shape_cast %184 : vector<1x128x256xbf16> to vector<128x256xbf16>
    %cst_67 = arith.constant dense<0.000000e+00> : vector<8x256xf32>
    %186 = tpu.matmul %183, %185, %cst_67 {dimension_numbers = #tpu.dot_dimension_numbers<[1], [0], [0], [1], [0, 0, 1, 1], [], []>} : vector<8x128xbf16>, vector<128x256xbf16>, vector<8x256xf32> -> vector<8x256xf32>
    %c0_68 = arith.constant 0 : index
    %c0_69 = arith.constant 0 : index
    %c0_70 = arith.constant 0 : index
    %187 = vector.load %arg21[%c0_68, %c0_69, %c0_70] : memref<1x1x256xf32, #tpu.memory_space<vmem>>, vector<1x1x256xf32>
    %188 = vector.shape_cast %187 : vector<1x1x256xf32> to vector<1x256xf32>
    %189 = vector.broadcast %188 : vector<1x256xf32> to vector<8x256xf32>
    %190 = arith.addf %186, %189 : vector<8x256xf32>
    %191 = vector.extract_strided_slice %181 {offsets = [0, 0], sizes = [8, 32], strides = [1, 1]} : vector<8x128xf32> to vector<8x32xf32>
    %192 = vector.extract_strided_slice %190 {offsets = [0, 0], sizes = [8, 32], strides = [1, 1]} : vector<8x256xf32> to vector<8x32xf32>
    %193 = vector.extract_strided_slice %190 {offsets = [0, 128], sizes = [8, 32], strides = [1, 1]} : vector<8x256xf32> to vector<8x32xf32>
    %194 = vector.extract_strided_slice %191 {offsets = [0, 0], sizes = [8, 8], strides = [1, 1]} : vector<8x32xf32> to vector<8x8xf32>
    %195 = vector.extract_strided_slice %191 {offsets = [0, 8], sizes = [8, 8], strides = [1, 1]} : vector<8x32xf32> to vector<8x8xf32>
    %196 = vector.extract_strided_slice %191 {offsets = [0, 16], sizes = [8, 8], strides = [1, 1]} : vector<8x32xf32> to vector<8x8xf32>
    %197 = vector.extract_strided_slice %191 {offsets = [0, 24], sizes = [8, 8], strides = [1, 1]} : vector<8x32xf32> to vector<8x8xf32>
    %198 = vector.shape_cast %194 : vector<8x8xf32> to vector<1x8x8xf32>
    %199 = vector.shape_cast %195 : vector<8x8xf32> to vector<1x8x8xf32>
    %200 = vector.shape_cast %196 : vector<8x8xf32> to vector<1x8x8xf32>
    %201 = vector.shape_cast %197 : vector<8x8xf32> to vector<1x8x8xf32>
    %202 = tpu.concatenate %198, %199, %200, %201 in 0 : vector<1x8x8xf32>, vector<1x8x8xf32>, vector<1x8x8xf32>, vector<1x8x8xf32> -> vector<4x8x8xf32>
    %203 = vector.extract_strided_slice %192 {offsets = [0, 0], sizes = [8, 8], strides = [1, 1]} : vector<8x32xf32> to vector<8x8xf32>
    %204 = vector.extract_strided_slice %192 {offsets = [0, 8], sizes = [8, 8], strides = [1, 1]} : vector<8x32xf32> to vector<8x8xf32>
    %205 = vector.extract_strided_slice %192 {offsets = [0, 16], sizes = [8, 8], strides = [1, 1]} : vector<8x32xf32> to vector<8x8xf32>
    %206 = vector.extract_strided_slice %192 {offsets = [0, 24], sizes = [8, 8], strides = [1, 1]} : vector<8x32xf32> to vector<8x8xf32>
    %207 = vector.shape_cast %203 : vector<8x8xf32> to vector<1x8x8xf32>
    %208 = vector.shape_cast %204 : vector<8x8xf32> to vector<1x8x8xf32>
    %209 = vector.shape_cast %205 : vector<8x8xf32> to vector<1x8x8xf32>
    %210 = vector.shape_cast %206 : vector<8x8xf32> to vector<1x8x8xf32>
    %211 = tpu.concatenate %207, %208, %209, %210 in 0 : vector<1x8x8xf32>, vector<1x8x8xf32>, vector<1x8x8xf32>, vector<1x8x8xf32> -> vector<4x8x8xf32>
    %212 = vector.extract_strided_slice %193 {offsets = [0, 0], sizes = [8, 8], strides = [1, 1]} : vector<8x32xf32> to vector<8x8xf32>
    %213 = vector.extract_strided_slice %193 {offsets = [0, 8], sizes = [8, 8], strides = [1, 1]} : vector<8x32xf32> to vector<8x8xf32>
    %214 = vector.extract_strided_slice %193 {offsets = [0, 16], sizes = [8, 8], strides = [1, 1]} : vector<8x32xf32> to vector<8x8xf32>
    %215 = vector.extract_strided_slice %193 {offsets = [0, 24], sizes = [8, 8], strides = [1, 1]} : vector<8x32xf32> to vector<8x8xf32>
    %216 = vector.shape_cast %212 : vector<8x8xf32> to vector<1x8x8xf32>
    %217 = vector.shape_cast %213 : vector<8x8xf32> to vector<1x8x8xf32>
    %218 = vector.shape_cast %214 : vector<8x8xf32> to vector<1x8x8xf32>
    %219 = vector.shape_cast %215 : vector<8x8xf32> to vector<1x8x8xf32>
    %220 = tpu.concatenate %216, %217, %218, %219 in 0 : vector<1x8x8xf32>, vector<1x8x8xf32>, vector<1x8x8xf32>, vector<1x8x8xf32> -> vector<4x8x8xf32>
    %221 = vector.extract_strided_slice %202 {offsets = [0, 0, 0], sizes = [4, 8, 4], strides = [1, 1, 1]} : vector<4x8x8xf32> to vector<4x8x4xf32>
    %222 = vector.extract_strided_slice %202 {offsets = [0, 0, 4], sizes = [4, 8, 4], strides = [1, 1, 1]} : vector<4x8x8xf32> to vector<4x8x4xf32>
    %223 = vector.shape_cast %5 : vector<8x4xf32> to vector<1x8x4xf32>
    %224 = vector.broadcast %223 : vector<1x8x4xf32> to vector<4x8x4xf32>
    %225 = arith.mulf %221, %224 : vector<4x8x4xf32>
    %226 = vector.shape_cast %6 : vector<8x4xf32> to vector<1x8x4xf32>
    %227 = vector.broadcast %226 : vector<1x8x4xf32> to vector<4x8x4xf32>
    %228 = arith.mulf %222, %227 : vector<4x8x4xf32>
    %229 = arith.subf %225, %228 : vector<4x8x4xf32>
    %230 = vector.shape_cast %5 : vector<8x4xf32> to vector<1x8x4xf32>
    %231 = vector.broadcast %230 : vector<1x8x4xf32> to vector<4x8x4xf32>
    %232 = arith.mulf %222, %231 : vector<4x8x4xf32>
    %233 = vector.shape_cast %6 : vector<8x4xf32> to vector<1x8x4xf32>
    %234 = vector.broadcast %233 : vector<1x8x4xf32> to vector<4x8x4xf32>
    %235 = arith.mulf %221, %234 : vector<4x8x4xf32>
    %236 = arith.addf %232, %235 : vector<4x8x4xf32>
    %237 = tpu.concatenate %229, %236 in 2 : vector<4x8x4xf32>, vector<4x8x4xf32> -> vector<4x8x8xf32>
    %cst_71 = arith.constant 0.353553385 : f32
    %238 = vector.broadcast %cst_71 : f32 to vector<4x8x8xf32>
    %239 = arith.mulf %237, %238 : vector<4x8x8xf32>
    %240 = vector.extract_strided_slice %211 {offsets = [0, 0, 0], sizes = [4, 8, 4], strides = [1, 1, 1]} : vector<4x8x8xf32> to vector<4x8x4xf32>
    %241 = vector.extract_strided_slice %211 {offsets = [0, 0, 4], sizes = [4, 8, 4], strides = [1, 1, 1]} : vector<4x8x8xf32> to vector<4x8x4xf32>
    %242 = vector.shape_cast %7 : vector<8x4xf32> to vector<1x8x4xf32>
    %243 = vector.broadcast %242 : vector<1x8x4xf32> to vector<4x8x4xf32>
    %244 = arith.mulf %240, %243 : vector<4x8x4xf32>
    %245 = vector.shape_cast %8 : vector<8x4xf32> to vector<1x8x4xf32>
    %246 = vector.broadcast %245 : vector<1x8x4xf32> to vector<4x8x4xf32>
    %247 = arith.mulf %241, %246 : vector<4x8x4xf32>
    %248 = arith.subf %244, %247 : vector<4x8x4xf32>
    %249 = vector.shape_cast %7 : vector<8x4xf32> to vector<1x8x4xf32>
    %250 = vector.broadcast %249 : vector<1x8x4xf32> to vector<4x8x4xf32>
    %251 = arith.mulf %241, %250 : vector<4x8x4xf32>
    %252 = vector.shape_cast %8 : vector<8x4xf32> to vector<1x8x4xf32>
    %253 = vector.broadcast %252 : vector<1x8x4xf32> to vector<4x8x4xf32>
    %254 = arith.mulf %240, %253 : vector<4x8x4xf32>
    %255 = arith.addf %251, %254 : vector<4x8x4xf32>
    %256 = tpu.concatenate %248, %255 in 2 : vector<4x8x4xf32>, vector<4x8x4xf32> -> vector<4x8x8xf32>
    %257 = arith.truncf %239 : vector<4x8x8xf32> to vector<4x8x8xbf16>
    %258 = arith.truncf %256 : vector<4x8x8xf32> to vector<4x8x8xbf16>
    %259 = arith.truncf %220 : vector<4x8x8xf32> to vector<4x8x8xbf16>
    %cst_72 = arith.constant dense<0.000000e+00> : vector<4x8x8xf32>
    %260 = tpu.matmul %257, %258, %cst_72 {dimension_numbers = #tpu.dot_dimension_numbers<[2], [2], [1], [1], [0, 0, 0, 1, 1, 1], [0], [0]>} : vector<4x8x8xbf16>, vector<4x8x8xbf16>, vector<4x8x8xf32> -> vector<4x8x8xf32>
    %c0_73 = arith.constant 0 : index
    %c0_74 = arith.constant 0 : index
    %c0_75 = arith.constant 0 : index
    %261 = vector.load %arg5[%c0_73, %c0_74, %c0_75] : memref<1x1x8xf32, #tpu.memory_space<vmem>>, vector<1x1x8xf32>
    %262 = vector.shape_cast %261 : vector<1x1x8xf32> to vector<1x8xf32>
    %263 = vector.shape_cast %262 : vector<1x8xf32> to vector<1x1x8xf32>
    %264 = vector.broadcast %263 : vector<1x1x8xf32> to vector<4x8x8xf32>
    %265 = arith.addf %260, %264 : vector<4x8x8xf32>
    %cst_76 = arith.constant dense<0xFF800000> : vector<4x8xf32>
    %266 = vector.multi_reduction <maximumf>, %265, %cst_76 [2] : vector<4x8x8xf32> to vector<4x8xf32>
    %267 = vector.shape_cast %266 : vector<4x8xf32> to vector<4x8x1xf32>
    %268 = vector.broadcast %267 : vector<4x8x1xf32> to vector<4x8x8xf32>
    %269 = arith.subf %265, %268 : vector<4x8x8xf32>
    %270 = math.exp %269 : vector<4x8x8xf32>
    %cst_77 = arith.constant dense<0.000000e+00> : vector<4x8xf32>
    %271 = vector.multi_reduction <add>, %270, %cst_77 [2] : vector<4x8x8xf32> to vector<4x8xf32>
    %272 = vector.shape_cast %271 : vector<4x8xf32> to vector<4x8x1xf32>
    %273 = tpu.reciprocal %272 {approx = true} : vector<4x8x1xf32> -> vector<4x8x1xf32>
    %274 = vector.broadcast %273 : vector<4x8x1xf32> to vector<4x8x8xf32>
    %275 = arith.mulf %270, %274 : vector<4x8x8xf32>
    %276 = arith.truncf %275 : vector<4x8x8xf32> to vector<4x8x8xbf16>
    %cst_78 = arith.constant dense<0.000000e+00> : vector<4x8x8xf32>
    %277 = tpu.matmul %276, %259, %cst_78 {dimension_numbers = #tpu.dot_dimension_numbers<[2], [1], [1], [2], [0, 0, 0, 1, 1, 2], [0], [0]>} : vector<4x8x8xbf16>, vector<4x8x8xbf16>, vector<4x8x8xf32> -> vector<4x8x8xf32>
    %278 = vector.extract_strided_slice %277 {offsets = [0, 0, 0], sizes = [1, 8, 8], strides = [1, 1, 1]} : vector<4x8x8xf32> to vector<1x8x8xf32>
    %279 = vector.shape_cast %278 : vector<1x8x8xf32> to vector<8x8xf32>
    %280 = vector.extract_strided_slice %277 {offsets = [1, 0, 0], sizes = [1, 8, 8], strides = [1, 1, 1]} : vector<4x8x8xf32> to vector<1x8x8xf32>
    %281 = vector.shape_cast %280 : vector<1x8x8xf32> to vector<8x8xf32>
    %282 = vector.extract_strided_slice %277 {offsets = [2, 0, 0], sizes = [1, 8, 8], strides = [1, 1, 1]} : vector<4x8x8xf32> to vector<1x8x8xf32>
    %283 = vector.shape_cast %282 : vector<1x8x8xf32> to vector<8x8xf32>
    %284 = vector.extract_strided_slice %277 {offsets = [3, 0, 0], sizes = [1, 8, 8], strides = [1, 1, 1]} : vector<4x8x8xf32> to vector<1x8x8xf32>
    %285 = vector.shape_cast %284 : vector<1x8x8xf32> to vector<8x8xf32>
    %286 = tpu.concatenate %279, %281, %283, %285 in 1 : vector<8x8xf32>, vector<8x8xf32>, vector<8x8xf32>, vector<8x8xf32> -> vector<8x32xf32>
    %287 = arith.truncf %286 : vector<8x32xf32> to vector<8x32xbf16>
    %c0_79 = arith.constant 0 : index
    %c0_80 = arith.constant 0 : index
    %c0_81 = arith.constant 0 : index
    %288 = vector.load %arg22[%c0_79, %c0_80, %c0_81] : memref<1x32x128xbf16, #tpu.memory_space<vmem>>, vector<1x32x128xbf16>
    %289 = vector.shape_cast %288 : vector<1x32x128xbf16> to vector<32x128xbf16>
    %cst_82 = arith.constant dense<0.000000e+00> : vector<8x128xf32>
    %290 = tpu.matmul %287, %289, %cst_82 {dimension_numbers = #tpu.dot_dimension_numbers<[1], [0], [0], [1], [0, 0, 1, 1], [], []>} : vector<8x32xbf16>, vector<32x128xbf16>, vector<8x128xf32> -> vector<8x128xf32>
    %291 = arith.addf %147, %290 : vector<8x128xf32>
    %c0_83 = arith.constant 0 : index
    %c0_84 = arith.constant 0 : index
    %c0_85 = arith.constant 0 : index
    %292 = vector.load %arg23[%c0_83, %c0_84, %c0_85] : memref<1x1x128xf32, #tpu.memory_space<vmem>>, vector<1x1x128xf32>
    %293 = vector.shape_cast %292 : vector<1x1x128xf32> to vector<1x128xf32>
    %294 = vector.broadcast %293 : vector<1x128xf32> to vector<8x128xf32>
    %295 = arith.addf %291, %294 : vector<8x128xf32>
    %c0_86 = arith.constant 0 : index
    %c0_87 = arith.constant 0 : index
    %c0_88 = arith.constant 0 : index
    %296 = vector.load %arg24[%c0_86, %c0_87, %c0_88] : memref<1x1x128xf32, #tpu.memory_space<vmem>>, vector<1x1x128xf32>
    %297 = vector.shape_cast %296 : vector<1x1x128xf32> to vector<1x128xf32>
    %c0_89 = arith.constant 0 : index
    %c0_90 = arith.constant 0 : index
    %c0_91 = arith.constant 0 : index
    %298 = vector.load %arg25[%c0_89, %c0_90, %c0_91] : memref<1x1x128xf32, #tpu.memory_space<vmem>>, vector<1x1x128xf32>
    %299 = vector.shape_cast %298 : vector<1x1x128xf32> to vector<1x128xf32>
    %cst_92 = arith.constant dense<0.000000e+00> : vector<8xf32>
    %300 = vector.multi_reduction <add>, %295, %cst_92 [1] : vector<8x128xf32> to vector<8xf32>
    %301 = vector.shape_cast %300 : vector<8xf32> to vector<8x1xf32>
    %cst_93 = arith.constant 3.125000e-02 : f32
    %302 = vector.broadcast %cst_93 : f32 to vector<8x1xf32>
    %303 = arith.mulf %301, %302 : vector<8x1xf32>
    %304 = arith.mulf %295, %295 : vector<8x128xf32>
    %cst_94 = arith.constant dense<0.000000e+00> : vector<8xf32>
    %305 = vector.multi_reduction <add>, %304, %cst_94 [1] : vector<8x128xf32> to vector<8xf32>
    %306 = vector.shape_cast %305 : vector<8xf32> to vector<8x1xf32>
    %cst_95 = arith.constant 3.125000e-02 : f32
    %307 = vector.broadcast %cst_95 : f32 to vector<8x1xf32>
    %308 = arith.mulf %306, %307 : vector<8x1xf32>
    %309 = arith.mulf %303, %303 : vector<8x1xf32>
    %310 = arith.subf %308, %309 : vector<8x1xf32>
    %311 = vector.broadcast %303 : vector<8x1xf32> to vector<8x128xf32>
    %312 = arith.subf %295, %311 : vector<8x128xf32>
    %cst_96 = arith.constant 9.99999974E-6 : f32
    %313 = vector.broadcast %cst_96 : f32 to vector<8x1xf32>
    %314 = arith.addf %310, %313 : vector<8x1xf32>
    %315 = math.rsqrt %314 : vector<8x1xf32>
    %316 = vector.broadcast %315 : vector<8x1xf32> to vector<8x128xf32>
    %317 = arith.mulf %312, %316 : vector<8x128xf32>
    %318 = vector.broadcast %297 : vector<1x128xf32> to vector<8x128xf32>
    %319 = arith.mulf %317, %318 : vector<8x128xf32>
    %320 = vector.broadcast %299 : vector<1x128xf32> to vector<8x128xf32>
    %321 = arith.addf %319, %320 : vector<8x128xf32>
    %322 = arith.truncf %321 : vector<8x128xf32> to vector<8x128xbf16>
    %c0_97 = arith.constant 0 : index
    %c0_98 = arith.constant 0 : index
    %c0_99 = arith.constant 0 : index
    %323 = vector.load %arg26[%c0_97, %c0_98, %c0_99] : memref<1x128x128xbf16, #tpu.memory_space<vmem>>, vector<1x128x128xbf16>
    %324 = vector.shape_cast %323 : vector<1x128x128xbf16> to vector<128x128xbf16>
    %cst_100 = arith.constant dense<0.000000e+00> : vector<8x128xf32>
    %325 = tpu.matmul %322, %324, %cst_100 {dimension_numbers = #tpu.dot_dimension_numbers<[1], [0], [0], [1], [0, 0, 1, 1], [], []>} : vector<8x128xbf16>, vector<128x128xbf16>, vector<8x128xf32> -> vector<8x128xf32>
    %c0_101 = arith.constant 0 : index
    %c0_102 = arith.constant 0 : index
    %c0_103 = arith.constant 0 : index
    %326 = vector.load %arg27[%c0_101, %c0_102, %c0_103] : memref<1x1x128xf32, #tpu.memory_space<vmem>>, vector<1x1x128xf32>
    %327 = vector.shape_cast %326 : vector<1x1x128xf32> to vector<1x128xf32>
    %328 = vector.broadcast %327 : vector<1x128xf32> to vector<8x128xf32>
    %329 = arith.addf %325, %328 : vector<8x128xf32>
    %cst_104 = arith.constant 0.000000e+00 : f32
    %330 = vector.broadcast %cst_104 : f32 to vector<8x128xf32>
    %331 = arith.maximumf %329, %330 : vector<8x128xf32>
    %332 = arith.truncf %331 : vector<8x128xf32> to vector<8x128xbf16>
    %c0_105 = arith.constant 0 : index
    %c0_106 = arith.constant 0 : index
    %c0_107 = arith.constant 0 : index
    %333 = vector.load %arg28[%c0_105, %c0_106, %c0_107] : memref<1x128x128xbf16, #tpu.memory_space<vmem>>, vector<1x128x128xbf16>
    %334 = vector.shape_cast %333 : vector<1x128x128xbf16> to vector<128x128xbf16>
    %cst_108 = arith.constant dense<0.000000e+00> : vector<8x128xf32>
    %335 = tpu.matmul %332, %334, %cst_108 {dimension_numbers = #tpu.dot_dimension_numbers<[1], [0], [0], [1], [0, 0, 1, 1], [], []>} : vector<8x128xbf16>, vector<128x128xbf16>, vector<8x128xf32> -> vector<8x128xf32>
    %336 = arith.addf %295, %335 : vector<8x128xf32>
    %c0_109 = arith.constant 0 : index
    %c0_110 = arith.constant 0 : index
    %c0_111 = arith.constant 0 : index
    %337 = vector.load %arg29[%c0_109, %c0_110, %c0_111] : memref<1x1x128xf32, #tpu.memory_space<vmem>>, vector<1x1x128xf32>
    %338 = vector.shape_cast %337 : vector<1x1x128xf32> to vector<1x128xf32>
    %339 = vector.broadcast %338 : vector<1x128xf32> to vector<8x128xf32>
    %340 = arith.addf %336, %339 : vector<8x128xf32>
    %341 = vector.shape_cast %340 : vector<8x128xf32> to vector<1x8x128xf32>
    %c0_112 = arith.constant 0 : index
    %c0_113 = arith.constant 0 : index
    %c0_114 = arith.constant 0 : index
    %342 = vector.load %arg31[%c0_112, %c0_113, %c0_114] : memref<1x8x128xf32, #tpu.memory_space<vmem>>, vector<1x8x128xf32>
    tpu.vector_store %arg31[%c0_112, %c0_113, %c0_114], %341 {strides = array<i32>} : memref<1x8x128xf32, #tpu.memory_space<vmem>>, vector<1x8x128xf32>,
    %c1_i32 = arith.constant 1 : i32
    %343 = arith.cmpi eq, %arg1, %c1_i32 : i32
    %344 = arith.extui %343 : i1 to i32
    %c0_i32_115 = arith.constant 0 : i32
    %345 = arith.cmpi ne, %344, %c0_i32_115 : i32
    scf.if %345 {
      %c0_116 = arith.constant 0 : index
      %c0_117 = arith.constant 0 : index
      %c0_118 = arith.constant 0 : index
      %346 = vector.load %arg31[%c0_116, %c0_117, %c0_118] : memref<1x8x128xf32, #tpu.memory_space<vmem>>, vector<1x8x128xf32>
      %c0_119 = arith.constant 0 : index
      %c0_120 = arith.constant 0 : index
      %c0_121 = arith.constant 0 : index
      %347 = vector.load %arg30[%c0_119, %c0_120, %c0_121] : memref<1x8x128xf32, #tpu.memory_space<vmem>>, vector<1x8x128xf32>
      tpu.vector_store %arg30[%c0_119, %c0_120, %c0_121], %346 {strides = array<i32>} : memref<1x8x128xf32, #tpu.memory_space<vmem>>, vector<1x8x128xf32>,
    } else {
    }
    return
  }
  func.func @transform_0(%arg0: i32, %arg1: i32) -> (i32, i32, i32) {
    %c0_i32 = arith.constant 0 : i32
    %c0_i32_0 = arith.constant 0 : i32
    %c0_i32_1 = arith.constant 0 : i32
    return %arg0, %c0_i32, %c0_i32_0 : i32, i32, i32
  }
  func.func @transform_1(%arg0: i32, %arg1: i32) -> (i32, i32, i32) {
    %c0_i32 = arith.constant 0 : i32
    %c0_i32_0 = arith.constant 0 : i32
    %c0_i32_1 = arith.constant 0 : i32
    return %arg0, %c0_i32, %c0_i32_0 : i32, i32, i32
  }
  func.func @transform_2(%arg0: i32, %arg1: i32) -> (i32, i32, i32) {
    %c0_i32 = arith.constant 0 : i32
    %c0_i32_0 = arith.constant 0 : i32
    %c0_i32_1 = arith.constant 0 : i32
    return %arg0, %c0_i32, %c0_i32_0 : i32, i32, i32
  }
  func.func @transform_3(%arg0: i32, %arg1: i32) -> (i32, i32, i32) {
    %c0_i32 = arith.constant 0 : i32
    %c0_i32_0 = arith.constant 0 : i32
    %c0_i32_1 = arith.constant 0 : i32
    return %arg0, %c0_i32, %c0_i32_0 : i32, i32, i32
  }
  func.func @transform_4(%arg0: i32, %arg1: i32) -> (i32, i32) {
    %c0_i32 = arith.constant 0 : i32
    %c0_i32_0 = arith.constant 0 : i32
    %c0_i32_1 = arith.constant 0 : i32
    return %c0_i32, %c0_i32_0 : i32, i32
  }
  func.func @transform_5(%arg0: i32, %arg1: i32) -> (i32, i32) {
    %c0_i32 = arith.constant 0 : i32
    %c0_i32_0 = arith.constant 0 : i32
    %c0_i32_1 = arith.constant 0 : i32
    return %c0_i32, %c0_i32_0 : i32, i32
  }
  func.func @transform_6(%arg0: i32, %arg1: i32) -> (i32, i32) {
    %c0_i32 = arith.constant 0 : i32
    %c0_i32_0 = arith.constant 0 : i32
    %c0_i32_1 = arith.constant 0 : i32
    return %c0_i32, %c0_i32_0 : i32, i32
  }
  func.func @transform_7(%arg0: i32, %arg1: i32) -> (i32, i32) {
    %c0_i32 = arith.constant 0 : i32
    %c0_i32_0 = arith.constant 0 : i32
    %c0_i32_1 = arith.constant 0 : i32
    return %c0_i32, %c0_i32_0 : i32, i32
  }
  func.func @transform_8(%arg0: i32, %arg1: i32) -> (i32, i32, i32) {
    %c0_i32 = arith.constant 0 : i32
    %c0_i32_0 = arith.constant 0 : i32
    %c0_i32_1 = arith.constant 0 : i32
    return %arg1, %c0_i32, %c0_i32_0 : i32, i32, i32
  }
  func.func @transform_9(%arg0: i32, %arg1: i32) -> (i32, i32, i32) {
    %c0_i32 = arith.constant 0 : i32
    %c0_i32_0 = arith.constant 0 : i32
    %c0_i32_1 = arith.constant 0 : i32
    return %arg1, %c0_i32, %c0_i32_0 : i32, i32, i32
  }
  func.func @transform_10(%arg0: i32, %arg1: i32) -> (i32, i32, i32) {
    %c0_i32 = arith.constant 0 : i32
    %c0_i32_0 = arith.constant 0 : i32
    %c0_i32_1 = arith.constant 0 : i32
    return %arg1, %c0_i32, %c0_i32_0 : i32, i32, i32
  }
  func.func @transform_11(%arg0: i32, %arg1: i32) -> (i32, i32, i32) {
    %c0_i32 = arith.constant 0 : i32
    %c0_i32_0 = arith.constant 0 : i32
    %c0_i32_1 = arith.constant 0 : i32
    return %arg1, %c0_i32, %c0_i32_0 : i32, i32, i32
  }
  func.func @transform_12(%arg0: i32, %arg1: i32) -> (i32, i32, i32) {
    %c0_i32 = arith.constant 0 : i32
    %c0_i32_0 = arith.constant 0 : i32
    %c0_i32_1 = arith.constant 0 : i32
    return %arg1, %c0_i32, %c0_i32_0 : i32, i32, i32
  }
  func.func @transform_13(%arg0: i32, %arg1: i32) -> (i32, i32, i32) {
    %c0_i32 = arith.constant 0 : i32
    %c0_i32_0 = arith.constant 0 : i32
    %c0_i32_1 = arith.constant 0 : i32
    return %arg1, %c0_i32, %c0_i32_0 : i32, i32, i32
  }
  func.func @transform_14(%arg0: i32, %arg1: i32) -> (i32, i32, i32) {
    %c0_i32 = arith.constant 0 : i32
    %c0_i32_0 = arith.constant 0 : i32
    %c0_i32_1 = arith.constant 0 : i32
    return %arg1, %c0_i32, %c0_i32_0 : i32, i32, i32
  }
  func.func @transform_15(%arg0: i32, %arg1: i32) -> (i32, i32, i32) {
    %c0_i32 = arith.constant 0 : i32
    %c0_i32_0 = arith.constant 0 : i32
    %c0_i32_1 = arith.constant 0 : i32
    return %arg1, %c0_i32, %c0_i32_0 : i32, i32, i32
  }
  func.func @transform_16(%arg0: i32, %arg1: i32) -> (i32, i32, i32) {
    %c0_i32 = arith.constant 0 : i32
    %c0_i32_0 = arith.constant 0 : i32
    %c0_i32_1 = arith.constant 0 : i32
    return %arg1, %c0_i32, %c0_i32_0 : i32, i32, i32
  }
  func.func @transform_17(%arg0: i32, %arg1: i32) -> (i32, i32, i32) {
    %c0_i32 = arith.constant 0 : i32
    %c0_i32_0 = arith.constant 0 : i32
    %c0_i32_1 = arith.constant 0 : i32
    return %arg1, %c0_i32, %c0_i32_0 : i32, i32, i32
  }
  func.func @transform_18(%arg0: i32, %arg1: i32) -> (i32, i32, i32) {
    %c0_i32 = arith.constant 0 : i32
    %c0_i32_0 = arith.constant 0 : i32
    %c0_i32_1 = arith.constant 0 : i32
    return %arg1, %c0_i32, %c0_i32_0 : i32, i32, i32
  }
  func.func @transform_19(%arg0: i32, %arg1: i32) -> (i32, i32, i32) {
    %c0_i32 = arith.constant 0 : i32
    %c0_i32_0 = arith.constant 0 : i32
    %c0_i32_1 = arith.constant 0 : i32
    return %arg1, %c0_i32, %c0_i32_0 : i32, i32, i32
  }
  func.func @transform_20(%arg0: i32, %arg1: i32) -> (i32, i32, i32) {
    %c0_i32 = arith.constant 0 : i32
    %c0_i32_0 = arith.constant 0 : i32
    %c0_i32_1 = arith.constant 0 : i32
    return %arg1, %c0_i32, %c0_i32_0 : i32, i32, i32
  }
  func.func @transform_21(%arg0: i32, %arg1: i32) -> (i32, i32, i32) {
    %c0_i32 = arith.constant 0 : i32
    %c0_i32_0 = arith.constant 0 : i32
    %c0_i32_1 = arith.constant 0 : i32
    return %arg1, %c0_i32, %c0_i32_0 : i32, i32, i32
  }
  func.func @transform_22(%arg0: i32, %arg1: i32) -> (i32, i32, i32) {
    %c0_i32 = arith.constant 0 : i32
    %c0_i32_0 = arith.constant 0 : i32
    %c0_i32_1 = arith.constant 0 : i32
    return %arg1, %c0_i32, %c0_i32_0 : i32, i32, i32
  }
  func.func @transform_23(%arg0: i32, %arg1: i32) -> (i32, i32, i32) {
    %c0_i32 = arith.constant 0 : i32
    %c0_i32_0 = arith.constant 0 : i32
    %c0_i32_1 = arith.constant 0 : i32
    return %arg1, %c0_i32, %c0_i32_0 : i32, i32, i32
  }
  func.func @transform_24(%arg0: i32, %arg1: i32) -> (i32, i32, i32) {
    %c0_i32 = arith.constant 0 : i32
    %c0_i32_0 = arith.constant 0 : i32
    %c0_i32_1 = arith.constant 0 : i32
    return %arg1, %c0_i32, %c0_i32_0 : i32, i32, i32
  }
  func.func @transform_25(%arg0: i32, %arg1: i32) -> (i32, i32, i32) {
    %c0_i32 = arith.constant 0 : i32
    %c0_i32_0 = arith.constant 0 : i32
    %c0_i32_1 = arith.constant 0 : i32
    return %arg1, %c0_i32, %c0_i32_0 : i32, i32, i32
  }
  func.func @transform_26(%arg0: i32, %arg1: i32) -> (i32, i32, i32) {
    %c0_i32 = arith.constant 0 : i32
    %c0_i32_0 = arith.constant 0 : i32
    %c0_i32_1 = arith.constant 0 : i32
    return %arg1, %c0_i32, %c0_i32_0 : i32, i32, i32
  }
  func.func @transform_27(%arg0: i32, %arg1: i32) -> (i32, i32, i32) {
    %c0_i32 = arith.constant 0 : i32
    %c0_i32_0 = arith.constant 0 : i32
    %c0_i32_1 = arith.constant 0 : i32
    return %arg1, %c0_i32, %c0_i32_0 : i32, i32, i32
  }
  func.func @transform_28(%arg0: i32, %arg1: i32) -> (i32, i32, i32) {
    %c0_i32 = arith.constant 0 : i32
    %c0_i32_0 = arith.constant 0 : i32
    %c0_i32_1 = arith.constant 0 : i32
    return %arg0, %c0_i32, %c0_i32_0 : i32, i32, i32
  }
}

</mosaic_0001>

<llo_original>
// kernel: transformer_forward.5
$region0: #{transformer_forward.5}
  #allocation0 [shape = 'u32[]', space=smem, size = 0x4, offset = 0x4, fixed_abs, tag = 'smem constant byte address 0x4 - core index']
  #allocation1 [shape = 'u32[72,128]{1,0:T(1,128)}', space=vmem, size = 0x9000, scoped, tag = 'internal scratch']
  %s0 = inlined_call_operand.vmem [shape: f32[16,128], index: 0, kind: input, shape index: {}]
  %s1 = inlined_call_operand.hbm [shape: bf16[128,128], index: 1, kind: input, shape index: {}]
  %s2 = inlined_call_operand.vmem [shape: f32[1,128], index: 2, kind: input, shape index: {}]
  %s3 = inlined_call_operand.vmem [shape: f32[16,128], index: 3, kind: output, shape index: {}]
  %s4 = sld [smem:[#allocation0]]
  $region26: #{transformer_forward.5} parent=0
    _
  %s6 = ssub.s32 1, %s4
  %s7 = scalar_select 0, %s6, %s4
  $region1: #{transformer_forward.5} parent=0
    #allocation2 [shape = 'u8[32768]{0}', space=vmem, size = 0x8000, scoped, tag = 'input window, operand 1, single buffered']
    #allocation3 [shape = 's32[1]{0}', space=sflag, size = 0x4, scoped, tag = 'scoped memory for transformer_forward.5']
    %8 = vsyncpa [#allocation3], 0
    // Predicated region
    $region2: #{transformer_forward.5} parent=1 // pred_check
      _
    $region3: #{transformer_forward.5} parent=1 // pred_check_branch
      %10 = sbr.rel (0) target = $region5
    $region4: #{transformer_forward.5} parent=1 // pred_region
      _
    $region5: #{transformer_forward.5} parent=1 // pred_fallthru
      _
    // Predicated region
    $region6: #{transformer_forward.5} parent=1 // pred_check
      _
    $region7: #{transformer_forward.5} parent=1 // pred_check_branch
      %12 = sbr.rel (0) target = $region9
    $region8: #{transformer_forward.5} parent=1 // pred_region
      %14 = vsyncadd [#allocation3], 0
      %s15 = sshll.u32 %s1, 4
      %s16 = int_to_ptr.hbm [resolvable:$true] %s15
      %s17 = sshll.u32 [#allocation2], 4
      %s18 = int_to_ptr.vmem [resolvable:$true] %s17
      %23 = dma.hbm_to_vmem [thread:$0]  %s16, 1024, %s18, [#allocation3], 64, 64, 4
    $region9: #{transformer_forward.5} parent=1 // pred_fallthru
      _
    // Predicated region
    $region10: #{transformer_forward.5} parent=1 // pred_check
      _
    $region11: #{transformer_forward.5} parent=1 // pred_check_branch
      %25 = sbr.rel (0) target = $region13
    $region12: #{transformer_forward.5} parent=1 // pred_region
      _
    $region13: #{transformer_forward.5} parent=1 // pred_fallthru
      _
    // Predicated region
    $region14: #{transformer_forward.5} parent=1 // pred_check
      _
    $region15: #{transformer_forward.5} parent=1 // pred_check_branch
      %27 = sbr.rel (0) target = $region17
    $region16: #{transformer_forward.5} parent=1 // pred_region
      %29 = dma.done [#allocation3], 1024
    $region17: #{transformer_forward.5} parent=1 // pred_fallthru
      _
    %v30 = vld [vmem:[%s0] sm:$0xff]
    %v31 = vld [vmem:[%s0 + $0x8] sm:$0xff]
    %v32 = vpack.c.bf16 %v31, %v30
    %v33 = vld [vmem:[#allocation2] sm:$0xf]
    %v34 = vld [vmem:[#allocation2 + $0x4] sm:$0xf]
    %v35 = vld [vmem:[#allocation2 + $0x8] sm:$0xf]
    %v36 = vld [vmem:[#allocation2 + $0xc] sm:$0xf]
    %v37 = vld [vmem:[#allocation2 + $0x10] sm:$0xf]
    %v38 = vld [vmem:[#allocation2 + $0x14] sm:$0xf]
    %v39 = vld [vmem:[#allocation2 + $0x18] sm:$0xf]
    %v40 = vld [vmem:[#allocation2 + $0x1c] sm:$0xf]
    %v41 = vld [vmem:[#allocation2 + $0x20] sm:$0xf]
    %v42 = vld [vmem:[#allocation2 + $0x24] sm:$0xf]
    %v43 = vld [vmem:[#allocation2 + $0x28] sm:$0xf]
    %v44 = vld [vmem:[#allocation2 + $0x2c] sm:$0xf]
    %v45 = vld [vmem:[#allocation2 + $0x30] sm:$0xf]
    %v46 = vld [vmem:[#allocation2 + $0x34] sm:$0xf]
    %v47 = vld [vmem:[#allocation2 + $0x38] sm:$0xf]
    %v48 = vld [vmem:[#allocation2 + $0x3c] sm:$0xf]
    %v49 = vld [vmem:[%s2] sm:$0x1]
    %v51 = vperm.slane %v49, 0
    %v69 = vunpack.c.l.b16 %v33
    %v70 = vunpack.c.l.b16 %v34
    %v71 = vunpack.c.l.b16 %v35
    %v72 = vunpack.c.l.b16 %v36
    %v73 = vunpack.c.l.b16 %v37
    %v74 = vunpack.c.l.b16 %v38
    %v75 = vunpack.c.l.b16 %v39
    %v76 = vunpack.c.l.b16 %v40
    %v77 = vunpack.c.l.b16 %v41
    %v78 = vunpack.c.l.b16 %v42
    %v79 = vunpack.c.l.b16 %v43
    %v80 = vunpack.c.l.b16 %v44
    %v81 = vunpack.c.l.b16 %v45
    %v82 = vunpack.c.l.b16 %v46
    %v83 = vunpack.c.l.b16 %v47
    %v84 = vunpack.c.l.b16 %v48
    %v85 = vpack.c.b16 %v70, %v69
    %v86 = vpack.c.b16 %v72, %v71
    %v87 = vpack.c.b16 %v74, %v73
    %v88 = vpack.c.b16 %v76, %v75
    %v89 = vpack.c.b16 %v78, %v77
    %v90 = vpack.c.b16 %v80, %v79
    %v91 = vpack.c.b16 %v82, %v81
    %v92 = vpack.c.b16 %v84, %v83
    %101 = vmatpush.bf16.msra.mxu0 %v92
    %102 = vmatpush.bf16.msra.mxu0 %v91
    %103 = vmatpush.bf16.msra.mxu0 %v90
    %104 = vmatpush.bf16.msra.mxu0 %v89
    %105 = vmatpush.bf16.msra.mxu0 %v88
    %106 = vmatpush.bf16.msra.mxu0 %v87
    %107 = vmatpush.bf16.msra.mxu0 %v86
    %108 = vmatpush.bf16.msra.mxu0 %v85
    %109 = vmatmul.bf16.gmra.mxu0 %v32
    %v110 = vpop.f32.mrf.mxu0
    %v111 = vadd.f32 %v51, %v110
    %v112 = vpop.f32.mrf.mxu0
    %v113 = vadd.f32 %v51, %v112
    %114 = vdwg.mxu0
    %115 = vst [vmem:[%s3] sm:$0xff] %v111
    %116 = vst [vmem:[%s3 + $0x8] sm:$0xff] %v113
    // Predicated region
    $region18: #{transformer_forward.5} parent=1 // pred_check
      _
    $region19: #{transformer_forward.5} parent=1 // pred_check_branch
      %118 = sbr.rel (0) target = $region21
    $region20: #{transformer_forward.5} parent=1 // pred_region
      _
    $region21: #{transformer_forward.5} parent=1 // pred_fallthru
      _
    // Predicated region
    $region22: #{transformer_forward.5} parent=1 // pred_check
      _
    $region23: #{transformer_forward.5} parent=1 // pred_check_branch
      %120 = sbr.rel (0) target = $region25
    $region24: #{transformer_forward.5} parent=1 // pred_region
      _
    $region25: #{transformer_forward.5} parent=1 // pred_fallthru
      _
    %121 = vsyncpa [#allocation3], 1

// kernel: transformer_forward.7
$region0: #{transformer_forward.7}
  #allocation0 [shape = 'u32[]', space=smem, size = 0x4, offset = 0x4, fixed_abs, tag = 'smem constant byte address 0x4 - core index']
  #allocation1 [shape = 'u32[72,128]{1,0:T(1,128)}', space=vmem, size = 0x9000, scoped, tag = 'internal scratch']
  %s0 = inlined_call_operand.vmem [shape: f32[16,128], index: 0, kind: input, shape index: {}]
  %s1 = inlined_call_operand.vmem [shape: f32[16,128], index: 1, kind: input, shape index: {}]
  %s2 = inlined_call_operand.vmem [shape: f32[1,128], index: 2, kind: input, shape index: {}]
  %s3 = inlined_call_operand.vmem [shape: f32[1,128], index: 3, kind: input, shape index: {}]
  %s4 = inlined_call_operand.hbm [shape: bf16[128,128], index: 4, kind: input, shape index: {}]
  %s5 = inlined_call_operand.vmem [shape: f32[1,128], index: 5, kind: input, shape index: {}]
  %s6 = inlined_call_operand.vmem [shape: f32[16,128], index: 6, kind: output, shape index: {0}]
  %s7 = inlined_call_operand.hbm [shape: f32[1,1], index: 7, kind: output, shape index: {1}]
  %8 = xla_tuple %s6, %s7
  %s9 = sld [smem:[#allocation0]]
  $region46: #{transformer_forward.7} parent=0
    _
  %s11 = ssub.s32 1, %s9
  %s12 = scalar_select 0, %s11, %s9
  $region1: #{transformer_forward.7} parent=0
    #allocation2 [shape = 'u8[32768]{0}', space=vmem, size = 0x8000, scoped, tag = 'input window, operand 4, single buffered']
    #allocation3 [shape = 's32[1]{0}', space=sflag, size = 0x4, scoped, tag = 'scoped memory for transformer_forward.7']
    #allocation4 [shape = 's32[1]{0}', space=sflag, size = 0x4, scoped, tag = 'scoped memory for transformer_forward.7']
    #allocation5 [shape = 'u8[512]{0}', space=vmem, size = 0x400, scoped, tag = 'output window, operand 1, single buffered']
    %13 = vsyncpa [#allocation3], 0
    %14 = vsyncpa [#allocation4], 0
    // Predicated region
    $region2: #{transformer_forward.7} parent=1 // pred_check
      _
    $region3: #{transformer_forward.7} parent=1 // pred_check_branch
      %16 = sbr.rel (0) target = $region5
    $region4: #{transformer_forward.7} parent=1 // pred_region
      _
    $region5: #{transformer_forward.7} parent=1 // pred_fallthru
      _
    // Predicated region
    $region6: #{transformer_forward.7} parent=1 // pred_check
      _
    $region7: #{transformer_forward.7} parent=1 // pred_check_branch
      %18 = sbr.rel (0) target = $region9
    $region8: #{transformer_forward.7} parent=1 // pred_region
      _
    $region9: #{transformer_forward.7} parent=1 // pred_fallthru
      _
    // Predicated region
    $region10: #{transformer_forward.7} parent=1 // pred_check
      _
    $region11: #{transformer_forward.7} parent=1 // pred_check_branch
      %20 = sbr.rel (0) target = $region13
    $region12: #{transformer_forward.7} parent=1 // pred_region
      _
    $region13: #{transformer_forward.7} parent=1 // pred_fallthru
      _
    // Predicated region
    $region14: #{transformer_forward.7} parent=1 // pred_check
      _
    $region15: #{transformer_forward.7} parent=1 // pred_check_branch
      %22 = sbr.rel (0) target = $region17
    $region16: #{transformer_forward.7} parent=1 // pred_region
      _
    $region17: #{transformer_forward.7} parent=1 // pred_fallthru
      _
    // Predicated region
    $region18: #{transformer_forward.7} parent=1 // pred_check
      _
    $region19: #{transformer_forward.7} parent=1 // pred_check_branch
      %24 = sbr.rel (0) target = $region21
    $region20: #{transformer_forward.7} parent=1 // pred_region
      %26 = vsyncadd [#allocation3], 0
      %s27 = sshll.u32 %s4, 4
      %s28 = int_to_ptr.hbm [resolvable:$true] %s27
      %s29 = sshll.u32 [#allocation2], 4
      %s30 = int_to_ptr.vmem [resolvable:$true] %s29
      %35 = dma.hbm_to_vmem [thread:$0]  %s28, 1024, %s30, [#allocation3], 64, 64, 4
    $region21: #{transformer_forward.7} parent=1 // pred_fallthru
      _
    // Predicated region
    $region22: #{transformer_forward.7} parent=1 // pred_check
      _
    $region23: #{transformer_forward.7} parent=1 // pred_check_branch
      %37 = sbr.rel (0) target = $region25
    $region24: #{transformer_forward.7} parent=1 // pred_region
      _
    $region25: #{transformer_forward.7} parent=1 // pred_fallthru
      _
    // Predicated region
    $region26: #{transformer_forward.7} parent=1 // pred_check
      _
    $region27: #{transformer_forward.7} parent=1 // pred_check_branch
      %39 = sbr.rel (0) target = $region29
    $region28: #{transformer_forward.7} parent=1 // pred_region
      %41 = dma.done [#allocation3], 1024
    $region29: #{transformer_forward.7} parent=1 // pred_fallthru
      _
    %v42 = vld [vmem:[%s0] sm:$0xff]
    %v43 = vld [vmem:[%s0 + $0x8] sm:$0xff]
    %v44 = vld [vmem:[%s2] sm:$0x1]
    %v45 = vld [vmem:[%s3] sm:$0x1]
    %46 = vadd.xlane.f32.xlu0 %v42
    %v47 = vpop.xlane.xlu0 %46
    %48 = vadd.xlane.f32.xlu0 %v43
    %v49 = vpop.xlane.xlu0 %48
    %v50 = vmul.f32 %v47, 0.03125
    %v51 = vmul.f32 %v49, 0.03125
    %v52 = vmul.f32 %v42, %v42
    %v53 = vmul.f32 %v43, %v43
    %54 = vadd.xlane.f32.xlu0 %v52
    %v55 = vpop.xlane.xlu0 %54
    %56 = vadd.xlane.f32.xlu0 %v53
    %v57 = vpop.xlane.xlu0 %56
    %v58 = vmul.f32 %v55, 0.03125
    %v59 = vmul.f32 %v57, 0.03125
    %v60 = vmul.f32 %v50, %v50
    %v61 = vmul.f32 %v51, %v51
    %v62 = vsub.f32 %v58, %v60
    %v63 = vsub.f32 %v59, %v61
    %v64 = vsub.f32 %v42, %v50
    %v65 = vsub.f32 %v43, %v51
    %v66 = vadd.f32 %v62, 1e-05
    %v67 = vadd.f32 %v63, 1e-05
    %v68 = vrsqrt.pop %v66
    %v69 = vmul.f32 %v68, %v66
    %v70 = vmul.f32 %v69, %v68
    %v71 = vmul.f32 0.5, %v70
    %v72 = vsub.f32 1.5, %v71
    %v73 = vmul.f32 %v68, %v72
    %vm74 = vweird.f32 %v66
    %vm75 = vweird.f32 %v68
    %vm76 = vmor %vm74, %vm75
    %v77 = vsel %vm76, %v68, %v73
    %v78 = vrsqrt.pop %v67
    %v79 = vmul.f32 %v78, %v67
    %v80 = vmul.f32 %v79, %v78
    %v81 = vmul.f32 0.5, %v80
    %v82 = vsub.f32 1.5, %v81
    %v83 = vmul.f32 %v78, %v82
    %vm84 = vweird.f32 %v67
    %vm85 = vweird.f32 %v78
    %vm86 = vmor %vm84, %vm85
    %v87 = vsel %vm86, %v78, %v83
    %v88 = vmul.f32 %v64, %v77
    %v89 = vmul.f32 %v65, %v87
    %v91 = vperm.slane %v44, 0
    %v93 = vmul.f32 %v88, %v91
    %v94 = vmul.f32 %v89, %v91
    %v96 = vperm.slane %v45, 0
    %v98 = vadd.f32 %v93, %v96
    %v99 = vadd.f32 %v94, %v96
    %v100 = vpack.c.bf16 %v99, %v98
    %v101 = vld [vmem:[#allocation2] sm:$0xf]
    %v102 = vld [vmem:[#allocation2 + $0x4] sm:$0xf]
    %v103 = vld [vmem:[#allocation2 + $0x8] sm:$0xf]
    %v104 = vld [vmem:[#allocation2 + $0xc] sm:$0xf]
    %v105 = vld [vmem:[#allocation2 + $0x10] sm:$0xf]
    %v106 = vld [vmem:[#allocation2 + $0x14] sm:$0xf]
    %v107 = vld [vmem:[#allocation2 + $0x18] sm:$0xf]
    %v108 = vld [vmem:[#allocation2 + $0x1c] sm:$0xf]
    %v109 = vld [vmem:[#allocation2 + $0x20] sm:$0xf]
    %v110 = vld [vmem:[#allocation2 + $0x24] sm:$0xf]
    %v111 = vld [vmem:[#allocation2 + $0x28] sm:$0xf]
    %v112 = vld [vmem:[#allocation2 + $0x2c] sm:$0xf]
    %v113 = vld [vmem:[#allocation2 + $0x30] sm:$0xf]
    %v114 = vld [vmem:[#allocation2 + $0x34] sm:$0xf]
    %v115 = vld [vmem:[#allocation2 + $0x38] sm:$0xf]
    %v116 = vld [vmem:[#allocation2 + $0x3c] sm:$0xf]
    %v117 = vld [vmem:[%s5] sm:$0x1]
    %v119 = vperm.slane %v117, 0
    %v137 = vunpack.c.l.b16 %v101
    %v138 = vunpack.c.l.b16 %v102
    %v139 = vunpack.c.l.b16 %v103
    %v140 = vunpack.c.l.b16 %v104
    %v141 = vunpack.c.l.b16 %v105
    %v142 = vunpack.c.l.b16 %v106
    %v143 = vunpack.c.l.b16 %v107
    %v144 = vunpack.c.l.b16 %v108
    %v145 = vunpack.c.l.b16 %v109
    %v146 = vunpack.c.l.b16 %v110
    %v147 = vunpack.c.l.b16 %v111
    %v148 = vunpack.c.l.b16 %v112
    %v149 = vunpack.c.l.b16 %v113
    %v150 = vunpack.c.l.b16 %v114
    %v151 = vunpack.c.l.b16 %v115
    %v152 = vunpack.c.l.b16 %v116
    %v153 = vpack.c.b16 %v138, %v137
    %v154 = vpack.c.b16 %v140, %v139
    %v155 = vpack.c.b16 %v142, %v141
    %v156 = vpack.c.b16 %v144, %v143
    %v157 = vpack.c.b16 %v146, %v145
    %v158 = vpack.c.b16 %v148, %v147
    %v159 = vpack.c.b16 %v150, %v149
    %v160 = vpack.c.b16 %v152, %v151
    %169 = vmatpush.bf16.msra.mxu0 %v160
    %170 = vmatpush.bf16.msra.mxu0 %v159
    %171 = vmatpush.bf16.msra.mxu0 %v158
    %172 = vmatpush.bf16.msra.mxu0 %v157
    %173 = vmatpush.bf16.msra.mxu0 %v156
    %174 = vmatpush.bf16.msra.mxu0 %v155
    %175 = vmatpush.bf16.msra.mxu0 %v154
    %176 = vmatpush.bf16.msra.mxu0 %v153
    %177 = vmatmul.bf16.gmra.mxu0 %v100
    %v178 = vpop.f32.mrf.mxu0
    %v179 = vadd.f32 %v119, %v178
    %v180 = vpop.f32.mrf.mxu0
    %v181 = vadd.f32 %v119, %v180
    %182 = vdwg.mxu0
    %v183 = vld [vmem:[%s1] sm:$0xff]
    %v184 = vld [vmem:[%s1 + $0x8] sm:$0xff]
    %vm185 = vcmp.ne.f32.partialorder %v183, -100.0
    %vm186 = vcmp.ne.f32.partialorder %v184, -100.0
    %v187 = vsel %vm185, %v179, 0.0
    %v188 = vsel %vm186, %v181, 0.0
    %v189 = vsel %vm185, %v183, 0.0
    %v190 = vsel %vm186, %v184, 0.0
    %v191 = vsub.f32 %v187, %v189
    %v192 = vsub.f32 %v188, %v190
    %v193 = vand.u32 2147483647, %v191
    %v194 = vand.u32 2147483647, %v192
    %v195 = vadd.f32 %v193, %v194
    %196 = vadd.xlane.f32.xlu0 %v195
    %v197 = vpop.xlane.xlu0 %196
    %v198 = vrot.slane %v197, 4
    %v199 = vadd.f32 %v197, %v198
    %v200 = vrot.slane %v199, 2
    %v201 = vadd.f32 %v199, %v200
    %v202 = vrot.slane %v201, 1
    %v203 = vadd.f32 %v201, %v202
    %s204 = vtos %v203
    %v205 = vstv %s204
    %v206 = vsel %vm185, 1, 0
    %v207 = vsel %vm186, 1, 0
    %v208 = vcvt.s32.f32 %v206
    %v209 = vcvt.s32.f32 %v207
    %v210 = vadd.f32 %v208, %v209
    %211 = vadd.xlane.f32.xlu0 %v210
    %v212 = vpop.xlane.xlu0 %211
    %v213 = vrot.slane %v212, 4
    %v214 = vadd.f32 %v212, %v213
    %v215 = vrot.slane %v214, 2
    %v216 = vadd.f32 %v214, %v215
    %v217 = vrot.slane %v216, 1
    %v218 = vadd.f32 %v216, %v217
    %s219 = vtos %v218
    %v220 = vstv %s219
    %221 = vst [vmem:[%s6] sm:$0xff] %v187
    %222 = vst [vmem:[%s6 + $0x8] sm:$0xff] %v188
    %v223 = vrcp.pop %v220
    %v224 = vmul.f32 %v220, %v223
    %v225 = vsub.f32 1.0, %v224
    %v226 = vmul.f32 %v223, %v225
    %v227 = vadd.f32 %v223, %v226
    %vm228 = vweird.f32 %v220
    %vm229 = vweird.f32 %v223
    %vm230 = vmor %vm228, %vm229
    %v231 = vsel %vm230, %v223, %v227
    %v232 = vand.u32 2147483647, %v220
    %vm233 = vcmp.eq.f32.partialorder %v232, 8.507059e+37
    %v234 = vand.u32 %v220, 2147483648
    %v235 = vor.u32 1.1754944e-38, %v234
    %v236 = vsel %vm233, %v235, %v231
    %v237 = vmul.f32 %v205, %v236
    %vm238 = vcmask 0
    %239 = vst.msk [vmem:[#allocation5] sm:$0x1] %vm238, %v237
    // Predicated region
    $region30: #{transformer_forward.7} parent=1 // pred_check
      _
    $region31: #{transformer_forward.7} parent=1 // pred_check_branch
      %241 = sbr.rel (0) target = $region33
    $region32: #{transformer_forward.7} parent=1 // pred_region
      _
    $region33: #{transformer_forward.7} parent=1 // pred_fallthru
      _
    // Predicated region
    $region34: #{transformer_forward.7} parent=1 // pred_check
      _
    $region35: #{transformer_forward.7} parent=1 // pred_check_branch
      %243 = sbr.rel (0) target = $region37
    $region36: #{transformer_forward.7} parent=1 // pred_region
      %245 = vsyncadd [#allocation4], 0
      %s247 = sshll.u32 [#allocation5], 4
      %s248 = int_to_ptr.vmem [resolvable:$true] %s247
      %s249 = sshll.u32 %s7, 4
      %s250 = int_to_ptr.hbm [resolvable:$true] %s249
      %252 = dma.vmem_to_hbm [thread:$0]  %s248, 16, %s250, [#allocation4]
    $region37: #{transformer_forward.7} parent=1 // pred_fallthru
      _
    // Predicated region
    $region38: #{transformer_forward.7} parent=1 // pred_check
      _
    $region39: #{transformer_forward.7} parent=1 // pred_check_branch
      %254 = sbr.rel (0) target = $region41
    $region40: #{transformer_forward.7} parent=1 // pred_region
      _
    $region41: #{transformer_forward.7} parent=1 // pred_fallthru
      _
    // Predicated region
    $region42: #{transformer_forward.7} parent=1 // pred_check
      _
    $region43: #{transformer_forward.7} parent=1 // pred_check_branch
      %256 = sbr.rel (0) target = $region45
    $region44: #{transformer_forward.7} parent=1 // pred_region
      %258 = dma.done [#allocation4], 16
    $region45: #{transformer_forward.7} parent=1 // pred_fallthru
      _
    %259 = vsyncpa [#allocation3], 1
    %260 = vsyncpa [#allocation4], 1

// kernel: transformer_forward.4
$region0: #{transformer_forward.4}
  #allocation0 [shape = 'u32[]', space=smem, size = 0x4, offset = 0x4, fixed_abs, tag = 'smem constant byte address 0x4 - core index']
  #allocation1 [shape = 'u32[72,128]{1,0:T(1,128)}', space=vmem, size = 0x9000, scoped, tag = 'internal scratch']
  #allocation2 [shape = 'f32[1,8,128]{2,1,0:T(8,128)}', space=vmem, size = 0x1000, scoped, tag = 'scratch operand']
  %s0 = inlined_call_operand.vmem [shape: f32[2,8,128], index: 0, kind: input, shape index: {}]
  %s1 = inlined_call_operand.vmem [shape: f32[2,1,8], index: 1, kind: input, shape index: {}]
  %s2 = inlined_call_operand.vmem [shape: f32[8,4], index: 2, kind: input, shape index: {}]
  %s3 = inlined_call_operand.vmem [shape: f32[8,4], index: 3, kind: input, shape index: {}]
  %s4 = inlined_call_operand.vmem [shape: f32[2,1,128], index: 4, kind: input, shape index: {}]
  %s5 = inlined_call_operand.vmem [shape: f32[2,1,128], index: 5, kind: input, shape index: {}]
  %s6 = inlined_call_operand.hbm [shape: bf16[2,128,384], index: 6, kind: input, shape index: {}]
  %s7 = inlined_call_operand.vmem [shape: f32[2,1,384], index: 7, kind: input, shape index: {}]
  %s8 = inlined_call_operand.vmem [shape: bf16[2,32,128], index: 8, kind: input, shape index: {}]
  %s9 = inlined_call_operand.vmem [shape: f32[2,1,128], index: 9, kind: input, shape index: {}]
  %s10 = inlined_call_operand.vmem [shape: f32[2,1,128], index: 10, kind: input, shape index: {}]
  %s11 = inlined_call_operand.vmem [shape: f32[2,1,128], index: 11, kind: input, shape index: {}]
  %s12 = inlined_call_operand.vmem [shape: bf16[2,128,128], index: 12, kind: input, shape index: {}]
  %s13 = inlined_call_operand.vmem [shape: f32[2,1,128], index: 13, kind: input, shape index: {}]
  %s14 = inlined_call_operand.hbm [shape: bf16[2,128,128], index: 14, kind: input, shape index: {}]
  %s15 = inlined_call_operand.vmem [shape: f32[2,1,128], index: 15, kind: input, shape index: {}]
  %s16 = inlined_call_operand.vmem [shape: bf16[2,8,128], index: 16, kind: output, shape index: {}]
  %s17 = sld [smem:[#allocation0]]
  $region113: #{transformer_forward.4} parent=0
    _
  %s19 = ssub.s32 1, %s17
  %s20 = scalar_select 0, %s19, %s17
  $region1: #{transformer_forward.4} parent=0
    #allocation3 [shape = 'u8[196608]{0}', space=vmem, size = 0x30000, scoped, tag = 'input window, operand 6']
    #allocation4 [shape = 's32[2]{0}', space=sflag, size = 0x8, scoped, tag = 'scoped memory for transformer_forward.4']
    #allocation5 [shape = 'u8[65536]{0}', space=vmem, size = 0x10000, scoped, tag = 'input window, operand 14']
    #allocation6 [shape = 's32[2]{0}', space=sflag, size = 0x8, scoped, tag = 'scoped memory for transformer_forward.4']
    %21 = vsyncpa [#allocation4], 0
    %s22 = scalar_lea.sflag [#allocation4], 1
    %23 = vsyncpa %s22, 0
    %24 = vsyncpa [#allocation6], 0
    %s25 = scalar_lea.sflag [#allocation6], 1
    %26 = vsyncpa %s25, 0
    loop: start=0, step=1, limit=6
    $region2: #{transformer_forward.4} parent=1 // loop_pre_header
      _
    $region3: #{transformer_forward.4} parent=1 // loop_header
      %s28 = sphi 0, %s32
      %p29 = scmp.ge.s32.totalorder %s28, 6
      %s35 = sphi 0, %s47
      %s36 = sphi 0, %s43
      %s37 = sphi 0, %s35
      %s38 = sphi 0, %s36
      %s39 = sphi 0, %s37
      %s40 = sphi 0, %s38
      %s50 = sphi 0, %s52
      %s53 = sphi 0, %s50
      %s54 = sphi 0, %s53
      %s70 = sphi 0, %s54
      %s76 = sphi 0, %s78
      %s79 = sphi 0, %s76
      %s80 = sphi 0, %s79
      %s96 = sphi 0, %s80
      %s100 = sphi 0, %s100
      %s102 = sphi 0, %s100
      %s103 = sphi 0, %s102
      %s117 = sphi 0, %s103
      %s121 = sphi 0, %s121
      %s123 = sphi 0, %s121
      %s124 = sphi 0, %s123
      %s138 = sphi 0, %s124
      %s144 = sphi 0, %s146
      %s147 = sphi 0, %s144
      %s148 = sphi 0, %s147
      %s164 = sphi 0, %s148
      %s170 = sphi 0, %s172
      %s173 = sphi 0, %s170
      %s174 = sphi 0, %s173
      %s190 = sphi 0, %s174
      %s196 = sphi 0, %s198
      %s199 = sphi 0, %s196
      %s200 = sphi 0, %s199
      %s216 = sphi 0, %s200
      %s222 = sphi 0, %s224
      %s225 = sphi 0, %s222
      %s226 = sphi 0, %s225
      %s242 = sphi 0, %s226
      %s248 = sphi 0, %s250
      %s251 = sphi 0, %s248
      %s252 = sphi 0, %s251
      %s268 = sphi 0, %s252
      %s274 = sphi 0, %s276
      %s277 = sphi 0, %s274
      %s278 = sphi 0, %s277
      %s294 = sphi 0, %s278
      %s300 = sphi 0, %s302
      %s303 = sphi 0, %s300
      %s304 = sphi 0, %s303
      %s320 = sphi 0, %s304
      %s326 = sphi 0, %s328
      %s329 = sphi 0, %s326
      %s330 = sphi 0, %s329
      %s346 = sphi 0, %s330
      %s352 = sphi 0, %s354
      %s355 = sphi 0, %s352
      %s356 = sphi 0, %s355
      %s372 = sphi 0, %s356
      %s378 = sphi 0, %s380
      %s381 = sphi 0, %s378
      %s382 = sphi 0, %s381
      %s398 = sphi 0, %s382
      %s404 = sphi 0, %s406
      %s407 = sphi 0, %s404
      %s408 = sphi 0, %s407
      %s424 = sphi 0, %s408
      %s430 = sphi 0, %s432
      %s433 = sphi 0, %s430
      %s434 = sphi 0, %s433
      %s450 = sphi 0, %s434
      %s456 = sphi 0, %s458
      %s459 = sphi 0, %s456
      %s460 = sphi 0, %s459
      %s476 = sphi 0, %s460
    $region4: #{transformer_forward.4} parent=1 // loop_header_branch
      %31 = sbr.rel (%p29) target = $region8
    $region5: #{transformer_forward.4} parent=1 // loop_body
      %s33 = ssub.s32 %s28, 1
      %s34 = ssub.s32 %s28, 2
      %s41 = sadd.s32 1, %s36
      %p42 = scmp.ge.s32.totalorder %s41, 2
      %s43 = scalar_select %p42, 0, %s41
      %s44 = sadd.s32 1, %s35
      %s45 = scalar_select %p42, %s44, %s35
      %p46 = scmp.ge.s32.totalorder %s45, 2
      %s47 = scalar_select %p46, 0, %s45
      %s48 = ssub.s32 %s35, %s47
      %p49 = scmp.eq.s32.totalorder %s48, 0
      %s51 = sadd.s32 %s50, 1
      %s52 = scalar_select %p49, %s50, %s51
      %p55 = pneg %p49
      %p56 = scmp.eq.s32.totalorder %s28, 3
      %p57 = por %p55, %p56
      %p58 = scmp.ne.s32.totalorder %s50, %s53
      %p59 = scmp.eq.s32.totalorder %s28, 0
      %p60 = por %p58, %p59
      %p61 = scmp.ne.s32.totalorder %s50, %s53
      %p62 = scmp.eq.s32.totalorder %s33, 3
      %p63 = por %p61, %p62
      %p64 = scmp.ne.s32.totalorder %s53, %s54
      %p65 = scmp.eq.s32.totalorder %s33, 0
      %p66 = por %p64, %p65
      %p67 = scmp.ne.s32.totalorder %s53, %s54
      %p68 = scmp.eq.s32.totalorder %s34, 3
      %p69 = por %p67, %p68
      %p71 = scmp.ne.s32.totalorder %s54, %s70
      %p72 = scmp.eq.s32.totalorder %s34, 0
      %p73 = por %p71, %p72
      %s74 = ssub.s32 %s35, %s47
      %p75 = scmp.eq.s32.totalorder %s74, 0
      %s77 = sadd.s32 %s76, 1
      %s78 = scalar_select %p75, %s76, %s77
      %p81 = pneg %p75
      %p82 = scmp.eq.s32.totalorder %s28, 3
      %p83 = por %p81, %p82
      %p84 = scmp.ne.s32.totalorder %s76, %s79
      %p85 = scmp.eq.s32.totalorder %s28, 0
      %p86 = por %p84, %p85
      %p87 = scmp.ne.s32.totalorder %s76, %s79
      %p88 = scmp.eq.s32.totalorder %s33, 3
      %p89 = por %p87, %p88
      %p90 = scmp.ne.s32.totalorder %s79, %s80
      %p91 = scmp.eq.s32.totalorder %s33, 0
      %p92 = por %p90, %p91
      %p93 = scmp.ne.s32.totalorder %s79, %s80
      %p94 = scmp.eq.s32.totalorder %s34, 3
      %p95 = por %p93, %p94
      %p97 = scmp.ne.s32.totalorder %s80, %s96
      %p98 = scmp.eq.s32.totalorder %s34, 0
      %p99 = por %p97, %p98
      %s101 = sadd.s32 %s100, 1
      %p104 = scmp.eq.s32.totalorder %s28, 3
      %p105 = scmp.ne.s32.totalorder %s100, %s102
      %p106 = scmp.eq.s32.totalorder %s28, 0
      %p107 = por %p105, %p106
      %p108 = scmp.ne.s32.totalorder %s100, %s102
      %p109 = scmp.eq.s32.totalorder %s33, 3
      %p110 = por %p108, %p109
      %p111 = scmp.ne.s32.totalorder %s102, %s103
      %p112 = scmp.eq.s32.totalorder %s33, 0
      %p113 = por %p111, %p112
      %p114 = scmp.ne.s32.totalorder %s102, %s103
      %p115 = scmp.eq.s32.totalorder %s34, 3
      %p116 = por %p114, %p115
      %p118 = scmp.ne.s32.totalorder %s103, %s117
      %p119 = scmp.eq.s32.totalorder %s34, 0
      %p120 = por %p118, %p119
      %s122 = sadd.s32 %s121, 1
      %p125 = scmp.eq.s32.totalorder %s28, 3
      %p126 = scmp.ne.s32.totalorder %s121, %s123
      %p127 = scmp.eq.s32.totalorder %s28, 0
      %p128 = por %p126, %p127
      %p129 = scmp.ne.s32.totalorder %s121, %s123
      %p130 = scmp.eq.s32.totalorder %s33, 3
      %p131 = por %p129, %p130
      %p132 = scmp.ne.s32.totalorder %s123, %s124
      %p133 = scmp.eq.s32.totalorder %s33, 0
      %p134 = por %p132, %p133
      %p135 = scmp.ne.s32.totalorder %s123, %s124
      %p136 = scmp.eq.s32.totalorder %s34, 3
      %p137 = por %p135, %p136
      %p139 = scmp.ne.s32.totalorder %s124, %s138
      %p140 = scmp.eq.s32.totalorder %s34, 0
      %p141 = por %p139, %p140
      %s142 = ssub.s32 %s36, %s43
      %p143 = scmp.eq.s32.totalorder %s142, 0
      %s145 = sadd.s32 %s144, 1
      %s146 = scalar_select %p143, %s144, %s145
      %p149 = pneg %p143
      %p150 = scmp.eq.s32.totalorder %s28, 3
      %p151 = por %p149, %p150
      %p152 = scmp.ne.s32.totalorder %s144, %s147
      %p153 = scmp.eq.s32.totalorder %s28, 0
      %p154 = por %p152, %p153
      %p155 = scmp.ne.s32.totalorder %s144, %s147
      %p156 = scmp.eq.s32.totalorder %s33, 3
      %p157 = por %p155, %p156
      %p158 = scmp.ne.s32.totalorder %s147, %s148
      %p159 = scmp.eq.s32.totalorder %s33, 0
      %p160 = por %p158, %p159
      %p161 = scmp.ne.s32.totalorder %s147, %s148
      %p162 = scmp.eq.s32.totalorder %s34, 3
      %p163 = por %p161, %p162
      %p165 = scmp.ne.s32.totalorder %s148, %s164
      %p166 = scmp.eq.s32.totalorder %s34, 0
      %p167 = por %p165, %p166
      %s168 = ssub.s32 %s36, %s43
      %p169 = scmp.eq.s32.totalorder %s168, 0
      %s171 = sadd.s32 %s170, 1
      %s172 = scalar_select %p169, %s170, %s171
      %p175 = pneg %p169
      %p176 = scmp.eq.s32.totalorder %s28, 3
      %p177 = por %p175, %p176
      %p178 = scmp.ne.s32.totalorder %s170, %s173
      %p179 = scmp.eq.s32.totalorder %s28, 0
      %p180 = por %p178, %p179
      %p181 = scmp.ne.s32.totalorder %s170, %s173
      %p182 = scmp.eq.s32.totalorder %s33, 3
      %p183 = por %p181, %p182
      %p184 = scmp.ne.s32.totalorder %s173, %s174
      %p185 = scmp.eq.s32.totalorder %s33, 0
      %p186 = por %p184, %p185
      %p187 = scmp.ne.s32.totalorder %s173, %s174
      %p188 = scmp.eq.s32.totalorder %s34, 3
      %p189 = por %p187, %p188
      %p191 = scmp.ne.s32.totalorder %s174, %s190
      %p192 = scmp.eq.s32.totalorder %s34, 0
      %p193 = por %p191, %p192
      %s194 = ssub.s32 %s36, %s43
      %p195 = scmp.eq.s32.totalorder %s194, 0
      %s197 = sadd.s32 %s196, 1
      %s198 = scalar_select %p195, %s196, %s197
      %p201 = pneg %p195
      %p202 = scmp.eq.s32.totalorder %s28, 3
      %p203 = por %p201, %p202
      %p204 = scmp.ne.s32.totalorder %s196, %s199
      %p205 = scmp.eq.s32.totalorder %s28, 0
      %p206 = por %p204, %p205
      %p207 = scmp.ne.s32.totalorder %s196, %s199
      %p208 = scmp.eq.s32.totalorder %s33, 3
      %p209 = por %p207, %p208
      %p210 = scmp.ne.s32.totalorder %s199, %s200
      %p211 = scmp.eq.s32.totalorder %s33, 0
      %p212 = por %p210, %p211
      %p213 = scmp.ne.s32.totalorder %s199, %s200
      %p214 = scmp.eq.s32.totalorder %s34, 3
      %p215 = por %p213, %p214
      %p217 = scmp.ne.s32.totalorder %s200, %s216
      %p218 = scmp.eq.s32.totalorder %s34, 0
      %p219 = por %p217, %p218
      %s220 = ssub.s32 %s36, %s43
      %p221 = scmp.eq.s32.totalorder %s220, 0
      %s223 = sadd.s32 %s222, 1
      %s224 = scalar_select %p221, %s222, %s223
      %p227 = pneg %p221
      %p228 = scmp.eq.s32.totalorder %s28, 3
      %p229 = por %p227, %p228
      %p230 = scmp.ne.s32.totalorder %s222, %s225
      %p231 = scmp.eq.s32.totalorder %s28, 0
      %p232 = por %p230, %p231
      %p233 = scmp.ne.s32.totalorder %s222, %s225
      %p234 = scmp.eq.s32.totalorder %s33, 3
      %p235 = por %p233, %p234
      %p236 = scmp.ne.s32.totalorder %s225, %s226
      %p237 = scmp.eq.s32.totalorder %s33, 0
      %p238 = por %p236, %p237
      %p239 = scmp.ne.s32.totalorder %s225, %s226
      %p240 = scmp.eq.s32.totalorder %s34, 3
      %p241 = por %p239, %p240
      %p243 = scmp.ne.s32.totalorder %s226, %s242
      %p244 = scmp.eq.s32.totalorder %s34, 0
      %p245 = por %p243, %p244
      %s246 = ssub.s32 %s36, %s43
      %p247 = scmp.eq.s32.totalorder %s246, 0
      %s249 = sadd.s32 %s248, 1
      %s250 = scalar_select %p247, %s248, %s249
      %p253 = pneg %p247
      %p254 = scmp.eq.s32.totalorder %s28, 3
      %p255 = por %p253, %p254
      %p256 = scmp.ne.s32.totalorder %s248, %s251
      %p257 = scmp.eq.s32.totalorder %s28, 0
      %p258 = por %p256, %p257
      %p259 = scmp.ne.s32.totalorder %s248, %s251
      %p260 = scmp.eq.s32.totalorder %s33, 3
      %p261 = por %p259, %p260
      %p262 = scmp.ne.s32.totalorder %s251, %s252
      %p263 = scmp.eq.s32.totalorder %s33, 0
      %p264 = por %p262, %p263
      %p265 = scmp.ne.s32.totalorder %s251, %s252
      %p266 = scmp.eq.s32.totalorder %s34, 3
      %p267 = por %p265, %p266
      %p269 = scmp.ne.s32.totalorder %s252, %s268
      %p270 = scmp.eq.s32.totalorder %s34, 0
      %p271 = por %p269, %p270
      %s272 = ssub.s32 %s36, %s43
      %p273 = scmp.eq.s32.totalorder %s272, 0
      %s275 = sadd.s32 %s274, 1
      %s276 = scalar_select %p273, %s274, %s275
      %p279 = pneg %p273
      %p280 = scmp.eq.s32.totalorder %s28, 3
      %p281 = por %p279, %p280
      %p282 = scmp.ne.s32.totalorder %s274, %s277
      %p283 = scmp.eq.s32.totalorder %s28, 0
      %p284 = por %p282, %p283
      %p285 = scmp.ne.s32.totalorder %s274, %s277
      %p286 = scmp.eq.s32.totalorder %s33, 3
      %p287 = por %p285, %p286
      %p288 = scmp.ne.s32.totalorder %s277, %s278
      %p289 = scmp.eq.s32.totalorder %s33, 0
      %p290 = por %p288, %p289
      %p291 = scmp.ne.s32.totalorder %s277, %s278
      %p292 = scmp.eq.s32.totalorder %s34, 3
      %p293 = por %p291, %p292
      %p295 = scmp.ne.s32.totalorder %s278, %s294
      %p296 = scmp.eq.s32.totalorder %s34, 0
      %p297 = por %p295, %p296
      %s298 = ssub.s32 %s36, %s43
      %p299 = scmp.eq.s32.totalorder %s298, 0
      %s301 = sadd.s32 %s300, 1
      %s302 = scalar_select %p299, %s300, %s301
      %p305 = pneg %p299
      %p306 = scmp.eq.s32.totalorder %s28, 3
      %p307 = por %p305, %p306
      %p308 = scmp.ne.s32.totalorder %s300, %s303
      %p309 = scmp.eq.s32.totalorder %s28, 0
      %p310 = por %p308, %p309
      %p311 = scmp.ne.s32.totalorder %s300, %s303
      %p312 = scmp.eq.s32.totalorder %s33, 3
      %p313 = por %p311, %p312
      %p314 = scmp.ne.s32.totalorder %s303, %s304
      %p315 = scmp.eq.s32.totalorder %s33, 0
      %p316 = por %p314, %p315
      %p317 = scmp.ne.s32.totalorder %s303, %s304
      %p318 = scmp.eq.s32.totalorder %s34, 3
      %p319 = por %p317, %p318
      %p321 = scmp.ne.s32.totalorder %s304, %s320
      %p322 = scmp.eq.s32.totalorder %s34, 0
      %p323 = por %p321, %p322
      %s324 = ssub.s32 %s36, %s43
      %p325 = scmp.eq.s32.totalorder %s324, 0
      %s327 = sadd.s32 %s326, 1
      %s328 = scalar_select %p325, %s326, %s327
      %p331 = pneg %p325
      %p332 = scmp.eq.s32.totalorder %s28, 3
      %p333 = por %p331, %p332
      %p334 = scmp.ne.s32.totalorder %s326, %s329
      %p335 = scmp.eq.s32.totalorder %s28, 0
      %p336 = por %p334, %p335
      %p337 = scmp.ne.s32.totalorder %s326, %s329
      %p338 = scmp.eq.s32.totalorder %s33, 3
      %p339 = por %p337, %p338
      %p340 = scmp.ne.s32.totalorder %s329, %s330
      %p341 = scmp.eq.s32.totalorder %s33, 0
      %p342 = por %p340, %p341
      %p343 = scmp.ne.s32.totalorder %s329, %s330
      %p344 = scmp.eq.s32.totalorder %s34, 3
      %p345 = por %p343, %p344
      %p347 = scmp.ne.s32.totalorder %s330, %s346
      %p348 = scmp.eq.s32.totalorder %s34, 0
      %p349 = por %p347, %p348
      %s350 = ssub.s32 %s36, %s43
      %p351 = scmp.eq.s32.totalorder %s350, 0
      %s353 = sadd.s32 %s352, 1
      %s354 = scalar_select %p351, %s352, %s353
      %p357 = pneg %p351
      %p358 = scmp.eq.s32.totalorder %s28, 3
      %p359 = por %p357, %p358
      %p360 = scmp.ne.s32.totalorder %s352, %s355
      %p361 = scmp.eq.s32.totalorder %s28, 0
      %p362 = por %p360, %p361
      %p363 = scmp.ne.s32.totalorder %s352, %s355
      %p364 = scmp.eq.s32.totalorder %s33, 3
      %p365 = por %p363, %p364
      %p366 = scmp.ne.s32.totalorder %s355, %s356
      %p367 = scmp.eq.s32.totalorder %s33, 0
      %p368 = por %p366, %p367
      %p369 = scmp.ne.s32.totalorder %s355, %s356
      %p370 = scmp.eq.s32.totalorder %s34, 3
      %p371 = por %p369, %p370
      %p373 = scmp.ne.s32.totalorder %s356, %s372
      %p374 = scmp.eq.s32.totalorder %s34, 0
      %p375 = por %p373, %p374
      %s376 = ssub.s32 %s36, %s43
      %p377 = scmp.eq.s32.totalorder %s376, 0
      %s379 = sadd.s32 %s378, 1
      %s380 = scalar_select %p377, %s378, %s379
      %p383 = pneg %p377
      %p384 = scmp.eq.s32.totalorder %s28, 3
      %p385 = por %p383, %p384
      %p386 = scmp.ne.s32.totalorder %s378, %s381
      %p387 = scmp.eq.s32.totalorder %s28, 0
      %p388 = por %p386, %p387
      %p389 = scmp.ne.s32.totalorder %s378, %s381
      %p390 = scmp.eq.s32.totalorder %s33, 3
      %p391 = por %p389, %p390
      %p392 = scmp.ne.s32.totalorder %s381, %s382
      %p393 = scmp.eq.s32.totalorder %s33, 0
      %p394 = por %p392, %p393
      %p395 = scmp.ne.s32.totalorder %s381, %s382
      %p396 = scmp.eq.s32.totalorder %s34, 3
      %p397 = por %p395, %p396
      %p399 = scmp.ne.s32.totalorder %s382, %s398
      %p400 = scmp.eq.s32.totalorder %s34, 0
      %p401 = por %p399, %p400
      %s402 = ssub.s32 %s36, %s43
      %p403 = scmp.eq.s32.totalorder %s402, 0
      %s405 = sadd.s32 %s404, 1
      %s406 = scalar_select %p403, %s404, %s405
      %p409 = pneg %p403
      %p410 = scmp.eq.s32.totalorder %s28, 3
      %p411 = por %p409, %p410
      %p412 = scmp.ne.s32.totalorder %s404, %s407
      %p413 = scmp.eq.s32.totalorder %s28, 0
      %p414 = por %p412, %p413
      %p415 = scmp.ne.s32.totalorder %s404, %s407
      %p416 = scmp.eq.s32.totalorder %s33, 3
      %p417 = por %p415, %p416
      %p418 = scmp.ne.s32.totalorder %s407, %s408
      %p419 = scmp.eq.s32.totalorder %s33, 0
      %p420 = por %p418, %p419
      %p421 = scmp.ne.s32.totalorder %s407, %s408
      %p422 = scmp.eq.s32.totalorder %s34, 3
      %p423 = por %p421, %p422
      %p425 = scmp.ne.s32.totalorder %s408, %s424
      %p426 = scmp.eq.s32.totalorder %s34, 0
      %p427 = por %p425, %p426
      %s428 = ssub.s32 %s36, %s43
      %p429 = scmp.eq.s32.totalorder %s428, 0
      %s431 = sadd.s32 %s430, 1
      %s432 = scalar_select %p429, %s430, %s431
      %p435 = pneg %p429
      %p436 = scmp.eq.s32.totalorder %s28, 3
      %p437 = por %p435, %p436
      %p438 = scmp.ne.s32.totalorder %s430, %s433
      %p439 = scmp.eq.s32.totalorder %s28, 0
      %p440 = por %p438, %p439
      %p441 = scmp.ne.s32.totalorder %s430, %s433
      %p442 = scmp.eq.s32.totalorder %s33, 3
      %p443 = por %p441, %p442
      %p444 = scmp.ne.s32.totalorder %s433, %s434
      %p445 = scmp.eq.s32.totalorder %s33, 0
      %p446 = por %p444, %p445
      %p447 = scmp.ne.s32.totalorder %s433, %s434
      %p448 = scmp.eq.s32.totalorder %s34, 3
      %p449 = por %p447, %p448
      %p451 = scmp.ne.s32.totalorder %s434, %s450
      %p452 = scmp.eq.s32.totalorder %s34, 0
      %p453 = por %p451, %p452
      %s454 = ssub.s32 %s35, %s47
      %p455 = scmp.eq.s32.totalorder %s454, 0
      %s457 = sadd.s32 %s456, 1
      %s458 = scalar_select %p455, %s456, %s457
      %p461 = pneg %p455
      %p462 = scmp.eq.s32.totalorder %s28, 3
      %p463 = por %p461, %p462
      %p464 = scmp.ne.s32.totalorder %s456, %s459
      %p465 = scmp.eq.s32.totalorder %s28, 0
      %p466 = por %p464, %p465
      %p467 = scmp.ne.s32.totalorder %s456, %s459
      %p468 = scmp.eq.s32.totalorder %s33, 3
      %p469 = por %p467, %p468
      %p470 = scmp.ne.s32.totalorder %s459, %s460
      %p471 = scmp.eq.s32.totalorder %s33, 0
      %p472 = por %p470, %p471
      %p473 = scmp.ne.s32.totalorder %s459, %s460
      %p474 = scmp.eq.s32.totalorder %s34, 3
      %p475 = por %p473, %p474
      %p477 = scmp.ne.s32.totalorder %s460, %s476
      %p478 = scmp.eq.s32.totalorder %s34, 0
      %p479 = por %p477, %p478
      %p480 = scmp.le.s32.totalorder 1, %s28
      %p481 = scmp.lt.s32.totalorder %s28, 5
      %p482 = pnand %p480, %p481
      %p483 = pneg %p482
      // Predicated region
      $region9: #{transformer_forward.4} parent=5 // pred_check
        _
      $region10: #{transformer_forward.4} parent=5 // pred_check_branch
        %485 = sbr.rel (%p482) target = $region12
      $region11: #{transformer_forward.4} parent=5 // pred_region
        %s486 = ssub.s32 %s28, 1
        // Predicated region
        $region13: #{transformer_forward.4} parent=11 // pred_check
          %p487 = pneg %p113
        $region14: #{transformer_forward.4} parent=11 // pred_check_branch
          %489 = sbr.rel (%p487) target = $region16
        $region15: #{transformer_forward.4} parent=11 // pred_region
          _
        $region16: #{transformer_forward.4} parent=11 // pred_fallthru
          _
        // Predicated region
        $region17: #{transformer_forward.4} parent=11 // pred_check
          %p490 = pneg %p134
        $region18: #{transformer_forward.4} parent=11 // pred_check_branch
          %492 = sbr.rel (%p490) target = $region20
        $region19: #{transformer_forward.4} parent=11 // pred_region
          _
        $region20: #{transformer_forward.4} parent=11 // pred_fallthru
          _
      $region12: #{transformer_forward.4} parent=5 // pred_fallthru
        _
      %p493 = scmp.lt.s32.totalorder %s28, 4
      // Predicated region
      $region21: #{transformer_forward.4} parent=5 // pred_check
        %p494 = pneg %p493
      $region22: #{transformer_forward.4} parent=5 // pred_check_branch
        %496 = sbr.rel (%p494) target = $region24
      $region23: #{transformer_forward.4} parent=5 // pred_region
        // Predicated region
        $region25: #{transformer_forward.4} parent=23 // pred_check
          %p497 = pneg %p60
        $region26: #{transformer_forward.4} parent=23 // pred_check_branch
          %499 = sbr.rel (%p497) target = $region28
        $region27: #{transformer_forward.4} parent=23 // pred_region
          %p500 = scmp.lt.s32.totalorder %s35, 1
          %s501 = scalar_select %p500, %s35, 1
          %s502 = smul.addr %s501, 8
          %s503 = scalar_lea.vmem %s0, %s502
        $region28: #{transformer_forward.4} parent=23 // pred_fallthru
          _
        // Predicated region
        $region29: #{transformer_forward.4} parent=23 // pred_check
          %p504 = pneg %p86
        $region30: #{transformer_forward.4} parent=23 // pred_check_branch
          %506 = sbr.rel (%p504) target = $region32
        $region31: #{transformer_forward.4} parent=23 // pred_region
          %p507 = scmp.lt.s32.totalorder %s35, 1
          %s508 = scalar_select %p507, %s35, 1
          %s509 = scalar_lea.vmem %s1, %s508
        $region32: #{transformer_forward.4} parent=23 // pred_fallthru
          _
        // Predicated region
        $region33: #{transformer_forward.4} parent=23 // pred_check
          %p510 = pneg %p154
        $region34: #{transformer_forward.4} parent=23 // pred_check_branch
          %512 = sbr.rel (%p510) target = $region36
        $region35: #{transformer_forward.4} parent=23 // pred_region
          %p513 = scmp.lt.s32.totalorder %s36, 1
          %s514 = scalar_select %p513, %s36, 1
          %s515 = scalar_lea.vmem %s4, %s514
        $region36: #{transformer_forward.4} parent=23 // pred_fallthru
          _
        // Predicated region
        $region37: #{transformer_forward.4} parent=23 // pred_check
          %p516 = pneg %p180
        $region38: #{transformer_forward.4} parent=23 // pred_check_branch
          %518 = sbr.rel (%p516) target = $region40
        $region39: #{transformer_forward.4} parent=23 // pred_region
          %p519 = scmp.lt.s32.totalorder %s36, 1
          %s520 = scalar_select %p519, %s36, 1
          %s521 = scalar_lea.vmem %s5, %s520
        $region40: #{transformer_forward.4} parent=23 // pred_fallthru
          _
        // Predicated region
        $region41: #{transformer_forward.4} parent=23 // pred_check
          %p522 = pneg %p206
        $region42: #{transformer_forward.4} parent=23 // pred_check_branch
          %524 = sbr.rel (%p522) target = $region44
        $region43: #{transformer_forward.4} parent=23 // pred_region
          %s525 = sand.u32 %s196, 1
          %s526 = scalar_lea.sflag [#allocation4], %s525
          %s527 = sand.u32 %s196, 1
          %s528 = smul.addr %s527, 192
          %s529 = scalar_lea.vmem [#allocation3], %s528
          %531 = vsyncadd %s526, 0
          %s532 = smul.addr %s36, 48
          %s533 = smul.addr %s532, 4
          %s534 = scalar_lea.hbm %s6, %s533
          %s535 = sshll.u32 %s534, 4
          %s536 = int_to_ptr.hbm [resolvable:$true] %s535
          %s537 = sshll.u32 %s529, 4
          %s538 = int_to_ptr.vmem [resolvable:$true] %s537
          %543 = dma.hbm_to_vmem [thread:$0]  %s536, 3072, %s538, %s526, 192, 192, 12
        $region44: #{transformer_forward.4} parent=23 // pred_fallthru
          _
        // Predicated region
        $region45: #{transformer_forward.4} parent=23 // pred_check
          %p544 = pneg %p232
        $region46: #{transformer_forward.4} parent=23 // pred_check_branch
          %546 = sbr.rel (%p544) target = $region48
        $region47: #{transformer_forward.4} parent=23 // pred_region
          %p547 = scmp.lt.s32.totalorder %s36, 1
          %s548 = scalar_select %p547, %s36, 1
          %s549 = smul.addr %s548, 3
          %s550 = scalar_lea.vmem %s7, %s549
        $region48: #{transformer_forward.4} parent=23 // pred_fallthru
          _
        // Predicated region
        $region49: #{transformer_forward.4} parent=23 // pred_check
          %p551 = pneg %p258
        $region50: #{transformer_forward.4} parent=23 // pred_check_branch
          %553 = sbr.rel (%p551) target = $region52
        $region51: #{transformer_forward.4} parent=23 // pred_region
          %p554 = scmp.lt.s32.totalorder %s36, 1
          %s555 = scalar_select %p554, %s36, 1
          %s556 = smul.addr %s555, 4
          %s557 = smul.addr %s556, 4
          %s558 = scalar_lea.vmem %s8, %s557
        $region52: #{transformer_forward.4} parent=23 // pred_fallthru
          _
        // Predicated region
        $region53: #{transformer_forward.4} parent=23 // pred_check
          %p559 = pneg %p284
        $region54: #{transformer_forward.4} parent=23 // pred_check_branch
          %561 = sbr.rel (%p559) target = $region56
        $region55: #{transformer_forward.4} parent=23 // pred_region
          %p562 = scmp.lt.s32.totalorder %s36, 1
          %s563 = scalar_select %p562, %s36, 1
          %s564 = scalar_lea.vmem %s9, %s563
        $region56: #{transformer_forward.4} parent=23 // pred_fallthru
          _
        // Predicated region
        $region57: #{transformer_forward.4} parent=23 // pred_check
          %p565 = pneg %p310
        $region58: #{transformer_forward.4} parent=23 // pred_check_branch
          %567 = sbr.rel (%p565) target = $region60
        $region59: #{transformer_forward.4} parent=23 // pred_region
          %p568 = scmp.lt.s32.totalorder %s36, 1
          %s569 = scalar_select %p568, %s36, 1
          %s570 = scalar_lea.vmem %s10, %s569
        $region60: #{transformer_forward.4} parent=23 // pred_fallthru
          _
        // Predicated region
        $region61: #{transformer_forward.4} parent=23 // pred_check
          %p571 = pneg %p336
        $region62: #{transformer_forward.4} parent=23 // pred_check_branch
          %573 = sbr.rel (%p571) target = $region64
        $region63: #{transformer_forward.4} parent=23 // pred_region
          %p574 = scmp.lt.s32.totalorder %s36, 1
          %s575 = scalar_select %p574, %s36, 1
          %s576 = scalar_lea.vmem %s11, %s575
        $region64: #{transformer_forward.4} parent=23 // pred_fallthru
          _
        // Predicated region
        $region65: #{transformer_forward.4} parent=23 // pred_check
          %p577 = pneg %p362
        $region66: #{transformer_forward.4} parent=23 // pred_check_branch
          %579 = sbr.rel (%p577) target = $region68
        $region67: #{transformer_forward.4} parent=23 // pred_region
          %p580 = scmp.lt.s32.totalorder %s36, 1
          %s581 = scalar_select %p580, %s36, 1
          %s582 = smul.addr %s581, 16
          %s583 = smul.addr %s582, 4
          %s584 = scalar_lea.vmem %s12, %s583
        $region68: #{transformer_forward.4} parent=23 // pred_fallthru
          _
        // Predicated region
        $region69: #{transformer_forward.4} parent=23 // pred_check
          %p585 = pneg %p388
        $region70: #{transformer_forward.4} parent=23 // pred_check_branch
          %587 = sbr.rel (%p585) target = $region72
        $region71: #{transformer_forward.4} parent=23 // pred_region
          %p588 = scmp.lt.s32.totalorder %s36, 1
          %s589 = scalar_select %p588, %s36, 1
          %s590 = scalar_lea.vmem %s13, %s589
        $region72: #{transformer_forward.4} parent=23 // pred_fallthru
          _
        // Predicated region
        $region73: #{transformer_forward.4} parent=23 // pred_check
          %p591 = pneg %p414
        $region74: #{transformer_forward.4} parent=23 // pred_check_branch
          %593 = sbr.rel (%p591) target = $region76
        $region75: #{transformer_forward.4} parent=23 // pred_region
          %s594 = sand.u32 %s404, 1
          %s595 = scalar_lea.sflag [#allocation6], %s594
          %s596 = sand.u32 %s404, 1
          %s597 = smul.addr %s596, 64
          %s598 = scalar_lea.vmem [#allocation5], %s597
          %600 = vsyncadd %s595, 0
          %s601 = smul.addr %s36, 16
          %s602 = smul.addr %s601, 4
          %s603 = scalar_lea.hbm %s14, %s602
          %s604 = sshll.u32 %s603, 4
          %s605 = int_to_ptr.hbm [resolvable:$true] %s604
          %s606 = sshll.u32 %s598, 4
          %s607 = int_to_ptr.vmem [resolvable:$true] %s606
          %612 = dma.hbm_to_vmem [thread:$0]  %s605, 1024, %s607, %s595, 64, 64, 4
        $region76: #{transformer_forward.4} parent=23 // pred_fallthru
          _
        // Predicated region
        $region77: #{transformer_forward.4} parent=23 // pred_check
          %p613 = pneg %p440
        $region78: #{transformer_forward.4} parent=23 // pred_check_branch
          %615 = sbr.rel (%p613) target = $region80
        $region79: #{transformer_forward.4} parent=23 // pred_region
          %p616 = scmp.lt.s32.totalorder %s36, 1
          %s617 = scalar_select %p616, %s36, 1
          %s618 = scalar_lea.vmem %s15, %s617
        $region80: #{transformer_forward.4} parent=23 // pred_fallthru
          _
      $region24: #{transformer_forward.4} parent=5 // pred_fallthru
        _
      %p619 = scmp.le.s32.totalorder 1, %s28
      %p620 = scmp.lt.s32.totalorder %s28, 5
      %p621 = pnand %p619, %p620
      %p622 = pneg %p621
      // Predicated region
      $region81: #{transformer_forward.4} parent=5 // pred_check
        _
      $region82: #{transformer_forward.4} parent=5 // pred_check_branch
        %624 = sbr.rel (%p621) target = $region84
      $region83: #{transformer_forward.4} parent=5 // pred_region
        %s625 = ssub.s32 %s28, 1
        %s626 = sand.u32 %s199, 1
        %s627 = scalar_lea.sflag [#allocation4], %s626
        %s628 = sand.u32 %s199, 1
        %s629 = smul.addr %s628, 192
        %s630 = scalar_lea.vmem [#allocation3], %s629
        // Predicated region
        $region85: #{transformer_forward.4} parent=83 // pred_check
          %p631 = pneg %p212
        $region86: #{transformer_forward.4} parent=83 // pred_check_branch
          %633 = sbr.rel (%p631) target = $region88
        $region87: #{transformer_forward.4} parent=83 // pred_region
          %635 = dma.done %s627, 3072
        $region88: #{transformer_forward.4} parent=83 // pred_fallthru
          _
        %s636 = sand.u32 %s407, 1
        %s637 = scalar_lea.sflag [#allocation6], %s636
        %s638 = sand.u32 %s407, 1
        %s639 = smul.addr %s638, 64
        %s640 = scalar_lea.vmem [#allocation5], %s639
        // Predicated region
        $region89: #{transformer_forward.4} parent=83 // pred_check
          %p641 = pneg %p420
        $region90: #{transformer_forward.4} parent=83 // pred_check_branch
          %643 = sbr.rel (%p641) target = $region92
        $region91: #{transformer_forward.4} parent=83 // pred_region
          %645 = dma.done %s637, 1024
        $region92: #{transformer_forward.4} parent=83 // pred_fallthru
          _
        %p646 = scmp.lt.s32.totalorder %s37, 1
        %s647 = scalar_select %p646, %s37, 1
        %s648 = smul.addr %s647, 8
        %s649 = scalar_lea.vmem %s0, %s648
        %p650 = pneg %p66
        %p651 = pneg %p63
        %p652 = scmp.lt.s32.totalorder %s37, 1
        %s653 = scalar_select %p652, %s37, 1
        %s654 = scalar_lea.vmem %s1, %s653
        %p655 = pneg %p92
        %p656 = pneg %p89
        %p657 = pneg %p113
        %p658 = pneg %p110
        %p659 = pneg %p134
        %p660 = pneg %p131
        %p661 = scmp.lt.s32.totalorder %s38, 1
        %s662 = scalar_select %p661, %s38, 1
        %s663 = scalar_lea.vmem %s4, %s662
        %p664 = pneg %p160
        %p665 = pneg %p157
        %p666 = scmp.lt.s32.totalorder %s38, 1
        %s667 = scalar_select %p666, %s38, 1
        %s668 = scalar_lea.vmem %s5, %s667
        %p669 = pneg %p186
        %p670 = pneg %p183
        %s671 = sand.u32 %s199, 1
        %s672 = scalar_lea.sflag [#allocation4], %s671
        %s673 = sand.u32 %s199, 1
        %s674 = smul.addr %s673, 192
        %s675 = scalar_lea.vmem [#allocation3], %s674
        %p676 = pneg %p212
        %p677 = pneg %p209
        %p678 = scmp.lt.s32.totalorder %s38, 1
        %s679 = scalar_select %p678, %s38, 1
        %s680 = smul.addr %s679, 3
        %s681 = scalar_lea.vmem %s7, %s680
        %p682 = pneg %p238
        %p683 = pneg %p235
        %p684 = scmp.lt.s32.totalorder %s38, 1
        %s685 = scalar_select %p684, %s38, 1
        %s686 = smul.addr %s685, 4
        %s687 = smul.addr %s686, 4
        %s688 = scalar_lea.vmem %s8, %s687
        %p689 = pneg %p264
        %p690 = pneg %p261
        %p691 = scmp.lt.s32.totalorder %s38, 1
        %s692 = scalar_select %p691, %s38, 1
        %s693 = scalar_lea.vmem %s9, %s692
        %p694 = pneg %p290
        %p695 = pneg %p287
        %p696 = scmp.lt.s32.totalorder %s38, 1
        %s697 = scalar_select %p696, %s38, 1
        %s698 = scalar_lea.vmem %s10, %s697
        %p699 = pneg %p316
        %p700 = pneg %p313
        %p701 = scmp.lt.s32.totalorder %s38, 1
        %s702 = scalar_select %p701, %s38, 1
        %s703 = scalar_lea.vmem %s11, %s702
        %p704 = pneg %p342
        %p705 = pneg %p339
        %p706 = scmp.lt.s32.totalorder %s38, 1
        %s707 = scalar_select %p706, %s38, 1
        %s708 = smul.addr %s707, 16
        %s709 = smul.addr %s708, 4
        %s710 = scalar_lea.vmem %s12, %s709
        %p711 = pneg %p368
        %p712 = pneg %p365
        %p713 = scmp.lt.s32.totalorder %s38, 1
        %s714 = scalar_select %p713, %s38, 1
        %s715 = scalar_lea.vmem %s13, %s714
        %p716 = pneg %p394
        %p717 = pneg %p391
        %s718 = sand.u32 %s407, 1
        %s719 = scalar_lea.sflag [#allocation6], %s718
        %s720 = sand.u32 %s407, 1
        %s721 = smul.addr %s720, 64
        %s722 = scalar_lea.vmem [#allocation5], %s721
        %p723 = pneg %p420
        %p724 = pneg %p417
        %p725 = scmp.lt.s32.totalorder %s38, 1
        %s726 = scalar_select %p725, %s38, 1
        %s727 = scalar_lea.vmem %s15, %s726
        %p728 = pneg %p446
        %p729 = pneg %p443
        %p730 = pneg %p472
        %p731 = pneg %p469
        %p732 = scmp.lt.s32.totalorder %s37, 1
        %s733 = scalar_select %p732, %s37, 1
        %s734 = smul.addr %s733, 4
        %s735 = scalar_lea.vmem %s16, %s734
        %p736 = scmp.lt.s32.totalorder %s37, 1
        %s737 = scalar_select %p736, %s37, 1
        %s738 = smul.addr %s737, 8
        %s739 = scalar_lea.vmem %s0, %s738
        %p740 = scmp.lt.s32.totalorder %s37, 1
        %s741 = scalar_select %p740, %s37, 1
        %s742 = scalar_lea.vmem %s1, %s741
        %p743 = scmp.lt.s32.totalorder %s38, 1
        %s744 = scalar_select %p743, %s38, 1
        %s745 = scalar_lea.vmem %s4, %s744
        %p746 = scmp.lt.s32.totalorder %s38, 1
        %s747 = scalar_select %p746, %s38, 1
        %s748 = scalar_lea.vmem %s5, %s747
        %p749 = scmp.lt.s32.totalorder %s38, 1
        %s750 = scalar_select %p749, %s38, 1
        %s751 = smul.addr %s750, 3
        %s752 = scalar_lea.vmem %s7, %s751
        %p753 = scmp.lt.s32.totalorder %s38, 1
        %s754 = scalar_select %p753, %s38, 1
        %s755 = smul.addr %s754, 4
        %s756 = smul.addr %s755, 4
        %s757 = scalar_lea.vmem %s8, %s756
        %p758 = scmp.lt.s32.totalorder %s38, 1
        %s759 = scalar_select %p758, %s38, 1
        %s760 = scalar_lea.vmem %s9, %s759
        %p761 = scmp.lt.s32.totalorder %s38, 1
        %s762 = scalar_select %p761, %s38, 1
        %s763 = scalar_lea.vmem %s10, %s762
        %p764 = scmp.lt.s32.totalorder %s38, 1
        %s765 = scalar_select %p764, %s38, 1
        %s766 = scalar_lea.vmem %s11, %s765
        %p767 = scmp.lt.s32.totalorder %s38, 1
        %s768 = scalar_select %p767, %s38, 1
        %s769 = smul.addr %s768, 16
        %s770 = smul.addr %s769, 4
        %s771 = scalar_lea.vmem %s12, %s770
        %p772 = scmp.lt.s32.totalorder %s38, 1
        %s773 = scalar_select %p772, %s38, 1
        %s774 = scalar_lea.vmem %s13, %s773
        %p775 = scmp.lt.s32.totalorder %s38, 1
        %s776 = scalar_select %p775, %s38, 1
        %s777 = scalar_lea.vmem %s15, %s776
        %p778 = scmp.lt.s32.totalorder %s37, 1
        %s779 = scalar_select %p778, %s37, 1
        %s780 = smul.addr %s779, 4
        %s781 = scalar_lea.vmem %s16, %s780
        %p783 = scmp.eq.s32.totalorder %s38, 0
        // Predicated region
        $region93: #{transformer_forward.4} parent=83 // pred_check
          %p784 = pneg %p783
        $region94: #{transformer_forward.4} parent=83 // pred_check_branch
          %786 = sbr.rel (%p784) target = $region96
        $region95: #{transformer_forward.4} parent=83 // pred_region
          %v787 = vld [vmem:[%s739] sm:$0xff]
          %788 = vst [vmem:[#allocation2] sm:$0xff] %v787
        $region96: #{transformer_forward.4} parent=83 // pred_fallthru
          _
        %v789 = vld [vmem:[#allocation2] sm:$0xff]
        %v790 = vld [vmem:[%s2] sm:$0xff]
        %v791 = vld [vmem:[%s3] sm:$0xff]
        %v792 = vld [vmem:[%s745] sm:$0x1]
        %v793 = vld [vmem:[%s748] sm:$0x1]
        %794 = vadd.xlane.f32.xlu0 %v789
        %v795 = vpop.xlane.xlu0 %794
        %v796 = vmul.f32 %v795, 0.03125
        %v797 = vmul.f32 %v789, %v789
        %798 = vadd.xlane.f32.xlu0 %v797
        %v799 = vpop.xlane.xlu0 %798
        %v800 = vmul.f32 %v799, 0.03125
        %v801 = vmul.f32 %v796, %v796
        %v802 = vsub.f32 %v800, %v801
        %v803 = vsub.f32 %v789, %v796
        %v804 = vadd.f32 %v802, 1e-05
        %v805 = vrsqrt.pop %v804
        %v806 = vmul.f32 %v805, %v804
        %v807 = vmul.f32 %v806, %v805
        %v808 = vmul.f32 0.5, %v807
        %v809 = vsub.f32 1.5, %v808
        %v810 = vmul.f32 %v805, %v809
        %vm811 = vweird.f32 %v804
        %vm812 = vweird.f32 %v805
        %vm813 = vmor %vm811, %vm812
        %v814 = vsel %vm813, %v805, %v810
        %v815 = vmul.f32 %v803, %v814
        %v817 = vperm.slane %v792, 0
        %v819 = vmul.f32 %v815, %v817
        %v821 = vperm.slane %v793, 0
        %v823 = vadd.f32 %v819, %v821
        %v824 = vpack.c.bf16 %v823, %v823
        %v825 = vld [vmem:[%s630] sm:$0xff]
        %v826 = vld [vmem:[%s630 + $0x8] sm:$0xf]
        %v827 = vld [vmem:[%s630 + $0xc] sm:$0xff]
        %v828 = vld [vmem:[%s630 + $0x14] sm:$0xf]
        %v829 = vld [vmem:[%s630 + $0x18] sm:$0xff]
        %v830 = vld [vmem:[%s630 + $0x20] sm:$0xf]
        %v831 = vld [vmem:[%s630 + $0x24] sm:$0xff]
        %v832 = vld [vmem:[%s630 + $0x2c] sm:$0xf]
        %v833 = vld [vmem:[%s630 + $0x30] sm:$0xff]
        %v834 = vld [vmem:[%s630 + $0x38] sm:$0xf]
        %v835 = vld [vmem:[%s630 + $0x3c] sm:$0xff]
        %v836 = vld [vmem:[%s630 + $0x44] sm:$0xf]
        %v837 = vld [vmem:[%s630 + $0x48] sm:$0xff]
        %v838 = vld [vmem:[%s630 + $0x50] sm:$0xf]
        %v839 = vld [vmem:[%s630 + $0x54] sm:$0xff]
        %v840 = vld [vmem:[%s630 + $0x5c] sm:$0xf]
        %v841 = vld [vmem:[%s630 + $0x60] sm:$0xff]
        %v842 = vld [vmem:[%s630 + $0x68] sm:$0xf]
        %v843 = vld [vmem:[%s630 + $0x6c] sm:$0xff]
        %v844 = vld [vmem:[%s630 + $0x74] sm:$0xf]
        %v845 = vld [vmem:[%s630 + $0x78] sm:$0xff]
        %v846 = vld [vmem:[%s630 + $0x80] sm:$0xf]
        %v847 = vld [vmem:[%s630 + $0x84] sm:$0xff]
        %v848 = vld [vmem:[%s630 + $0x8c] sm:$0xf]
        %v849 = vld [vmem:[%s630 + $0x90] sm:$0xff]
        %v850 = vld [vmem:[%s630 + $0x98] sm:$0xf]
        %v851 = vld [vmem:[%s630 + $0x9c] sm:$0xff]
        %v852 = vld [vmem:[%s630 + $0xa4] sm:$0xf]
        %v853 = vld [vmem:[%s630 + $0xa8] sm:$0xff]
        %v854 = vld [vmem:[%s630 + $0xb0] sm:$0xf]
        %v855 = vld [vmem:[%s630 + $0xb4] sm:$0xff]
        %v856 = vld [vmem:[%s630 + $0xbc] sm:$0xf]
        %v857 = vld [vmem:[%s752] sm:$0x7]
        %v859 = vperm.slane %v857, 0
        %v860 = vperm.slane %v857, 1
        %v861 = vperm.slane %v857, 2
        %v897 = vunpack.c.l.b16 %v825
        %v898 = vunpack.c.h.b16 %v825
        %v899 = vunpack.c.l.b16 %v826
        %v900 = vunpack.c.l.b16 %v827
        %v901 = vunpack.c.h.b16 %v827
        %v902 = vunpack.c.l.b16 %v828
        %v903 = vunpack.c.l.b16 %v829
        %v904 = vunpack.c.h.b16 %v829
        %v905 = vunpack.c.l.b16 %v830
        %v906 = vunpack.c.l.b16 %v831
        %v907 = vunpack.c.h.b16 %v831
        %v908 = vunpack.c.l.b16 %v832
        %v909 = vunpack.c.l.b16 %v833
        %v910 = vunpack.c.h.b16 %v833
        %v911 = vunpack.c.l.b16 %v834
        %v912 = vunpack.c.l.b16 %v835
        %v913 = vunpack.c.h.b16 %v835
        %v914 = vunpack.c.l.b16 %v836
        %v915 = vunpack.c.l.b16 %v837
        %v916 = vunpack.c.h.b16 %v837
        %v917 = vunpack.c.l.b16 %v838
        %v918 = vunpack.c.l.b16 %v839
        %v919 = vunpack.c.h.b16 %v839
        %v920 = vunpack.c.l.b16 %v840
        %v921 = vunpack.c.l.b16 %v841
        %v922 = vunpack.c.h.b16 %v841
        %v923 = vunpack.c.l.b16 %v842
        %v924 = vunpack.c.l.b16 %v843
        %v925 = vunpack.c.h.b16 %v843
        %v926 = vunpack.c.l.b16 %v844
        %v927 = vunpack.c.l.b16 %v845
        %v928 = vunpack.c.h.b16 %v845
        %v929 = vunpack.c.l.b16 %v846
        %v930 = vunpack.c.l.b16 %v847
        %v931 = vunpack.c.h.b16 %v847
        %v932 = vunpack.c.l.b16 %v848
        %v933 = vunpack.c.l.b16 %v849
        %v934 = vunpack.c.h.b16 %v849
        %v935 = vunpack.c.l.b16 %v850
        %v936 = vunpack.c.l.b16 %v851
        %v937 = vunpack.c.h.b16 %v851
        %v938 = vunpack.c.l.b16 %v852
        %v939 = vunpack.c.l.b16 %v853
        %v940 = vunpack.c.h.b16 %v853
        %v941 = vunpack.c.l.b16 %v854
        %v942 = vunpack.c.l.b16 %v855
        %v943 = vunpack.c.h.b16 %v855
        %v944 = vunpack.c.l.b16 %v856
        %v945 = vpack.c.b16 %v900, %v897
        %v946 = vpack.c.b16 %v901, %v898
        %v947 = vpack.c.b16 %v902, %v899
        %v948 = vpack.c.b16 %v906, %v903
        %v949 = vpack.c.b16 %v907, %v904
        %v950 = vpack.c.b16 %v908, %v905
        %v951 = vpack.c.b16 %v912, %v909
        %v952 = vpack.c.b16 %v913, %v910
        %v953 = vpack.c.b16 %v914, %v911
        %v954 = vpack.c.b16 %v918, %v915
        %v955 = vpack.c.b16 %v919, %v916
        %v956 = vpack.c.b16 %v920, %v917
        %v957 = vpack.c.b16 %v924, %v921
        %v958 = vpack.c.b16 %v925, %v922
        %v959 = vpack.c.b16 %v926, %v923
        %v960 = vpack.c.b16 %v930, %v927
        %v961 = vpack.c.b16 %v931, %v928
        %v962 = vpack.c.b16 %v932, %v929
        %v963 = vpack.c.b16 %v936, %v933
        %v964 = vpack.c.b16 %v937, %v934
        %v965 = vpack.c.b16 %v938, %v935
        %v966 = vpack.c.b16 %v942, %v939
        %v967 = vpack.c.b16 %v943, %v940
        %v968 = vpack.c.b16 %v944, %v941
        %993 = vmatpush.bf16.msra.mxu0 %v966
        %994 = vmatpush.bf16.msra.mxu0 %v963
        %995 = vmatpush.bf16.msra.mxu0 %v960
        %996 = vmatpush.bf16.msra.mxu0 %v957
        %997 = vmatpush.bf16.msra.mxu0 %v954
        %998 = vmatpush.bf16.msra.mxu0 %v951
        %999 = vmatpush.bf16.msra.mxu0 %v948
        %1000 = vmatpush.bf16.msra.mxu0 %v945
        %1001 = vmatmul.bf16.gmra.mxu0 %v824
        %v1002 = vpop.f32.mrf.mxu0
        %v1003 = vadd.f32 %v859, %v1002
        %v1004 = vpop.f32.mrf.mxu0
        %1005 = vdwg.mxu0
        %1006 = vmatpush.bf16.msra.mxu0 %v967
        %1007 = vmatpush.bf16.msra.mxu0 %v964
        %1008 = vmatpush.bf16.msra.mxu0 %v961
        %1009 = vmatpush.bf16.msra.mxu0 %v958
        %1010 = vmatpush.bf16.msra.mxu0 %v955
        %1011 = vmatpush.bf16.msra.mxu0 %v952
        %1012 = vmatpush.bf16.msra.mxu0 %v949
        %1013 = vmatpush.bf16.msra.mxu0 %v946
        %1014 = vmatmul.bf16.gmra.mxu0 %v824
        %v1015 = vpop.f32.mrf.mxu0
        %v1016 = vadd.f32 %v860, %v1015
        %v1017 = vpop.f32.mrf.mxu0
        %1018 = vdwg.mxu0
        %1019 = vmatpush.bf16.msra.mxu0 %v968
        %1020 = vmatpush.bf16.msra.mxu0 %v965
        %1021 = vmatpush.bf16.msra.mxu0 %v962
        %1022 = vmatpush.bf16.msra.mxu0 %v959
        %1023 = vmatpush.bf16.msra.mxu0 %v956
        %1024 = vmatpush.bf16.msra.mxu0 %v953
        %1025 = vmatpush.bf16.msra.mxu0 %v950
        %1026 = vmatpush.bf16.msra.mxu0 %v947
        %1027 = vmatmul.bf16.gmra.mxu0 %v824
        %v1028 = vpop.f32.mrf.mxu0
        %v1029 = vadd.f32 %v861, %v1028
        %v1030 = vpop.f32.mrf.mxu0
        %1031 = vdwg.mxu0
        %1033 = vrot.lane.b32.xlu0 %v1003, 120
        %v1034 = vpop.permute.xlu0 %1033
        %1036 = vrot.lane.b32.xlu0 %v1003, 112
        %v1037 = vpop.permute.xlu0 %1036
        %1039 = vrot.lane.b32.xlu0 %v1003, 104
        %v1040 = vpop.permute.xlu0 %1039
        %1043 = vrot.lane.b32.xlu0 %v1016, 120
        %v1044 = vpop.permute.xlu0 %1043
        %1046 = vrot.lane.b32.xlu0 %v1016, 112
        %v1047 = vpop.permute.xlu0 %1046
        %1049 = vrot.lane.b32.xlu0 %v1016, 104
        %v1050 = vpop.permute.xlu0 %1049
        %1053 = vrot.lane.b32.xlu0 %v1029, 120
        %v1054 = vpop.permute.xlu0 %1053
        %1056 = vrot.lane.b32.xlu0 %v1029, 112
        %v1057 = vpop.permute.xlu0 %1056
        %1059 = vrot.lane.b32.xlu0 %v1029, 104
        %v1060 = vpop.permute.xlu0 %1059
        %v1062 = vmul.f32 %v1003, %v790
        %v1063 = vmul.f32 %v1034, %v790
        %v1064 = vmul.f32 %v1037, %v790
        %v1065 = vmul.f32 %v1040, %v790
        %1067 = vrot.lane.b32.xlu0 %v791, 4
        %v1068 = vpop.permute.xlu0 %1067
        %v1070 = vmul.f32 %v1003, %v1068
        %v1071 = vmul.f32 %v1034, %v1068
        %v1072 = vmul.f32 %v1037, %v1068
        %v1073 = vmul.f32 %v1040, %v1068
        %1078 = vrot.lane.b32.xlu0 %v1070, 124
        %v1079 = vpop.permute.xlu0 %1078
        %1080 = vrot.lane.b32.xlu0 %v1071, 124
        %v1081 = vpop.permute.xlu0 %1080
        %1082 = vrot.lane.b32.xlu0 %v1072, 124
        %v1083 = vpop.permute.xlu0 %1082
        %1084 = vrot.lane.b32.xlu0 %v1073, 124
        %v1085 = vpop.permute.xlu0 %1084
        %v1090 = vsub.f32 %v1062, %v1079
        %v1091 = vsub.f32 %v1063, %v1081
        %v1092 = vsub.f32 %v1064, %v1083
        %v1093 = vsub.f32 %v1065, %v1085
        %1095 = vrot.lane.b32.xlu0 %v790, 4
        %v1096 = vpop.permute.xlu0 %1095
        %v1098 = vmul.f32 %v1003, %v1096
        %v1099 = vmul.f32 %v1034, %v1096
        %v1100 = vmul.f32 %v1037, %v1096
        %v1101 = vmul.f32 %v1040, %v1096
        %v1102 = vmul.f32 %v1003, %v791
        %v1103 = vmul.f32 %v1034, %v791
        %v1104 = vmul.f32 %v1037, %v791
        %v1105 = vmul.f32 %v1040, %v791
        %1110 = vrot.lane.b32.xlu0 %v1102, 4
        %v1111 = vpop.permute.xlu0 %1110
        %1112 = vrot.lane.b32.xlu0 %v1103, 4
        %v1113 = vpop.permute.xlu0 %1112
        %1114 = vrot.lane.b32.xlu0 %v1104, 4
        %v1115 = vpop.permute.xlu0 %1114
        %1116 = vrot.lane.b32.xlu0 %v1105, 4
        %v1117 = vpop.permute.xlu0 %1116
        %v1122 = vadd.f32 %v1098, %v1111
        %v1123 = vadd.f32 %v1099, %v1113
        %v1124 = vadd.f32 %v1100, %v1115
        %v1125 = vadd.f32 %v1101, %v1117
        %vm1126 = vcmask 31744
        %v1127 = vsel %vm1126, %v1090, %v1122
        %v1128 = vsel %vm1126, %v1091, %v1123
        %v1129 = vsel %vm1126, %v1092, %v1124
        %v1130 = vsel %vm1126, %v1093, %v1125
        %v1131 = vmul.f32 %v1127, 0.35355338
        %v1132 = vmul.f32 %v1128, 0.35355338
        %v1133 = vmul.f32 %v1129, 0.35355338
        %v1134 = vmul.f32 %v1130, 0.35355338
        %v1135 = vmul.f32 %v1016, %v790
        %v1136 = vmul.f32 %v1044, %v790
        %v1137 = vmul.f32 %v1047, %v790
        %v1138 = vmul.f32 %v1050, %v790
        %v1139 = vmul.f32 %v1016, %v1068
        %v1140 = vmul.f32 %v1044, %v1068
        %v1141 = vmul.f32 %v1047, %v1068
        %v1142 = vmul.f32 %v1050, %v1068
        %1147 = vrot.lane.b32.xlu0 %v1139, 124
        %v1148 = vpop.permute.xlu0 %1147
        %1149 = vrot.lane.b32.xlu0 %v1140, 124
        %v1150 = vpop.permute.xlu0 %1149
        %1151 = vrot.lane.b32.xlu0 %v1141, 124
        %v1152 = vpop.permute.xlu0 %1151
        %1153 = vrot.lane.b32.xlu0 %v1142, 124
        %v1154 = vpop.permute.xlu0 %1153
        %v1159 = vsub.f32 %v1135, %v1148
        %v1160 = vsub.f32 %v1136, %v1150
        %v1161 = vsub.f32 %v1137, %v1152
        %v1162 = vsub.f32 %v1138, %v1154
        %v1163 = vmul.f32 %v1016, %v1096
        %v1164 = vmul.f32 %v1044, %v1096
        %v1165 = vmul.f32 %v1047, %v1096
        %v1166 = vmul.f32 %v1050, %v1096
        %v1167 = vmul.f32 %v1016, %v791
        %v1168 = vmul.f32 %v1044, %v791
        %v1169 = vmul.f32 %v1047, %v791
        %v1170 = vmul.f32 %v1050, %v791
        %1175 = vrot.lane.b32.xlu0 %v1167, 4
        %v1176 = vpop.permute.xlu0 %1175
        %1177 = vrot.lane.b32.xlu0 %v1168, 4
        %v1178 = vpop.permute.xlu0 %1177
        %1179 = vrot.lane.b32.xlu0 %v1169, 4
        %v1180 = vpop.permute.xlu0 %1179
        %1181 = vrot.lane.b32.xlu0 %v1170, 4
        %v1182 = vpop.permute.xlu0 %1181
        %v1187 = vadd.f32 %v1163, %v1176
        %v1188 = vadd.f32 %v1164, %v1178
        %v1189 = vadd.f32 %v1165, %v1180
        %v1190 = vadd.f32 %v1166, %v1182
        %v1191 = vsel %vm1126, %v1159, %v1187
        %v1192 = vsel %vm1126, %v1160, %v1188
        %v1193 = vsel %vm1126, %v1161, %v1189
        %v1194 = vsel %vm1126, %v1162, %v1190
        %v1195 = vpack.c.bf16 %v1131, %v1131
        %v1196 = vpack.c.bf16 %v1132, %v1132
        %v1197 = vpack.c.bf16 %v1133, %v1133
        %v1198 = vpack.c.bf16 %v1134, %v1134
        %v1199 = vpack.c.bf16 %v1191, %v1191
        %v1200 = vpack.c.bf16 %v1192, %v1192
        %v1201 = vpack.c.bf16 %v1193, %v1193
        %v1202 = vpack.c.bf16 %v1194, %v1194
        %v1203 = vpack.c.bf16 %v1029, %v1029
        %v1204 = vpack.c.bf16 %v1054, %v1054
        %v1205 = vpack.c.bf16 %v1057, %v1057
        %v1206 = vpack.c.bf16 %v1060, %v1060
        %v1207 = vld [vmem:[%s742] sm:$0x1]
        %v1209 = vperm.slane %v1207, 0
        %vm1211 = vcmask 64512
        %v1213 = vsel %vm1211, %v1195, 0
        %v1216 = vsel %vm1211, %v1199, 0
        %1218 = vmatpush.bf16.xpose.msra.mxu0 0
        %1219 = vmatpush.bf16.xpose.msra.mxu0 0
        %1220 = vmatpush.bf16.xpose.msra.mxu0 0
        %1221 = vmatpush.bf16.xpose.msra.mxu0 0
        %1222 = vmatpush.bf16.xpose.msra.mxu0 0
        %1223 = vmatpush.bf16.xpose.msra.mxu0 0
        %1224 = vmatpush.bf16.xpose.msra.mxu0 0
        %1225 = vmatpush.bf16.xpose.msra.mxu0 %v1216
        %1226 = vmatmul.bf16.gmra.mxu0 %v1213
        %v1227 = vpop.f32.mrf.mxu0
        %v1228 = vadd.f32 %v1209, %v1227
        %v1229 = vpop.f32.mrf.mxu0
        %1230 = vdwg.mxu0
        %v1232 = vsel %vm1211, %v1196, 0
        %v1235 = vsel %vm1211, %v1200, 0
        %1237 = vmatpush.bf16.xpose.msra.mxu0 0
        %1238 = vmatpush.bf16.xpose.msra.mxu0 0
        %1239 = vmatpush.bf16.xpose.msra.mxu0 0
        %1240 = vmatpush.bf16.xpose.msra.mxu0 0
        %1241 = vmatpush.bf16.xpose.msra.mxu0 0
        %1242 = vmatpush.bf16.xpose.msra.mxu0 0
        %1243 = vmatpush.bf16.xpose.msra.mxu0 0
        %1244 = vmatpush.bf16.xpose.msra.mxu0 %v1235
        %1245 = vmatmul.bf16.gmra.mxu0 %v1232
        %v1246 = vpop.f32.mrf.mxu0
        %v1247 = vadd.f32 %v1209, %v1246
        %v1248 = vpop.f32.mrf.mxu0
        %1249 = vdwg.mxu0
        %v1251 = vsel %vm1211, %v1197, 0
        %v1254 = vsel %vm1211, %v1201, 0
        %1256 = vmatpush.bf16.xpose.msra.mxu0 0
        %1257 = vmatpush.bf16.xpose.msra.mxu0 0
        %1258 = vmatpush.bf16.xpose.msra.mxu0 0
        %1259 = vmatpush.bf16.xpose.msra.mxu0 0
        %1260 = vmatpush.bf16.xpose.msra.mxu0 0
        %1261 = vmatpush.bf16.xpose.msra.mxu0 0
        %1262 = vmatpush.bf16.xpose.msra.mxu0 0
        %1263 = vmatpush.bf16.xpose.msra.mxu0 %v1254
        %1264 = vmatmul.bf16.gmra.mxu0 %v1251
        %v1265 = vpop.f32.mrf.mxu0
        %v1266 = vadd.f32 %v1209, %v1265
        %v1267 = vpop.f32.mrf.mxu0
        %1268 = vdwg.mxu0
        %v1270 = vsel %vm1211, %v1198, 0
        %v1273 = vsel %vm1211, %v1202, 0
        %1275 = vmatpush.bf16.xpose.msra.mxu0 0
        %1276 = vmatpush.bf16.xpose.msra.mxu0 0
        %1277 = vmatpush.bf16.xpose.msra.mxu0 0
        %1278 = vmatpush.bf16.xpose.msra.mxu0 0
        %1279 = vmatpush.bf16.xpose.msra.mxu0 0
        %1280 = vmatpush.bf16.xpose.msra.mxu0 0
        %1281 = vmatpush.bf16.xpose.msra.mxu0 0
        %1282 = vmatpush.bf16.xpose.msra.mxu0 %v1273
        %1283 = vmatmul.bf16.gmra.mxu0 %v1270
        %v1284 = vpop.f32.mrf.mxu0
        %v1285 = vadd.f32 %v1209, %v1284
        %v1286 = vpop.f32.mrf.mxu0
        %1287 = vdwg.mxu0
        %v1288 = vsel %vm1211, %v1228, -inf
        %1289 = vmax.xlane.f32.xlu0 %v1288
        %v1290 = vpop.xlane.xlu0 %1289
        %v1291 = vsel %vm1211, %v1247, -inf
        %1292 = vmax.xlane.f32.xlu0 %v1291
        %v1293 = vpop.xlane.xlu0 %1292
        %v1294 = vsel %vm1211, %v1266, -inf
        %1295 = vmax.xlane.f32.xlu0 %v1294
        %v1296 = vpop.xlane.xlu0 %1295
        %v1297 = vsel %vm1211, %v1285, -inf
        %1298 = vmax.xlane.f32.xlu0 %v1297
        %v1299 = vpop.xlane.xlu0 %1298
        %v1300 = vsub.f32 %v1228, %v1290
        %v1301 = vsub.f32 %v1247, %v1293
        %v1302 = vsub.f32 %v1266, %v1296
        %v1303 = vsub.f32 %v1285, %v1299
        %v1304 = vmul.f32 %v1300, 1.442695
        %v1305 = vpow.pop %v1304
        %v1306 = vmul.f32 %v1301, 1.442695
        %v1307 = vpow.pop %v1306
        %v1308 = vmul.f32 %v1302, 1.442695
        %v1309 = vpow.pop %v1308
        %v1310 = vmul.f32 %v1303, 1.442695
        %v1311 = vpow.pop %v1310
        %v1312 = vsel %vm1211, %v1305, 0.0
        %1313 = vadd.xlane.f32.xlu0 %v1312
        %v1314 = vpop.xlane.xlu0 %1313
        %v1315 = vsel %vm1211, %v1307, 0.0
        %1316 = vadd.xlane.f32.xlu0 %v1315
        %v1317 = vpop.xlane.xlu0 %1316
        %v1318 = vsel %vm1211, %v1309, 0.0
        %1319 = vadd.xlane.f32.xlu0 %v1318
        %v1320 = vpop.xlane.xlu0 %1319
        %v1321 = vsel %vm1211, %v1311, 0.0
        %1322 = vadd.xlane.f32.xlu0 %v1321
        %v1323 = vpop.xlane.xlu0 %1322
        %v1324 = vrcp.pop %v1314
        %v1325 = vrcp.pop %v1317
        %v1326 = vrcp.pop %v1320
        %v1327 = vrcp.pop %v1323
        %v1328 = vmul.f32 %v1305, %v1324
        %v1329 = vmul.f32 %v1307, %v1325
        %v1330 = vmul.f32 %v1309, %v1326
        %v1331 = vmul.f32 %v1311, %v1327
        %v1332 = vpack.c.bf16 %v1328, %v1328
        %v1333 = vpack.c.bf16 %v1329, %v1329
        %v1334 = vpack.c.bf16 %v1330, %v1330
        %v1335 = vpack.c.bf16 %v1331, %v1331
        %v1337 = vsel %vm1211, %v1332, 0
        %vm1339 = vcmask 1043456
        %v1341 = vsel %vm1339, %v1203, 0
        %1343 = vmatpush.bf16.msra.mxu0 0
        %1344 = vmatpush.bf16.msra.mxu0 0
        %1345 = vmatpush.bf16.msra.mxu0 0
        %1346 = vmatpush.bf16.msra.mxu0 0
        %1347 = vmatpush.bf16.msra.mxu0 0
        %1348 = vmatpush.bf16.msra.mxu0 0
        %1349 = vmatpush.bf16.msra.mxu0 0
        %1350 = vmatpush.bf16.msra.mxu0 %v1341
        %1351 = vmatmul.bf16.gmra.mxu0 %v1337
        %v1352 = vpop.f32.mrf.mxu0
        %v1353 = vadd.f32 0.0, %v1352
        %v1354 = vpop.f32.mrf.mxu0
        %1355 = vdwg.mxu0
        %v1357 = vsel %vm1211, %v1333, 0
        %v1360 = vsel %vm1339, %v1204, 0
        %1362 = vmatpush.bf16.msra.mxu0 0
        %1363 = vmatpush.bf16.msra.mxu0 0
        %1364 = vmatpush.bf16.msra.mxu0 0
        %1365 = vmatpush.bf16.msra.mxu0 0
        %1366 = vmatpush.bf16.msra.mxu0 0
        %1367 = vmatpush.bf16.msra.mxu0 0
        %1368 = vmatpush.bf16.msra.mxu0 0
        %1369 = vmatpush.bf16.msra.mxu0 %v1360
        %1370 = vmatmul.bf16.gmra.mxu0 %v1357
        %v1371 = vpop.f32.mrf.mxu0
        %v1372 = vadd.f32 0.0, %v1371
        %v1373 = vpop.f32.mrf.mxu0
        %1374 = vdwg.mxu0
        %v1376 = vsel %vm1211, %v1334, 0
        %v1379 = vsel %vm1339, %v1205, 0
        %1381 = vmatpush.bf16.msra.mxu0 0
        %1382 = vmatpush.bf16.msra.mxu0 0
        %1383 = vmatpush.bf16.msra.mxu0 0
        %1384 = vmatpush.bf16.msra.mxu0 0
        %1385 = vmatpush.bf16.msra.mxu0 0
        %1386 = vmatpush.bf16.msra.mxu0 0
        %1387 = vmatpush.bf16.msra.mxu0 0
        %1388 = vmatpush.bf16.msra.mxu0 %v1379
        %1389 = vmatmul.bf16.gmra.mxu0 %v1376
        %v1390 = vpop.f32.mrf.mxu0
        %v1391 = vadd.f32 0.0, %v1390
        %v1392 = vpop.f32.mrf.mxu0
        %1393 = vdwg.mxu0
        %v1395 = vsel %vm1211, %v1335, 0
        %v1398 = vsel %vm1339, %v1206, 0
        %1400 = vmatpush.bf16.msra.mxu0 0
        %1401 = vmatpush.bf16.msra.mxu0 0
        %1402 = vmatpush.bf16.msra.mxu0 0
        %1403 = vmatpush.bf16.msra.mxu0 0
        %1404 = vmatpush.bf16.msra.mxu0 0
        %1405 = vmatpush.bf16.msra.mxu0 0
        %1406 = vmatpush.bf16.msra.mxu0 0
        %1407 = vmatpush.bf16.msra.mxu0 %v1398
        %1408 = vmatmul.bf16.gmra.mxu0 %v1395
        %v1409 = vpop.f32.mrf.mxu0
        %v1410 = vadd.f32 0.0, %v1409
        %v1411 = vpop.f32.mrf.mxu0
        %1412 = vdwg.mxu0
        %1414 = vrot.lane.b32.xlu0 %v1372, 8
        %v1415 = vpop.permute.xlu0 %1414
        %1418 = vrot.lane.b32.xlu0 %v1391, 16
        %v1419 = vpop.permute.xlu0 %1418
        %1422 = vrot.lane.b32.xlu0 %v1410, 24
        %v1423 = vpop.permute.xlu0 %1422
        %v1425 = vsel %vm1211, %v1353, %v1415
        %vm1426 = vcmask 130048
        %v1427 = vsel %vm1426, %v1425, %v1419
        %vm1428 = vcmask 195584
        %v1429 = vsel %vm1428, %v1427, %v1423
        %v1430 = vpack.c.bf16 %v1429, %v1429
        %v1431 = vld [vmem:[%s757] sm:$0xf]
        %v1432 = vld [vmem:[%s757 + $0x4] sm:$0xf]
        %v1433 = vld [vmem:[%s757 + $0x8] sm:$0xf]
        %v1434 = vld [vmem:[%s757 + $0xc] sm:$0xf]
        %v1439 = vunpack.c.l.b16 %v1431
        %v1440 = vunpack.c.l.b16 %v1432
        %v1441 = vunpack.c.l.b16 %v1433
        %v1442 = vunpack.c.l.b16 %v1434
        %v1443 = vpack.c.b16 %v1440, %v1439
        %v1444 = vpack.c.b16 %v1442, %v1441
        %vm1447 = vcmask 261120
        %v1449 = vsel %vm1447, %v1430, 0
        %1451 = vmatpush.bf16.msra.mxu0 0
        %1452 = vmatpush.bf16.msra.mxu0 0
        %1453 = vmatpush.bf16.msra.mxu0 0
        %1454 = vmatpush.bf16.msra.mxu0 0
        %1455 = vmatpush.bf16.msra.mxu0 0
        %1456 = vmatpush.bf16.msra.mxu0 0
        %1457 = vmatpush.bf16.msra.mxu0 %v1444
        %1458 = vmatpush.bf16.msra.mxu0 %v1443
        %1459 = vmatmul.bf16.gmra.mxu0 %v1449
        %v1460 = vpop.f32.mrf.mxu0
        %v1461 = vadd.f32 0.0, %v1460
        %v1462 = vpop.f32.mrf.mxu0
        %1463 = vdwg.mxu0
        %v1464 = vadd.f32 %v789, %v1461
        %v1465 = vld [vmem:[%s760] sm:$0x1]
        %v1467 = vperm.slane %v1465, 0
        %v1469 = vadd.f32 %v1464, %v1467
        %v1470 = vld [vmem:[%s763] sm:$0x1]
        %v1471 = vld [vmem:[%s766] sm:$0x1]
        %1472 = vadd.xlane.f32.xlu0 %v1469
        %v1473 = vpop.xlane.xlu0 %1472
        %v1474 = vmul.f32 %v1473, 0.03125
        %v1475 = vmul.f32 %v1469, %v1469
        %1476 = vadd.xlane.f32.xlu0 %v1475
        %v1477 = vpop.xlane.xlu0 %1476
        %v1478 = vmul.f32 %v1477, 0.03125
        %v1479 = vmul.f32 %v1474, %v1474
        %v1480 = vsub.f32 %v1478, %v1479
        %v1481 = vsub.f32 %v1469, %v1474
        %v1482 = vadd.f32 %v1480, 1e-05
        %v1483 = vrsqrt.pop %v1482
        %v1484 = vmul.f32 %v1483, %v1482
        %v1485 = vmul.f32 %v1484, %v1483
        %v1486 = vmul.f32 0.5, %v1485
        %v1487 = vsub.f32 1.5, %v1486
        %v1488 = vmul.f32 %v1483, %v1487
        %vm1489 = vweird.f32 %v1482
        %vm1490 = vweird.f32 %v1483
        %vm1491 = vmor %vm1489, %vm1490
        %v1492 = vsel %vm1491, %v1483, %v1488
        %v1493 = vmul.f32 %v1481, %v1492
        %v1495 = vperm.slane %v1470, 0
        %v1497 = vmul.f32 %v1493, %v1495
        %v1499 = vperm.slane %v1471, 0
        %v1501 = vadd.f32 %v1497, %v1499
        %v1502 = vpack.c.bf16 %v1501, %v1501
        %v1503 = vld [vmem:[%s771] sm:$0xf]
        %v1504 = vld [vmem:[%s771 + $0x4] sm:$0xf]
        %v1505 = vld [vmem:[%s771 + $0x8] sm:$0xf]
        %v1506 = vld [vmem:[%s771 + $0xc] sm:$0xf]
        %v1507 = vld [vmem:[%s771 + $0x10] sm:$0xf]
        %v1508 = vld [vmem:[%s771 + $0x14] sm:$0xf]
        %v1509 = vld [vmem:[%s771 + $0x18] sm:$0xf]
        %v1510 = vld [vmem:[%s771 + $0x1c] sm:$0xf]
        %v1511 = vld [vmem:[%s771 + $0x20] sm:$0xf]
        %v1512 = vld [vmem:[%s771 + $0x24] sm:$0xf]
        %v1513 = vld [vmem:[%s771 + $0x28] sm:$0xf]
        %v1514 = vld [vmem:[%s771 + $0x2c] sm:$0xf]
        %v1515 = vld [vmem:[%s771 + $0x30] sm:$0xf]
        %v1516 = vld [vmem:[%s771 + $0x34] sm:$0xf]
        %v1517 = vld [vmem:[%s771 + $0x38] sm:$0xf]
        %v1518 = vld [vmem:[%s771 + $0x3c] sm:$0xf]
        %v1519 = vld [vmem:[%s774] sm:$0x1]
        %v1521 = vperm.slane %v1519, 0
        %v1539 = vunpack.c.l.b16 %v1503
        %v1540 = vunpack.c.l.b16 %v1504
        %v1541 = vunpack.c.l.b16 %v1505
        %v1542 = vunpack.c.l.b16 %v1506
        %v1543 = vunpack.c.l.b16 %v1507
        %v1544 = vunpack.c.l.b16 %v1508
        %v1545 = vunpack.c.l.b16 %v1509
        %v1546 = vunpack.c.l.b16 %v1510
        %v1547 = vunpack.c.l.b16 %v1511
        %v1548 = vunpack.c.l.b16 %v1512
        %v1549 = vunpack.c.l.b16 %v1513
        %v1550 = vunpack.c.l.b16 %v1514
        %v1551 = vunpack.c.l.b16 %v1515
        %v1552 = vunpack.c.l.b16 %v1516
        %v1553 = vunpack.c.l.b16 %v1517
        %v1554 = vunpack.c.l.b16 %v1518
        %v1555 = vpack.c.b16 %v1540, %v1539
        %v1556 = vpack.c.b16 %v1542, %v1541
        %v1557 = vpack.c.b16 %v1544, %v1543
        %v1558 = vpack.c.b16 %v1546, %v1545
        %v1559 = vpack.c.b16 %v1548, %v1547
        %v1560 = vpack.c.b16 %v1550, %v1549
        %v1561 = vpack.c.b16 %v1552, %v1551
        %v1562 = vpack.c.b16 %v1554, %v1553
        %1571 = vmatpush.bf16.msra.mxu0 %v1562
        %1572 = vmatpush.bf16.msra.mxu0 %v1561
        %1573 = vmatpush.bf16.msra.mxu0 %v1560
        %1574 = vmatpush.bf16.msra.mxu0 %v1559
        %1575 = vmatpush.bf16.msra.mxu0 %v1558
        %1576 = vmatpush.bf16.msra.mxu0 %v1557
        %1577 = vmatpush.bf16.msra.mxu0 %v1556
        %1578 = vmatpush.bf16.msra.mxu0 %v1555
        %1579 = vmatmul.bf16.gmra.mxu0 %v1502
        %v1580 = vpop.f32.mrf.mxu0
        %v1581 = vadd.f32 %v1521, %v1580
        %v1582 = vpop.f32.mrf.mxu0
        %1583 = vdwg.mxu0
        %v1584 = vmax.f32 %v1581, 0.0
        %v1585 = vpack.c.bf16 %v1584, %v1584
        %v1586 = vld [vmem:[%s640] sm:$0xf]
        %v1587 = vld [vmem:[%s640 + $0x4] sm:$0xf]
        %v1588 = vld [vmem:[%s640 + $0x8] sm:$0xf]
        %v1589 = vld [vmem:[%s640 + $0xc] sm:$0xf]
        %v1590 = vld [vmem:[%s640 + $0x10] sm:$0xf]
        %v1591 = vld [vmem:[%s640 + $0x14] sm:$0xf]
        %v1592 = vld [vmem:[%s640 + $0x18] sm:$0xf]
        %v1593 = vld [vmem:[%s640 + $0x1c] sm:$0xf]
        %v1594 = vld [vmem:[%s640 + $0x20] sm:$0xf]
        %v1595 = vld [vmem:[%s640 + $0x24] sm:$0xf]
        %v1596 = vld [vmem:[%s640 + $0x28] sm:$0xf]
        %v1597 = vld [vmem:[%s640 + $0x2c] sm:$0xf]
        %v1598 = vld [vmem:[%s640 + $0x30] sm:$0xf]
        %v1599 = vld [vmem:[%s640 + $0x34] sm:$0xf]
        %v1600 = vld [vmem:[%s640 + $0x38] sm:$0xf]
        %v1601 = vld [vmem:[%s640 + $0x3c] sm:$0xf]
        %v1618 = vunpack.c.l.b16 %v1586
        %v1619 = vunpack.c.l.b16 %v1587
        %v1620 = vunpack.c.l.b16 %v1588
        %v1621 = vunpack.c.l.b16 %v1589
        %v1622 = vunpack.c.l.b16 %v1590
        %v1623 = vunpack.c.l.b16 %v1591
        %v1624 = vunpack.c.l.b16 %v1592
        %v1625 = vunpack.c.l.b16 %v1593
        %v1626 = vunpack.c.l.b16 %v1594
        %v1627 = vunpack.c.l.b16 %v1595
        %v1628 = vunpack.c.l.b16 %v1596
        %v1629 = vunpack.c.l.b16 %v1597
        %v1630 = vunpack.c.l.b16 %v1598
        %v1631 = vunpack.c.l.b16 %v1599
        %v1632 = vunpack.c.l.b16 %v1600
        %v1633 = vunpack.c.l.b16 %v1601
        %v1634 = vpack.c.b16 %v1619, %v1618
        %v1635 = vpack.c.b16 %v1621, %v1620
        %v1636 = vpack.c.b16 %v1623, %v1622
        %v1637 = vpack.c.b16 %v1625, %v1624
        %v1638 = vpack.c.b16 %v1627, %v1626
        %v1639 = vpack.c.b16 %v1629, %v1628
        %v1640 = vpack.c.b16 %v1631, %v1630
        %v1641 = vpack.c.b16 %v1633, %v1632
        %1650 = vmatpush.bf16.msra.mxu0 %v1641
        %1651 = vmatpush.bf16.msra.mxu0 %v1640
        %1652 = vmatpush.bf16.msra.mxu0 %v1639
        %1653 = vmatpush.bf16.msra.mxu0 %v1638
        %1654 = vmatpush.bf16.msra.mxu0 %v1637
        %1655 = vmatpush.bf16.msra.mxu0 %v1636
        %1656 = vmatpush.bf16.msra.mxu0 %v1635
        %1657 = vmatpush.bf16.msra.mxu0 %v1634
        %1658 = vmatmul.bf16.gmra.mxu0 %v1585
        %v1659 = vpop.f32.mrf.mxu0
        %v1660 = vadd.f32 0.0, %v1659
        %v1661 = vpop.f32.mrf.mxu0
        %1662 = vdwg.mxu0
        %v1663 = vadd.f32 %v1469, %v1660
        %v1664 = vld [vmem:[%s777] sm:$0x1]
        %v1666 = vperm.slane %v1664, 0
        %v1668 = vadd.f32 %v1663, %v1666
        %1669 = vst [vmem:[#allocation2] sm:$0xff] %v1668
        %p1670 = scmp.eq.s32.totalorder %s38, 1
        // Predicated region
        $region97: #{transformer_forward.4} parent=83 // pred_check
          %p1671 = pneg %p1670
        $region98: #{transformer_forward.4} parent=83 // pred_check_branch
          %1673 = sbr.rel (%p1671) target = $region100
        $region99: #{transformer_forward.4} parent=83 // pred_region
          %v1674 = vld [vmem:[#allocation2] sm:$0xff]
          %v1675 = vpack.c.bf16 %v1674, %v1674
          %1676 = vst [vmem:[%s781] sm:$0xf] %v1675
        $region100: #{transformer_forward.4} parent=83 // pred_fallthru
          _
        %p1677 = scmp.lt.s32.totalorder %s37, 1
        %s1678 = scalar_select %p1677, %s37, 1
        %s1679 = smul.addr %s1678, 4
        %s1680 = scalar_lea.vmem %s16, %s1679
        // Predicated region
        $region101: #{transformer_forward.4} parent=83 // pred_check
          %p1681 = pneg %p469
        $region102: #{transformer_forward.4} parent=83 // pred_check_branch
          %1683 = sbr.rel (%p1681) target = $region104
        $region103: #{transformer_forward.4} parent=83 // pred_region
          _
        $region104: #{transformer_forward.4} parent=83 // pred_fallthru
          _
      $region84: #{transformer_forward.4} parent=5 // pred_fallthru
        _
      %p1684 = scmp.le.s32.totalorder 2, %s28
      // Predicated region
      $region105: #{transformer_forward.4} parent=5 // pred_check
        %p1685 = pneg %p1684
      $region106: #{transformer_forward.4} parent=5 // pred_check_branch
        %1687 = sbr.rel (%p1685) target = $region108
      $region107: #{transformer_forward.4} parent=5 // pred_region
        %s1688 = ssub.s32 %s28, 2
        // Predicated region
        $region109: #{transformer_forward.4} parent=107 // pred_check
          %p1689 = pneg %p475
        $region110: #{transformer_forward.4} parent=107 // pred_check_branch
          %1691 = sbr.rel (%p1689) target = $region112
        $region111: #{transformer_forward.4} parent=107 // pred_region
          %p1692 = scmp.lt.s32.totalorder %s39, 1
          %s1693 = scalar_select %p1692, %s39, 1
          %s1694 = smul.addr %s1693, 4
          %s1695 = scalar_lea.vmem %s16, %s1694
        $region112: #{transformer_forward.4} parent=107 // pred_fallthru
          _
      $region108: #{transformer_forward.4} parent=5 // pred_fallthru
        _
    $region6: #{transformer_forward.4} parent=1 // loop_footer
      %s32 = sadd.s32 1, %s28
    $region7: #{transformer_forward.4} parent=1 // loop_footer_branch
      %27 = sbr.rel target = $region3
    $region8: #{transformer_forward.4} parent=1 // loop_exit
      _
    %1696 = vsyncpa [#allocation4], 1
    %s1697 = scalar_lea.sflag [#allocation4], 1
    %1698 = vsyncpa %s1697, 1
    %1699 = vsyncpa [#allocation6], 1
    %s1700 = scalar_lea.sflag [#allocation6], 1
    %1701 = vsyncpa %s1700, 1

// kernel: transformer_forward.6
$region0: #{transformer_forward.6}
  #allocation0 [shape = 'u32[]', space=smem, size = 0x4, offset = 0x4, fixed_abs, tag = 'smem constant byte address 0x4 - core index']
  #allocation1 [shape = 'u32[72,128]{1,0:T(1,128)}', space=vmem, size = 0x9000, scoped, tag = 'internal scratch']
  #allocation2 [shape = 'f32[1,8,128]{2,1,0:T(8,128)}', space=vmem, size = 0x1000, scoped, tag = 'scratch operand']
  %s0 = inlined_call_operand.vmem [shape: f32[2,8,128], index: 0, kind: input, shape index: {}]
  %s1 = inlined_call_operand.vmem [shape: bf16[2,8,128], index: 1, kind: input, shape index: {}]
  %s2 = inlined_call_operand.vmem [shape: f32[2,1,8], index: 2, kind: input, shape index: {}]
  %s3 = inlined_call_operand.vmem [shape: f32[2,1,8], index: 3, kind: input, shape index: {}]
  %s4 = inlined_call_operand.vmem [shape: f32[8,4], index: 4, kind: input, shape index: {}, may-alias: {4,6}]
  %s5 = inlined_call_operand.vmem [shape: f32[8,4], index: 5, kind: input, shape index: {}, may-alias: {5,7}]
  %s6 = inlined_call_operand.vmem [shape: f32[8,4], index: 6, kind: input, shape index: {}, may-alias: {4,6}]
  %s7 = inlined_call_operand.vmem [shape: f32[8,4], index: 7, kind: input, shape index: {}, may-alias: {5,7}]
  %s8 = inlined_call_operand.vmem [shape: f32[2,1,128], index: 8, kind: input, shape index: {}]
  %s9 = inlined_call_operand.vmem [shape: f32[2,1,128], index: 9, kind: input, shape index: {}]
  %s10 = inlined_call_operand.hbm [shape: bf16[2,128,384], index: 10, kind: input, shape index: {}]
  %s11 = inlined_call_operand.vmem [shape: f32[2,1,384], index: 11, kind: input, shape index: {}]
  %s12 = inlined_call_operand.vmem [shape: bf16[2,32,128], index: 12, kind: input, shape index: {}]
  %s13 = inlined_call_operand.vmem [shape: f32[2,1,128], index: 13, kind: input, shape index: {}]
  %s14 = inlined_call_operand.vmem [shape: f32[2,1,128], index: 14, kind: input, shape index: {}]
  %s15 = inlined_call_operand.vmem [shape: f32[2,1,128], index: 15, kind: input, shape index: {}]
  %s16 = inlined_call_operand.hbm [shape: bf16[2,128,128], index: 16, kind: input, shape index: {}]
  %s17 = inlined_call_operand.vmem [shape: f32[2,1,128], index: 17, kind: input, shape index: {}]
  %s18 = inlined_call_operand.hbm [shape: bf16[2,128,256], index: 18, kind: input, shape index: {}]
  %s19 = inlined_call_operand.vmem [shape: f32[2,1,256], index: 19, kind: input, shape index: {}]
  %s20 = inlined_call_operand.hbm [shape: bf16[2,32,128], index: 20, kind: input, shape index: {}]
  %s21 = inlined_call_operand.vmem [shape: f32[2,1,128], index: 21, kind: input, shape index: {}]
  %s22 = inlined_call_operand.vmem [shape: f32[2,1,128], index: 22, kind: input, shape index: {}]
  %s23 = inlined_call_operand.vmem [shape: f32[2,1,128], index: 23, kind: input, shape index: {}]
  %s24 = inlined_call_operand.hbm [shape: bf16[2,128,128], index: 24, kind: input, shape index: {}]
  %s25 = inlined_call_operand.hbm [shape: f32[2,1,128], index: 25, kind: input, shape index: {}]
  %s26 = inlined_call_operand.hbm [shape: bf16[2,128,128], index: 26, kind: input, shape index: {}]
  %s27 = inlined_call_operand.hbm [shape: f32[2,1,128], index: 27, kind: input, shape index: {}]
  %s28 = inlined_call_operand.vmem [shape: f32[2,8,128], index: 28, kind: output, shape index: {}]
  %s29 = sld [smem:[#allocation0]]
  $region185: #{transformer_forward.6} parent=0
    _
  %s31 = ssub.s32 1, %s29
  %s32 = scalar_select 0, %s31, %s29
  $region1: #{transformer_forward.6} parent=0
    #allocation3 [shape = 'u8[196608]{0}', space=vmem, size = 0x30000, scoped, tag = 'input window, operand 10']
    #allocation4 [shape = 's32[2]{0}', space=sflag, size = 0x8, scoped, tag = 'scoped memory for transformer_forward.6']
    #allocation5 [shape = 'u8[65536]{0}', space=vmem, size = 0x10000, scoped, tag = 'input window, operand 16']
    #allocation6 [shape = 's32[2]{0}', space=sflag, size = 0x8, scoped, tag = 'scoped memory for transformer_forward.6']
    #allocation7 [shape = 'u8[131072]{0}', space=vmem, size = 0x20000, scoped, tag = 'input window, operand 18']
    #allocation8 [shape = 'u8[16384]{0}', space=vmem, size = 0x4000, scoped, tag = 'input window, operand 20']
    #allocation9 [shape = 's32[2]{0}', space=sflag, size = 0x8, scoped, tag = 'scoped memory for transformer_forward.6']
    #allocation10 [shape = 'u8[65536]{0}', space=vmem, size = 0x10000, scoped, tag = 'input window, operand 24']
    #allocation11 [shape = 'u8[1024]{0}', space=vmem, size = 0x400, scoped, tag = 'input window, operand 25']
    #allocation12 [shape = 's32[2]{0}', space=sflag, size = 0x8, scoped, tag = 'scoped memory for transformer_forward.6']
    #allocation13 [shape = 'u8[65536]{0}', space=vmem, size = 0x10000, scoped, tag = 'input window, operand 26']
    #allocation14 [shape = 'u8[1024]{0}', space=vmem, size = 0x400, scoped, tag = 'input window, operand 27']
    #allocation15 [shape = 's32[2]{0}', space=sflag, size = 0x8, scoped, tag = 'scoped memory for transformer_forward.6']
    %33 = vsyncpa [#allocation4], 0
    %s34 = scalar_lea.sflag [#allocation4], 1
    %35 = vsyncpa %s34, 0
    %36 = vsyncpa [#allocation6], 0
    %s37 = scalar_lea.sflag [#allocation6], 1
    %38 = vsyncpa %s37, 0
    %39 = vsyncpa [#allocation9], 0
    %s40 = scalar_lea.sflag [#allocation9], 1
    %41 = vsyncpa %s40, 0
    %42 = vsyncpa [#allocation12], 0
    %s43 = scalar_lea.sflag [#allocation12], 1
    %44 = vsyncpa %s43, 0
    %45 = vsyncpa [#allocation15], 0
    %s46 = scalar_lea.sflag [#allocation15], 1
    %47 = vsyncpa %s46, 0
    loop: start=0, step=1, limit=6
    $region2: #{transformer_forward.6} parent=1 // loop_pre_header
      _
    $region3: #{transformer_forward.6} parent=1 // loop_header
      %s49 = sphi 0, %s53
      %p50 = scmp.ge.s32.totalorder %s49, 6
      %s56 = sphi 0, %s68
      %s57 = sphi 0, %s64
      %s58 = sphi 0, %s56
      %s59 = sphi 0, %s57
      %s60 = sphi 0, %s58
      %s61 = sphi 0, %s59
      %s71 = sphi 0, %s73
      %s74 = sphi 0, %s71
      %s75 = sphi 0, %s74
      %s91 = sphi 0, %s75
      %s97 = sphi 0, %s99
      %s100 = sphi 0, %s97
      %s101 = sphi 0, %s100
      %s117 = sphi 0, %s101
      %s123 = sphi 0, %s125
      %s126 = sphi 0, %s123
      %s127 = sphi 0, %s126
      %s143 = sphi 0, %s127
      %s149 = sphi 0, %s151
      %s152 = sphi 0, %s149
      %s153 = sphi 0, %s152
      %s169 = sphi 0, %s153
      %s173 = sphi 0, %s173
      %s175 = sphi 0, %s173
      %s176 = sphi 0, %s175
      %s190 = sphi 0, %s176
      %s194 = sphi 0, %s194
      %s196 = sphi 0, %s194
      %s197 = sphi 0, %s196
      %s211 = sphi 0, %s197
      %s215 = sphi 0, %s215
      %s217 = sphi 0, %s215
      %s218 = sphi 0, %s217
      %s232 = sphi 0, %s218
      %s236 = sphi 0, %s236
      %s238 = sphi 0, %s236
      %s239 = sphi 0, %s238
      %s253 = sphi 0, %s239
      %s259 = sphi 0, %s261
      %s262 = sphi 0, %s259
      %s263 = sphi 0, %s262
      %s279 = sphi 0, %s263
      %s285 = sphi 0, %s287
      %s288 = sphi 0, %s285
      %s289 = sphi 0, %s288
      %s305 = sphi 0, %s289
      %s311 = sphi 0, %s313
      %s314 = sphi 0, %s311
      %s315 = sphi 0, %s314
      %s331 = sphi 0, %s315
      %s337 = sphi 0, %s339
      %s340 = sphi 0, %s337
      %s341 = sphi 0, %s340
      %s357 = sphi 0, %s341
      %s363 = sphi 0, %s365
      %s366 = sphi 0, %s363
      %s367 = sphi 0, %s366
      %s383 = sphi 0, %s367
      %s389 = sphi 0, %s391
      %s392 = sphi 0, %s389
      %s393 = sphi 0, %s392
      %s409 = sphi 0, %s393
      %s415 = sphi 0, %s417
      %s418 = sphi 0, %s415
      %s419 = sphi 0, %s418
      %s435 = sphi 0, %s419
      %s441 = sphi 0, %s443
      %s444 = sphi 0, %s441
      %s445 = sphi 0, %s444
      %s461 = sphi 0, %s445
      %s467 = sphi 0, %s469
      %s470 = sphi 0, %s467
      %s471 = sphi 0, %s470
      %s487 = sphi 0, %s471
      %s493 = sphi 0, %s495
      %s496 = sphi 0, %s493
      %s497 = sphi 0, %s496
      %s513 = sphi 0, %s497
      %s519 = sphi 0, %s521
      %s522 = sphi 0, %s519
      %s523 = sphi 0, %s522
      %s539 = sphi 0, %s523
      %s545 = sphi 0, %s547
      %s548 = sphi 0, %s545
      %s549 = sphi 0, %s548
      %s565 = sphi 0, %s549
      %s571 = sphi 0, %s573
      %s574 = sphi 0, %s571
      %s575 = sphi 0, %s574
      %s591 = sphi 0, %s575
      %s597 = sphi 0, %s599
      %s600 = sphi 0, %s597
      %s601 = sphi 0, %s600
      %s617 = sphi 0, %s601
      %s623 = sphi 0, %s625
      %s626 = sphi 0, %s623
      %s627 = sphi 0, %s626
      %s643 = sphi 0, %s627
      %s649 = sphi 0, %s651
      %s652 = sphi 0, %s649
      %s653 = sphi 0, %s652
      %s669 = sphi 0, %s653
      %s675 = sphi 0, %s677
      %s678 = sphi 0, %s675
      %s679 = sphi 0, %s678
      %s695 = sphi 0, %s679
      %s701 = sphi 0, %s703
      %s704 = sphi 0, %s701
      %s705 = sphi 0, %s704
      %s721 = sphi 0, %s705
      %s727 = sphi 0, %s729
      %s730 = sphi 0, %s727
      %s731 = sphi 0, %s730
      %s747 = sphi 0, %s731
      %s753 = sphi 0, %s755
      %s756 = sphi 0, %s753
      %s757 = sphi 0, %s756
      %s773 = sphi 0, %s757
      %s779 = sphi 0, %s781
      %s782 = sphi 0, %s779
      %s783 = sphi 0, %s782
      %s799 = sphi 0, %s783
    $region4: #{transformer_forward.6} parent=1 // loop_header_branch
      %52 = sbr.rel (%p50) target = $region8
    $region5: #{transformer_forward.6} parent=1 // loop_body
      %s54 = ssub.s32 %s49, 1
      %s55 = ssub.s32 %s49, 2
      %s62 = sadd.s32 1, %s57
      %p63 = scmp.ge.s32.totalorder %s62, 2
      %s64 = scalar_select %p63, 0, %s62
      %s65 = sadd.s32 1, %s56
      %s66 = scalar_select %p63, %s65, %s56
      %p67 = scmp.ge.s32.totalorder %s66, 2
      %s68 = scalar_select %p67, 0, %s66
      %s69 = ssub.s32 %s56, %s68
      %p70 = scmp.eq.s32.totalorder %s69, 0
      %s72 = sadd.s32 %s71, 1
      %s73 = scalar_select %p70, %s71, %s72
      %p76 = pneg %p70
      %p77 = scmp.eq.s32.totalorder %s49, 3
      %p78 = por %p76, %p77
      %p79 = scmp.ne.s32.totalorder %s71, %s74
      %p80 = scmp.eq.s32.totalorder %s49, 0
      %p81 = por %p79, %p80
      %p82 = scmp.ne.s32.totalorder %s71, %s74
      %p83 = scmp.eq.s32.totalorder %s54, 3
      %p84 = por %p82, %p83
      %p85 = scmp.ne.s32.totalorder %s74, %s75
      %p86 = scmp.eq.s32.totalorder %s54, 0
      %p87 = por %p85, %p86
      %p88 = scmp.ne.s32.totalorder %s74, %s75
      %p89 = scmp.eq.s32.totalorder %s55, 3
      %p90 = por %p88, %p89
      %p92 = scmp.ne.s32.totalorder %s75, %s91
      %p93 = scmp.eq.s32.totalorder %s55, 0
      %p94 = por %p92, %p93
      %s95 = ssub.s32 %s56, %s68
      %p96 = scmp.eq.s32.totalorder %s95, 0
      %s98 = sadd.s32 %s97, 1
      %s99 = scalar_select %p96, %s97, %s98
      %p102 = pneg %p96
      %p103 = scmp.eq.s32.totalorder %s49, 3
      %p104 = por %p102, %p103
      %p105 = scmp.ne.s32.totalorder %s97, %s100
      %p106 = scmp.eq.s32.totalorder %s49, 0
      %p107 = por %p105, %p106
      %p108 = scmp.ne.s32.totalorder %s97, %s100
      %p109 = scmp.eq.s32.totalorder %s54, 3
      %p110 = por %p108, %p109
      %p111 = scmp.ne.s32.totalorder %s100, %s101
      %p112 = scmp.eq.s32.totalorder %s54, 0
      %p113 = por %p111, %p112
      %p114 = scmp.ne.s32.totalorder %s100, %s101
      %p115 = scmp.eq.s32.totalorder %s55, 3
      %p116 = por %p114, %p115
      %p118 = scmp.ne.s32.totalorder %s101, %s117
      %p119 = scmp.eq.s32.totalorder %s55, 0
      %p120 = por %p118, %p119
      %s121 = ssub.s32 %s56, %s68
      %p122 = scmp.eq.s32.totalorder %s121, 0
      %s124 = sadd.s32 %s123, 1
      %s125 = scalar_select %p122, %s123, %s124
      %p128 = pneg %p122
      %p129 = scmp.eq.s32.totalorder %s49, 3
      %p130 = por %p128, %p129
      %p131 = scmp.ne.s32.totalorder %s123, %s126
      %p132 = scmp.eq.s32.totalorder %s49, 0
      %p133 = por %p131, %p132
      %p134 = scmp.ne.s32.totalorder %s123, %s126
      %p135 = scmp.eq.s32.totalorder %s54, 3
      %p136 = por %p134, %p135
      %p137 = scmp.ne.s32.totalorder %s126, %s127
      %p138 = scmp.eq.s32.totalorder %s54, 0
      %p139 = por %p137, %p138
      %p140 = scmp.ne.s32.totalorder %s126, %s127
      %p141 = scmp.eq.s32.totalorder %s55, 3
      %p142 = por %p140, %p141
      %p144 = scmp.ne.s32.totalorder %s127, %s143
      %p145 = scmp.eq.s32.totalorder %s55, 0
      %p146 = por %p144, %p145
      %s147 = ssub.s32 %s56, %s68
      %p148 = scmp.eq.s32.totalorder %s147, 0
      %s150 = sadd.s32 %s149, 1
      %s151 = scalar_select %p148, %s149, %s150
      %p154 = pneg %p148
      %p155 = scmp.eq.s32.totalorder %s49, 3
      %p156 = por %p154, %p155
      %p157 = scmp.ne.s32.totalorder %s149, %s152
      %p158 = scmp.eq.s32.totalorder %s49, 0
      %p159 = por %p157, %p158
      %p160 = scmp.ne.s32.totalorder %s149, %s152
      %p161 = scmp.eq.s32.totalorder %s54, 3
      %p162 = por %p160, %p161
      %p163 = scmp.ne.s32.totalorder %s152, %s153
      %p164 = scmp.eq.s32.totalorder %s54, 0
      %p165 = por %p163, %p164
      %p166 = scmp.ne.s32.totalorder %s152, %s153
      %p167 = scmp.eq.s32.totalorder %s55, 3
      %p168 = por %p166, %p167
      %p170 = scmp.ne.s32.totalorder %s153, %s169
      %p171 = scmp.eq.s32.totalorder %s55, 0
      %p172 = por %p170, %p171
      %s174 = sadd.s32 %s173, 1
      %p177 = scmp.eq.s32.totalorder %s49, 3
      %p178 = scmp.ne.s32.totalorder %s173, %s175
      %p179 = scmp.eq.s32.totalorder %s49, 0
      %p180 = por %p178, %p179
      %p181 = scmp.ne.s32.totalorder %s173, %s175
      %p182 = scmp.eq.s32.totalorder %s54, 3
      %p183 = por %p181, %p182
      %p184 = scmp.ne.s32.totalorder %s175, %s176
      %p185 = scmp.eq.s32.totalorder %s54, 0
      %p186 = por %p184, %p185
      %p187 = scmp.ne.s32.totalorder %s175, %s176
      %p188 = scmp.eq.s32.totalorder %s55, 3
      %p189 = por %p187, %p188
      %p191 = scmp.ne.s32.totalorder %s176, %s190
      %p192 = scmp.eq.s32.totalorder %s55, 0
      %p193 = por %p191, %p192
      %s195 = sadd.s32 %s194, 1
      %p198 = scmp.eq.s32.totalorder %s49, 3
      %p199 = scmp.ne.s32.totalorder %s194, %s196
      %p200 = scmp.eq.s32.totalorder %s49, 0
      %p201 = por %p199, %p200
      %p202 = scmp.ne.s32.totalorder %s194, %s196
      %p203 = scmp.eq.s32.totalorder %s54, 3
      %p204 = por %p202, %p203
      %p205 = scmp.ne.s32.totalorder %s196, %s197
      %p206 = scmp.eq.s32.totalorder %s54, 0
      %p207 = por %p205, %p206
      %p208 = scmp.ne.s32.totalorder %s196, %s197
      %p209 = scmp.eq.s32.totalorder %s55, 3
      %p210 = por %p208, %p209
      %p212 = scmp.ne.s32.totalorder %s197, %s211
      %p213 = scmp.eq.s32.totalorder %s55, 0
      %p214 = por %p212, %p213
      %s216 = sadd.s32 %s215, 1
      %p219 = scmp.eq.s32.totalorder %s49, 3
      %p220 = scmp.ne.s32.totalorder %s215, %s217
      %p221 = scmp.eq.s32.totalorder %s49, 0
      %p222 = por %p220, %p221
      %p223 = scmp.ne.s32.totalorder %s215, %s217
      %p224 = scmp.eq.s32.totalorder %s54, 3
      %p225 = por %p223, %p224
      %p226 = scmp.ne.s32.totalorder %s217, %s218
      %p227 = scmp.eq.s32.totalorder %s54, 0
      %p228 = por %p226, %p227
      %p229 = scmp.ne.s32.totalorder %s217, %s218
      %p230 = scmp.eq.s32.totalorder %s55, 3
      %p231 = por %p229, %p230
      %p233 = scmp.ne.s32.totalorder %s218, %s232
      %p234 = scmp.eq.s32.totalorder %s55, 0
      %p235 = por %p233, %p234
      %s237 = sadd.s32 %s236, 1
      %p240 = scmp.eq.s32.totalorder %s49, 3
      %p241 = scmp.ne.s32.totalorder %s236, %s238
      %p242 = scmp.eq.s32.totalorder %s49, 0
      %p243 = por %p241, %p242
      %p244 = scmp.ne.s32.totalorder %s236, %s238
      %p245 = scmp.eq.s32.totalorder %s54, 3
      %p246 = por %p244, %p245
      %p247 = scmp.ne.s32.totalorder %s238, %s239
      %p248 = scmp.eq.s32.totalorder %s54, 0
      %p249 = por %p247, %p248
      %p250 = scmp.ne.s32.totalorder %s238, %s239
      %p251 = scmp.eq.s32.totalorder %s55, 3
      %p252 = por %p250, %p251
      %p254 = scmp.ne.s32.totalorder %s239, %s253
      %p255 = scmp.eq.s32.totalorder %s55, 0
      %p256 = por %p254, %p255
      %s257 = ssub.s32 %s57, %s64
      %p258 = scmp.eq.s32.totalorder %s257, 0
      %s260 = sadd.s32 %s259, 1
      %s261 = scalar_select %p258, %s259, %s260
      %p264 = pneg %p258
      %p265 = scmp.eq.s32.totalorder %s49, 3
      %p266 = por %p264, %p265
      %p267 = scmp.ne.s32.totalorder %s259, %s262
      %p268 = scmp.eq.s32.totalorder %s49, 0
      %p269 = por %p267, %p268
      %p270 = scmp.ne.s32.totalorder %s259, %s262
      %p271 = scmp.eq.s32.totalorder %s54, 3
      %p272 = por %p270, %p271
      %p273 = scmp.ne.s32.totalorder %s262, %s263
      %p274 = scmp.eq.s32.totalorder %s54, 0
      %p275 = por %p273, %p274
      %p276 = scmp.ne.s32.totalorder %s262, %s263
      %p277 = scmp.eq.s32.totalorder %s55, 3
      %p278 = por %p276, %p277
      %p280 = scmp.ne.s32.totalorder %s263, %s279
      %p281 = scmp.eq.s32.totalorder %s55, 0
      %p282 = por %p280, %p281
      %s283 = ssub.s32 %s57, %s64
      %p284 = scmp.eq.s32.totalorder %s283, 0
      %s286 = sadd.s32 %s285, 1
      %s287 = scalar_select %p284, %s285, %s286
      %p290 = pneg %p284
      %p291 = scmp.eq.s32.totalorder %s49, 3
      %p292 = por %p290, %p291
      %p293 = scmp.ne.s32.totalorder %s285, %s288
      %p294 = scmp.eq.s32.totalorder %s49, 0
      %p295 = por %p293, %p294
      %p296 = scmp.ne.s32.totalorder %s285, %s288
      %p297 = scmp.eq.s32.totalorder %s54, 3
      %p298 = por %p296, %p297
      %p299 = scmp.ne.s32.totalorder %s288, %s289
      %p300 = scmp.eq.s32.totalorder %s54, 0
      %p301 = por %p299, %p300
      %p302 = scmp.ne.s32.totalorder %s288, %s289
      %p303 = scmp.eq.s32.totalorder %s55, 3
      %p304 = por %p302, %p303
      %p306 = scmp.ne.s32.totalorder %s289, %s305
      %p307 = scmp.eq.s32.totalorder %s55, 0
      %p308 = por %p306, %p307
      %s309 = ssub.s32 %s57, %s64
      %p310 = scmp.eq.s32.totalorder %s309, 0
      %s312 = sadd.s32 %s311, 1
      %s313 = scalar_select %p310, %s311, %s312
      %p316 = pneg %p310
      %p317 = scmp.eq.s32.totalorder %s49, 3
      %p318 = por %p316, %p317
      %p319 = scmp.ne.s32.totalorder %s311, %s314
      %p320 = scmp.eq.s32.totalorder %s49, 0
      %p321 = por %p319, %p320
      %p322 = scmp.ne.s32.totalorder %s311, %s314
      %p323 = scmp.eq.s32.totalorder %s54, 3
      %p324 = por %p322, %p323
      %p325 = scmp.ne.s32.totalorder %s314, %s315
      %p326 = scmp.eq.s32.totalorder %s54, 0
      %p327 = por %p325, %p326
      %p328 = scmp.ne.s32.totalorder %s314, %s315
      %p329 = scmp.eq.s32.totalorder %s55, 3
      %p330 = por %p328, %p329
      %p332 = scmp.ne.s32.totalorder %s315, %s331
      %p333 = scmp.eq.s32.totalorder %s55, 0
      %p334 = por %p332, %p333
      %s335 = ssub.s32 %s57, %s64
      %p336 = scmp.eq.s32.totalorder %s335, 0
      %s338 = sadd.s32 %s337, 1
      %s339 = scalar_select %p336, %s337, %s338
      %p342 = pneg %p336
      %p343 = scmp.eq.s32.totalorder %s49, 3
      %p344 = por %p342, %p343
      %p345 = scmp.ne.s32.totalorder %s337, %s340
      %p346 = scmp.eq.s32.totalorder %s49, 0
      %p347 = por %p345, %p346
      %p348 = scmp.ne.s32.totalorder %s337, %s340
      %p349 = scmp.eq.s32.totalorder %s54, 3
      %p350 = por %p348, %p349
      %p351 = scmp.ne.s32.totalorder %s340, %s341
      %p352 = scmp.eq.s32.totalorder %s54, 0
      %p353 = por %p351, %p352
      %p354 = scmp.ne.s32.totalorder %s340, %s341
      %p355 = scmp.eq.s32.totalorder %s55, 3
      %p356 = por %p354, %p355
      %p358 = scmp.ne.s32.totalorder %s341, %s357
      %p359 = scmp.eq.s32.totalorder %s55, 0
      %p360 = por %p358, %p359
      %s361 = ssub.s32 %s57, %s64
      %p362 = scmp.eq.s32.totalorder %s361, 0
      %s364 = sadd.s32 %s363, 1
      %s365 = scalar_select %p362, %s363, %s364
      %p368 = pneg %p362
      %p369 = scmp.eq.s32.totalorder %s49, 3
      %p370 = por %p368, %p369
      %p371 = scmp.ne.s32.totalorder %s363, %s366
      %p372 = scmp.eq.s32.totalorder %s49, 0
      %p373 = por %p371, %p372
      %p374 = scmp.ne.s32.totalorder %s363, %s366
      %p375 = scmp.eq.s32.totalorder %s54, 3
      %p376 = por %p374, %p375
      %p377 = scmp.ne.s32.totalorder %s366, %s367
      %p378 = scmp.eq.s32.totalorder %s54, 0
      %p379 = por %p377, %p378
      %p380 = scmp.ne.s32.totalorder %s366, %s367
      %p381 = scmp.eq.s32.totalorder %s55, 3
      %p382 = por %p380, %p381
      %p384 = scmp.ne.s32.totalorder %s367, %s383
      %p385 = scmp.eq.s32.totalorder %s55, 0
      %p386 = por %p384, %p385
      %s387 = ssub.s32 %s57, %s64
      %p388 = scmp.eq.s32.totalorder %s387, 0
      %s390 = sadd.s32 %s389, 1
      %s391 = scalar_select %p388, %s389, %s390
      %p394 = pneg %p388
      %p395 = scmp.eq.s32.totalorder %s49, 3
      %p396 = por %p394, %p395
      %p397 = scmp.ne.s32.totalorder %s389, %s392
      %p398 = scmp.eq.s32.totalorder %s49, 0
      %p399 = por %p397, %p398
      %p400 = scmp.ne.s32.totalorder %s389, %s392
      %p401 = scmp.eq.s32.totalorder %s54, 3
      %p402 = por %p400, %p401
      %p403 = scmp.ne.s32.totalorder %s392, %s393
      %p404 = scmp.eq.s32.totalorder %s54, 0
      %p405 = por %p403, %p404
      %p406 = scmp.ne.s32.totalorder %s392, %s393
      %p407 = scmp.eq.s32.totalorder %s55, 3
      %p408 = por %p406, %p407
      %p410 = scmp.ne.s32.totalorder %s393, %s409
      %p411 = scmp.eq.s32.totalorder %s55, 0
      %p412 = por %p410, %p411
      %s413 = ssub.s32 %s57, %s64
      %p414 = scmp.eq.s32.totalorder %s413, 0
      %s416 = sadd.s32 %s415, 1
      %s417 = scalar_select %p414, %s415, %s416
      %p420 = pneg %p414
      %p421 = scmp.eq.s32.totalorder %s49, 3
      %p422 = por %p420, %p421
      %p423 = scmp.ne.s32.totalorder %s415, %s418
      %p424 = scmp.eq.s32.totalorder %s49, 0
      %p425 = por %p423, %p424
      %p426 = scmp.ne.s32.totalorder %s415, %s418
      %p427 = scmp.eq.s32.totalorder %s54, 3
      %p428 = por %p426, %p427
      %p429 = scmp.ne.s32.totalorder %s418, %s419
      %p430 = scmp.eq.s32.totalorder %s54, 0
      %p431 = por %p429, %p430
      %p432 = scmp.ne.s32.totalorder %s418, %s419
      %p433 = scmp.eq.s32.totalorder %s55, 3
      %p434 = por %p432, %p433
      %p436 = scmp.ne.s32.totalorder %s419, %s435
      %p437 = scmp.eq.s32.totalorder %s55, 0
      %p438 = por %p436, %p437
      %s439 = ssub.s32 %s57, %s64
      %p440 = scmp.eq.s32.totalorder %s439, 0
      %s442 = sadd.s32 %s441, 1
      %s443 = scalar_select %p440, %s441, %s442
      %p446 = pneg %p440
      %p447 = scmp.eq.s32.totalorder %s49, 3
      %p448 = por %p446, %p447
      %p449 = scmp.ne.s32.totalorder %s441, %s444
      %p450 = scmp.eq.s32.totalorder %s49, 0
      %p451 = por %p449, %p450
      %p452 = scmp.ne.s32.totalorder %s441, %s444
      %p453 = scmp.eq.s32.totalorder %s54, 3
      %p454 = por %p452, %p453
      %p455 = scmp.ne.s32.totalorder %s444, %s445
      %p456 = scmp.eq.s32.totalorder %s54, 0
      %p457 = por %p455, %p456
      %p458 = scmp.ne.s32.totalorder %s444, %s445
      %p459 = scmp.eq.s32.totalorder %s55, 3
      %p460 = por %p458, %p459
      %p462 = scmp.ne.s32.totalorder %s445, %s461
      %p463 = scmp.eq.s32.totalorder %s55, 0
      %p464 = por %p462, %p463
      %s465 = ssub.s32 %s57, %s64
      %p466 = scmp.eq.s32.totalorder %s465, 0
      %s468 = sadd.s32 %s467, 1
      %s469 = scalar_select %p466, %s467, %s468
      %p472 = pneg %p466
      %p473 = scmp.eq.s32.totalorder %s49, 3
      %p474 = por %p472, %p473
      %p475 = scmp.ne.s32.totalorder %s467, %s470
      %p476 = scmp.eq.s32.totalorder %s49, 0
      %p477 = por %p475, %p476
      %p478 = scmp.ne.s32.totalorder %s467, %s470
      %p479 = scmp.eq.s32.totalorder %s54, 3
      %p480 = por %p478, %p479
      %p481 = scmp.ne.s32.totalorder %s470, %s471
      %p482 = scmp.eq.s32.totalorder %s54, 0
      %p483 = por %p481, %p482
      %p484 = scmp.ne.s32.totalorder %s470, %s471
      %p485 = scmp.eq.s32.totalorder %s55, 3
      %p486 = por %p484, %p485
      %p488 = scmp.ne.s32.totalorder %s471, %s487
      %p489 = scmp.eq.s32.totalorder %s55, 0
      %p490 = por %p488, %p489
      %s491 = ssub.s32 %s57, %s64
      %p492 = scmp.eq.s32.totalorder %s491, 0
      %s494 = sadd.s32 %s493, 1
      %s495 = scalar_select %p492, %s493, %s494
      %p498 = pneg %p492
      %p499 = scmp.eq.s32.totalorder %s49, 3
      %p500 = por %p498, %p499
      %p501 = scmp.ne.s32.totalorder %s493, %s496
      %p502 = scmp.eq.s32.totalorder %s49, 0
      %p503 = por %p501, %p502
      %p504 = scmp.ne.s32.totalorder %s493, %s496
      %p505 = scmp.eq.s32.totalorder %s54, 3
      %p506 = por %p504, %p505
      %p507 = scmp.ne.s32.totalorder %s496, %s497
      %p508 = scmp.eq.s32.totalorder %s54, 0
      %p509 = por %p507, %p508
      %p510 = scmp.ne.s32.totalorder %s496, %s497
      %p511 = scmp.eq.s32.totalorder %s55, 3
      %p512 = por %p510, %p511
      %p514 = scmp.ne.s32.totalorder %s497, %s513
      %p515 = scmp.eq.s32.totalorder %s55, 0
      %p516 = por %p514, %p515
      %s517 = ssub.s32 %s57, %s64
      %p518 = scmp.eq.s32.totalorder %s517, 0
      %s520 = sadd.s32 %s519, 1
      %s521 = scalar_select %p518, %s519, %s520
      %p524 = pneg %p518
      %p525 = scmp.eq.s32.totalorder %s49, 3
      %p526 = por %p524, %p525
      %p527 = scmp.ne.s32.totalorder %s519, %s522
      %p528 = scmp.eq.s32.totalorder %s49, 0
      %p529 = por %p527, %p528
      %p530 = scmp.ne.s32.totalorder %s519, %s522
      %p531 = scmp.eq.s32.totalorder %s54, 3
      %p532 = por %p530, %p531
      %p533 = scmp.ne.s32.totalorder %s522, %s523
      %p534 = scmp.eq.s32.totalorder %s54, 0
      %p535 = por %p533, %p534
      %p536 = scmp.ne.s32.totalorder %s522, %s523
      %p537 = scmp.eq.s32.totalorder %s55, 3
      %p538 = por %p536, %p537
      %p540 = scmp.ne.s32.totalorder %s523, %s539
      %p541 = scmp.eq.s32.totalorder %s55, 0
      %p542 = por %p540, %p541
      %s543 = ssub.s32 %s57, %s64
      %p544 = scmp.eq.s32.totalorder %s543, 0
      %s546 = sadd.s32 %s545, 1
      %s547 = scalar_select %p544, %s545, %s546
      %p550 = pneg %p544
      %p551 = scmp.eq.s32.totalorder %s49, 3
      %p552 = por %p550, %p551
      %p553 = scmp.ne.s32.totalorder %s545, %s548
      %p554 = scmp.eq.s32.totalorder %s49, 0
      %p555 = por %p553, %p554
      %p556 = scmp.ne.s32.totalorder %s545, %s548
      %p557 = scmp.eq.s32.totalorder %s54, 3
      %p558 = por %p556, %p557
      %p559 = scmp.ne.s32.totalorder %s548, %s549
      %p560 = scmp.eq.s32.totalorder %s54, 0
      %p561 = por %p559, %p560
      %p562 = scmp.ne.s32.totalorder %s548, %s549
      %p563 = scmp.eq.s32.totalorder %s55, 3
      %p564 = por %p562, %p563
      %p566 = scmp.ne.s32.totalorder %s549, %s565
      %p567 = scmp.eq.s32.totalorder %s55, 0
      %p568 = por %p566, %p567
      %s569 = ssub.s32 %s57, %s64
      %p570 = scmp.eq.s32.totalorder %s569, 0
      %s572 = sadd.s32 %s571, 1
      %s573 = scalar_select %p570, %s571, %s572
      %p576 = pneg %p570
      %p577 = scmp.eq.s32.totalorder %s49, 3
      %p578 = por %p576, %p577
      %p579 = scmp.ne.s32.totalorder %s571, %s574
      %p580 = scmp.eq.s32.totalorder %s49, 0
      %p581 = por %p579, %p580
      %p582 = scmp.ne.s32.totalorder %s571, %s574
      %p583 = scmp.eq.s32.totalorder %s54, 3
      %p584 = por %p582, %p583
      %p585 = scmp.ne.s32.totalorder %s574, %s575
      %p586 = scmp.eq.s32.totalorder %s54, 0
      %p587 = por %p585, %p586
      %p588 = scmp.ne.s32.totalorder %s574, %s575
      %p589 = scmp.eq.s32.totalorder %s55, 3
      %p590 = por %p588, %p589
      %p592 = scmp.ne.s32.totalorder %s575, %s591
      %p593 = scmp.eq.s32.totalorder %s55, 0
      %p594 = por %p592, %p593
      %s595 = ssub.s32 %s57, %s64
      %p596 = scmp.eq.s32.totalorder %s595, 0
      %s598 = sadd.s32 %s597, 1
      %s599 = scalar_select %p596, %s597, %s598
      %p602 = pneg %p596
      %p603 = scmp.eq.s32.totalorder %s49, 3
      %p604 = por %p602, %p603
      %p605 = scmp.ne.s32.totalorder %s597, %s600
      %p606 = scmp.eq.s32.totalorder %s49, 0
      %p607 = por %p605, %p606
      %p608 = scmp.ne.s32.totalorder %s597, %s600
      %p609 = scmp.eq.s32.totalorder %s54, 3
      %p610 = por %p608, %p609
      %p611 = scmp.ne.s32.totalorder %s600, %s601
      %p612 = scmp.eq.s32.totalorder %s54, 0
      %p613 = por %p611, %p612
      %p614 = scmp.ne.s32.totalorder %s600, %s601
      %p615 = scmp.eq.s32.totalorder %s55, 3
      %p616 = por %p614, %p615
      %p618 = scmp.ne.s32.totalorder %s601, %s617
      %p619 = scmp.eq.s32.totalorder %s55, 0
      %p620 = por %p618, %p619
      %s621 = ssub.s32 %s57, %s64
      %p622 = scmp.eq.s32.totalorder %s621, 0
      %s624 = sadd.s32 %s623, 1
      %s625 = scalar_select %p622, %s623, %s624
      %p628 = pneg %p622
      %p629 = scmp.eq.s32.totalorder %s49, 3
      %p630 = por %p628, %p629
      %p631 = scmp.ne.s32.totalorder %s623, %s626
      %p632 = scmp.eq.s32.totalorder %s49, 0
      %p633 = por %p631, %p632
      %p634 = scmp.ne.s32.totalorder %s623, %s626
      %p635 = scmp.eq.s32.totalorder %s54, 3
      %p636 = por %p634, %p635
      %p637 = scmp.ne.s32.totalorder %s626, %s627
      %p638 = scmp.eq.s32.totalorder %s54, 0
      %p639 = por %p637, %p638
      %p640 = scmp.ne.s32.totalorder %s626, %s627
      %p641 = scmp.eq.s32.totalorder %s55, 3
      %p642 = por %p640, %p641
      %p644 = scmp.ne.s32.totalorder %s627, %s643
      %p645 = scmp.eq.s32.totalorder %s55, 0
      %p646 = por %p644, %p645
      %s647 = ssub.s32 %s57, %s64
      %p648 = scmp.eq.s32.totalorder %s647, 0
      %s650 = sadd.s32 %s649, 1
      %s651 = scalar_select %p648, %s649, %s650
      %p654 = pneg %p648
      %p655 = scmp.eq.s32.totalorder %s49, 3
      %p656 = por %p654, %p655
      %p657 = scmp.ne.s32.totalorder %s649, %s652
      %p658 = scmp.eq.s32.totalorder %s49, 0
      %p659 = por %p657, %p658
      %p660 = scmp.ne.s32.totalorder %s649, %s652
      %p661 = scmp.eq.s32.totalorder %s54, 3
      %p662 = por %p660, %p661
      %p663 = scmp.ne.s32.totalorder %s652, %s653
      %p664 = scmp.eq.s32.totalorder %s54, 0
      %p665 = por %p663, %p664
      %p666 = scmp.ne.s32.totalorder %s652, %s653
      %p667 = scmp.eq.s32.totalorder %s55, 3
      %p668 = por %p666, %p667
      %p670 = scmp.ne.s32.totalorder %s653, %s669
      %p671 = scmp.eq.s32.totalorder %s55, 0
      %p672 = por %p670, %p671
      %s673 = ssub.s32 %s57, %s64
      %p674 = scmp.eq.s32.totalorder %s673, 0
      %s676 = sadd.s32 %s675, 1
      %s677 = scalar_select %p674, %s675, %s676
      %p680 = pneg %p674
      %p681 = scmp.eq.s32.totalorder %s49, 3
      %p682 = por %p680, %p681
      %p683 = scmp.ne.s32.totalorder %s675, %s678
      %p684 = scmp.eq.s32.totalorder %s49, 0
      %p685 = por %p683, %p684
      %p686 = scmp.ne.s32.totalorder %s675, %s678
      %p687 = scmp.eq.s32.totalorder %s54, 3
      %p688 = por %p686, %p687
      %p689 = scmp.ne.s32.totalorder %s678, %s679
      %p690 = scmp.eq.s32.totalorder %s54, 0
      %p691 = por %p689, %p690
      %p692 = scmp.ne.s32.totalorder %s678, %s679
      %p693 = scmp.eq.s32.totalorder %s55, 3
      %p694 = por %p692, %p693
      %p696 = scmp.ne.s32.totalorder %s679, %s695
      %p697 = scmp.eq.s32.totalorder %s55, 0
      %p698 = por %p696, %p697
      %s699 = ssub.s32 %s57, %s64
      %p700 = scmp.eq.s32.totalorder %s699, 0
      %s702 = sadd.s32 %s701, 1
      %s703 = scalar_select %p700, %s701, %s702
      %p706 = pneg %p700
      %p707 = scmp.eq.s32.totalorder %s49, 3
      %p708 = por %p706, %p707
      %p709 = scmp.ne.s32.totalorder %s701, %s704
      %p710 = scmp.eq.s32.totalorder %s49, 0
      %p711 = por %p709, %p710
      %p712 = scmp.ne.s32.totalorder %s701, %s704
      %p713 = scmp.eq.s32.totalorder %s54, 3
      %p714 = por %p712, %p713
      %p715 = scmp.ne.s32.totalorder %s704, %s705
      %p716 = scmp.eq.s32.totalorder %s54, 0
      %p717 = por %p715, %p716
      %p718 = scmp.ne.s32.totalorder %s704, %s705
      %p719 = scmp.eq.s32.totalorder %s55, 3
      %p720 = por %p718, %p719
      %p722 = scmp.ne.s32.totalorder %s705, %s721
      %p723 = scmp.eq.s32.totalorder %s55, 0
      %p724 = por %p722, %p723
      %s725 = ssub.s32 %s57, %s64
      %p726 = scmp.eq.s32.totalorder %s725, 0
      %s728 = sadd.s32 %s727, 1
      %s729 = scalar_select %p726, %s727, %s728
      %p732 = pneg %p726
      %p733 = scmp.eq.s32.totalorder %s49, 3
      %p734 = por %p732, %p733
      %p735 = scmp.ne.s32.totalorder %s727, %s730
      %p736 = scmp.eq.s32.totalorder %s49, 0
      %p737 = por %p735, %p736
      %p738 = scmp.ne.s32.totalorder %s727, %s730
      %p739 = scmp.eq.s32.totalorder %s54, 3
      %p740 = por %p738, %p739
      %p741 = scmp.ne.s32.totalorder %s730, %s731
      %p742 = scmp.eq.s32.totalorder %s54, 0
      %p743 = por %p741, %p742
      %p744 = scmp.ne.s32.totalorder %s730, %s731
      %p745 = scmp.eq.s32.totalorder %s55, 3
      %p746 = por %p744, %p745
      %p748 = scmp.ne.s32.totalorder %s731, %s747
      %p749 = scmp.eq.s32.totalorder %s55, 0
      %p750 = por %p748, %p749
      %s751 = ssub.s32 %s57, %s64
      %p752 = scmp.eq.s32.totalorder %s751, 0
      %s754 = sadd.s32 %s753, 1
      %s755 = scalar_select %p752, %s753, %s754
      %p758 = pneg %p752
      %p759 = scmp.eq.s32.totalorder %s49, 3
      %p760 = por %p758, %p759
      %p761 = scmp.ne.s32.totalorder %s753, %s756
      %p762 = scmp.eq.s32.totalorder %s49, 0
      %p763 = por %p761, %p762
      %p764 = scmp.ne.s32.totalorder %s753, %s756
      %p765 = scmp.eq.s32.totalorder %s54, 3
      %p766 = por %p764, %p765
      %p767 = scmp.ne.s32.totalorder %s756, %s757
      %p768 = scmp.eq.s32.totalorder %s54, 0
      %p769 = por %p767, %p768
      %p770 = scmp.ne.s32.totalorder %s756, %s757
      %p771 = scmp.eq.s32.totalorder %s55, 3
      %p772 = por %p770, %p771
      %p774 = scmp.ne.s32.totalorder %s757, %s773
      %p775 = scmp.eq.s32.totalorder %s55, 0
      %p776 = por %p774, %p775
      %s777 = ssub.s32 %s56, %s68
      %p778 = scmp.eq.s32.totalorder %s777, 0
      %s780 = sadd.s32 %s779, 1
      %s781 = scalar_select %p778, %s779, %s780
      %p784 = pneg %p778
      %p785 = scmp.eq.s32.totalorder %s49, 3
      %p786 = por %p784, %p785
      %p787 = scmp.ne.s32.totalorder %s779, %s782
      %p788 = scmp.eq.s32.totalorder %s49, 0
      %p789 = por %p787, %p788
      %p790 = scmp.ne.s32.totalorder %s779, %s782
      %p791 = scmp.eq.s32.totalorder %s54, 3
      %p792 = por %p790, %p791
      %p793 = scmp.ne.s32.totalorder %s782, %s783
      %p794 = scmp.eq.s32.totalorder %s54, 0
      %p795 = por %p793, %p794
      %p796 = scmp.ne.s32.totalorder %s782, %s783
      %p797 = scmp.eq.s32.totalorder %s55, 3
      %p798 = por %p796, %p797
      %p800 = scmp.ne.s32.totalorder %s783, %s799
      %p801 = scmp.eq.s32.totalorder %s55, 0
      %p802 = por %p800, %p801
      %p803 = scmp.le.s32.totalorder 1, %s49
      %p804 = scmp.lt.s32.totalorder %s49, 5
      %p805 = pnand %p803, %p804
      %p806 = pneg %p805
      // Predicated region
      $region9: #{transformer_forward.6} parent=5 // pred_check
        _
      $region10: #{transformer_forward.6} parent=5 // pred_check_branch
        %808 = sbr.rel (%p805) target = $region12
      $region11: #{transformer_forward.6} parent=5 // pred_region
        %s809 = ssub.s32 %s49, 1
        // Predicated region
        $region13: #{transformer_forward.6} parent=11 // pred_check
          %p810 = pneg %p186
        $region14: #{transformer_forward.6} parent=11 // pred_check_branch
          %812 = sbr.rel (%p810) target = $region16
        $region15: #{transformer_forward.6} parent=11 // pred_region
          _
        $region16: #{transformer_forward.6} parent=11 // pred_fallthru
          _
        // Predicated region
        $region17: #{transformer_forward.6} parent=11 // pred_check
          %p813 = pneg %p207
        $region18: #{transformer_forward.6} parent=11 // pred_check_branch
          %815 = sbr.rel (%p813) target = $region20
        $region19: #{transformer_forward.6} parent=11 // pred_region
          _
        $region20: #{transformer_forward.6} parent=11 // pred_fallthru
          _
        // Predicated region
        $region21: #{transformer_forward.6} parent=11 // pred_check
          %p816 = pneg %p228
        $region22: #{transformer_forward.6} parent=11 // pred_check_branch
          %818 = sbr.rel (%p816) target = $region24
        $region23: #{transformer_forward.6} parent=11 // pred_region
          _
        $region24: #{transformer_forward.6} parent=11 // pred_fallthru
          _
        // Predicated region
        $region25: #{transformer_forward.6} parent=11 // pred_check
          %p819 = pneg %p249
        $region26: #{transformer_forward.6} parent=11 // pred_check_branch
          %821 = sbr.rel (%p819) target = $region28
        $region27: #{transformer_forward.6} parent=11 // pred_region
          _
        $region28: #{transformer_forward.6} parent=11 // pred_fallthru
          _
      $region12: #{transformer_forward.6} parent=5 // pred_fallthru
        _
      %p822 = scmp.lt.s32.totalorder %s49, 4
      // Predicated region
      $region29: #{transformer_forward.6} parent=5 // pred_check
        %p823 = pneg %p822
      $region30: #{transformer_forward.6} parent=5 // pred_check_branch
        %825 = sbr.rel (%p823) target = $region32
      $region31: #{transformer_forward.6} parent=5 // pred_region
        // Predicated region
        $region33: #{transformer_forward.6} parent=31 // pred_check
          %p826 = pneg %p81
        $region34: #{transformer_forward.6} parent=31 // pred_check_branch
          %828 = sbr.rel (%p826) target = $region36
        $region35: #{transformer_forward.6} parent=31 // pred_region
          %p829 = scmp.lt.s32.totalorder %s56, 1
          %s830 = scalar_select %p829, %s56, 1
          %s831 = smul.addr %s830, 8
          %s832 = scalar_lea.vmem %s0, %s831
        $region36: #{transformer_forward.6} parent=31 // pred_fallthru
          _
        // Predicated region
        $region37: #{transformer_forward.6} parent=31 // pred_check
          %p833 = pneg %p107
        $region38: #{transformer_forward.6} parent=31 // pred_check_branch
          %835 = sbr.rel (%p833) target = $region40
        $region39: #{transformer_forward.6} parent=31 // pred_region
          %p836 = scmp.lt.s32.totalorder %s56, 1
          %s837 = scalar_select %p836, %s56, 1
          %s838 = smul.addr %s837, 4
          %s839 = scalar_lea.vmem %s1, %s838
        $region40: #{transformer_forward.6} parent=31 // pred_fallthru
          _
        // Predicated region
        $region41: #{transformer_forward.6} parent=31 // pred_check
          %p840 = pneg %p133
        $region42: #{transformer_forward.6} parent=31 // pred_check_branch
          %842 = sbr.rel (%p840) target = $region44
        $region43: #{transformer_forward.6} parent=31 // pred_region
          %p843 = scmp.lt.s32.totalorder %s56, 1
          %s844 = scalar_select %p843, %s56, 1
          %s845 = scalar_lea.vmem %s2, %s844
        $region44: #{transformer_forward.6} parent=31 // pred_fallthru
          _
        // Predicated region
        $region45: #{transformer_forward.6} parent=31 // pred_check
          %p846 = pneg %p159
        $region46: #{transformer_forward.6} parent=31 // pred_check_branch
          %848 = sbr.rel (%p846) target = $region48
        $region47: #{transformer_forward.6} parent=31 // pred_region
          %p849 = scmp.lt.s32.totalorder %s56, 1
          %s850 = scalar_select %p849, %s56, 1
          %s851 = scalar_lea.vmem %s3, %s850
        $region48: #{transformer_forward.6} parent=31 // pred_fallthru
          _
        // Predicated region
        $region49: #{transformer_forward.6} parent=31 // pred_check
          %p852 = pneg %p269
        $region50: #{transformer_forward.6} parent=31 // pred_check_branch
          %854 = sbr.rel (%p852) target = $region52
        $region51: #{transformer_forward.6} parent=31 // pred_region
          %p855 = scmp.lt.s32.totalorder %s57, 1
          %s856 = scalar_select %p855, %s57, 1
          %s857 = scalar_lea.vmem %s8, %s856
        $region52: #{transformer_forward.6} parent=31 // pred_fallthru
          _
        // Predicated region
        $region53: #{transformer_forward.6} parent=31 // pred_check
          %p858 = pneg %p295
        $region54: #{transformer_forward.6} parent=31 // pred_check_branch
          %860 = sbr.rel (%p858) target = $region56
        $region55: #{transformer_forward.6} parent=31 // pred_region
          %p861 = scmp.lt.s32.totalorder %s57, 1
          %s862 = scalar_select %p861, %s57, 1
          %s863 = scalar_lea.vmem %s9, %s862
        $region56: #{transformer_forward.6} parent=31 // pred_fallthru
          _
        // Predicated region
        $region57: #{transformer_forward.6} parent=31 // pred_check
          %p864 = pneg %p321
        $region58: #{transformer_forward.6} parent=31 // pred_check_branch
          %866 = sbr.rel (%p864) target = $region60
        $region59: #{transformer_forward.6} parent=31 // pred_region
          %s867 = sand.u32 %s311, 1
          %s868 = scalar_lea.sflag [#allocation4], %s867
          %s869 = sand.u32 %s311, 1
          %s870 = smul.addr %s869, 192
          %s871 = scalar_lea.vmem [#allocation3], %s870
          %873 = vsyncadd %s868, 0
          %s874 = smul.addr %s57, 48
          %s875 = smul.addr %s874, 4
          %s876 = scalar_lea.hbm %s10, %s875
          %s877 = sshll.u32 %s876, 4
          %s878 = int_to_ptr.hbm [resolvable:$true] %s877
          %s879 = sshll.u32 %s871, 4
          %s880 = int_to_ptr.vmem [resolvable:$true] %s879
          %885 = dma.hbm_to_vmem [thread:$0]  %s878, 3072, %s880, %s868, 192, 192, 12
        $region60: #{transformer_forward.6} parent=31 // pred_fallthru
          _
        // Predicated region
        $region61: #{transformer_forward.6} parent=31 // pred_check
          %p886 = pneg %p347
        $region62: #{transformer_forward.6} parent=31 // pred_check_branch
          %888 = sbr.rel (%p886) target = $region64
        $region63: #{transformer_forward.6} parent=31 // pred_region
          %p889 = scmp.lt.s32.totalorder %s57, 1
          %s890 = scalar_select %p889, %s57, 1
          %s891 = smul.addr %s890, 3
          %s892 = scalar_lea.vmem %s11, %s891
        $region64: #{transformer_forward.6} parent=31 // pred_fallthru
          _
        // Predicated region
        $region65: #{transformer_forward.6} parent=31 // pred_check
          %p893 = pneg %p373
        $region66: #{transformer_forward.6} parent=31 // pred_check_branch
          %895 = sbr.rel (%p893) target = $region68
        $region67: #{transformer_forward.6} parent=31 // pred_region
          %p896 = scmp.lt.s32.totalorder %s57, 1
          %s897 = scalar_select %p896, %s57, 1
          %s898 = smul.addr %s897, 4
          %s899 = smul.addr %s898, 4
          %s900 = scalar_lea.vmem %s12, %s899
        $region68: #{transformer_forward.6} parent=31 // pred_fallthru
          _
        // Predicated region
        $region69: #{transformer_forward.6} parent=31 // pred_check
          %p901 = pneg %p399
        $region70: #{transformer_forward.6} parent=31 // pred_check_branch
          %903 = sbr.rel (%p901) target = $region72
        $region71: #{transformer_forward.6} parent=31 // pred_region
          %p904 = scmp.lt.s32.totalorder %s57, 1
          %s905 = scalar_select %p904, %s57, 1
          %s906 = scalar_lea.vmem %s13, %s905
        $region72: #{transformer_forward.6} parent=31 // pred_fallthru
          _
        // Predicated region
        $region73: #{transformer_forward.6} parent=31 // pred_check
          %p907 = pneg %p425
        $region74: #{transformer_forward.6} parent=31 // pred_check_branch
          %909 = sbr.rel (%p907) target = $region76
        $region75: #{transformer_forward.6} parent=31 // pred_region
          %p910 = scmp.lt.s32.totalorder %s57, 1
          %s911 = scalar_select %p910, %s57, 1
          %s912 = scalar_lea.vmem %s14, %s911
        $region76: #{transformer_forward.6} parent=31 // pred_fallthru
          _
        // Predicated region
        $region77: #{transformer_forward.6} parent=31 // pred_check
          %p913 = pneg %p451
        $region78: #{transformer_forward.6} parent=31 // pred_check_branch
          %915 = sbr.rel (%p913) target = $region80
        $region79: #{transformer_forward.6} parent=31 // pred_region
          %p916 = scmp.lt.s32.totalorder %s57, 1
          %s917 = scalar_select %p916, %s57, 1
          %s918 = scalar_lea.vmem %s15, %s917
        $region80: #{transformer_forward.6} parent=31 // pred_fallthru
          _
        // Predicated region
        $region81: #{transformer_forward.6} parent=31 // pred_check
          %p919 = pneg %p477
        $region82: #{transformer_forward.6} parent=31 // pred_check_branch
          %921 = sbr.rel (%p919) target = $region84
        $region83: #{transformer_forward.6} parent=31 // pred_region
          %s922 = sand.u32 %s49, 1
          %s923 = scalar_lea.sflag [#allocation6], %s922
          %s924 = sand.u32 %s467, 1
          %s925 = smul.addr %s924, 64
          %s926 = scalar_lea.vmem [#allocation5], %s925
          %928 = vsyncadd %s923, 0
          %s929 = smul.addr %s57, 16
          %s930 = smul.addr %s929, 4
          %s931 = scalar_lea.hbm %s16, %s930
          %s932 = sshll.u32 %s931, 4
          %s933 = int_to_ptr.hbm [resolvable:$true] %s932
          %s934 = sshll.u32 %s926, 4
          %s935 = int_to_ptr.vmem [resolvable:$true] %s934
          %940 = dma.hbm_to_vmem [thread:$0]  %s933, 1024, %s935, %s923, 64, 64, 4
        $region84: #{transformer_forward.6} parent=31 // pred_fallthru
          _
        // Predicated region
        $region85: #{transformer_forward.6} parent=31 // pred_check
          %p941 = pneg %p503
        $region86: #{transformer_forward.6} parent=31 // pred_check_branch
          %943 = sbr.rel (%p941) target = $region88
        $region87: #{transformer_forward.6} parent=31 // pred_region
          %p944 = scmp.lt.s32.totalorder %s57, 1
          %s945 = scalar_select %p944, %s57, 1
          %s946 = scalar_lea.vmem %s17, %s945
        $region88: #{transformer_forward.6} parent=31 // pred_fallthru
          _
        // Predicated region
        $region89: #{transformer_forward.6} parent=31 // pred_check
          %p947 = pneg %p529
        $region90: #{transformer_forward.6} parent=31 // pred_check_branch
          %949 = sbr.rel (%p947) target = $region92
        $region91: #{transformer_forward.6} parent=31 // pred_region
          %s950 = sand.u32 %s49, 1
          %s951 = scalar_lea.sflag [#allocation6], %s950
          %s952 = sand.u32 %s519, 1
          %s953 = smul.addr %s952, 128
          %s954 = scalar_lea.vmem [#allocation7], %s953
          %956 = vsyncadd %s951, 0
          %s957 = smul.addr %s57, 32
          %s958 = smul.addr %s957, 4
          %s959 = scalar_lea.hbm %s18, %s958
          %s960 = sshll.u32 %s959, 4
          %s961 = int_to_ptr.hbm [resolvable:$true] %s960
          %s962 = sshll.u32 %s954, 4
          %s963 = int_to_ptr.vmem [resolvable:$true] %s962
          %968 = dma.hbm_to_vmem [thread:$0]  %s961, 2048, %s963, %s951, 128, 128, 8
        $region92: #{transformer_forward.6} parent=31 // pred_fallthru
          _
        // Predicated region
        $region93: #{transformer_forward.6} parent=31 // pred_check
          %p969 = pneg %p555
        $region94: #{transformer_forward.6} parent=31 // pred_check_branch
          %971 = sbr.rel (%p969) target = $region96
        $region95: #{transformer_forward.6} parent=31 // pred_region
          %p972 = scmp.lt.s32.totalorder %s57, 1
          %s973 = scalar_select %p972, %s57, 1
          %s974 = smul.addr %s973, 2
          %s975 = scalar_lea.vmem %s19, %s974
        $region96: #{transformer_forward.6} parent=31 // pred_fallthru
          _
        // Predicated region
        $region97: #{transformer_forward.6} parent=31 // pred_check
          %p976 = pneg %p581
        $region98: #{transformer_forward.6} parent=31 // pred_check_branch
          %978 = sbr.rel (%p976) target = $region100
        $region99: #{transformer_forward.6} parent=31 // pred_region
          %s979 = sand.u32 %s49, 1
          %s980 = scalar_lea.sflag [#allocation9], %s979
          %s981 = sand.u32 %s571, 1
          %s982 = smul.addr %s981, 16
          %s983 = scalar_lea.vmem [#allocation8], %s982
          %985 = vsyncadd %s980, 0
          %s986 = smul.addr %s57, 4
          %s987 = smul.addr %s986, 4
          %s988 = scalar_lea.hbm %s20, %s987
          %s989 = sshll.u32 %s988, 4
          %s990 = int_to_ptr.hbm [resolvable:$true] %s989
          %s991 = sshll.u32 %s983, 4
          %s992 = int_to_ptr.vmem [resolvable:$true] %s991
          %997 = dma.hbm_to_vmem [thread:$0]  %s990, 256, %s992, %s980, 64, 64, 4
        $region100: #{transformer_forward.6} parent=31 // pred_fallthru
          _
        // Predicated region
        $region101: #{transformer_forward.6} parent=31 // pred_check
          %p998 = pneg %p607
        $region102: #{transformer_forward.6} parent=31 // pred_check_branch
          %1000 = sbr.rel (%p998) target = $region104
        $region103: #{transformer_forward.6} parent=31 // pred_region
          %p1001 = scmp.lt.s32.totalorder %s57, 1
          %s1002 = scalar_select %p1001, %s57, 1
          %s1003 = scalar_lea.vmem %s21, %s1002
        $region104: #{transformer_forward.6} parent=31 // pred_fallthru
          _
        // Predicated region
        $region105: #{transformer_forward.6} parent=31 // pred_check
          %p1004 = pneg %p633
        $region106: #{transformer_forward.6} parent=31 // pred_check_branch
          %1006 = sbr.rel (%p1004) target = $region108
        $region107: #{transformer_forward.6} parent=31 // pred_region
          %p1007 = scmp.lt.s32.totalorder %s57, 1
          %s1008 = scalar_select %p1007, %s57, 1
          %s1009 = scalar_lea.vmem %s22, %s1008
        $region108: #{transformer_forward.6} parent=31 // pred_fallthru
          _
        // Predicated region
        $region109: #{transformer_forward.6} parent=31 // pred_check
          %p1010 = pneg %p659
        $region110: #{transformer_forward.6} parent=31 // pred_check_branch
          %1012 = sbr.rel (%p1010) target = $region112
        $region111: #{transformer_forward.6} parent=31 // pred_region
          %p1013 = scmp.lt.s32.totalorder %s57, 1
          %s1014 = scalar_select %p1013, %s57, 1
          %s1015 = scalar_lea.vmem %s23, %s1014
        $region112: #{transformer_forward.6} parent=31 // pred_fallthru
          _
        // Predicated region
        $region113: #{transformer_forward.6} parent=31 // pred_check
          %p1016 = pneg %p685
        $region114: #{transformer_forward.6} parent=31 // pred_check_branch
          %1018 = sbr.rel (%p1016) target = $region116
        $region115: #{transformer_forward.6} parent=31 // pred_region
          %s1019 = sand.u32 %s49, 1
          %s1020 = scalar_lea.sflag [#allocation9], %s1019
          %s1021 = sand.u32 %s675, 1
          %s1022 = smul.addr %s1021, 64
          %s1023 = scalar_lea.vmem [#allocation10], %s1022
          %1025 = vsyncadd %s1020, 0
          %s1026 = smul.addr %s57, 16
          %s1027 = smul.addr %s1026, 4
          %s1028 = scalar_lea.hbm %s24, %s1027
          %s1029 = sshll.u32 %s1028, 4
          %s1030 = int_to_ptr.hbm [resolvable:$true] %s1029
          %s1031 = sshll.u32 %s1023, 4
          %s1032 = int_to_ptr.vmem [resolvable:$true] %s1031
          %1037 = dma.hbm_to_vmem [thread:$0]  %s1030, 1024, %s1032, %s1020, 64, 64, 4
        $region116: #{transformer_forward.6} parent=31 // pred_fallthru
          _
        // Predicated region
        $region117: #{transformer_forward.6} parent=31 // pred_check
          %p1038 = pneg %p711
        $region118: #{transformer_forward.6} parent=31 // pred_check_branch
          %1040 = sbr.rel (%p1038) target = $region120
        $region119: #{transformer_forward.6} parent=31 // pred_region
          %s1041 = sand.u32 %s49, 1
          %s1042 = scalar_lea.sflag [#allocation12], %s1041
          %s1043 = sand.u32 %s701, 1
          %s1044 = scalar_lea.vmem [#allocation11], %s1043
          %1046 = vsyncadd %s1042, 0
          %s1047 = scalar_lea.hbm %s25, %s57
          %s1049 = sshll.u32 %s1047, 4
          %s1050 = int_to_ptr.hbm [resolvable:$true] %s1049
          %s1051 = sshll.u32 %s1044, 4
          %s1052 = int_to_ptr.vmem [resolvable:$true] %s1051
          %1054 = dma.hbm_to_vmem [thread:$0]  %s1050, 16, %s1052, %s1042
        $region120: #{transformer_forward.6} parent=31 // pred_fallthru
          _
        // Predicated region
        $region121: #{transformer_forward.6} parent=31 // pred_check
          %p1055 = pneg %p737
        $region122: #{transformer_forward.6} parent=31 // pred_check_branch
          %1057 = sbr.rel (%p1055) target = $region124
        $region123: #{transformer_forward.6} parent=31 // pred_region
          %s1058 = sand.u32 %s49, 1
          %s1059 = scalar_lea.sflag [#allocation12], %s1058
          %s1060 = sand.u32 %s727, 1
          %s1061 = smul.addr %s1060, 64
          %s1062 = scalar_lea.vmem [#allocation13], %s1061
          %1064 = vsyncadd %s1059, 0
          %s1065 = smul.addr %s57, 16
          %s1066 = smul.addr %s1065, 4
          %s1067 = scalar_lea.hbm %s26, %s1066
          %s1068 = sshll.u32 %s1067, 4
          %s1069 = int_to_ptr.hbm [resolvable:$true] %s1068
          %s1070 = sshll.u32 %s1062, 4
          %s1071 = int_to_ptr.vmem [resolvable:$true] %s1070
          %1076 = dma.hbm_to_vmem [thread:$0]  %s1069, 1024, %s1071, %s1059, 64, 64, 4
        $region124: #{transformer_forward.6} parent=31 // pred_fallthru
          _
        // Predicated region
        $region125: #{transformer_forward.6} parent=31 // pred_check
          %p1077 = pneg %p763
        $region126: #{transformer_forward.6} parent=31 // pred_check_branch
          %1079 = sbr.rel (%p1077) target = $region128
        $region127: #{transformer_forward.6} parent=31 // pred_region
          %s1080 = sand.u32 %s753, 1
          %s1081 = scalar_lea.sflag [#allocation15], %s1080
          %s1082 = sand.u32 %s753, 1
          %s1083 = scalar_lea.vmem [#allocation14], %s1082
          %1085 = vsyncadd %s1081, 0
          %s1086 = scalar_lea.hbm %s27, %s57
          %s1088 = sshll.u32 %s1086, 4
          %s1089 = int_to_ptr.hbm [resolvable:$true] %s1088
          %s1090 = sshll.u32 %s1083, 4
          %s1091 = int_to_ptr.vmem [resolvable:$true] %s1090
          %1093 = dma.hbm_to_vmem [thread:$0]  %s1089, 16, %s1091, %s1081
        $region128: #{transformer_forward.6} parent=31 // pred_fallthru
          _
      $region32: #{transformer_forward.6} parent=5 // pred_fallthru
        _
      %p1094 = scmp.le.s32.totalorder 1, %s49
      %p1095 = scmp.lt.s32.totalorder %s49, 5
      %p1096 = pnand %p1094, %p1095
      %p1097 = pneg %p1096
      // Predicated region
      $region129: #{transformer_forward.6} parent=5 // pred_check
        _
      $region130: #{transformer_forward.6} parent=5 // pred_check_branch
        %1099 = sbr.rel (%p1096) target = $region132
      $region131: #{transformer_forward.6} parent=5 // pred_region
        %s1100 = ssub.s32 %s49, 1
        %s1101 = sand.u32 %s314, 1
        %s1102 = scalar_lea.sflag [#allocation4], %s1101
        %s1103 = sand.u32 %s314, 1
        %s1104 = smul.addr %s1103, 192
        %s1105 = scalar_lea.vmem [#allocation3], %s1104
        // Predicated region
        $region133: #{transformer_forward.6} parent=131 // pred_check
          %p1106 = pneg %p327
        $region134: #{transformer_forward.6} parent=131 // pred_check_branch
          %1108 = sbr.rel (%p1106) target = $region136
        $region135: #{transformer_forward.6} parent=131 // pred_region
          %1110 = dma.done %s1102, 3072
        $region136: #{transformer_forward.6} parent=131 // pred_fallthru
          _
        %s1111 = sand.u32 %s54, 1
        %s1112 = scalar_lea.sflag [#allocation6], %s1111
        %s1113 = sand.u32 %s470, 1
        %s1114 = smul.addr %s1113, 64
        %s1115 = scalar_lea.vmem [#allocation5], %s1114
        // Predicated region
        $region137: #{transformer_forward.6} parent=131 // pred_check
          %p1116 = pneg %p483
        $region138: #{transformer_forward.6} parent=131 // pred_check_branch
          %1118 = sbr.rel (%p1116) target = $region140
        $region139: #{transformer_forward.6} parent=131 // pred_region
          %1120 = dma.done %s1112, 1024
        $region140: #{transformer_forward.6} parent=131 // pred_fallthru
          _
        %s1121 = sand.u32 %s54, 1
        %s1122 = scalar_lea.sflag [#allocation6], %s1121
        %s1123 = sand.u32 %s522, 1
        %s1124 = smul.addr %s1123, 128
        %s1125 = scalar_lea.vmem [#allocation7], %s1124
        // Predicated region
        $region141: #{transformer_forward.6} parent=131 // pred_check
          %p1126 = pneg %p535
        $region142: #{transformer_forward.6} parent=131 // pred_check_branch
          %1128 = sbr.rel (%p1126) target = $region144
        $region143: #{transformer_forward.6} parent=131 // pred_region
          %1130 = dma.done %s1122, 2048
        $region144: #{transformer_forward.6} parent=131 // pred_fallthru
          _
        %s1131 = sand.u32 %s54, 1
        %s1132 = scalar_lea.sflag [#allocation9], %s1131
        %s1133 = sand.u32 %s574, 1
        %s1134 = smul.addr %s1133, 16
        %s1135 = scalar_lea.vmem [#allocation8], %s1134
        // Predicated region
        $region145: #{transformer_forward.6} parent=131 // pred_check
          %p1136 = pneg %p587
        $region146: #{transformer_forward.6} parent=131 // pred_check_branch
          %1138 = sbr.rel (%p1136) target = $region148
        $region147: #{transformer_forward.6} parent=131 // pred_region
          %1140 = dma.done %s1132, 256
        $region148: #{transformer_forward.6} parent=131 // pred_fallthru
          _
        %s1141 = sand.u32 %s54, 1
        %s1142 = scalar_lea.sflag [#allocation9], %s1141
        %s1143 = sand.u32 %s678, 1
        %s1144 = smul.addr %s1143, 64
        %s1145 = scalar_lea.vmem [#allocation10], %s1144
        // Predicated region
        $region149: #{transformer_forward.6} parent=131 // pred_check
          %p1146 = pneg %p691
        $region150: #{transformer_forward.6} parent=131 // pred_check_branch
          %1148 = sbr.rel (%p1146) target = $region152
        $region151: #{transformer_forward.6} parent=131 // pred_region
          %1150 = dma.done %s1142, 1024
        $region152: #{transformer_forward.6} parent=131 // pred_fallthru
          _
        %s1151 = sand.u32 %s54, 1
        %s1152 = scalar_lea.sflag [#allocation12], %s1151
        %s1153 = sand.u32 %s704, 1
        %s1154 = scalar_lea.vmem [#allocation11], %s1153
        // Predicated region
        $region153: #{transformer_forward.6} parent=131 // pred_check
          %p1155 = pneg %p717
        $region154: #{transformer_forward.6} parent=131 // pred_check_branch
          %1157 = sbr.rel (%p1155) target = $region156
        $region155: #{transformer_forward.6} parent=131 // pred_region
          %1159 = dma.done %s1152, 16
        $region156: #{transformer_forward.6} parent=131 // pred_fallthru
          _
        %s1160 = sand.u32 %s54, 1
        %s1161 = scalar_lea.sflag [#allocation12], %s1160
        %s1162 = sand.u32 %s730, 1
        %s1163 = smul.addr %s1162, 64
        %s1164 = scalar_lea.vmem [#allocation13], %s1163
        // Predicated region
        $region157: #{transformer_forward.6} parent=131 // pred_check
          %p1165 = pneg %p743
        $region158: #{transformer_forward.6} parent=131 // pred_check_branch
          %1167 = sbr.rel (%p1165) target = $region160
        $region159: #{transformer_forward.6} parent=131 // pred_region
          %1169 = dma.done %s1161, 1024
        $region160: #{transformer_forward.6} parent=131 // pred_fallthru
          _
        %s1170 = sand.u32 %s756, 1
        %s1171 = scalar_lea.sflag [#allocation15], %s1170
        %s1172 = sand.u32 %s756, 1
        %s1173 = scalar_lea.vmem [#allocation14], %s1172
        // Predicated region
        $region161: #{transformer_forward.6} parent=131 // pred_check
          %p1174 = pneg %p769
        $region162: #{transformer_forward.6} parent=131 // pred_check_branch
          %1176 = sbr.rel (%p1174) target = $region164
        $region163: #{transformer_forward.6} parent=131 // pred_region
          %1178 = dma.done %s1171, 16
        $region164: #{transformer_forward.6} parent=131 // pred_fallthru
          _
        %p1179 = scmp.lt.s32.totalorder %s58, 1
        %s1180 = scalar_select %p1179, %s58, 1
        %s1181 = smul.addr %s1180, 8
        %s1182 = scalar_lea.vmem %s0, %s1181
        %p1183 = pneg %p87
        %p1184 = pneg %p84
        %p1185 = scmp.lt.s32.totalorder %s58, 1
        %s1186 = scalar_select %p1185, %s58, 1
        %s1187 = smul.addr %s1186, 4
        %s1188 = scalar_lea.vmem %s1, %s1187
        %p1189 = pneg %p113
        %p1190 = pneg %p110
        %p1191 = scmp.lt.s32.totalorder %s58, 1
        %s1192 = scalar_select %p1191, %s58, 1
        %s1193 = scalar_lea.vmem %s2, %s1192
        %p1194 = pneg %p139
        %p1195 = pneg %p136
        %p1196 = scmp.lt.s32.totalorder %s58, 1
        %s1197 = scalar_select %p1196, %s58, 1
        %s1198 = scalar_lea.vmem %s3, %s1197
        %p1199 = pneg %p165
        %p1200 = pneg %p162
        %p1201 = pneg %p186
        %p1202 = pneg %p183
        %p1203 = pneg %p207
        %p1204 = pneg %p204
        %p1205 = pneg %p228
        %p1206 = pneg %p225
        %p1207 = pneg %p249
        %p1208 = pneg %p246
        %p1209 = scmp.lt.s32.totalorder %s59, 1
        %s1210 = scalar_select %p1209, %s59, 1
        %s1211 = scalar_lea.vmem %s8, %s1210
        %p1212 = pneg %p275
        %p1213 = pneg %p272
        %p1214 = scmp.lt.s32.totalorder %s59, 1
        %s1215 = scalar_select %p1214, %s59, 1
        %s1216 = scalar_lea.vmem %s9, %s1215
        %p1217 = pneg %p301
        %p1218 = pneg %p298
        %s1219 = sand.u32 %s314, 1
        %s1220 = scalar_lea.sflag [#allocation4], %s1219
        %s1221 = sand.u32 %s314, 1
        %s1222 = smul.addr %s1221, 192
        %s1223 = scalar_lea.vmem [#allocation3], %s1222
        %p1224 = pneg %p327
        %p1225 = pneg %p324
        %p1226 = scmp.lt.s32.totalorder %s59, 1
        %s1227 = scalar_select %p1226, %s59, 1
        %s1228 = smul.addr %s1227, 3
        %s1229 = scalar_lea.vmem %s11, %s1228
        %p1230 = pneg %p353
        %p1231 = pneg %p350
        %p1232 = scmp.lt.s32.totalorder %s59, 1
        %s1233 = scalar_select %p1232, %s59, 1
        %s1234 = smul.addr %s1233, 4
        %s1235 = smul.addr %s1234, 4
        %s1236 = scalar_lea.vmem %s12, %s1235
        %p1237 = pneg %p379
        %p1238 = pneg %p376
        %p1239 = scmp.lt.s32.totalorder %s59, 1
        %s1240 = scalar_select %p1239, %s59, 1
        %s1241 = scalar_lea.vmem %s13, %s1240
        %p1242 = pneg %p405
        %p1243 = pneg %p402
        %p1244 = scmp.lt.s32.totalorder %s59, 1
        %s1245 = scalar_select %p1244, %s59, 1
        %s1246 = scalar_lea.vmem %s14, %s1245
        %p1247 = pneg %p431
        %p1248 = pneg %p428
        %p1249 = scmp.lt.s32.totalorder %s59, 1
        %s1250 = scalar_select %p1249, %s59, 1
        %s1251 = scalar_lea.vmem %s15, %s1250
        %p1252 = pneg %p457
        %p1253 = pneg %p454
        %s1254 = sand.u32 %s54, 1
        %s1255 = scalar_lea.sflag [#allocation6], %s1254
        %s1256 = sand.u32 %s470, 1
        %s1257 = smul.addr %s1256, 64
        %s1258 = scalar_lea.vmem [#allocation5], %s1257
        %p1259 = pneg %p483
        %p1260 = pneg %p480
        %p1261 = scmp.lt.s32.totalorder %s59, 1
        %s1262 = scalar_select %p1261, %s59, 1
        %s1263 = scalar_lea.vmem %s17, %s1262
        %p1264 = pneg %p509
        %p1265 = pneg %p506
        %s1266 = sand.u32 %s54, 1
        %s1267 = scalar_lea.sflag [#allocation6], %s1266
        %s1268 = sand.u32 %s522, 1
        %s1269 = smul.addr %s1268, 128
        %s1270 = scalar_lea.vmem [#allocation7], %s1269
        %p1271 = pneg %p535
        %p1272 = pneg %p532
        %p1273 = scmp.lt.s32.totalorder %s59, 1
        %s1274 = scalar_select %p1273, %s59, 1
        %s1275 = smul.addr %s1274, 2
        %s1276 = scalar_lea.vmem %s19, %s1275
        %p1277 = pneg %p561
        %p1278 = pneg %p558
        %s1279 = sand.u32 %s54, 1
        %s1280 = scalar_lea.sflag [#allocation9], %s1279
        %s1281 = sand.u32 %s574, 1
        %s1282 = smul.addr %s1281, 16
        %s1283 = scalar_lea.vmem [#allocation8], %s1282
        %p1284 = pneg %p587
        %p1285 = pneg %p584
        %p1286 = scmp.lt.s32.totalorder %s59, 1
        %s1287 = scalar_select %p1286, %s59, 1
        %s1288 = scalar_lea.vmem %s21, %s1287
        %p1289 = pneg %p613
        %p1290 = pneg %p610
        %p1291 = scmp.lt.s32.totalorder %s59, 1
        %s1292 = scalar_select %p1291, %s59, 1
        %s1293 = scalar_lea.vmem %s22, %s1292
        %p1294 = pneg %p639
        %p1295 = pneg %p636
        %p1296 = scmp.lt.s32.totalorder %s59, 1
        %s1297 = scalar_select %p1296, %s59, 1
        %s1298 = scalar_lea.vmem %s23, %s1297
        %p1299 = pneg %p665
        %p1300 = pneg %p662
        %s1301 = sand.u32 %s54, 1
        %s1302 = scalar_lea.sflag [#allocation9], %s1301
        %s1303 = sand.u32 %s678, 1
        %s1304 = smul.addr %s1303, 64
        %s1305 = scalar_lea.vmem [#allocation10], %s1304
        %p1306 = pneg %p691
        %p1307 = pneg %p688
        %s1308 = sand.u32 %s54, 1
        %s1309 = scalar_lea.sflag [#allocation12], %s1308
        %s1310 = sand.u32 %s704, 1
        %s1311 = scalar_lea.vmem [#allocation11], %s1310
        %p1312 = pneg %p717
        %p1313 = pneg %p714
        %s1314 = sand.u32 %s54, 1
        %s1315 = scalar_lea.sflag [#allocation12], %s1314
        %s1316 = sand.u32 %s730, 1
        %s1317 = smul.addr %s1316, 64
        %s1318 = scalar_lea.vmem [#allocation13], %s1317
        %p1319 = pneg %p743
        %p1320 = pneg %p740
        %s1321 = sand.u32 %s756, 1
        %s1322 = scalar_lea.sflag [#allocation15], %s1321
        %s1323 = sand.u32 %s756, 1
        %s1324 = scalar_lea.vmem [#allocation14], %s1323
        %p1325 = pneg %p769
        %p1326 = pneg %p766
        %p1327 = pneg %p795
        %p1328 = pneg %p792
        %p1329 = scmp.lt.s32.totalorder %s58, 1
        %s1330 = scalar_select %p1329, %s58, 1
        %s1331 = smul.addr %s1330, 8
        %s1332 = scalar_lea.vmem %s28, %s1331
        %p1333 = scmp.lt.s32.totalorder %s58, 1
        %s1334 = scalar_select %p1333, %s58, 1
        %s1335 = smul.addr %s1334, 8
        %s1336 = scalar_lea.vmem %s0, %s1335
        %p1337 = scmp.lt.s32.totalorder %s58, 1
        %s1338 = scalar_select %p1337, %s58, 1
        %s1339 = smul.addr %s1338, 4
        %s1340 = scalar_lea.vmem %s1, %s1339
        %p1341 = scmp.lt.s32.totalorder %s58, 1
        %s1342 = scalar_select %p1341, %s58, 1
        %s1343 = scalar_lea.vmem %s2, %s1342
        %p1344 = scmp.lt.s32.totalorder %s58, 1
        %s1345 = scalar_select %p1344, %s58, 1
        %s1346 = scalar_lea.vmem %s3, %s1345
        %p1347 = scmp.lt.s32.totalorder %s59, 1
        %s1348 = scalar_select %p1347, %s59, 1
        %s1349 = scalar_lea.vmem %s8, %s1348
        %p1350 = scmp.lt.s32.totalorder %s59, 1
        %s1351 = scalar_select %p1350, %s59, 1
        %s1352 = scalar_lea.vmem %s9, %s1351
        %p1353 = scmp.lt.s32.totalorder %s59, 1
        %s1354 = scalar_select %p1353, %s59, 1
        %s1355 = smul.addr %s1354, 3
        %s1356 = scalar_lea.vmem %s11, %s1355
        %p1357 = scmp.lt.s32.totalorder %s59, 1
        %s1358 = scalar_select %p1357, %s59, 1
        %s1359 = smul.addr %s1358, 4
        %s1360 = smul.addr %s1359, 4
        %s1361 = scalar_lea.vmem %s12, %s1360
        %p1362 = scmp.lt.s32.totalorder %s59, 1
        %s1363 = scalar_select %p1362, %s59, 1
        %s1364 = scalar_lea.vmem %s13, %s1363
        %p1365 = scmp.lt.s32.totalorder %s59, 1
        %s1366 = scalar_select %p1365, %s59, 1
        %s1367 = scalar_lea.vmem %s14, %s1366
        %p1368 = scmp.lt.s32.totalorder %s59, 1
        %s1369 = scalar_select %p1368, %s59, 1
        %s1370 = scalar_lea.vmem %s15, %s1369
        %p1371 = scmp.lt.s32.totalorder %s59, 1
        %s1372 = scalar_select %p1371, %s59, 1
        %s1373 = scalar_lea.vmem %s17, %s1372
        %p1374 = scmp.lt.s32.totalorder %s59, 1
        %s1375 = scalar_select %p1374, %s59, 1
        %s1376 = smul.addr %s1375, 2
        %s1377 = scalar_lea.vmem %s19, %s1376
        %p1378 = scmp.lt.s32.totalorder %s59, 1
        %s1379 = scalar_select %p1378, %s59, 1
        %s1380 = scalar_lea.vmem %s21, %s1379
        %p1381 = scmp.lt.s32.totalorder %s59, 1
        %s1382 = scalar_select %p1381, %s59, 1
        %s1383 = scalar_lea.vmem %s22, %s1382
        %p1384 = scmp.lt.s32.totalorder %s59, 1
        %s1385 = scalar_select %p1384, %s59, 1
        %s1386 = scalar_lea.vmem %s23, %s1385
        %p1387 = scmp.lt.s32.totalorder %s58, 1
        %s1388 = scalar_select %p1387, %s58, 1
        %s1389 = smul.addr %s1388, 8
        %s1390 = scalar_lea.vmem %s28, %s1389
        %p1392 = scmp.eq.s32.totalorder %s59, 0
        // Predicated region
        $region165: #{transformer_forward.6} parent=131 // pred_check
          %p1393 = pneg %p1392
        $region166: #{transformer_forward.6} parent=131 // pred_check_branch
          %1395 = sbr.rel (%p1393) target = $region168
        $region167: #{transformer_forward.6} parent=131 // pred_region
          %v1396 = vld [vmem:[%s1336] sm:$0xff]
          %1397 = vst [vmem:[#allocation2] sm:$0xff] %v1396
        $region168: #{transformer_forward.6} parent=131 // pred_fallthru
          _
        %v1398 = vld [vmem:[#allocation2] sm:$0xff]
        %v1399 = vld [vmem:[%s4] sm:$0xff]
        %v1400 = vld [vmem:[%s5] sm:$0xff]
        %v1401 = vld [vmem:[%s6] sm:$0xff]
        %v1402 = vld [vmem:[%s7] sm:$0xff]
        %v1403 = vld [vmem:[%s1349] sm:$0x1]
        %v1404 = vld [vmem:[%s1352] sm:$0x1]
        %1405 = vadd.xlane.f32.xlu0 %v1398
        %v1406 = vpop.xlane.xlu0 %1405
        %v1407 = vmul.f32 %v1406, 0.03125
        %v1408 = vmul.f32 %v1398, %v1398
        %1409 = vadd.xlane.f32.xlu0 %v1408
        %v1410 = vpop.xlane.xlu0 %1409
        %v1411 = vmul.f32 %v1410, 0.03125
        %v1412 = vmul.f32 %v1407, %v1407
        %v1413 = vsub.f32 %v1411, %v1412
        %v1414 = vsub.f32 %v1398, %v1407
        %v1415 = vadd.f32 %v1413, 1e-05
        %v1416 = vrsqrt.pop %v1415
        %v1417 = vmul.f32 %v1416, %v1415
        %v1418 = vmul.f32 %v1417, %v1416
        %v1419 = vmul.f32 0.5, %v1418
        %v1420 = vsub.f32 1.5, %v1419
        %v1421 = vmul.f32 %v1416, %v1420
        %vm1422 = vweird.f32 %v1415
        %vm1423 = vweird.f32 %v1416
        %vm1424 = vmor %vm1422, %vm1423
        %v1425 = vsel %vm1424, %v1416, %v1421
        %v1426 = vmul.f32 %v1414, %v1425
        %v1428 = vperm.slane %v1403, 0
        %v1430 = vmul.f32 %v1426, %v1428
        %v1432 = vperm.slane %v1404, 0
        %v1434 = vadd.f32 %v1430, %v1432
        %v1435 = vpack.c.bf16 %v1434, %v1434
        %v1436 = vld [vmem:[%s1105] sm:$0xff]
        %v1437 = vld [vmem:[%s1105 + $0x8] sm:$0xf]
        %v1438 = vld [vmem:[%s1105 + $0xc] sm:$0xff]
        %v1439 = vld [vmem:[%s1105 + $0x14] sm:$0xf]
        %v1440 = vld [vmem:[%s1105 + $0x18] sm:$0xff]
        %v1441 = vld [vmem:[%s1105 + $0x20] sm:$0xf]
        %v1442 = vld [vmem:[%s1105 + $0x24] sm:$0xff]
        %v1443 = vld [vmem:[%s1105 + $0x2c] sm:$0xf]
        %v1444 = vld [vmem:[%s1105 + $0x30] sm:$0xff]
        %v1445 = vld [vmem:[%s1105 + $0x38] sm:$0xf]
        %v1446 = vld [vmem:[%s1105 + $0x3c] sm:$0xff]
        %v1447 = vld [vmem:[%s1105 + $0x44] sm:$0xf]
        %v1448 = vld [vmem:[%s1105 + $0x48] sm:$0xff]
        %v1449 = vld [vmem:[%s1105 + $0x50] sm:$0xf]
        %v1450 = vld [vmem:[%s1105 + $0x54] sm:$0xff]
        %v1451 = vld [vmem:[%s1105 + $0x5c] sm:$0xf]
        %v1452 = vld [vmem:[%s1105 + $0x60] sm:$0xff]
        %v1453 = vld [vmem:[%s1105 + $0x68] sm:$0xf]
        %v1454 = vld [vmem:[%s1105 + $0x6c] sm:$0xff]
        %v1455 = vld [vmem:[%s1105 + $0x74] sm:$0xf]
        %v1456 = vld [vmem:[%s1105 + $0x78] sm:$0xff]
        %v1457 = vld [vmem:[%s1105 + $0x80] sm:$0xf]
        %v1458 = vld [vmem:[%s1105 + $0x84] sm:$0xff]
        %v1459 = vld [vmem:[%s1105 + $0x8c] sm:$0xf]
        %v1460 = vld [vmem:[%s1105 + $0x90] sm:$0xff]
        %v1461 = vld [vmem:[%s1105 + $0x98] sm:$0xf]
        %v1462 = vld [vmem:[%s1105 + $0x9c] sm:$0xff]
        %v1463 = vld [vmem:[%s1105 + $0xa4] sm:$0xf]
        %v1464 = vld [vmem:[%s1105 + $0xa8] sm:$0xff]
        %v1465 = vld [vmem:[%s1105 + $0xb0] sm:$0xf]
        %v1466 = vld [vmem:[%s1105 + $0xb4] sm:$0xff]
        %v1467 = vld [vmem:[%s1105 + $0xbc] sm:$0xf]
        %v1468 = vld [vmem:[%s1356] sm:$0x7]
        %v1470 = vperm.slane %v1468, 0
        %v1471 = vperm.slane %v1468, 1
        %v1472 = vperm.slane %v1468, 2
        %v1508 = vunpack.c.l.b16 %v1436
        %v1509 = vunpack.c.h.b16 %v1436
        %v1510 = vunpack.c.l.b16 %v1437
        %v1511 = vunpack.c.l.b16 %v1438
        %v1512 = vunpack.c.h.b16 %v1438
        %v1513 = vunpack.c.l.b16 %v1439
        %v1514 = vunpack.c.l.b16 %v1440
        %v1515 = vunpack.c.h.b16 %v1440
        %v1516 = vunpack.c.l.b16 %v1441
        %v1517 = vunpack.c.l.b16 %v1442
        %v1518 = vunpack.c.h.b16 %v1442
        %v1519 = vunpack.c.l.b16 %v1443
        %v1520 = vunpack.c.l.b16 %v1444
        %v1521 = vunpack.c.h.b16 %v1444
        %v1522 = vunpack.c.l.b16 %v1445
        %v1523 = vunpack.c.l.b16 %v1446
        %v1524 = vunpack.c.h.b16 %v1446
        %v1525 = vunpack.c.l.b16 %v1447
        %v1526 = vunpack.c.l.b16 %v1448
        %v1527 = vunpack.c.h.b16 %v1448
        %v1528 = vunpack.c.l.b16 %v1449
        %v1529 = vunpack.c.l.b16 %v1450
        %v1530 = vunpack.c.h.b16 %v1450
        %v1531 = vunpack.c.l.b16 %v1451
        %v1532 = vunpack.c.l.b16 %v1452
        %v1533 = vunpack.c.h.b16 %v1452
        %v1534 = vunpack.c.l.b16 %v1453
        %v1535 = vunpack.c.l.b16 %v1454
        %v1536 = vunpack.c.h.b16 %v1454
        %v1537 = vunpack.c.l.b16 %v1455
        %v1538 = vunpack.c.l.b16 %v1456
        %v1539 = vunpack.c.h.b16 %v1456
        %v1540 = vunpack.c.l.b16 %v1457
        %v1541 = vunpack.c.l.b16 %v1458
        %v1542 = vunpack.c.h.b16 %v1458
        %v1543 = vunpack.c.l.b16 %v1459
        %v1544 = vunpack.c.l.b16 %v1460
        %v1545 = vunpack.c.h.b16 %v1460
        %v1546 = vunpack.c.l.b16 %v1461
        %v1547 = vunpack.c.l.b16 %v1462
        %v1548 = vunpack.c.h.b16 %v1462
        %v1549 = vunpack.c.l.b16 %v1463
        %v1550 = vunpack.c.l.b16 %v1464
        %v1551 = vunpack.c.h.b16 %v1464
        %v1552 = vunpack.c.l.b16 %v1465
        %v1553 = vunpack.c.l.b16 %v1466
        %v1554 = vunpack.c.h.b16 %v1466
        %v1555 = vunpack.c.l.b16 %v1467
        %v1556 = vpack.c.b16 %v1511, %v1508
        %v1557 = vpack.c.b16 %v1512, %v1509
        %v1558 = vpack.c.b16 %v1513, %v1510
        %v1559 = vpack.c.b16 %v1517, %v1514
        %v1560 = vpack.c.b16 %v1518, %v1515
        %v1561 = vpack.c.b16 %v1519, %v1516
        %v1562 = vpack.c.b16 %v1523, %v1520
        %v1563 = vpack.c.b16 %v1524, %v1521
        %v1564 = vpack.c.b16 %v1525, %v1522
        %v1565 = vpack.c.b16 %v1529, %v1526
        %v1566 = vpack.c.b16 %v1530, %v1527
        %v1567 = vpack.c.b16 %v1531, %v1528
        %v1568 = vpack.c.b16 %v1535, %v1532
        %v1569 = vpack.c.b16 %v1536, %v1533
        %v1570 = vpack.c.b16 %v1537, %v1534
        %v1571 = vpack.c.b16 %v1541, %v1538
        %v1572 = vpack.c.b16 %v1542, %v1539
        %v1573 = vpack.c.b16 %v1543, %v1540
        %v1574 = vpack.c.b16 %v1547, %v1544
        %v1575 = vpack.c.b16 %v1548, %v1545
        %v1576 = vpack.c.b16 %v1549, %v1546
        %v1577 = vpack.c.b16 %v1553, %v1550
        %v1578 = vpack.c.b16 %v1554, %v1551
        %v1579 = vpack.c.b16 %v1555, %v1552
        %1604 = vmatpush.bf16.msra.mxu0 %v1577
        %1605 = vmatpush.bf16.msra.mxu0 %v1574
        %1606 = vmatpush.bf16.msra.mxu0 %v1571
        %1607 = vmatpush.bf16.msra.mxu0 %v1568
        %1608 = vmatpush.bf16.msra.mxu0 %v1565
        %1609 = vmatpush.bf16.msra.mxu0 %v1562
        %1610 = vmatpush.bf16.msra.mxu0 %v1559
        %1611 = vmatpush.bf16.msra.mxu0 %v1556
        %1612 = vmatmul.bf16.gmra.mxu0 %v1435
        %v1613 = vpop.f32.mrf.mxu0
        %v1614 = vadd.f32 %v1470, %v1613
        %v1615 = vpop.f32.mrf.mxu0
        %1616 = vdwg.mxu0
        %1617 = vmatpush.bf16.msra.mxu0 %v1578
        %1618 = vmatpush.bf16.msra.mxu0 %v1575
        %1619 = vmatpush.bf16.msra.mxu0 %v1572
        %1620 = vmatpush.bf16.msra.mxu0 %v1569
        %1621 = vmatpush.bf16.msra.mxu0 %v1566
        %1622 = vmatpush.bf16.msra.mxu0 %v1563
        %1623 = vmatpush.bf16.msra.mxu0 %v1560
        %1624 = vmatpush.bf16.msra.mxu0 %v1557
        %1625 = vmatmul.bf16.gmra.mxu0 %v1435
        %v1626 = vpop.f32.mrf.mxu0
        %v1627 = vadd.f32 %v1471, %v1626
        %v1628 = vpop.f32.mrf.mxu0
        %1629 = vdwg.mxu0
        %1630 = vmatpush.bf16.msra.mxu0 %v1579
        %1631 = vmatpush.bf16.msra.mxu0 %v1576
        %1632 = vmatpush.bf16.msra.mxu0 %v1573
        %1633 = vmatpush.bf16.msra.mxu0 %v1570
        %1634 = vmatpush.bf16.msra.mxu0 %v1567
        %1635 = vmatpush.bf16.msra.mxu0 %v1564
        %1636 = vmatpush.bf16.msra.mxu0 %v1561
        %1637 = vmatpush.bf16.msra.mxu0 %v1558
        %1638 = vmatmul.bf16.gmra.mxu0 %v1435
        %v1639 = vpop.f32.mrf.mxu0
        %v1640 = vadd.f32 %v1472, %v1639
        %v1641 = vpop.f32.mrf.mxu0
        %1642 = vdwg.mxu0
        %1644 = vrot.lane.b32.xlu0 %v1614, 120
        %v1645 = vpop.permute.xlu0 %1644
        %1647 = vrot.lane.b32.xlu0 %v1614, 112
        %v1648 = vpop.permute.xlu0 %1647
        %1650 = vrot.lane.b32.xlu0 %v1614, 104
        %v1651 = vpop.permute.xlu0 %1650
        %1654 = vrot.lane.b32.xlu0 %v1627, 120
        %v1655 = vpop.permute.xlu0 %1654
        %1657 = vrot.lane.b32.xlu0 %v1627, 112
        %v1658 = vpop.permute.xlu0 %1657
        %1660 = vrot.lane.b32.xlu0 %v1627, 104
        %v1661 = vpop.permute.xlu0 %1660
        %1664 = vrot.lane.b32.xlu0 %v1640, 120
        %v1665 = vpop.permute.xlu0 %1664
        %1667 = vrot.lane.b32.xlu0 %v1640, 112
        %v1668 = vpop.permute.xlu0 %1667
        %1670 = vrot.lane.b32.xlu0 %v1640, 104
        %v1671 = vpop.permute.xlu0 %1670
        %v1673 = vmul.f32 %v1614, %v1399
        %v1674 = vmul.f32 %v1645, %v1399
        %v1675 = vmul.f32 %v1648, %v1399
        %v1676 = vmul.f32 %v1651, %v1399
        %1678 = vrot.lane.b32.xlu0 %v1400, 4
        %v1679 = vpop.permute.xlu0 %1678
        %v1681 = vmul.f32 %v1614, %v1679
        %v1682 = vmul.f32 %v1645, %v1679
        %v1683 = vmul.f32 %v1648, %v1679
        %v1684 = vmul.f32 %v1651, %v1679
        %1689 = vrot.lane.b32.xlu0 %v1681, 124
        %v1690 = vpop.permute.xlu0 %1689
        %1691 = vrot.lane.b32.xlu0 %v1682, 124
        %v1692 = vpop.permute.xlu0 %1691
        %1693 = vrot.lane.b32.xlu0 %v1683, 124
        %v1694 = vpop.permute.xlu0 %1693
        %1695 = vrot.lane.b32.xlu0 %v1684, 124
        %v1696 = vpop.permute.xlu0 %1695
        %v1701 = vsub.f32 %v1673, %v1690
        %v1702 = vsub.f32 %v1674, %v1692
        %v1703 = vsub.f32 %v1675, %v1694
        %v1704 = vsub.f32 %v1676, %v1696
        %1706 = vrot.lane.b32.xlu0 %v1399, 4
        %v1707 = vpop.permute.xlu0 %1706
        %v1709 = vmul.f32 %v1614, %v1707
        %v1710 = vmul.f32 %v1645, %v1707
        %v1711 = vmul.f32 %v1648, %v1707
        %v1712 = vmul.f32 %v1651, %v1707
        %v1713 = vmul.f32 %v1614, %v1400
        %v1714 = vmul.f32 %v1645, %v1400
        %v1715 = vmul.f32 %v1648, %v1400
        %v1716 = vmul.f32 %v1651, %v1400
        %1721 = vrot.lane.b32.xlu0 %v1713, 4
        %v1722 = vpop.permute.xlu0 %1721
        %1723 = vrot.lane.b32.xlu0 %v1714, 4
        %v1724 = vpop.permute.xlu0 %1723
        %1725 = vrot.lane.b32.xlu0 %v1715, 4
        %v1726 = vpop.permute.xlu0 %1725
        %1727 = vrot.lane.b32.xlu0 %v1716, 4
        %v1728 = vpop.permute.xlu0 %1727
        %v1733 = vadd.f32 %v1709, %v1722
        %v1734 = vadd.f32 %v1710, %v1724
        %v1735 = vadd.f32 %v1711, %v1726
        %v1736 = vadd.f32 %v1712, %v1728
        %vm1737 = vcmask 31744
        %v1738 = vsel %vm1737, %v1701, %v1733
        %v1739 = vsel %vm1737, %v1702, %v1734
        %v1740 = vsel %vm1737, %v1703, %v1735
        %v1741 = vsel %vm1737, %v1704, %v1736
        %v1742 = vmul.f32 %v1738, 0.35355338
        %v1743 = vmul.f32 %v1739, 0.35355338
        %v1744 = vmul.f32 %v1740, 0.35355338
        %v1745 = vmul.f32 %v1741, 0.35355338
        %v1746 = vmul.f32 %v1627, %v1399
        %v1747 = vmul.f32 %v1655, %v1399
        %v1748 = vmul.f32 %v1658, %v1399
        %v1749 = vmul.f32 %v1661, %v1399
        %v1750 = vmul.f32 %v1627, %v1679
        %v1751 = vmul.f32 %v1655, %v1679
        %v1752 = vmul.f32 %v1658, %v1679
        %v1753 = vmul.f32 %v1661, %v1679
        %1758 = vrot.lane.b32.xlu0 %v1750, 124
        %v1759 = vpop.permute.xlu0 %1758
        %1760 = vrot.lane.b32.xlu0 %v1751, 124
        %v1761 = vpop.permute.xlu0 %1760
        %1762 = vrot.lane.b32.xlu0 %v1752, 124
        %v1763 = vpop.permute.xlu0 %1762
        %1764 = vrot.lane.b32.xlu0 %v1753, 124
        %v1765 = vpop.permute.xlu0 %1764
        %v1770 = vsub.f32 %v1746, %v1759
        %v1771 = vsub.f32 %v1747, %v1761
        %v1772 = vsub.f32 %v1748, %v1763
        %v1773 = vsub.f32 %v1749, %v1765
        %v1774 = vmul.f32 %v1627, %v1707
        %v1775 = vmul.f32 %v1655, %v1707
        %v1776 = vmul.f32 %v1658, %v1707
        %v1777 = vmul.f32 %v1661, %v1707
        %v1778 = vmul.f32 %v1627, %v1400
        %v1779 = vmul.f32 %v1655, %v1400
        %v1780 = vmul.f32 %v1658, %v1400
        %v1781 = vmul.f32 %v1661, %v1400
        %1786 = vrot.lane.b32.xlu0 %v1778, 4
        %v1787 = vpop.permute.xlu0 %1786
        %1788 = vrot.lane.b32.xlu0 %v1779, 4
        %v1789 = vpop.permute.xlu0 %1788
        %1790 = vrot.lane.b32.xlu0 %v1780, 4
        %v1791 = vpop.permute.xlu0 %1790
        %1792 = vrot.lane.b32.xlu0 %v1781, 4
        %v1793 = vpop.permute.xlu0 %1792
        %v1798 = vadd.f32 %v1774, %v1787
        %v1799 = vadd.f32 %v1775, %v1789
        %v1800 = vadd.f32 %v1776, %v1791
        %v1801 = vadd.f32 %v1777, %v1793
        %v1802 = vsel %vm1737, %v1770, %v1798
        %v1803 = vsel %vm1737, %v1771, %v1799
        %v1804 = vsel %vm1737, %v1772, %v1800
        %v1805 = vsel %vm1737, %v1773, %v1801
        %v1806 = vpack.c.bf16 %v1742, %v1742
        %v1807 = vpack.c.bf16 %v1743, %v1743
        %v1808 = vpack.c.bf16 %v1744, %v1744
        %v1809 = vpack.c.bf16 %v1745, %v1745
        %v1810 = vpack.c.bf16 %v1802, %v1802
        %v1811 = vpack.c.bf16 %v1803, %v1803
        %v1812 = vpack.c.bf16 %v1804, %v1804
        %v1813 = vpack.c.bf16 %v1805, %v1805
        %v1814 = vpack.c.bf16 %v1640, %v1640
        %v1815 = vpack.c.bf16 %v1665, %v1665
        %v1816 = vpack.c.bf16 %v1668, %v1668
        %v1817 = vpack.c.bf16 %v1671, %v1671
        %v1818 = vld [vmem:[%s1343] sm:$0x1]
        %v1820 = vperm.slane %v1818, 0
        %vm1822 = vcmask 64512
        %v1824 = vsel %vm1822, %v1806, 0
        %v1827 = vsel %vm1822, %v1810, 0
        %1829 = vmatpush.bf16.xpose.msra.mxu0 0
        %1830 = vmatpush.bf16.xpose.msra.mxu0 0
        %1831 = vmatpush.bf16.xpose.msra.mxu0 0
        %1832 = vmatpush.bf16.xpose.msra.mxu0 0
        %1833 = vmatpush.bf16.xpose.msra.mxu0 0
        %1834 = vmatpush.bf16.xpose.msra.mxu0 0
        %1835 = vmatpush.bf16.xpose.msra.mxu0 0
        %1836 = vmatpush.bf16.xpose.msra.mxu0 %v1827
        %1837 = vmatmul.bf16.gmra.mxu0 %v1824
        %v1838 = vpop.f32.mrf.mxu0
        %v1839 = vadd.f32 %v1820, %v1838
        %v1840 = vpop.f32.mrf.mxu0
        %1841 = vdwg.mxu0
        %v1843 = vsel %vm1822, %v1807, 0
        %v1846 = vsel %vm1822, %v1811, 0
        %1848 = vmatpush.bf16.xpose.msra.mxu0 0
        %1849 = vmatpush.bf16.xpose.msra.mxu0 0
        %1850 = vmatpush.bf16.xpose.msra.mxu0 0
        %1851 = vmatpush.bf16.xpose.msra.mxu0 0
        %1852 = vmatpush.bf16.xpose.msra.mxu0 0
        %1853 = vmatpush.bf16.xpose.msra.mxu0 0
        %1854 = vmatpush.bf16.xpose.msra.mxu0 0
        %1855 = vmatpush.bf16.xpose.msra.mxu0 %v1846
        %1856 = vmatmul.bf16.gmra.mxu0 %v1843
        %v1857 = vpop.f32.mrf.mxu0
        %v1858 = vadd.f32 %v1820, %v1857
        %v1859 = vpop.f32.mrf.mxu0
        %1860 = vdwg.mxu0
        %v1862 = vsel %vm1822, %v1808, 0
        %v1865 = vsel %vm1822, %v1812, 0
        %1867 = vmatpush.bf16.xpose.msra.mxu0 0
        %1868 = vmatpush.bf16.xpose.msra.mxu0 0
        %1869 = vmatpush.bf16.xpose.msra.mxu0 0
        %1870 = vmatpush.bf16.xpose.msra.mxu0 0
        %1871 = vmatpush.bf16.xpose.msra.mxu0 0
        %1872 = vmatpush.bf16.xpose.msra.mxu0 0
        %1873 = vmatpush.bf16.xpose.msra.mxu0 0
        %1874 = vmatpush.bf16.xpose.msra.mxu0 %v1865
        %1875 = vmatmul.bf16.gmra.mxu0 %v1862
        %v1876 = vpop.f32.mrf.mxu0
        %v1877 = vadd.f32 %v1820, %v1876
        %v1878 = vpop.f32.mrf.mxu0
        %1879 = vdwg.mxu0
        %v1881 = vsel %vm1822, %v1809, 0
        %v1884 = vsel %vm1822, %v1813, 0
        %1886 = vmatpush.bf16.xpose.msra.mxu0 0
        %1887 = vmatpush.bf16.xpose.msra.mxu0 0
        %1888 = vmatpush.bf16.xpose.msra.mxu0 0
        %1889 = vmatpush.bf16.xpose.msra.mxu0 0
        %1890 = vmatpush.bf16.xpose.msra.mxu0 0
        %1891 = vmatpush.bf16.xpose.msra.mxu0 0
        %1892 = vmatpush.bf16.xpose.msra.mxu0 0
        %1893 = vmatpush.bf16.xpose.msra.mxu0 %v1884
        %1894 = vmatmul.bf16.gmra.mxu0 %v1881
        %v1895 = vpop.f32.mrf.mxu0
        %v1896 = vadd.f32 %v1820, %v1895
        %v1897 = vpop.f32.mrf.mxu0
        %1898 = vdwg.mxu0
        %v1899 = vsel %vm1822, %v1839, -inf
        %1900 = vmax.xlane.f32.xlu0 %v1899
        %v1901 = vpop.xlane.xlu0 %1900
        %v1902 = vsel %vm1822, %v1858, -inf
        %1903 = vmax.xlane.f32.xlu0 %v1902
        %v1904 = vpop.xlane.xlu0 %1903
        %v1905 = vsel %vm1822, %v1877, -inf
        %1906 = vmax.xlane.f32.xlu0 %v1905
        %v1907 = vpop.xlane.xlu0 %1906
        %v1908 = vsel %vm1822, %v1896, -inf
        %1909 = vmax.xlane.f32.xlu0 %v1908
        %v1910 = vpop.xlane.xlu0 %1909
        %v1911 = vsub.f32 %v1839, %v1901
        %v1912 = vsub.f32 %v1858, %v1904
        %v1913 = vsub.f32 %v1877, %v1907
        %v1914 = vsub.f32 %v1896, %v1910
        %v1915 = vmul.f32 %v1911, 1.442695
        %v1916 = vpow.pop %v1915
        %v1917 = vmul.f32 %v1912, 1.442695
        %v1918 = vpow.pop %v1917
        %v1919 = vmul.f32 %v1913, 1.442695
        %v1920 = vpow.pop %v1919
        %v1921 = vmul.f32 %v1914, 1.442695
        %v1922 = vpow.pop %v1921
        %v1923 = vsel %vm1822, %v1916, 0.0
        %1924 = vadd.xlane.f32.xlu0 %v1923
        %v1925 = vpop.xlane.xlu0 %1924
        %v1926 = vsel %vm1822, %v1918, 0.0
        %1927 = vadd.xlane.f32.xlu0 %v1926
        %v1928 = vpop.xlane.xlu0 %1927
        %v1929 = vsel %vm1822, %v1920, 0.0
        %1930 = vadd.xlane.f32.xlu0 %v1929
        %v1931 = vpop.xlane.xlu0 %1930
        %v1932 = vsel %vm1822, %v1922, 0.0
        %1933 = vadd.xlane.f32.xlu0 %v1932
        %v1934 = vpop.xlane.xlu0 %1933
        %v1935 = vrcp.pop %v1925
        %v1936 = vrcp.pop %v1928
        %v1937 = vrcp.pop %v1931
        %v1938 = vrcp.pop %v1934
        %v1939 = vmul.f32 %v1916, %v1935
        %v1940 = vmul.f32 %v1918, %v1936
        %v1941 = vmul.f32 %v1920, %v1937
        %v1942 = vmul.f32 %v1922, %v1938
        %v1943 = vpack.c.bf16 %v1939, %v1939
        %v1944 = vpack.c.bf16 %v1940, %v1940
        %v1945 = vpack.c.bf16 %v1941, %v1941
        %v1946 = vpack.c.bf16 %v1942, %v1942
        %v1948 = vsel %vm1822, %v1943, 0
        %vm1950 = vcmask 1043456
        %v1952 = vsel %vm1950, %v1814, 0
        %1954 = vmatpush.bf16.msra.mxu0 0
        %1955 = vmatpush.bf16.msra.mxu0 0
        %1956 = vmatpush.bf16.msra.mxu0 0
        %1957 = vmatpush.bf16.msra.mxu0 0
        %1958 = vmatpush.bf16.msra.mxu0 0
        %1959 = vmatpush.bf16.msra.mxu0 0
        %1960 = vmatpush.bf16.msra.mxu0 0
        %1961 = vmatpush.bf16.msra.mxu0 %v1952
        %1962 = vmatmul.bf16.gmra.mxu0 %v1948
        %v1963 = vpop.f32.mrf.mxu0
        %v1964 = vadd.f32 0.0, %v1963
        %v1965 = vpop.f32.mrf.mxu0
        %1966 = vdwg.mxu0
        %v1968 = vsel %vm1822, %v1944, 0
        %v1971 = vsel %vm1950, %v1815, 0
        %1973 = vmatpush.bf16.msra.mxu0 0
        %1974 = vmatpush.bf16.msra.mxu0 0
        %1975 = vmatpush.bf16.msra.mxu0 0
        %1976 = vmatpush.bf16.msra.mxu0 0
        %1977 = vmatpush.bf16.msra.mxu0 0
        %1978 = vmatpush.bf16.msra.mxu0 0
        %1979 = vmatpush.bf16.msra.mxu0 0
        %1980 = vmatpush.bf16.msra.mxu0 %v1971
        %1981 = vmatmul.bf16.gmra.mxu0 %v1968
        %v1982 = vpop.f32.mrf.mxu0
        %v1983 = vadd.f32 0.0, %v1982
        %v1984 = vpop.f32.mrf.mxu0
        %1985 = vdwg.mxu0
        %v1987 = vsel %vm1822, %v1945, 0
        %v1990 = vsel %vm1950, %v1816, 0
        %1992 = vmatpush.bf16.msra.mxu0 0
        %1993 = vmatpush.bf16.msra.mxu0 0
        %1994 = vmatpush.bf16.msra.mxu0 0
        %1995 = vmatpush.bf16.msra.mxu0 0
        %1996 = vmatpush.bf16.msra.mxu0 0
        %1997 = vmatpush.bf16.msra.mxu0 0
        %1998 = vmatpush.bf16.msra.mxu0 0
        %1999 = vmatpush.bf16.msra.mxu0 %v1990
        %2000 = vmatmul.bf16.gmra.mxu0 %v1987
        %v2001 = vpop.f32.mrf.mxu0
        %v2002 = vadd.f32 0.0, %v2001
        %v2003 = vpop.f32.mrf.mxu0
        %2004 = vdwg.mxu0
        %v2006 = vsel %vm1822, %v1946, 0
        %v2009 = vsel %vm1950, %v1817, 0
        %2011 = vmatpush.bf16.msra.mxu0 0
        %2012 = vmatpush.bf16.msra.mxu0 0
        %2013 = vmatpush.bf16.msra.mxu0 0
        %2014 = vmatpush.bf16.msra.mxu0 0
        %2015 = vmatpush.bf16.msra.mxu0 0
        %2016 = vmatpush.bf16.msra.mxu0 0
        %2017 = vmatpush.bf16.msra.mxu0 0
        %2018 = vmatpush.bf16.msra.mxu0 %v2009
        %2019 = vmatmul.bf16.gmra.mxu0 %v2006
        %v2020 = vpop.f32.mrf.mxu0
        %v2021 = vadd.f32 0.0, %v2020
        %v2022 = vpop.f32.mrf.mxu0
        %2023 = vdwg.mxu0
        %2025 = vrot.lane.b32.xlu0 %v1983, 8
        %v2026 = vpop.permute.xlu0 %2025
        %2029 = vrot.lane.b32.xlu0 %v2002, 16
        %v2030 = vpop.permute.xlu0 %2029
        %2033 = vrot.lane.b32.xlu0 %v2021, 24
        %v2034 = vpop.permute.xlu0 %2033
        %v2036 = vsel %vm1822, %v1964, %v2026
        %vm2037 = vcmask 130048
        %v2038 = vsel %vm2037, %v2036, %v2030
        %vm2039 = vcmask 195584
        %v2040 = vsel %vm2039, %v2038, %v2034
        %v2041 = vpack.c.bf16 %v2040, %v2040
        %v2042 = vld [vmem:[%s1361] sm:$0xf]
        %v2043 = vld [vmem:[%s1361 + $0x4] sm:$0xf]
        %v2044 = vld [vmem:[%s1361 + $0x8] sm:$0xf]
        %v2045 = vld [vmem:[%s1361 + $0xc] sm:$0xf]
        %v2050 = vunpack.c.l.b16 %v2042
        %v2051 = vunpack.c.l.b16 %v2043
        %v2052 = vunpack.c.l.b16 %v2044
        %v2053 = vunpack.c.l.b16 %v2045
        %v2054 = vpack.c.b16 %v2051, %v2050
        %v2055 = vpack.c.b16 %v2053, %v2052
        %vm2058 = vcmask 261120
        %v2060 = vsel %vm2058, %v2041, 0
        %2062 = vmatpush.bf16.msra.mxu0 0
        %2063 = vmatpush.bf16.msra.mxu0 0
        %2064 = vmatpush.bf16.msra.mxu0 0
        %2065 = vmatpush.bf16.msra.mxu0 0
        %2066 = vmatpush.bf16.msra.mxu0 0
        %2067 = vmatpush.bf16.msra.mxu0 0
        %2068 = vmatpush.bf16.msra.mxu0 %v2055
        %2069 = vmatpush.bf16.msra.mxu0 %v2054
        %2070 = vmatmul.bf16.gmra.mxu0 %v2060
        %v2071 = vpop.f32.mrf.mxu0
        %v2072 = vadd.f32 0.0, %v2071
        %v2073 = vpop.f32.mrf.mxu0
        %2074 = vdwg.mxu0
        %v2075 = vadd.f32 %v1398, %v2072
        %v2076 = vld [vmem:[%s1364] sm:$0x1]
        %v2078 = vperm.slane %v2076, 0
        %v2080 = vadd.f32 %v2075, %v2078
        %v2081 = vld [vmem:[%s1367] sm:$0x1]
        %v2082 = vld [vmem:[%s1370] sm:$0x1]
        %2083 = vadd.xlane.f32.xlu0 %v2080
        %v2084 = vpop.xlane.xlu0 %2083
        %v2085 = vmul.f32 %v2084, 0.03125
        %v2086 = vmul.f32 %v2080, %v2080
        %2087 = vadd.xlane.f32.xlu0 %v2086
        %v2088 = vpop.xlane.xlu0 %2087
        %v2089 = vmul.f32 %v2088, 0.03125
        %v2090 = vmul.f32 %v2085, %v2085
        %v2091 = vsub.f32 %v2089, %v2090
        %v2092 = vsub.f32 %v2080, %v2085
        %v2093 = vadd.f32 %v2091, 1e-05
        %v2094 = vrsqrt.pop %v2093
        %v2095 = vmul.f32 %v2094, %v2093
        %v2096 = vmul.f32 %v2095, %v2094
        %v2097 = vmul.f32 0.5, %v2096
        %v2098 = vsub.f32 1.5, %v2097
        %v2099 = vmul.f32 %v2094, %v2098
        %vm2100 = vweird.f32 %v2093
        %vm2101 = vweird.f32 %v2094
        %vm2102 = vmor %vm2100, %vm2101
        %v2103 = vsel %vm2102, %v2094, %v2099
        %v2104 = vmul.f32 %v2092, %v2103
        %v2106 = vperm.slane %v2081, 0
        %v2108 = vmul.f32 %v2104, %v2106
        %v2110 = vperm.slane %v2082, 0
        %v2112 = vadd.f32 %v2108, %v2110
        %v2113 = vpack.c.bf16 %v2112, %v2112
        %v2114 = vld [vmem:[%s1115] sm:$0xf]
        %v2115 = vld [vmem:[%s1115 + $0x4] sm:$0xf]
        %v2116 = vld [vmem:[%s1115 + $0x8] sm:$0xf]
        %v2117 = vld [vmem:[%s1115 + $0xc] sm:$0xf]
        %v2118 = vld [vmem:[%s1115 + $0x10] sm:$0xf]
        %v2119 = vld [vmem:[%s1115 + $0x14] sm:$0xf]
        %v2120 = vld [vmem:[%s1115 + $0x18] sm:$0xf]
        %v2121 = vld [vmem:[%s1115 + $0x1c] sm:$0xf]
        %v2122 = vld [vmem:[%s1115 + $0x20] sm:$0xf]
        %v2123 = vld [vmem:[%s1115 + $0x24] sm:$0xf]
        %v2124 = vld [vmem:[%s1115 + $0x28] sm:$0xf]
        %v2125 = vld [vmem:[%s1115 + $0x2c] sm:$0xf]
        %v2126 = vld [vmem:[%s1115 + $0x30] sm:$0xf]
        %v2127 = vld [vmem:[%s1115 + $0x34] sm:$0xf]
        %v2128 = vld [vmem:[%s1115 + $0x38] sm:$0xf]
        %v2129 = vld [vmem:[%s1115 + $0x3c] sm:$0xf]
        %v2130 = vld [vmem:[%s1373] sm:$0x1]
        %v2132 = vperm.slane %v2130, 0
        %v2150 = vunpack.c.l.b16 %v2114
        %v2151 = vunpack.c.l.b16 %v2115
        %v2152 = vunpack.c.l.b16 %v2116
        %v2153 = vunpack.c.l.b16 %v2117
        %v2154 = vunpack.c.l.b16 %v2118
        %v2155 = vunpack.c.l.b16 %v2119
        %v2156 = vunpack.c.l.b16 %v2120
        %v2157 = vunpack.c.l.b16 %v2121
        %v2158 = vunpack.c.l.b16 %v2122
        %v2159 = vunpack.c.l.b16 %v2123
        %v2160 = vunpack.c.l.b16 %v2124
        %v2161 = vunpack.c.l.b16 %v2125
        %v2162 = vunpack.c.l.b16 %v2126
        %v2163 = vunpack.c.l.b16 %v2127
        %v2164 = vunpack.c.l.b16 %v2128
        %v2165 = vunpack.c.l.b16 %v2129
        %v2166 = vpack.c.b16 %v2151, %v2150
        %v2167 = vpack.c.b16 %v2153, %v2152
        %v2168 = vpack.c.b16 %v2155, %v2154
        %v2169 = vpack.c.b16 %v2157, %v2156
        %v2170 = vpack.c.b16 %v2159, %v2158
        %v2171 = vpack.c.b16 %v2161, %v2160
        %v2172 = vpack.c.b16 %v2163, %v2162
        %v2173 = vpack.c.b16 %v2165, %v2164
        %2182 = vmatpush.bf16.msra.mxu0 %v2173
        %2183 = vmatpush.bf16.msra.mxu0 %v2172
        %2184 = vmatpush.bf16.msra.mxu0 %v2171
        %2185 = vmatpush.bf16.msra.mxu0 %v2170
        %2186 = vmatpush.bf16.msra.mxu0 %v2169
        %2187 = vmatpush.bf16.msra.mxu0 %v2168
        %2188 = vmatpush.bf16.msra.mxu0 %v2167
        %2189 = vmatpush.bf16.msra.mxu0 %v2166
        %2190 = vmatmul.bf16.gmra.mxu0 %v2113
        %v2191 = vpop.f32.mrf.mxu0
        %v2192 = vadd.f32 %v2132, %v2191
        %v2193 = vpop.f32.mrf.mxu0
        %2194 = vdwg.mxu0
        %v2195 = vld [vmem:[%s1340] sm:$0xf]
        %v2196 = vld [vmem:[%s1125] sm:$0xff]
        %v2197 = vld [vmem:[%s1125 + $0x8] sm:$0xff]
        %v2198 = vld [vmem:[%s1125 + $0x10] sm:$0xff]
        %v2199 = vld [vmem:[%s1125 + $0x18] sm:$0xff]
        %v2200 = vld [vmem:[%s1125 + $0x20] sm:$0xff]
        %v2201 = vld [vmem:[%s1125 + $0x28] sm:$0xff]
        %v2202 = vld [vmem:[%s1125 + $0x30] sm:$0xff]
        %v2203 = vld [vmem:[%s1125 + $0x38] sm:$0xff]
        %v2204 = vld [vmem:[%s1125 + $0x40] sm:$0xff]
        %v2205 = vld [vmem:[%s1125 + $0x48] sm:$0xff]
        %v2206 = vld [vmem:[%s1125 + $0x50] sm:$0xff]
        %v2207 = vld [vmem:[%s1125 + $0x58] sm:$0xff]
        %v2208 = vld [vmem:[%s1125 + $0x60] sm:$0xff]
        %v2209 = vld [vmem:[%s1125 + $0x68] sm:$0xff]
        %v2210 = vld [vmem:[%s1125 + $0x70] sm:$0xff]
        %v2211 = vld [vmem:[%s1125 + $0x78] sm:$0xff]
        %v2212 = vld [vmem:[%s1377] sm:$0x3]
        %v2214 = vperm.slane %v2212, 0
        %v2215 = vperm.slane %v2212, 1
        %v2234 = vunpack.c.l.b16 %v2196
        %v2235 = vunpack.c.h.b16 %v2196
        %v2236 = vunpack.c.l.b16 %v2197
        %v2237 = vunpack.c.h.b16 %v2197
        %v2238 = vunpack.c.l.b16 %v2198
        %v2239 = vunpack.c.h.b16 %v2198
        %v2240 = vunpack.c.l.b16 %v2199
        %v2241 = vunpack.c.h.b16 %v2199
        %v2242 = vunpack.c.l.b16 %v2200
        %v2243 = vunpack.c.h.b16 %v2200
        %v2244 = vunpack.c.l.b16 %v2201
        %v2245 = vunpack.c.h.b16 %v2201
        %v2246 = vunpack.c.l.b16 %v2202
        %v2247 = vunpack.c.h.b16 %v2202
        %v2248 = vunpack.c.l.b16 %v2203
        %v2249 = vunpack.c.h.b16 %v2203
        %v2250 = vunpack.c.l.b16 %v2204
        %v2251 = vunpack.c.h.b16 %v2204
        %v2252 = vunpack.c.l.b16 %v2205
        %v2253 = vunpack.c.h.b16 %v2205
        %v2254 = vunpack.c.l.b16 %v2206
        %v2255 = vunpack.c.h.b16 %v2206
        %v2256 = vunpack.c.l.b16 %v2207
        %v2257 = vunpack.c.h.b16 %v2207
        %v2258 = vunpack.c.l.b16 %v2208
        %v2259 = vunpack.c.h.b16 %v2208
        %v2260 = vunpack.c.l.b16 %v2209
        %v2261 = vunpack.c.h.b16 %v2209
        %v2262 = vunpack.c.l.b16 %v2210
        %v2263 = vunpack.c.h.b16 %v2210
        %v2264 = vunpack.c.l.b16 %v2211
        %v2265 = vunpack.c.h.b16 %v2211
        %v2266 = vpack.c.b16 %v2236, %v2234
        %v2267 = vpack.c.b16 %v2237, %v2235
        %v2268 = vpack.c.b16 %v2240, %v2238
        %v2269 = vpack.c.b16 %v2241, %v2239
        %v2270 = vpack.c.b16 %v2244, %v2242
        %v2271 = vpack.c.b16 %v2245, %v2243
        %v2272 = vpack.c.b16 %v2248, %v2246
        %v2273 = vpack.c.b16 %v2249, %v2247
        %v2274 = vpack.c.b16 %v2252, %v2250
        %v2275 = vpack.c.b16 %v2253, %v2251
        %v2276 = vpack.c.b16 %v2256, %v2254
        %v2277 = vpack.c.b16 %v2257, %v2255
        %v2278 = vpack.c.b16 %v2260, %v2258
        %v2279 = vpack.c.b16 %v2261, %v2259
        %v2280 = vpack.c.b16 %v2264, %v2262
        %v2281 = vpack.c.b16 %v2265, %v2263
        %2298 = vmatpush.bf16.msra.mxu0 %v2280
        %2299 = vmatpush.bf16.msra.mxu0 %v2278
        %2300 = vmatpush.bf16.msra.mxu0 %v2276
        %2301 = vmatpush.bf16.msra.mxu0 %v2274
        %2302 = vmatpush.bf16.msra.mxu0 %v2272
        %2303 = vmatpush.bf16.msra.mxu0 %v2270
        %2304 = vmatpush.bf16.msra.mxu0 %v2268
        %2305 = vmatpush.bf16.msra.mxu0 %v2266
        %2306 = vmatmul.bf16.gmra.mxu0 %v2195
        %v2307 = vpop.f32.mrf.mxu0
        %v2308 = vadd.f32 %v2214, %v2307
        %v2309 = vpop.f32.mrf.mxu0
        %2310 = vdwg.mxu0
        %2311 = vmatpush.bf16.msra.mxu0 %v2281
        %2312 = vmatpush.bf16.msra.mxu0 %v2279
        %2313 = vmatpush.bf16.msra.mxu0 %v2277
        %2314 = vmatpush.bf16.msra.mxu0 %v2275
        %2315 = vmatpush.bf16.msra.mxu0 %v2273
        %2316 = vmatpush.bf16.msra.mxu0 %v2271
        %2317 = vmatpush.bf16.msra.mxu0 %v2269
        %2318 = vmatpush.bf16.msra.mxu0 %v2267
        %2319 = vmatmul.bf16.gmra.mxu0 %v2195
        %v2320 = vpop.f32.mrf.mxu0
        %v2321 = vadd.f32 %v2215, %v2320
        %v2322 = vpop.f32.mrf.mxu0
        %2323 = vdwg.mxu0
        %2325 = vrot.lane.b32.xlu0 %v2192, 120
        %v2326 = vpop.permute.xlu0 %2325
        %2328 = vrot.lane.b32.xlu0 %v2192, 112
        %v2329 = vpop.permute.xlu0 %2328
        %2331 = vrot.lane.b32.xlu0 %v2192, 104
        %v2332 = vpop.permute.xlu0 %2331
        %2335 = vrot.lane.b32.xlu0 %v2308, 120
        %v2336 = vpop.permute.xlu0 %2335
        %2338 = vrot.lane.b32.xlu0 %v2308, 112
        %v2339 = vpop.permute.xlu0 %2338
        %2341 = vrot.lane.b32.xlu0 %v2308, 104
        %v2342 = vpop.permute.xlu0 %2341
        %2345 = vrot.lane.b32.xlu0 %v2321, 120
        %v2346 = vpop.permute.xlu0 %2345
        %2348 = vrot.lane.b32.xlu0 %v2321, 112
        %v2349 = vpop.permute.xlu0 %2348
        %2351 = vrot.lane.b32.xlu0 %v2321, 104
        %v2352 = vpop.permute.xlu0 %2351
        %v2354 = vmul.f32 %v2192, %v1399
        %v2355 = vmul.f32 %v2326, %v1399
        %v2356 = vmul.f32 %v2329, %v1399
        %v2357 = vmul.f32 %v2332, %v1399
        %v2358 = vmul.f32 %v2192, %v1679
        %v2359 = vmul.f32 %v2326, %v1679
        %v2360 = vmul.f32 %v2329, %v1679
        %v2361 = vmul.f32 %v2332, %v1679
        %2366 = vrot.lane.b32.xlu0 %v2358, 124
        %v2367 = vpop.permute.xlu0 %2366
        %2368 = vrot.lane.b32.xlu0 %v2359, 124
        %v2369 = vpop.permute.xlu0 %2368
        %2370 = vrot.lane.b32.xlu0 %v2360, 124
        %v2371 = vpop.permute.xlu0 %2370
        %2372 = vrot.lane.b32.xlu0 %v2361, 124
        %v2373 = vpop.permute.xlu0 %2372
        %v2378 = vsub.f32 %v2354, %v2367
        %v2379 = vsub.f32 %v2355, %v2369
        %v2380 = vsub.f32 %v2356, %v2371
        %v2381 = vsub.f32 %v2357, %v2373
        %v2382 = vmul.f32 %v2192, %v1707
        %v2383 = vmul.f32 %v2326, %v1707
        %v2384 = vmul.f32 %v2329, %v1707
        %v2385 = vmul.f32 %v2332, %v1707
        %v2386 = vmul.f32 %v2192, %v1400
        %v2387 = vmul.f32 %v2326, %v1400
        %v2388 = vmul.f32 %v2329, %v1400
        %v2389 = vmul.f32 %v2332, %v1400
        %2394 = vrot.lane.b32.xlu0 %v2386, 4
        %v2395 = vpop.permute.xlu0 %2394
        %2396 = vrot.lane.b32.xlu0 %v2387, 4
        %v2397 = vpop.permute.xlu0 %2396
        %2398 = vrot.lane.b32.xlu0 %v2388, 4
        %v2399 = vpop.permute.xlu0 %2398
        %2400 = vrot.lane.b32.xlu0 %v2389, 4
        %v2401 = vpop.permute.xlu0 %2400
        %v2406 = vadd.f32 %v2382, %v2395
        %v2407 = vadd.f32 %v2383, %v2397
        %v2408 = vadd.f32 %v2384, %v2399
        %v2409 = vadd.f32 %v2385, %v2401
        %v2410 = vsel %vm1737, %v2378, %v2406
        %v2411 = vsel %vm1737, %v2379, %v2407
        %v2412 = vsel %vm1737, %v2380, %v2408
        %v2413 = vsel %vm1737, %v2381, %v2409
        %v2414 = vmul.f32 %v2410, 0.35355338
        %v2415 = vmul.f32 %v2411, 0.35355338
        %v2416 = vmul.f32 %v2412, 0.35355338
        %v2417 = vmul.f32 %v2413, 0.35355338
        %v2418 = vmul.f32 %v2308, %v1401
        %v2419 = vmul.f32 %v2336, %v1401
        %v2420 = vmul.f32 %v2339, %v1401
        %v2421 = vmul.f32 %v2342, %v1401
        %2423 = vrot.lane.b32.xlu0 %v1402, 4
        %v2424 = vpop.permute.xlu0 %2423
        %v2426 = vmul.f32 %v2308, %v2424
        %v2427 = vmul.f32 %v2336, %v2424
        %v2428 = vmul.f32 %v2339, %v2424
        %v2429 = vmul.f32 %v2342, %v2424
        %2434 = vrot.lane.b32.xlu0 %v2426, 124
        %v2435 = vpop.permute.xlu0 %2434
        %2436 = vrot.lane.b32.xlu0 %v2427, 124
        %v2437 = vpop.permute.xlu0 %2436
        %2438 = vrot.lane.b32.xlu0 %v2428, 124
        %v2439 = vpop.permute.xlu0 %2438
        %2440 = vrot.lane.b32.xlu0 %v2429, 124
        %v2441 = vpop.permute.xlu0 %2440
        %v2446 = vsub.f32 %v2418, %v2435
        %v2447 = vsub.f32 %v2419, %v2437
        %v2448 = vsub.f32 %v2420, %v2439
        %v2449 = vsub.f32 %v2421, %v2441
        %2451 = vrot.lane.b32.xlu0 %v1401, 4
        %v2452 = vpop.permute.xlu0 %2451
        %v2454 = vmul.f32 %v2308, %v2452
        %v2455 = vmul.f32 %v2336, %v2452
        %v2456 = vmul.f32 %v2339, %v2452
        %v2457 = vmul.f32 %v2342, %v2452
        %v2458 = vmul.f32 %v2308, %v1402
        %v2459 = vmul.f32 %v2336, %v1402
        %v2460 = vmul.f32 %v2339, %v1402
        %v2461 = vmul.f32 %v2342, %v1402
        %2466 = vrot.lane.b32.xlu0 %v2458, 4
        %v2467 = vpop.permute.xlu0 %2466
        %2468 = vrot.lane.b32.xlu0 %v2459, 4
        %v2469 = vpop.permute.xlu0 %2468
        %2470 = vrot.lane.b32.xlu0 %v2460, 4
        %v2471 = vpop.permute.xlu0 %2470
        %2472 = vrot.lane.b32.xlu0 %v2461, 4
        %v2473 = vpop.permute.xlu0 %2472
        %v2478 = vadd.f32 %v2454, %v2467
        %v2479 = vadd.f32 %v2455, %v2469
        %v2480 = vadd.f32 %v2456, %v2471
        %v2481 = vadd.f32 %v2457, %v2473
        %v2482 = vsel %vm1737, %v2446, %v2478
        %v2483 = vsel %vm1737, %v2447, %v2479
        %v2484 = vsel %vm1737, %v2448, %v2480
        %v2485 = vsel %vm1737, %v2449, %v2481
        %v2486 = vpack.c.bf16 %v2414, %v2414
        %v2487 = vpack.c.bf16 %v2415, %v2415
        %v2488 = vpack.c.bf16 %v2416, %v2416
        %v2489 = vpack.c.bf16 %v2417, %v2417
        %v2490 = vpack.c.bf16 %v2482, %v2482
        %v2491 = vpack.c.bf16 %v2483, %v2483
        %v2492 = vpack.c.bf16 %v2484, %v2484
        %v2493 = vpack.c.bf16 %v2485, %v2485
        %v2494 = vpack.c.bf16 %v2321, %v2321
        %v2495 = vpack.c.bf16 %v2346, %v2346
        %v2496 = vpack.c.bf16 %v2349, %v2349
        %v2497 = vpack.c.bf16 %v2352, %v2352
        %v2498 = vld [vmem:[%s1346] sm:$0x1]
        %v2500 = vperm.slane %v2498, 0
        %v2503 = vsel %vm1822, %v2486, 0
        %v2506 = vsel %vm1822, %v2490, 0
        %2508 = vmatpush.bf16.xpose.msra.mxu0 0
        %2509 = vmatpush.bf16.xpose.msra.mxu0 0
        %2510 = vmatpush.bf16.xpose.msra.mxu0 0
        %2511 = vmatpush.bf16.xpose.msra.mxu0 0
        %2512 = vmatpush.bf16.xpose.msra.mxu0 0
        %2513 = vmatpush.bf16.xpose.msra.mxu0 0
        %2514 = vmatpush.bf16.xpose.msra.mxu0 0
        %2515 = vmatpush.bf16.xpose.msra.mxu0 %v2506
        %2516 = vmatmul.bf16.gmra.mxu0 %v2503
        %v2517 = vpop.f32.mrf.mxu0
        %v2518 = vadd.f32 %v2500, %v2517
        %v2519 = vpop.f32.mrf.mxu0
        %2520 = vdwg.mxu0
        %v2522 = vsel %vm1822, %v2487, 0
        %v2525 = vsel %vm1822, %v2491, 0
        %2527 = vmatpush.bf16.xpose.msra.mxu0 0
        %2528 = vmatpush.bf16.xpose.msra.mxu0 0
        %2529 = vmatpush.bf16.xpose.msra.mxu0 0
        %2530 = vmatpush.bf16.xpose.msra.mxu0 0
        %2531 = vmatpush.bf16.xpose.msra.mxu0 0
        %2532 = vmatpush.bf16.xpose.msra.mxu0 0
        %2533 = vmatpush.bf16.xpose.msra.mxu0 0
        %2534 = vmatpush.bf16.xpose.msra.mxu0 %v2525
        %2535 = vmatmul.bf16.gmra.mxu0 %v2522
        %v2536 = vpop.f32.mrf.mxu0
        %v2537 = vadd.f32 %v2500, %v2536
        %v2538 = vpop.f32.mrf.mxu0
        %2539 = vdwg.mxu0
        %v2541 = vsel %vm1822, %v2488, 0
        %v2544 = vsel %vm1822, %v2492, 0
        %2546 = vmatpush.bf16.xpose.msra.mxu0 0
        %2547 = vmatpush.bf16.xpose.msra.mxu0 0
        %2548 = vmatpush.bf16.xpose.msra.mxu0 0
        %2549 = vmatpush.bf16.xpose.msra.mxu0 0
        %2550 = vmatpush.bf16.xpose.msra.mxu0 0
        %2551 = vmatpush.bf16.xpose.msra.mxu0 0
        %2552 = vmatpush.bf16.xpose.msra.mxu0 0
        %2553 = vmatpush.bf16.xpose.msra.mxu0 %v2544
        %2554 = vmatmul.bf16.gmra.mxu0 %v2541
        %v2555 = vpop.f32.mrf.mxu0
        %v2556 = vadd.f32 %v2500, %v2555
        %v2557 = vpop.f32.mrf.mxu0
        %2558 = vdwg.mxu0
        %v2560 = vsel %vm1822, %v2489, 0
        %v2563 = vsel %vm1822, %v2493, 0
        %2565 = vmatpush.bf16.xpose.msra.mxu0 0
        %2566 = vmatpush.bf16.xpose.msra.mxu0 0
        %2567 = vmatpush.bf16.xpose.msra.mxu0 0
        %2568 = vmatpush.bf16.xpose.msra.mxu0 0
        %2569 = vmatpush.bf16.xpose.msra.mxu0 0
        %2570 = vmatpush.bf16.xpose.msra.mxu0 0
        %2571 = vmatpush.bf16.xpose.msra.mxu0 0
        %2572 = vmatpush.bf16.xpose.msra.mxu0 %v2563
        %2573 = vmatmul.bf16.gmra.mxu0 %v2560
        %v2574 = vpop.f32.mrf.mxu0
        %v2575 = vadd.f32 %v2500, %v2574
        %v2576 = vpop.f32.mrf.mxu0
        %2577 = vdwg.mxu0
        %v2578 = vsel %vm1822, %v2518, -inf
        %2579 = vmax.xlane.f32.xlu0 %v2578
        %v2580 = vpop.xlane.xlu0 %2579
        %v2581 = vsel %vm1822, %v2537, -inf
        %2582 = vmax.xlane.f32.xlu0 %v2581
        %v2583 = vpop.xlane.xlu0 %2582
        %v2584 = vsel %vm1822, %v2556, -inf
        %2585 = vmax.xlane.f32.xlu0 %v2584
        %v2586 = vpop.xlane.xlu0 %2585
        %v2587 = vsel %vm1822, %v2575, -inf
        %2588 = vmax.xlane.f32.xlu0 %v2587
        %v2589 = vpop.xlane.xlu0 %2588
        %v2590 = vsub.f32 %v2518, %v2580
        %v2591 = vsub.f32 %v2537, %v2583
        %v2592 = vsub.f32 %v2556, %v2586
        %v2593 = vsub.f32 %v2575, %v2589
        %v2594 = vmul.f32 %v2590, 1.442695
        %v2595 = vpow.pop %v2594
        %v2596 = vmul.f32 %v2591, 1.442695
        %v2597 = vpow.pop %v2596
        %v2598 = vmul.f32 %v2592, 1.442695
        %v2599 = vpow.pop %v2598
        %v2600 = vmul.f32 %v2593, 1.442695
        %v2601 = vpow.pop %v2600
        %v2602 = vsel %vm1822, %v2595, 0.0
        %2603 = vadd.xlane.f32.xlu0 %v2602
        %v2604 = vpop.xlane.xlu0 %2603
        %v2605 = vsel %vm1822, %v2597, 0.0
        %2606 = vadd.xlane.f32.xlu0 %v2605
        %v2607 = vpop.xlane.xlu0 %2606
        %v2608 = vsel %vm1822, %v2599, 0.0
        %2609 = vadd.xlane.f32.xlu0 %v2608
        %v2610 = vpop.xlane.xlu0 %2609
        %v2611 = vsel %vm1822, %v2601, 0.0
        %2612 = vadd.xlane.f32.xlu0 %v2611
        %v2613 = vpop.xlane.xlu0 %2612
        %v2614 = vrcp.pop %v2604
        %v2615 = vrcp.pop %v2607
        %v2616 = vrcp.pop %v2610
        %v2617 = vrcp.pop %v2613
        %v2618 = vmul.f32 %v2595, %v2614
        %v2619 = vmul.f32 %v2597, %v2615
        %v2620 = vmul.f32 %v2599, %v2616
        %v2621 = vmul.f32 %v2601, %v2617
        %v2622 = vpack.c.bf16 %v2618, %v2618
        %v2623 = vpack.c.bf16 %v2619, %v2619
        %v2624 = vpack.c.bf16 %v2620, %v2620
        %v2625 = vpack.c.bf16 %v2621, %v2621
        %v2627 = vsel %vm1822, %v2622, 0
        %v2630 = vsel %vm1950, %v2494, 0
        %2632 = vmatpush.bf16.msra.mxu0 0
        %2633 = vmatpush.bf16.msra.mxu0 0
        %2634 = vmatpush.bf16.msra.mxu0 0
        %2635 = vmatpush.bf16.msra.mxu0 0
        %2636 = vmatpush.bf16.msra.mxu0 0
        %2637 = vmatpush.bf16.msra.mxu0 0
        %2638 = vmatpush.bf16.msra.mxu0 0
        %2639 = vmatpush.bf16.msra.mxu0 %v2630
        %2640 = vmatmul.bf16.gmra.mxu0 %v2627
        %v2641 = vpop.f32.mrf.mxu0
        %v2642 = vadd.f32 0.0, %v2641
        %v2643 = vpop.f32.mrf.mxu0
        %2644 = vdwg.mxu0
        %v2646 = vsel %vm1822, %v2623, 0
        %v2649 = vsel %vm1950, %v2495, 0
        %2651 = vmatpush.bf16.msra.mxu0 0
        %2652 = vmatpush.bf16.msra.mxu0 0
        %2653 = vmatpush.bf16.msra.mxu0 0
        %2654 = vmatpush.bf16.msra.mxu0 0
        %2655 = vmatpush.bf16.msra.mxu0 0
        %2656 = vmatpush.bf16.msra.mxu0 0
        %2657 = vmatpush.bf16.msra.mxu0 0
        %2658 = vmatpush.bf16.msra.mxu0 %v2649
        %2659 = vmatmul.bf16.gmra.mxu0 %v2646
        %v2660 = vpop.f32.mrf.mxu0
        %v2661 = vadd.f32 0.0, %v2660
        %v2662 = vpop.f32.mrf.mxu0
        %2663 = vdwg.mxu0
        %v2665 = vsel %vm1822, %v2624, 0
        %v2668 = vsel %vm1950, %v2496, 0
        %2670 = vmatpush.bf16.msra.mxu0 0
        %2671 = vmatpush.bf16.msra.mxu0 0
        %2672 = vmatpush.bf16.msra.mxu0 0
        %2673 = vmatpush.bf16.msra.mxu0 0
        %2674 = vmatpush.bf16.msra.mxu0 0
        %2675 = vmatpush.bf16.msra.mxu0 0
        %2676 = vmatpush.bf16.msra.mxu0 0
        %2677 = vmatpush.bf16.msra.mxu0 %v2668
        %2678 = vmatmul.bf16.gmra.mxu0 %v2665
        %v2679 = vpop.f32.mrf.mxu0
        %v2680 = vadd.f32 0.0, %v2679
        %v2681 = vpop.f32.mrf.mxu0
        %2682 = vdwg.mxu0
        %v2684 = vsel %vm1822, %v2625, 0
        %v2687 = vsel %vm1950, %v2497, 0
        %2689 = vmatpush.bf16.msra.mxu0 0
        %2690 = vmatpush.bf16.msra.mxu0 0
        %2691 = vmatpush.bf16.msra.mxu0 0
        %2692 = vmatpush.bf16.msra.mxu0 0
        %2693 = vmatpush.bf16.msra.mxu0 0
        %2694 = vmatpush.bf16.msra.mxu0 0
        %2695 = vmatpush.bf16.msra.mxu0 0
        %2696 = vmatpush.bf16.msra.mxu0 %v2687
        %2697 = vmatmul.bf16.gmra.mxu0 %v2684
        %v2698 = vpop.f32.mrf.mxu0
        %v2699 = vadd.f32 0.0, %v2698
        %v2700 = vpop.f32.mrf.mxu0
        %2701 = vdwg.mxu0
        %2703 = vrot.lane.b32.xlu0 %v2661, 8
        %v2704 = vpop.permute.xlu0 %2703
        %2707 = vrot.lane.b32.xlu0 %v2680, 16
        %v2708 = vpop.permute.xlu0 %2707
        %2711 = vrot.lane.b32.xlu0 %v2699, 24
        %v2712 = vpop.permute.xlu0 %2711
        %v2714 = vsel %vm1822, %v2642, %v2704
        %v2715 = vsel %vm2037, %v2714, %v2708
        %v2716 = vsel %vm2039, %v2715, %v2712
        %v2717 = vpack.c.bf16 %v2716, %v2716
        %v2718 = vld [vmem:[%s1135] sm:$0xf]
        %v2719 = vld [vmem:[%s1135 + $0x4] sm:$0xf]
        %v2720 = vld [vmem:[%s1135 + $0x8] sm:$0xf]
        %v2721 = vld [vmem:[%s1135 + $0xc] sm:$0xf]
        %v2726 = vunpack.c.l.b16 %v2718
        %v2727 = vunpack.c.l.b16 %v2719
        %v2728 = vunpack.c.l.b16 %v2720
        %v2729 = vunpack.c.l.b16 %v2721
        %v2730 = vpack.c.b16 %v2727, %v2726
        %v2731 = vpack.c.b16 %v2729, %v2728
        %v2735 = vsel %vm2058, %v2717, 0
        %2737 = vmatpush.bf16.msra.mxu0 0
        %2738 = vmatpush.bf16.msra.mxu0 0
        %2739 = vmatpush.bf16.msra.mxu0 0
        %2740 = vmatpush.bf16.msra.mxu0 0
        %2741 = vmatpush.bf16.msra.mxu0 0
        %2742 = vmatpush.bf16.msra.mxu0 0
        %2743 = vmatpush.bf16.msra.mxu0 %v2731
        %2744 = vmatpush.bf16.msra.mxu0 %v2730
        %2745 = vmatmul.bf16.gmra.mxu0 %v2735
        %v2746 = vpop.f32.mrf.mxu0
        %v2747 = vadd.f32 0.0, %v2746
        %v2748 = vpop.f32.mrf.mxu0
        %2749 = vdwg.mxu0
        %v2750 = vadd.f32 %v2080, %v2747
        %v2751 = vld [vmem:[%s1380] sm:$0x1]
        %v2753 = vperm.slane %v2751, 0
        %v2755 = vadd.f32 %v2750, %v2753
        %v2756 = vld [vmem:[%s1383] sm:$0x1]
        %v2757 = vld [vmem:[%s1386] sm:$0x1]
        %2758 = vadd.xlane.f32.xlu0 %v2755
        %v2759 = vpop.xlane.xlu0 %2758
        %v2760 = vmul.f32 %v2759, 0.03125
        %v2761 = vmul.f32 %v2755, %v2755
        %2762 = vadd.xlane.f32.xlu0 %v2761
        %v2763 = vpop.xlane.xlu0 %2762
        %v2764 = vmul.f32 %v2763, 0.03125
        %v2765 = vmul.f32 %v2760, %v2760
        %v2766 = vsub.f32 %v2764, %v2765
        %v2767 = vsub.f32 %v2755, %v2760
        %v2768 = vadd.f32 %v2766, 1e-05
        %v2769 = vrsqrt.pop %v2768
        %v2770 = vmul.f32 %v2769, %v2768
        %v2771 = vmul.f32 %v2770, %v2769
        %v2772 = vmul.f32 0.5, %v2771
        %v2773 = vsub.f32 1.5, %v2772
        %v2774 = vmul.f32 %v2769, %v2773
        %vm2775 = vweird.f32 %v2768
        %vm2776 = vweird.f32 %v2769
        %vm2777 = vmor %vm2775, %vm2776
        %v2778 = vsel %vm2777, %v2769, %v2774
        %v2779 = vmul.f32 %v2767, %v2778
        %v2781 = vperm.slane %v2756, 0
        %v2783 = vmul.f32 %v2779, %v2781
        %v2785 = vperm.slane %v2757, 0
        %v2787 = vadd.f32 %v2783, %v2785
        %v2788 = vpack.c.bf16 %v2787, %v2787
        %v2789 = vld [vmem:[%s1145] sm:$0xf]
        %v2790 = vld [vmem:[%s1145 + $0x4] sm:$0xf]
        %v2791 = vld [vmem:[%s1145 + $0x8] sm:$0xf]
        %v2792 = vld [vmem:[%s1145 + $0xc] sm:$0xf]
        %v2793 = vld [vmem:[%s1145 + $0x10] sm:$0xf]
        %v2794 = vld [vmem:[%s1145 + $0x14] sm:$0xf]
        %v2795 = vld [vmem:[%s1145 + $0x18] sm:$0xf]
        %v2796 = vld [vmem:[%s1145 + $0x1c] sm:$0xf]
        %v2797 = vld [vmem:[%s1145 + $0x20] sm:$0xf]
        %v2798 = vld [vmem:[%s1145 + $0x24] sm:$0xf]
        %v2799 = vld [vmem:[%s1145 + $0x28] sm:$0xf]
        %v2800 = vld [vmem:[%s1145 + $0x2c] sm:$0xf]
        %v2801 = vld [vmem:[%s1145 + $0x30] sm:$0xf]
        %v2802 = vld [vmem:[%s1145 + $0x34] sm:$0xf]
        %v2803 = vld [vmem:[%s1145 + $0x38] sm:$0xf]
        %v2804 = vld [vmem:[%s1145 + $0x3c] sm:$0xf]
        %v2805 = vld [vmem:[%s1154] sm:$0x1]
        %v2807 = vperm.slane %v2805, 0
        %v2825 = vunpack.c.l.b16 %v2789
        %v2826 = vunpack.c.l.b16 %v2790
        %v2827 = vunpack.c.l.b16 %v2791
        %v2828 = vunpack.c.l.b16 %v2792
        %v2829 = vunpack.c.l.b16 %v2793
        %v2830 = vunpack.c.l.b16 %v2794
        %v2831 = vunpack.c.l.b16 %v2795
        %v2832 = vunpack.c.l.b16 %v2796
        %v2833 = vunpack.c.l.b16 %v2797
        %v2834 = vunpack.c.l.b16 %v2798
        %v2835 = vunpack.c.l.b16 %v2799
        %v2836 = vunpack.c.l.b16 %v2800
        %v2837 = vunpack.c.l.b16 %v2801
        %v2838 = vunpack.c.l.b16 %v2802
        %v2839 = vunpack.c.l.b16 %v2803
        %v2840 = vunpack.c.l.b16 %v2804
        %v2841 = vpack.c.b16 %v2826, %v2825
        %v2842 = vpack.c.b16 %v2828, %v2827
        %v2843 = vpack.c.b16 %v2830, %v2829
        %v2844 = vpack.c.b16 %v2832, %v2831
        %v2845 = vpack.c.b16 %v2834, %v2833
        %v2846 = vpack.c.b16 %v2836, %v2835
        %v2847 = vpack.c.b16 %v2838, %v2837
        %v2848 = vpack.c.b16 %v2840, %v2839
        %2857 = vmatpush.bf16.msra.mxu0 %v2848
        %2858 = vmatpush.bf16.msra.mxu0 %v2847
        %2859 = vmatpush.bf16.msra.mxu0 %v2846
        %2860 = vmatpush.bf16.msra.mxu0 %v2845
        %2861 = vmatpush.bf16.msra.mxu0 %v2844
        %2862 = vmatpush.bf16.msra.mxu0 %v2843
        %2863 = vmatpush.bf16.msra.mxu0 %v2842
        %2864 = vmatpush.bf16.msra.mxu0 %v2841
        %2865 = vmatmul.bf16.gmra.mxu0 %v2788
        %v2866 = vpop.f32.mrf.mxu0
        %v2867 = vadd.f32 %v2807, %v2866
        %v2868 = vpop.f32.mrf.mxu0
        %2869 = vdwg.mxu0
        %v2870 = vmax.f32 %v2867, 0.0
        %v2871 = vpack.c.bf16 %v2870, %v2870
        %v2872 = vld [vmem:[%s1164] sm:$0xf]
        %v2873 = vld [vmem:[%s1164 + $0x4] sm:$0xf]
        %v2874 = vld [vmem:[%s1164 + $0x8] sm:$0xf]
        %v2875 = vld [vmem:[%s1164 + $0xc] sm:$0xf]
        %v2876 = vld [vmem:[%s1164 + $0x10] sm:$0xf]
        %v2877 = vld [vmem:[%s1164 + $0x14] sm:$0xf]
        %v2878 = vld [vmem:[%s1164 + $0x18] sm:$0xf]
        %v2879 = vld [vmem:[%s1164 + $0x1c] sm:$0xf]
        %v2880 = vld [vmem:[%s1164 + $0x20] sm:$0xf]
        %v2881 = vld [vmem:[%s1164 + $0x24] sm:$0xf]
        %v2882 = vld [vmem:[%s1164 + $0x28] sm:$0xf]
        %v2883 = vld [vmem:[%s1164 + $0x2c] sm:$0xf]
        %v2884 = vld [vmem:[%s1164 + $0x30] sm:$0xf]
        %v2885 = vld [vmem:[%s1164 + $0x34] sm:$0xf]
        %v2886 = vld [vmem:[%s1164 + $0x38] sm:$0xf]
        %v2887 = vld [vmem:[%s1164 + $0x3c] sm:$0xf]
        %v2904 = vunpack.c.l.b16 %v2872
        %v2905 = vunpack.c.l.b16 %v2873
        %v2906 = vunpack.c.l.b16 %v2874
        %v2907 = vunpack.c.l.b16 %v2875
        %v2908 = vunpack.c.l.b16 %v2876
        %v2909 = vunpack.c.l.b16 %v2877
        %v2910 = vunpack.c.l.b16 %v2878
        %v2911 = vunpack.c.l.b16 %v2879
        %v2912 = vunpack.c.l.b16 %v2880
        %v2913 = vunpack.c.l.b16 %v2881
        %v2914 = vunpack.c.l.b16 %v2882
        %v2915 = vunpack.c.l.b16 %v2883
        %v2916 = vunpack.c.l.b16 %v2884
        %v2917 = vunpack.c.l.b16 %v2885
        %v2918 = vunpack.c.l.b16 %v2886
        %v2919 = vunpack.c.l.b16 %v2887
        %v2920 = vpack.c.b16 %v2905, %v2904
        %v2921 = vpack.c.b16 %v2907, %v2906
        %v2922 = vpack.c.b16 %v2909, %v2908
        %v2923 = vpack.c.b16 %v2911, %v2910
        %v2924 = vpack.c.b16 %v2913, %v2912
        %v2925 = vpack.c.b16 %v2915, %v2914
        %v2926 = vpack.c.b16 %v2917, %v2916
        %v2927 = vpack.c.b16 %v2919, %v2918
        %2936 = vmatpush.bf16.msra.mxu0 %v2927
        %2937 = vmatpush.bf16.msra.mxu0 %v2926
        %2938 = vmatpush.bf16.msra.mxu0 %v2925
        %2939 = vmatpush.bf16.msra.mxu0 %v2924
        %2940 = vmatpush.bf16.msra.mxu0 %v2923
        %2941 = vmatpush.bf16.msra.mxu0 %v2922
        %2942 = vmatpush.bf16.msra.mxu0 %v2921
        %2943 = vmatpush.bf16.msra.mxu0 %v2920
        %2944 = vmatmul.bf16.gmra.mxu0 %v2871
        %v2945 = vpop.f32.mrf.mxu0
        %v2946 = vadd.f32 0.0, %v2945
        %v2947 = vpop.f32.mrf.mxu0
        %2948 = vdwg.mxu0
        %v2949 = vadd.f32 %v2755, %v2946
        %v2950 = vld [vmem:[%s1173] sm:$0x1]
        %v2952 = vperm.slane %v2950, 0
        %v2954 = vadd.f32 %v2949, %v2952
        %2955 = vst [vmem:[#allocation2] sm:$0xff] %v2954
        %p2956 = scmp.eq.s32.totalorder %s59, 1
        // Predicated region
        $region169: #{transformer_forward.6} parent=131 // pred_check
          %p2957 = pneg %p2956
        $region170: #{transformer_forward.6} parent=131 // pred_check_branch
          %2959 = sbr.rel (%p2957) target = $region172
        $region171: #{transformer_forward.6} parent=131 // pred_region
          %v2960 = vld [vmem:[#allocation2] sm:$0xff]
          %2961 = vst [vmem:[%s1390] sm:$0xff] %v2960
        $region172: #{transformer_forward.6} parent=131 // pred_fallthru
          _
        %p2962 = scmp.lt.s32.totalorder %s58, 1
        %s2963 = scalar_select %p2962, %s58, 1
        %s2964 = smul.addr %s2963, 8
        %s2965 = scalar_lea.vmem %s28, %s2964
        // Predicated region
        $region173: #{transformer_forward.6} parent=131 // pred_check
          %p2966 = pneg %p792
        $region174: #{transformer_forward.6} parent=131 // pred_check_branch
          %2968 = sbr.rel (%p2966) target = $region176
        $region175: #{transformer_forward.6} parent=131 // pred_region
          _
        $region176: #{transformer_forward.6} parent=131 // pred_fallthru
          _
      $region132: #{transformer_forward.6} parent=5 // pred_fallthru
        _
      %p2969 = scmp.le.s32.totalorder 2, %s49
      // Predicated region
      $region177: #{transformer_forward.6} parent=5 // pred_check
        %p2970 = pneg %p2969
      $region178: #{transformer_forward.6} parent=5 // pred_check_branch
        %2972 = sbr.rel (%p2970) target = $region180
      $region179: #{transformer_forward.6} parent=5 // pred_region
        %s2973 = ssub.s32 %s49, 2
        // Predicated region
        $region181: #{transformer_forward.6} parent=179 // pred_check
          %p2974 = pneg %p798
        $region182: #{transformer_forward.6} parent=179 // pred_check_branch
          %2976 = sbr.rel (%p2974) target = $region184
        $region183: #{transformer_forward.6} parent=179 // pred_region
          %p2977 = scmp.lt.s32.totalorder %s60, 1
          %s2978 = scalar_select %p2977, %s60, 1
          %s2979 = smul.addr %s2978, 8
          %s2980 = scalar_lea.vmem %s28, %s2979
        $region184: #{transformer_forward.6} parent=179 // pred_fallthru
          _
      $region180: #{transformer_forward.6} parent=5 // pred_fallthru
        _
    $region6: #{transformer_forward.6} parent=1 // loop_footer
      %s53 = sadd.s32 1, %s49
    $region7: #{transformer_forward.6} parent=1 // loop_footer_branch
      %48 = sbr.rel target = $region3
    $region8: #{transformer_forward.6} parent=1 // loop_exit
      _
    %2981 = vsyncpa [#allocation4], 1
    %s2982 = scalar_lea.sflag [#allocation4], 1
    %2983 = vsyncpa %s2982, 1
    %2984 = vsyncpa [#allocation6], 1
    %s2985 = scalar_lea.sflag [#allocation6], 1
    %2986 = vsyncpa %s2985, 1
    %2987 = vsyncpa [#allocation9], 1
    %s2988 = scalar_lea.sflag [#allocation9], 1
    %2989 = vsyncpa %s2988, 1
    %2990 = vsyncpa [#allocation12], 1
    %s2991 = scalar_lea.sflag [#allocation12], 1
    %2992 = vsyncpa %s2991, 1
    %2993 = vsyncpa [#allocation15], 1
    %s2994 = scalar_lea.sflag [#allocation15], 1
    %2995 = vsyncpa %s2994, 1

</llo_original>
